<compile_context>
chip_gen: v6e
topology: v6e:2x2x1
jax: 0.10.0
libtpu: 0.0.40
codegen_flags: <defaults>
</compile_context>

<pallas_src>
import functools

import jax
import jax.numpy as jnp
from jax.experimental import pallas as pl
from jax.experimental.pallas import tpu as pltpu


def _round_up(x, m):
    return (x + m - 1) // m * m


# ---------------------------------------------------------------------------
# Pallas kernel: bf16 GEMM (f32 accumulate) + per-channel bias + activation.
# BN scale is pre-folded into the weights, so only a bias add remains.
# ---------------------------------------------------------------------------
def _gemm_fused_kernel(a_ref, w_ref, b_ref, o_ref, acc_ref, *, act):
    k = pl.program_id(1)

    @pl.when(k == 0)
    def _():
        acc_ref[...] = jnp.zeros_like(acc_ref)

    acc_ref[...] += jnp.dot(a_ref[...], w_ref[...],
                            preferred_element_type=jnp.float32)

    @pl.when(k == pl.num_programs(1) - 1)
    def _():
        y = acc_ref[...] + b_ref[...]               # (TM, N) + (1, N), f32
        if act == "leaky":
            y = jnp.where(y > 0, y, 0.2 * y)        # LeakyReLU(0.2)
        elif act == "sigmoid":
            y = jax.nn.sigmoid(y)
        o_ref[...] = y.astype(o_ref.dtype)


def fused_gemm(patches, w_mat, bias, act, out_dtype):
    """patches: (M, K) bf16, w_mat: (K, N) bf16, bias: (1, N) f32 -> (M, N)."""
    M, K = patches.shape
    Kw, N = w_mat.shape
    assert K == Kw and bias.shape == (1, N)

    # M tiling: pad M up to a multiple of TM; grid is always Mp // TM.
    TM = min(512, _round_up(M, 16))
    Mp = _round_up(M, TM)
    if Mp != M:
        patches = jnp.pad(patches, ((0, Mp - M), (0, 0)))

    # K tiling: single full-extent block when small, else 1024-wide chunks
    # accumulated in a f32 VMEM scratch (keeps weight blocks small on v7x).
    if K <= 2048:
        TK, Kp = K, K
    else:
        TK = 1024
        Kp = _round_up(K, TK)
        patches = jnp.pad(patches, ((0, 0), (0, Kp - K)))
        w_mat = jnp.pad(w_mat, ((0, Kp - K), (0, 0)))

    grid = (Mp // TM, Kp // TK)

    out = pl.pallas_call(
        functools.partial(_gemm_fused_kernel, act=act),
        out_shape=jax.ShapeDtypeStruct((Mp, N), out_dtype),
        grid_spec=pltpu.PrefetchScalarGridSpec(
            num_scalar_prefetch=0,
            grid=grid,
            in_specs=[
                pl.BlockSpec((TM, TK), lambda i, k: (i, k)),
                pl.BlockSpec((TK, N), lambda i, k: (k, 0)),
                pl.BlockSpec((1, N), lambda i, k: (0, 0)),
            ],
            out_specs=pl.BlockSpec((TM, N), lambda i, k: (i, 0)),
            scratch_shapes=[pltpu.VMEM((TM, N), jnp.float32)],
        ),
        compiler_params=pltpu.CompilerParams(
            dimension_semantics=("parallel", "arbitrary"),
            vmem_limit_bytes=32 * 1024 * 1024,
        ),
    )(patches, w_mat, bias)
    return out[:M] if Mp != M else out


# ---------------------------------------------------------------------------
# Glue: im2col (bf16, NHWC) + conv wrapper
# ---------------------------------------------------------------------------
def _im2col(x, kh, kw, stride, pad):
    if pad:
        x = jnp.pad(x, ((0, 0), (pad, pad), (pad, pad), (0, 0)))
    N, H, W, C = x.shape
    OH = (H - kh) // stride + 1
    OW = (W - kw) // stride + 1
    cols = []
    for i in range(kh):
        for j in range(kw):
            cols.append(x[:, i:i + OH * stride:stride,
                           j:j + OW * stride:stride, :])
    patches = jnp.stack(cols, axis=3)               # (N, OH, OW, kh*kw, C)
    return patches.reshape(N * OH * OW, kh * kw * C), (N, OH, OW)


def conv2d_fused(x, w_mat, bias, ksize, stride, pad, act,
                 out_dtype=jnp.bfloat16):
    patches, (N, OH, OW) = _im2col(x, ksize, ksize, stride, pad)
    y = fused_gemm(patches, w_mat, bias, act, out_dtype)
    return y.reshape(N, OH, OW, w_mat.shape[1])


# ---------------------------------------------------------------------------
# Parameters (deterministic, synthetic) — all GEMM-layout prep done ONCE here.
# ---------------------------------------------------------------------------
def _oihw_to_gemm(w_oihw):
    oc, ic, kh, kw = w_oihw.shape
    # OIHW -> (KH, KW, IC, OC) -> (KH*KW*IC, OC); matches im2col flatten order.
    return jnp.transpose(w_oihw, (2, 3, 1, 0)).reshape(kh * kw * ic, oc)


def _prep_conv(w_oihw, scale, bias):
    oc = w_oihw.shape[0]
    w_mat = _oihw_to_gemm(w_oihw)
    w_mat = (w_mat * scale[None, :]).astype(jnp.bfloat16)   # fold BN scale
    b = bias.reshape(1, oc).astype(jnp.float32)
    return w_mat, b


def init_params(key, ndf, efg):
    ks = jax.random.split(key, 16)

    def conv_w(k, oc, ic, ksize):
        return 0.02 * jax.random.normal(k, (oc, ic, ksize, ksize), jnp.float32)

    def bn_fold(k, c):
        k1, k2, k3, k4 = jax.random.split(k, 4)
        gamma = 1.0 + 0.1 * jax.random.normal(k1, (c,), jnp.float32)
        beta = 0.1 * jax.random.normal(k2, (c,), jnp.float32)
        mean = 0.1 * jax.random.normal(k3, (c,), jnp.float32)
        var = 0.9 + 0.2 * jax.nn.softplus(jax.random.normal(k4, (c,), jnp.float32))
        scale = gamma / jnp.sqrt(var + 1e-5)
        bias = beta - mean * scale
        return scale, bias

    ones = lambda c: jnp.ones((c,), jnp.float32)
    zeros = lambda c: jnp.zeros((c,), jnp.float32)

    p = {}
    # encode_image_by_8times: 3 -> ndf -> 2ndf -> 4ndf (stride-2) -> 8ndf (3x3)
    p["enc1"] = _prep_conv(conv_w(ks[0], ndf, 3, 4), ones(ndf), zeros(ndf))
    s, b = bn_fold(ks[2], ndf * 2)
    p["enc2"] = _prep_conv(conv_w(ks[1], ndf * 2, ndf, 4), s, b)
    s, b = bn_fold(ks[4], ndf * 4)
    p["enc3"] = _prep_conv(conv_w(ks[3], ndf * 4, ndf * 2, 4), s, b)
    s, b = bn_fold(ks[6], ndf * 8)
    p["enc4"] = _prep_conv(conv_w(ks[5], ndf * 8, ndf * 4, 3), s, b)
    # img_down: downBlock(ndf*8 -> ndf*16)
    s, b = bn_fold(ks[8], ndf * 16)
    p["down"] = _prep_conv(conv_w(ks[7], ndf * 16, ndf * 8, 4), s, b)
    # img_leakRelu: Block3x3_leakRelu(ndf*16 -> ndf*8)
    s, b = bn_fold(ks[10], ndf * 8)
    p["lrelu"] = _prep_conv(conv_w(ks[9], ndf * 8, ndf * 16, 3), s, b)
    # jointConv: Block3x3_leakRelu(ndf*8 + efg -> ndf*8)
    s, b = bn_fold(ks[12], ndf * 8)
    p["joint"] = _prep_conv(conv_w(ks[11], ndf * 8, ndf * 8 + efg, 3), s, b)

    # logits / uncond_logits: Conv2d(ndf*8, 1, k=4, s=4) + Sigmoid (with bias).
    # Merged once into a single (K, 2) GEMM operand.
    w_log = conv_w(ks[13], 1, ndf * 8, 4)
    b_log = 0.1 * jax.random.normal(ks[14], (1,), jnp.float32)
    w_unc = conv_w(ks[15], 1, ndf * 8, 4)
    b_unc = jnp.zeros((1,), jnp.float32)
    p["logits_W"] = jnp.concatenate(
        [_oihw_to_gemm(w_log), _oihw_to_gemm(w_unc)], axis=1).astype(jnp.bfloat16)
    p["logits_b"] = jnp.stack([b_log[0], b_unc[0]]).reshape(1, 2).astype(jnp.float32)
    return p


# ---------------------------------------------------------------------------
# D_NET64 forward
# ---------------------------------------------------------------------------
def d_net64_forward(params, x_nchw, c_code, ndf, efg):
    x = jnp.transpose(x_nchw, (0, 2, 3, 1)).astype(jnp.bfloat16)  # NCHW->NHWC

    # img_code_s8 = encode_image_by_8times(ndf): 64x64x3 -> 8x8x(ndf*8)
    x = conv2d_fused(x, *params["enc1"], 4, 2, 1, "leaky")
    x = conv2d_fused(x, *params["enc2"], 4, 2, 1, "leaky")
    x = conv2d_fused(x, *params["enc3"], 4, 2, 1, "leaky")
    x = conv2d_fused(x, *params["enc4"], 3, 1, 1, "leaky")
    # img_down: 8x8x(ndf*8) -> 4x4x(ndf*16)
    x = conv2d_fused(x, *params["down"], 4, 2, 1, "leaky")
    # img_leakRelu: 4x4x(ndf*16) -> 4x4x(ndf*8)
    x_code = conv2d_fused(x, *params["lrelu"], 3, 1, 1, "leaky")

    # c_code: (B, efg) -> (B, efg, 1, 1).repeat(1,1,4,4)  ==  NHWC broadcast
    B = c_code.shape[0]
    c = jnp.broadcast_to(c_code.astype(jnp.bfloat16)[:, None, None, :],
                         (B, 4, 4, efg))
    h_c = jnp.concatenate([c, x_code], axis=-1)     # torch.cat((c_code, x_code), 1)
    h_c = conv2d_fused(h_c, *params["joint"], 3, 1, 1, "leaky")

    # logits / uncond_logits: each 4x4/s4 conv on a 4x4 map is a single-row
    # dot product per image; both are computed by ONE merged 2-column GEMM.
    K = 4 * 4 * (ndf * 8)
    a = jnp.concatenate([h_c.reshape(B, K), x_code.reshape(B, K)], axis=0)
    out2 = fused_gemm(a, params["logits_W"], params["logits_b"],
                      "sigmoid", jnp.float32)       # (2B, 2) f32
    out = out2[:B, 0]          # logits(jointConv(h_c))
    out_uncond = out2[B:, 1]   # uncond_logits(x_code)
    return out, out_uncond


if __name__ == "__main__":
    NDF = 8       # cfg.GAN.DF_DIM  (small for test)
    EFG = 16      # cfg.GAN.EMBEDDING_DIM (small for test)
    B = 2

    key = jax.random.PRNGKey(0)
    kx, kc, kp = jax.random.split(key, 3)
    x_var = jax.random.normal(kx, (B, 3, 64, 64), jnp.float32)   # NCHW like PyTorch
    c_code = jax.random.normal(kc, (B, EFG), jnp.float32)
    params = init_params(kp, NDF, EFG)

    fwd = jax.jit(functools.partial(d_net64_forward, ndf=NDF, efg=EFG))
    out, out_uncond = fwd(params, x_var, c_code)
    jax.block_until_ready((out, out_uncond))

    assert out.shape == (B,) and out_uncond.shape == (B,)
    assert bool(jnp.all((out >= 0) & (out <= 1)))
    assert bool(jnp.all((out_uncond >= 0) & (out_uncond <= 1)))
    print("KERNEL_OK")
</pallas_src>

<mosaic_0001>
module attributes {stable_mosaic.version = 11 : i64} {
  func.func @_gemm_fused_kernel(%arg0: i32, %arg1: i32, %arg2: memref<512x48xbf16, #tpu.memory_space<vmem>>, %arg3: memref<48x8xbf16, #tpu.memory_space<vmem>>, %arg4: memref<1x8xf32, #tpu.memory_space<vmem>>, %arg5: memref<512x8xbf16, #tpu.memory_space<vmem>>, %arg6: memref<512x8xf32, #tpu.memory_space<vmem>>) attributes {dimension_semantics = [#tpu.dimension_semantics<parallel>, #tpu.dimension_semantics<arbitrary>], iteration_bounds = array<i64: 4, 1>, scalar_prefetch = 0 : i64, scratch_operands = 1 : i64, tpu.core_type = #tpu.core_type<tc>, window_params = [{transform_indices = @transform_0, window_bounds = array<i64: 512, 48>}, {transform_indices = @transform_1, window_bounds = array<i64: 48, 8>}, {pipeline_mode = #tpu.pipeline_mode<synchronous>, transform_indices = @transform_2, window_bounds = array<i64: 1, 8>}, {transform_indices = @transform_3, window_bounds = array<i64: 512, 8>}]} {
    %c0_i32 = arith.constant 0 : i32
    %0 = arith.cmpi eq, %arg1, %c0_i32 : i32
    %1 = arith.extui %0 : i1 to i32
    %c0_i32_0 = arith.constant 0 : i32
    %2 = arith.cmpi ne, %1, %c0_i32_0 : i32
    scf.if %2 {
      %cst_10 = arith.constant 0.000000e+00 : f32
      %12 = vector.broadcast %cst_10 : f32 to vector<512x8xf32>
      %c0_11 = arith.constant 0 : index
      %c0_12 = arith.constant 0 : index
      %13 = vector.load %arg6[%c0_11, %c0_12] : memref<512x8xf32, #tpu.memory_space<vmem>>, vector<512x8xf32>
      tpu.vector_store %arg6[%c0_11, %c0_12], %12 {strides = array<i32>} : memref<512x8xf32, #tpu.memory_space<vmem>>, vector<512x8xf32>,
    } else {
    }
    %c0 = arith.constant 0 : index
    %c0_1 = arith.constant 0 : index
    %3 = vector.load %arg6[%c0, %c0_1] : memref<512x8xf32, #tpu.memory_space<vmem>>, vector<512x8xf32>
    %c0_2 = arith.constant 0 : index
    %c0_3 = arith.constant 0 : index
    %4 = vector.load %arg2[%c0_2, %c0_3] : memref<512x48xbf16, #tpu.memory_space<vmem>>, vector<512x48xbf16>
    %c0_4 = arith.constant 0 : index
    %c0_5 = arith.constant 0 : index
    %5 = vector.load %arg3[%c0_4, %c0_5] : memref<48x8xbf16, #tpu.memory_space<vmem>>, vector<48x8xbf16>
    %cst = arith.constant dense<0.000000e+00> : vector<512x8xf32>
    %6 = tpu.matmul %4, %5, %cst {dimension_numbers = #tpu.dot_dimension_numbers<[1], [0], [0], [1], [0, 0, 1, 1], [], []>} : vector<512x48xbf16>, vector<48x8xbf16>, vector<512x8xf32> -> vector<512x8xf32>
    %7 = arith.addf %3, %6 : vector<512x8xf32>
    %c0_6 = arith.constant 0 : index
    %c0_7 = arith.constant 0 : index
    %8 = vector.load %arg6[%c0_6, %c0_7] : memref<512x8xf32, #tpu.memory_space<vmem>>, vector<512x8xf32>
    tpu.vector_store %arg6[%c0_6, %c0_7], %7 {strides = array<i32>} : memref<512x8xf32, #tpu.memory_space<vmem>>, vector<512x8xf32>,
    %c0_i32_8 = arith.constant 0 : i32
    %9 = arith.cmpi eq, %arg1, %c0_i32_8 : i32
    %10 = arith.extui %9 : i1 to i32
    %c0_i32_9 = arith.constant 0 : i32
    %11 = arith.cmpi ne, %10, %c0_i32_9 : i32
    scf.if %11 {
      %c0_10 = arith.constant 0 : index
      %c0_11 = arith.constant 0 : index
      %12 = vector.load %arg6[%c0_10, %c0_11] : memref<512x8xf32, #tpu.memory_space<vmem>>, vector<512x8xf32>
      %c0_12 = arith.constant 0 : index
      %c0_13 = arith.constant 0 : index
      %13 = vector.load %arg4[%c0_12, %c0_13] : memref<1x8xf32, #tpu.memory_space<vmem>>, vector<1x8xf32>
      %14 = vector.broadcast %13 : vector<1x8xf32> to vector<512x8xf32>
      %15 = arith.addf %12, %14 : vector<512x8xf32>
      %cst_14 = arith.constant 0.000000e+00 : f32
      %16 = vector.broadcast %cst_14 : f32 to vector<512x8xf32>
      %17 = arith.cmpf ogt, %15, %16 : vector<512x8xf32>
      %cst_15 = arith.constant 2.000000e-01 : f32
      %18 = vector.broadcast %cst_15 : f32 to vector<512x8xf32>
      %19 = arith.mulf %18, %15 : vector<512x8xf32>
      %20 = arith.select %17, %15, %19 : vector<512x8xi1>, vector<512x8xf32>
      %21 = arith.truncf %20 : vector<512x8xf32> to vector<512x8xbf16>
      %c0_16 = arith.constant 0 : index
      %c0_17 = arith.constant 0 : index
      %22 = vector.load %arg5[%c0_16, %c0_17] : memref<512x8xbf16, #tpu.memory_space<vmem>>, vector<512x8xbf16>
      tpu.vector_store %arg5[%c0_16, %c0_17], %21 {strides = array<i32>} : memref<512x8xbf16, #tpu.memory_space<vmem>>, vector<512x8xbf16>,
    } else {
    }
    return
  }
  func.func @transform_0(%arg0: i32, %arg1: i32) -> (i32, i32) {
    %c0_i32 = arith.constant 0 : i32
    return %arg0, %arg1 : i32, i32
  }
  func.func @transform_1(%arg0: i32, %arg1: i32) -> (i32, i32) {
    %c0_i32 = arith.constant 0 : i32
    %c0_i32_0 = arith.constant 0 : i32
    return %arg1, %c0_i32 : i32, i32
  }
  func.func @transform_2(%arg0: i32, %arg1: i32) -> (i32, i32) {
    %c0_i32 = arith.constant 0 : i32
    %c0_i32_0 = arith.constant 0 : i32
    %c0_i32_1 = arith.constant 0 : i32
    return %c0_i32, %c0_i32_0 : i32, i32
  }
  func.func @transform_3(%arg0: i32, %arg1: i32) -> (i32, i32) {
    %c0_i32 = arith.constant 0 : i32
    %c0_i32_0 = arith.constant 0 : i32
    return %arg0, %c0_i32 : i32, i32
  }
}

module attributes {stable_mosaic.version = 11 : i64} {
  func.func @_gemm_fused_kernel(%arg0: i32, %arg1: i32, %arg2: memref<512x128xbf16, #tpu.memory_space<vmem>>, %arg3: memref<128x16xbf16, #tpu.memory_space<vmem>>, %arg4: memref<1x16xf32, #tpu.memory_space<vmem>>, %arg5: memref<512x16xbf16, #tpu.memory_space<vmem>>, %arg6: memref<512x16xf32, #tpu.memory_space<vmem>>) attributes {dimension_semantics = [#tpu.dimension_semantics<parallel>, #tpu.dimension_semantics<arbitrary>], iteration_bounds = array<i64: 1, 1>, scalar_prefetch = 0 : i64, scratch_operands = 1 : i64, tpu.core_type = #tpu.core_type<tc>, window_params = [{transform_indices = @transform_0, window_bounds = array<i64: 512, 128>}, {transform_indices = @transform_1, window_bounds = array<i64: 128, 16>}, {pipeline_mode = #tpu.pipeline_mode<synchronous>, transform_indices = @transform_2, window_bounds = array<i64: 1, 16>}, {transform_indices = @transform_3, window_bounds = array<i64: 512, 16>}]} {
    %c0_i32 = arith.constant 0 : i32
    %0 = arith.cmpi eq, %arg1, %c0_i32 : i32
    %1 = arith.extui %0 : i1 to i32
    %c0_i32_0 = arith.constant 0 : i32
    %2 = arith.cmpi ne, %1, %c0_i32_0 : i32
    scf.if %2 {
      %cst_10 = arith.constant 0.000000e+00 : f32
      %12 = vector.broadcast %cst_10 : f32 to vector<512x16xf32>
      %c0_11 = arith.constant 0 : index
      %c0_12 = arith.constant 0 : index
      %13 = vector.load %arg6[%c0_11, %c0_12] : memref<512x16xf32, #tpu.memory_space<vmem>>, vector<512x16xf32>
      tpu.vector_store %arg6[%c0_11, %c0_12], %12 {strides = array<i32>} : memref<512x16xf32, #tpu.memory_space<vmem>>, vector<512x16xf32>,
    } else {
    }
    %c0 = arith.constant 0 : index
    %c0_1 = arith.constant 0 : index
    %3 = vector.load %arg6[%c0, %c0_1] : memref<512x16xf32, #tpu.memory_space<vmem>>, vector<512x16xf32>
    %c0_2 = arith.constant 0 : index
    %c0_3 = arith.constant 0 : index
    %4 = vector.load %arg2[%c0_2, %c0_3] : memref<512x128xbf16, #tpu.memory_space<vmem>>, vector<512x128xbf16>
    %c0_4 = arith.constant 0 : index
    %c0_5 = arith.constant 0 : index
    %5 = vector.load %arg3[%c0_4, %c0_5] : memref<128x16xbf16, #tpu.memory_space<vmem>>, vector<128x16xbf16>
    %cst = arith.constant dense<0.000000e+00> : vector<512x16xf32>
    %6 = tpu.matmul %4, %5, %cst {dimension_numbers = #tpu.dot_dimension_numbers<[1], [0], [0], [1], [0, 0, 1, 1], [], []>} : vector<512x128xbf16>, vector<128x16xbf16>, vector<512x16xf32> -> vector<512x16xf32>
    %7 = arith.addf %3, %6 : vector<512x16xf32>
    %c0_6 = arith.constant 0 : index
    %c0_7 = arith.constant 0 : index
    %8 = vector.load %arg6[%c0_6, %c0_7] : memref<512x16xf32, #tpu.memory_space<vmem>>, vector<512x16xf32>
    tpu.vector_store %arg6[%c0_6, %c0_7], %7 {strides = array<i32>} : memref<512x16xf32, #tpu.memory_space<vmem>>, vector<512x16xf32>,
    %c0_i32_8 = arith.constant 0 : i32
    %9 = arith.cmpi eq, %arg1, %c0_i32_8 : i32
    %10 = arith.extui %9 : i1 to i32
    %c0_i32_9 = arith.constant 0 : i32
    %11 = arith.cmpi ne, %10, %c0_i32_9 : i32
    scf.if %11 {
      %c0_10 = arith.constant 0 : index
      %c0_11 = arith.constant 0 : index
      %12 = vector.load %arg6[%c0_10, %c0_11] : memref<512x16xf32, #tpu.memory_space<vmem>>, vector<512x16xf32>
      %c0_12 = arith.constant 0 : index
      %c0_13 = arith.constant 0 : index
      %13 = vector.load %arg4[%c0_12, %c0_13] : memref<1x16xf32, #tpu.memory_space<vmem>>, vector<1x16xf32>
      %14 = vector.broadcast %13 : vector<1x16xf32> to vector<512x16xf32>
      %15 = arith.addf %12, %14 : vector<512x16xf32>
      %cst_14 = arith.constant 0.000000e+00 : f32
      %16 = vector.broadcast %cst_14 : f32 to vector<512x16xf32>
      %17 = arith.cmpf ogt, %15, %16 : vector<512x16xf32>
      %cst_15 = arith.constant 2.000000e-01 : f32
      %18 = vector.broadcast %cst_15 : f32 to vector<512x16xf32>
      %19 = arith.mulf %18, %15 : vector<512x16xf32>
      %20 = arith.select %17, %15, %19 : vector<512x16xi1>, vector<512x16xf32>
      %21 = arith.truncf %20 : vector<512x16xf32> to vector<512x16xbf16>
      %c0_16 = arith.constant 0 : index
      %c0_17 = arith.constant 0 : index
      %22 = vector.load %arg5[%c0_16, %c0_17] : memref<512x16xbf16, #tpu.memory_space<vmem>>, vector<512x16xbf16>
      tpu.vector_store %arg5[%c0_16, %c0_17], %21 {strides = array<i32>} : memref<512x16xbf16, #tpu.memory_space<vmem>>, vector<512x16xbf16>,
    } else {
    }
    return
  }
  func.func @transform_0(%arg0: i32, %arg1: i32) -> (i32, i32) {
    %c0_i32 = arith.constant 0 : i32
    return %arg0, %arg1 : i32, i32
  }
  func.func @transform_1(%arg0: i32, %arg1: i32) -> (i32, i32) {
    %c0_i32 = arith.constant 0 : i32
    %c0_i32_0 = arith.constant 0 : i32
    return %arg1, %c0_i32 : i32, i32
  }
  func.func @transform_2(%arg0: i32, %arg1: i32) -> (i32, i32) {
    %c0_i32 = arith.constant 0 : i32
    %c0_i32_0 = arith.constant 0 : i32
    %c0_i32_1 = arith.constant 0 : i32
    return %c0_i32, %c0_i32_0 : i32, i32
  }
  func.func @transform_3(%arg0: i32, %arg1: i32) -> (i32, i32) {
    %c0_i32 = arith.constant 0 : i32
    %c0_i32_0 = arith.constant 0 : i32
    return %arg0, %c0_i32 : i32, i32
  }
}

module attributes {stable_mosaic.version = 11 : i64} {
  func.func @_gemm_fused_kernel(%arg0: i32, %arg1: i32, %arg2: memref<128x256xbf16, #tpu.memory_space<vmem>>, %arg3: memref<256x32xbf16, #tpu.memory_space<vmem>>, %arg4: memref<1x32xf32, #tpu.memory_space<vmem>>, %arg5: memref<128x32xbf16, #tpu.memory_space<vmem>>, %arg6: memref<128x32xf32, #tpu.memory_space<vmem>>) attributes {dimension_semantics = [#tpu.dimension_semantics<parallel>, #tpu.dimension_semantics<arbitrary>], iteration_bounds = array<i64: 1, 1>, scalar_prefetch = 0 : i64, scratch_operands = 1 : i64, tpu.core_type = #tpu.core_type<tc>, window_params = [{transform_indices = @transform_0, window_bounds = array<i64: 128, 256>}, {transform_indices = @transform_1, window_bounds = array<i64: 256, 32>}, {pipeline_mode = #tpu.pipeline_mode<synchronous>, transform_indices = @transform_2, window_bounds = array<i64: 1, 32>}, {transform_indices = @transform_3, window_bounds = array<i64: 128, 32>}]} {
    %c0_i32 = arith.constant 0 : i32
    %0 = arith.cmpi eq, %arg1, %c0_i32 : i32
    %1 = arith.extui %0 : i1 to i32
    %c0_i32_0 = arith.constant 0 : i32
    %2 = arith.cmpi ne, %1, %c0_i32_0 : i32
    scf.if %2 {
      %cst_10 = arith.constant 0.000000e+00 : f32
      %12 = vector.broadcast %cst_10 : f32 to vector<128x32xf32>
      %c0_11 = arith.constant 0 : index
      %c0_12 = arith.constant 0 : index
      %13 = vector.load %arg6[%c0_11, %c0_12] : memref<128x32xf32, #tpu.memory_space<vmem>>, vector<128x32xf32>
      tpu.vector_store %arg6[%c0_11, %c0_12], %12 {strides = array<i32>} : memref<128x32xf32, #tpu.memory_space<vmem>>, vector<128x32xf32>,
    } else {
    }
    %c0 = arith.constant 0 : index
    %c0_1 = arith.constant 0 : index
    %3 = vector.load %arg6[%c0, %c0_1] : memref<128x32xf32, #tpu.memory_space<vmem>>, vector<128x32xf32>
    %c0_2 = arith.constant 0 : index
    %c0_3 = arith.constant 0 : index
    %4 = vector.load %arg2[%c0_2, %c0_3] : memref<128x256xbf16, #tpu.memory_space<vmem>>, vector<128x256xbf16>
    %c0_4 = arith.constant 0 : index
    %c0_5 = arith.constant 0 : index
    %5 = vector.load %arg3[%c0_4, %c0_5] : memref<256x32xbf16, #tpu.memory_space<vmem>>, vector<256x32xbf16>
    %cst = arith.constant dense<0.000000e+00> : vector<128x32xf32>
    %6 = tpu.matmul %4, %5, %cst {dimension_numbers = #tpu.dot_dimension_numbers<[1], [0], [0], [1], [0, 0, 1, 1], [], []>} : vector<128x256xbf16>, vector<256x32xbf16>, vector<128x32xf32> -> vector<128x32xf32>
    %7 = arith.addf %3, %6 : vector<128x32xf32>
    %c0_6 = arith.constant 0 : index
    %c0_7 = arith.constant 0 : index
    %8 = vector.load %arg6[%c0_6, %c0_7] : memref<128x32xf32, #tpu.memory_space<vmem>>, vector<128x32xf32>
    tpu.vector_store %arg6[%c0_6, %c0_7], %7 {strides = array<i32>} : memref<128x32xf32, #tpu.memory_space<vmem>>, vector<128x32xf32>,
    %c0_i32_8 = arith.constant 0 : i32
    %9 = arith.cmpi eq, %arg1, %c0_i32_8 : i32
    %10 = arith.extui %9 : i1 to i32
    %c0_i32_9 = arith.constant 0 : i32
    %11 = arith.cmpi ne, %10, %c0_i32_9 : i32
    scf.if %11 {
      %c0_10 = arith.constant 0 : index
      %c0_11 = arith.constant 0 : index
      %12 = vector.load %arg6[%c0_10, %c0_11] : memref<128x32xf32, #tpu.memory_space<vmem>>, vector<128x32xf32>
      %c0_12 = arith.constant 0 : index
      %c0_13 = arith.constant 0 : index
      %13 = vector.load %arg4[%c0_12, %c0_13] : memref<1x32xf32, #tpu.memory_space<vmem>>, vector<1x32xf32>
      %14 = vector.broadcast %13 : vector<1x32xf32> to vector<128x32xf32>
      %15 = arith.addf %12, %14 : vector<128x32xf32>
      %cst_14 = arith.constant 0.000000e+00 : f32
      %16 = vector.broadcast %cst_14 : f32 to vector<128x32xf32>
      %17 = arith.cmpf ogt, %15, %16 : vector<128x32xf32>
      %cst_15 = arith.constant 2.000000e-01 : f32
      %18 = vector.broadcast %cst_15 : f32 to vector<128x32xf32>
      %19 = arith.mulf %18, %15 : vector<128x32xf32>
      %20 = arith.select %17, %15, %19 : vector<128x32xi1>, vector<128x32xf32>
      %21 = arith.truncf %20 : vector<128x32xf32> to vector<128x32xbf16>
      %c0_16 = arith.constant 0 : index
      %c0_17 = arith.constant 0 : index
      %22 = vector.load %arg5[%c0_16, %c0_17] : memref<128x32xbf16, #tpu.memory_space<vmem>>, vector<128x32xbf16>
      tpu.vector_store %arg5[%c0_16, %c0_17], %21 {strides = array<i32>} : memref<128x32xbf16, #tpu.memory_space<vmem>>, vector<128x32xbf16>,
    } else {
    }
    return
  }
  func.func @transform_0(%arg0: i32, %arg1: i32) -> (i32, i32) {
    %c0_i32 = arith.constant 0 : i32
    return %arg0, %arg1 : i32, i32
  }
  func.func @transform_1(%arg0: i32, %arg1: i32) -> (i32, i32) {
    %c0_i32 = arith.constant 0 : i32
    %c0_i32_0 = arith.constant 0 : i32
    return %arg1, %c0_i32 : i32, i32
  }
  func.func @transform_2(%arg0: i32, %arg1: i32) -> (i32, i32) {
    %c0_i32 = arith.constant 0 : i32
    %c0_i32_0 = arith.constant 0 : i32
    %c0_i32_1 = arith.constant 0 : i32
    return %c0_i32, %c0_i32_0 : i32, i32
  }
  func.func @transform_3(%arg0: i32, %arg1: i32) -> (i32, i32) {
    %c0_i32 = arith.constant 0 : i32
    %c0_i32_0 = arith.constant 0 : i32
    return %arg0, %c0_i32 : i32, i32
  }
}

module attributes {stable_mosaic.version = 11 : i64} {
  func.func @_gemm_fused_kernel(%arg0: i32, %arg1: i32, %arg2: memref<128x288xbf16, #tpu.memory_space<vmem>>, %arg3: memref<288x64xbf16, #tpu.memory_space<vmem>>, %arg4: memref<1x64xf32, #tpu.memory_space<vmem>>, %arg5: memref<128x64xbf16, #tpu.memory_space<vmem>>, %arg6: memref<128x64xf32, #tpu.memory_space<vmem>>) attributes {dimension_semantics = [#tpu.dimension_semantics<parallel>, #tpu.dimension_semantics<arbitrary>], iteration_bounds = array<i64: 1, 1>, scalar_prefetch = 0 : i64, scratch_operands = 1 : i64, tpu.core_type = #tpu.core_type<tc>, window_params = [{transform_indices = @transform_0, window_bounds = array<i64: 128, 288>}, {transform_indices = @transform_1, window_bounds = array<i64: 288, 64>}, {pipeline_mode = #tpu.pipeline_mode<synchronous>, transform_indices = @transform_2, window_bounds = array<i64: 1, 64>}, {transform_indices = @transform_3, window_bounds = array<i64: 128, 64>}]} {
    %c0_i32 = arith.constant 0 : i32
    %0 = arith.cmpi eq, %arg1, %c0_i32 : i32
    %1 = arith.extui %0 : i1 to i32
    %c0_i32_0 = arith.constant 0 : i32
    %2 = arith.cmpi ne, %1, %c0_i32_0 : i32
    scf.if %2 {
      %cst_10 = arith.constant 0.000000e+00 : f32
      %12 = vector.broadcast %cst_10 : f32 to vector<128x64xf32>
      %c0_11 = arith.constant 0 : index
      %c0_12 = arith.constant 0 : index
      %13 = vector.load %arg6[%c0_11, %c0_12] : memref<128x64xf32, #tpu.memory_space<vmem>>, vector<128x64xf32>
      tpu.vector_store %arg6[%c0_11, %c0_12], %12 {strides = array<i32>} : memref<128x64xf32, #tpu.memory_space<vmem>>, vector<128x64xf32>,
    } else {
    }
    %c0 = arith.constant 0 : index
    %c0_1 = arith.constant 0 : index
    %3 = vector.load %arg6[%c0, %c0_1] : memref<128x64xf32, #tpu.memory_space<vmem>>, vector<128x64xf32>
    %c0_2 = arith.constant 0 : index
    %c0_3 = arith.constant 0 : index
    %4 = vector.load %arg2[%c0_2, %c0_3] : memref<128x288xbf16, #tpu.memory_space<vmem>>, vector<128x288xbf16>
    %c0_4 = arith.constant 0 : index
    %c0_5 = arith.constant 0 : index
    %5 = vector.load %arg3[%c0_4, %c0_5] : memref<288x64xbf16, #tpu.memory_space<vmem>>, vector<288x64xbf16>
    %cst = arith.constant dense<0.000000e+00> : vector<128x64xf32>
    %6 = tpu.matmul %4, %5, %cst {dimension_numbers = #tpu.dot_dimension_numbers<[1], [0], [0], [1], [0, 0, 1, 1], [], []>} : vector<128x288xbf16>, vector<288x64xbf16>, vector<128x64xf32> -> vector<128x64xf32>
    %7 = arith.addf %3, %6 : vector<128x64xf32>
    %c0_6 = arith.constant 0 : index
    %c0_7 = arith.constant 0 : index
    %8 = vector.load %arg6[%c0_6, %c0_7] : memref<128x64xf32, #tpu.memory_space<vmem>>, vector<128x64xf32>
    tpu.vector_store %arg6[%c0_6, %c0_7], %7 {strides = array<i32>} : memref<128x64xf32, #tpu.memory_space<vmem>>, vector<128x64xf32>,
    %c0_i32_8 = arith.constant 0 : i32
    %9 = arith.cmpi eq, %arg1, %c0_i32_8 : i32
    %10 = arith.extui %9 : i1 to i32
    %c0_i32_9 = arith.constant 0 : i32
    %11 = arith.cmpi ne, %10, %c0_i32_9 : i32
    scf.if %11 {
      %c0_10 = arith.constant 0 : index
      %c0_11 = arith.constant 0 : index
      %12 = vector.load %arg6[%c0_10, %c0_11] : memref<128x64xf32, #tpu.memory_space<vmem>>, vector<128x64xf32>
      %c0_12 = arith.constant 0 : index
      %c0_13 = arith.constant 0 : index
      %13 = vector.load %arg4[%c0_12, %c0_13] : memref<1x64xf32, #tpu.memory_space<vmem>>, vector<1x64xf32>
      %14 = vector.broadcast %13 : vector<1x64xf32> to vector<128x64xf32>
      %15 = arith.addf %12, %14 : vector<128x64xf32>
      %cst_14 = arith.constant 0.000000e+00 : f32
      %16 = vector.broadcast %cst_14 : f32 to vector<128x64xf32>
      %17 = arith.cmpf ogt, %15, %16 : vector<128x64xf32>
      %cst_15 = arith.constant 2.000000e-01 : f32
      %18 = vector.broadcast %cst_15 : f32 to vector<128x64xf32>
      %19 = arith.mulf %18, %15 : vector<128x64xf32>
      %20 = arith.select %17, %15, %19 : vector<128x64xi1>, vector<128x64xf32>
      %21 = arith.truncf %20 : vector<128x64xf32> to vector<128x64xbf16>
      %c0_16 = arith.constant 0 : index
      %c0_17 = arith.constant 0 : index
      %22 = vector.load %arg5[%c0_16, %c0_17] : memref<128x64xbf16, #tpu.memory_space<vmem>>, vector<128x64xbf16>
      tpu.vector_store %arg5[%c0_16, %c0_17], %21 {strides = array<i32>} : memref<128x64xbf16, #tpu.memory_space<vmem>>, vector<128x64xbf16>,
    } else {
    }
    return
  }
  func.func @transform_0(%arg0: i32, %arg1: i32) -> (i32, i32) {
    %c0_i32 = arith.constant 0 : i32
    return %arg0, %arg1 : i32, i32
  }
  func.func @transform_1(%arg0: i32, %arg1: i32) -> (i32, i32) {
    %c0_i32 = arith.constant 0 : i32
    %c0_i32_0 = arith.constant 0 : i32
    return %arg1, %c0_i32 : i32, i32
  }
  func.func @transform_2(%arg0: i32, %arg1: i32) -> (i32, i32) {
    %c0_i32 = arith.constant 0 : i32
    %c0_i32_0 = arith.constant 0 : i32
    %c0_i32_1 = arith.constant 0 : i32
    return %c0_i32, %c0_i32_0 : i32, i32
  }
  func.func @transform_3(%arg0: i32, %arg1: i32) -> (i32, i32) {
    %c0_i32 = arith.constant 0 : i32
    %c0_i32_0 = arith.constant 0 : i32
    return %arg0, %c0_i32 : i32, i32
  }
}

module attributes {stable_mosaic.version = 11 : i64} {
  func.func @_gemm_fused_kernel(%arg0: i32, %arg1: i32, %arg2: memref<32x1024xbf16, #tpu.memory_space<vmem>>, %arg3: memref<1024x128xbf16, #tpu.memory_space<vmem>>, %arg4: memref<1x128xf32, #tpu.memory_space<vmem>>, %arg5: memref<32x128xbf16, #tpu.memory_space<vmem>>, %arg6: memref<32x128xf32, #tpu.memory_space<vmem>>) attributes {dimension_semantics = [#tpu.dimension_semantics<parallel>, #tpu.dimension_semantics<arbitrary>], iteration_bounds = array<i64: 1, 1>, scalar_prefetch = 0 : i64, scratch_operands = 1 : i64, tpu.core_type = #tpu.core_type<tc>, window_params = [{transform_indices = @transform_0, window_bounds = array<i64: 32, 1024>}, {transform_indices = @transform_1, window_bounds = array<i64: 1024, 128>}, {pipeline_mode = #tpu.pipeline_mode<synchronous>, transform_indices = @transform_2, window_bounds = array<i64: 1, 128>}, {transform_indices = @transform_3, window_bounds = array<i64: 32, 128>}]} {
    %c0_i32 = arith.constant 0 : i32
    %0 = arith.cmpi eq, %arg1, %c0_i32 : i32
    %1 = arith.extui %0 : i1 to i32
    %c0_i32_0 = arith.constant 0 : i32
    %2 = arith.cmpi ne, %1, %c0_i32_0 : i32
    scf.if %2 {
      %cst_10 = arith.constant 0.000000e+00 : f32
      %12 = vector.broadcast %cst_10 : f32 to vector<32x128xf32>
      %c0_11 = arith.constant 0 : index
      %c0_12 = arith.constant 0 : index
      %13 = vector.load %arg6[%c0_11, %c0_12] : memref<32x128xf32, #tpu.memory_space<vmem>>, vector<32x128xf32>
      tpu.vector_store %arg6[%c0_11, %c0_12], %12 {strides = array<i32>} : memref<32x128xf32, #tpu.memory_space<vmem>>, vector<32x128xf32>,
    } else {
    }
    %c0 = arith.constant 0 : index
    %c0_1 = arith.constant 0 : index
    %3 = vector.load %arg6[%c0, %c0_1] : memref<32x128xf32, #tpu.memory_space<vmem>>, vector<32x128xf32>
    %c0_2 = arith.constant 0 : index
    %c0_3 = arith.constant 0 : index
    %4 = vector.load %arg2[%c0_2, %c0_3] : memref<32x1024xbf16, #tpu.memory_space<vmem>>, vector<32x1024xbf16>
    %c0_4 = arith.constant 0 : index
    %c0_5 = arith.constant 0 : index
    %5 = vector.load %arg3[%c0_4, %c0_5] : memref<1024x128xbf16, #tpu.memory_space<vmem>>, vector<1024x128xbf16>
    %cst = arith.constant dense<0.000000e+00> : vector<32x128xf32>
    %6 = tpu.matmul %4, %5, %cst {dimension_numbers = #tpu.dot_dimension_numbers<[1], [0], [0], [1], [0, 0, 1, 1], [], []>} : vector<32x1024xbf16>, vector<1024x128xbf16>, vector<32x128xf32> -> vector<32x128xf32>
    %7 = arith.addf %3, %6 : vector<32x128xf32>
    %c0_6 = arith.constant 0 : index
    %c0_7 = arith.constant 0 : index
    %8 = vector.load %arg6[%c0_6, %c0_7] : memref<32x128xf32, #tpu.memory_space<vmem>>, vector<32x128xf32>
    tpu.vector_store %arg6[%c0_6, %c0_7], %7 {strides = array<i32>} : memref<32x128xf32, #tpu.memory_space<vmem>>, vector<32x128xf32>,
    %c0_i32_8 = arith.constant 0 : i32
    %9 = arith.cmpi eq, %arg1, %c0_i32_8 : i32
    %10 = arith.extui %9 : i1 to i32
    %c0_i32_9 = arith.constant 0 : i32
    %11 = arith.cmpi ne, %10, %c0_i32_9 : i32
    scf.if %11 {
      %c0_10 = arith.constant 0 : index
      %c0_11 = arith.constant 0 : index
      %12 = vector.load %arg6[%c0_10, %c0_11] : memref<32x128xf32, #tpu.memory_space<vmem>>, vector<32x128xf32>
      %c0_12 = arith.constant 0 : index
      %c0_13 = arith.constant 0 : index
      %13 = vector.load %arg4[%c0_12, %c0_13] : memref<1x128xf32, #tpu.memory_space<vmem>>, vector<1x128xf32>
      %14 = vector.broadcast %13 : vector<1x128xf32> to vector<32x128xf32>
      %15 = arith.addf %12, %14 : vector<32x128xf32>
      %cst_14 = arith.constant 0.000000e+00 : f32
      %16 = vector.broadcast %cst_14 : f32 to vector<32x128xf32>
      %17 = arith.cmpf ogt, %15, %16 : vector<32x128xf32>
      %cst_15 = arith.constant 2.000000e-01 : f32
      %18 = vector.broadcast %cst_15 : f32 to vector<32x128xf32>
      %19 = arith.mulf %18, %15 : vector<32x128xf32>
      %20 = arith.select %17, %15, %19 : vector<32x128xi1>, vector<32x128xf32>
      %21 = arith.truncf %20 : vector<32x128xf32> to vector<32x128xbf16>
      %c0_16 = arith.constant 0 : index
      %c0_17 = arith.constant 0 : index
      %22 = vector.load %arg5[%c0_16, %c0_17] : memref<32x128xbf16, #tpu.memory_space<vmem>>, vector<32x128xbf16>
      tpu.vector_store %arg5[%c0_16, %c0_17], %21 {strides = array<i32>} : memref<32x128xbf16, #tpu.memory_space<vmem>>, vector<32x128xbf16>,
    } else {
    }
    return
  }
  func.func @transform_0(%arg0: i32, %arg1: i32) -> (i32, i32) {
    %c0_i32 = arith.constant 0 : i32
    return %arg0, %arg1 : i32, i32
  }
  func.func @transform_1(%arg0: i32, %arg1: i32) -> (i32, i32) {
    %c0_i32 = arith.constant 0 : i32
    %c0_i32_0 = arith.constant 0 : i32
    return %arg1, %c0_i32 : i32, i32
  }
  func.func @transform_2(%arg0: i32, %arg1: i32) -> (i32, i32) {
    %c0_i32 = arith.constant 0 : i32
    %c0_i32_0 = arith.constant 0 : i32
    %c0_i32_1 = arith.constant 0 : i32
    return %c0_i32, %c0_i32_0 : i32, i32
  }
  func.func @transform_3(%arg0: i32, %arg1: i32) -> (i32, i32) {
    %c0_i32 = arith.constant 0 : i32
    %c0_i32_0 = arith.constant 0 : i32
    return %arg0, %c0_i32 : i32, i32
  }
}

module attributes {stable_mosaic.version = 11 : i64} {
  func.func @_gemm_fused_kernel(%arg0: i32, %arg1: i32, %arg2: memref<32x1152xbf16, #tpu.memory_space<vmem>>, %arg3: memref<1152x64xbf16, #tpu.memory_space<vmem>>, %arg4: memref<1x64xf32, #tpu.memory_space<vmem>>, %arg5: memref<32x64xbf16, #tpu.memory_space<vmem>>, %arg6: memref<32x64xf32, #tpu.memory_space<vmem>>) attributes {dimension_semantics = [#tpu.dimension_semantics<parallel>, #tpu.dimension_semantics<arbitrary>], iteration_bounds = array<i64: 1, 1>, scalar_prefetch = 0 : i64, scratch_operands = 1 : i64, tpu.core_type = #tpu.core_type<tc>, window_params = [{transform_indices = @transform_0, window_bounds = array<i64: 32, 1152>}, {transform_indices = @transform_1, window_bounds = array<i64: 1152, 64>}, {pipeline_mode = #tpu.pipeline_mode<synchronous>, transform_indices = @transform_2, window_bounds = array<i64: 1, 64>}, {transform_indices = @transform_3, window_bounds = array<i64: 32, 64>}]} {
    %c0_i32 = arith.constant 0 : i32
    %0 = arith.cmpi eq, %arg1, %c0_i32 : i32
    %1 = arith.extui %0 : i1 to i32
    %c0_i32_0 = arith.constant 0 : i32
    %2 = arith.cmpi ne, %1, %c0_i32_0 : i32
    scf.if %2 {
      %cst_10 = arith.constant 0.000000e+00 : f32
      %12 = vector.broadcast %cst_10 : f32 to vector<32x64xf32>
      %c0_11 = arith.constant 0 : index
      %c0_12 = arith.constant 0 : index
      %13 = vector.load %arg6[%c0_11, %c0_12] : memref<32x64xf32, #tpu.memory_space<vmem>>, vector<32x64xf32>
      tpu.vector_store %arg6[%c0_11, %c0_12], %12 {strides = array<i32>} : memref<32x64xf32, #tpu.memory_space<vmem>>, vector<32x64xf32>,
    } else {
    }
    %c0 = arith.constant 0 : index
    %c0_1 = arith.constant 0 : index
    %3 = vector.load %arg6[%c0, %c0_1] : memref<32x64xf32, #tpu.memory_space<vmem>>, vector<32x64xf32>
    %c0_2 = arith.constant 0 : index
    %c0_3 = arith.constant 0 : index
    %4 = vector.load %arg2[%c0_2, %c0_3] : memref<32x1152xbf16, #tpu.memory_space<vmem>>, vector<32x1152xbf16>
    %c0_4 = arith.constant 0 : index
    %c0_5 = arith.constant 0 : index
    %5 = vector.load %arg3[%c0_4, %c0_5] : memref<1152x64xbf16, #tpu.memory_space<vmem>>, vector<1152x64xbf16>
    %cst = arith.constant dense<0.000000e+00> : vector<32x64xf32>
    %6 = tpu.matmul %4, %5, %cst {dimension_numbers = #tpu.dot_dimension_numbers<[1], [0], [0], [1], [0, 0, 1, 1], [], []>} : vector<32x1152xbf16>, vector<1152x64xbf16>, vector<32x64xf32> -> vector<32x64xf32>
    %7 = arith.addf %3, %6 : vector<32x64xf32>
    %c0_6 = arith.constant 0 : index
    %c0_7 = arith.constant 0 : index
    %8 = vector.load %arg6[%c0_6, %c0_7] : memref<32x64xf32, #tpu.memory_space<vmem>>, vector<32x64xf32>
    tpu.vector_store %arg6[%c0_6, %c0_7], %7 {strides = array<i32>} : memref<32x64xf32, #tpu.memory_space<vmem>>, vector<32x64xf32>,
    %c0_i32_8 = arith.constant 0 : i32
    %9 = arith.cmpi eq, %arg1, %c0_i32_8 : i32
    %10 = arith.extui %9 : i1 to i32
    %c0_i32_9 = arith.constant 0 : i32
    %11 = arith.cmpi ne, %10, %c0_i32_9 : i32
    scf.if %11 {
      %c0_10 = arith.constant 0 : index
      %c0_11 = arith.constant 0 : index
      %12 = vector.load %arg6[%c0_10, %c0_11] : memref<32x64xf32, #tpu.memory_space<vmem>>, vector<32x64xf32>
      %c0_12 = arith.constant 0 : index
      %c0_13 = arith.constant 0 : index
      %13 = vector.load %arg4[%c0_12, %c0_13] : memref<1x64xf32, #tpu.memory_space<vmem>>, vector<1x64xf32>
      %14 = vector.broadcast %13 : vector<1x64xf32> to vector<32x64xf32>
      %15 = arith.addf %12, %14 : vector<32x64xf32>
      %cst_14 = arith.constant 0.000000e+00 : f32
      %16 = vector.broadcast %cst_14 : f32 to vector<32x64xf32>
      %17 = arith.cmpf ogt, %15, %16 : vector<32x64xf32>
      %cst_15 = arith.constant 2.000000e-01 : f32
      %18 = vector.broadcast %cst_15 : f32 to vector<32x64xf32>
      %19 = arith.mulf %18, %15 : vector<32x64xf32>
      %20 = arith.select %17, %15, %19 : vector<32x64xi1>, vector<32x64xf32>
      %21 = arith.truncf %20 : vector<32x64xf32> to vector<32x64xbf16>
      %c0_16 = arith.constant 0 : index
      %c0_17 = arith.constant 0 : index
      %22 = vector.load %arg5[%c0_16, %c0_17] : memref<32x64xbf16, #tpu.memory_space<vmem>>, vector<32x64xbf16>
      tpu.vector_store %arg5[%c0_16, %c0_17], %21 {strides = array<i32>} : memref<32x64xbf16, #tpu.memory_space<vmem>>, vector<32x64xbf16>,
    } else {
    }
    return
  }
  func.func @transform_0(%arg0: i32, %arg1: i32) -> (i32, i32) {
    %c0_i32 = arith.constant 0 : i32
    return %arg0, %arg1 : i32, i32
  }
  func.func @transform_1(%arg0: i32, %arg1: i32) -> (i32, i32) {
    %c0_i32 = arith.constant 0 : i32
    %c0_i32_0 = arith.constant 0 : i32
    return %arg1, %c0_i32 : i32, i32
  }
  func.func @transform_2(%arg0: i32, %arg1: i32) -> (i32, i32) {
    %c0_i32 = arith.constant 0 : i32
    %c0_i32_0 = arith.constant 0 : i32
    %c0_i32_1 = arith.constant 0 : i32
    return %c0_i32, %c0_i32_0 : i32, i32
  }
  func.func @transform_3(%arg0: i32, %arg1: i32) -> (i32, i32) {
    %c0_i32 = arith.constant 0 : i32
    %c0_i32_0 = arith.constant 0 : i32
    return %arg0, %c0_i32 : i32, i32
  }
}

module attributes {stable_mosaic.version = 11 : i64} {
  func.func @_gemm_fused_kernel(%arg0: i32, %arg1: i32, %arg2: memref<32x720xbf16, #tpu.memory_space<vmem>>, %arg3: memref<720x64xbf16, #tpu.memory_space<vmem>>, %arg4: memref<1x64xf32, #tpu.memory_space<vmem>>, %arg5: memref<32x64xbf16, #tpu.memory_space<vmem>>, %arg6: memref<32x64xf32, #tpu.memory_space<vmem>>) attributes {dimension_semantics = [#tpu.dimension_semantics<parallel>, #tpu.dimension_semantics<arbitrary>], iteration_bounds = array<i64: 1, 1>, scalar_prefetch = 0 : i64, scratch_operands = 1 : i64, tpu.core_type = #tpu.core_type<tc>, window_params = [{transform_indices = @transform_0, window_bounds = array<i64: 32, 720>}, {transform_indices = @transform_1, window_bounds = array<i64: 720, 64>}, {pipeline_mode = #tpu.pipeline_mode<synchronous>, transform_indices = @transform_2, window_bounds = array<i64: 1, 64>}, {transform_indices = @transform_3, window_bounds = array<i64: 32, 64>}]} {
    %c0_i32 = arith.constant 0 : i32
    %0 = arith.cmpi eq, %arg1, %c0_i32 : i32
    %1 = arith.extui %0 : i1 to i32
    %c0_i32_0 = arith.constant 0 : i32
    %2 = arith.cmpi ne, %1, %c0_i32_0 : i32
    scf.if %2 {
      %cst_10 = arith.constant 0.000000e+00 : f32
      %12 = vector.broadcast %cst_10 : f32 to vector<32x64xf32>
      %c0_11 = arith.constant 0 : index
      %c0_12 = arith.constant 0 : index
      %13 = vector.load %arg6[%c0_11, %c0_12] : memref<32x64xf32, #tpu.memory_space<vmem>>, vector<32x64xf32>
      tpu.vector_store %arg6[%c0_11, %c0_12], %12 {strides = array<i32>} : memref<32x64xf32, #tpu.memory_space<vmem>>, vector<32x64xf32>,
    } else {
    }
    %c0 = arith.constant 0 : index
    %c0_1 = arith.constant 0 : index
    %3 = vector.load %arg6[%c0, %c0_1] : memref<32x64xf32, #tpu.memory_space<vmem>>, vector<32x64xf32>
    %c0_2 = arith.constant 0 : index
    %c0_3 = arith.constant 0 : index
    %4 = vector.load %arg2[%c0_2, %c0_3] : memref<32x720xbf16, #tpu.memory_space<vmem>>, vector<32x720xbf16>
    %c0_4 = arith.constant 0 : index
    %c0_5 = arith.constant 0 : index
    %5 = vector.load %arg3[%c0_4, %c0_5] : memref<720x64xbf16, #tpu.memory_space<vmem>>, vector<720x64xbf16>
    %cst = arith.constant dense<0.000000e+00> : vector<32x64xf32>
    %6 = tpu.matmul %4, %5, %cst {dimension_numbers = #tpu.dot_dimension_numbers<[1], [0], [0], [1], [0, 0, 1, 1], [], []>} : vector<32x720xbf16>, vector<720x64xbf16>, vector<32x64xf32> -> vector<32x64xf32>
    %7 = arith.addf %3, %6 : vector<32x64xf32>
    %c0_6 = arith.constant 0 : index
    %c0_7 = arith.constant 0 : index
    %8 = vector.load %arg6[%c0_6, %c0_7] : memref<32x64xf32, #tpu.memory_space<vmem>>, vector<32x64xf32>
    tpu.vector_store %arg6[%c0_6, %c0_7], %7 {strides = array<i32>} : memref<32x64xf32, #tpu.memory_space<vmem>>, vector<32x64xf32>,
    %c0_i32_8 = arith.constant 0 : i32
    %9 = arith.cmpi eq, %arg1, %c0_i32_8 : i32
    %10 = arith.extui %9 : i1 to i32
    %c0_i32_9 = arith.constant 0 : i32
    %11 = arith.cmpi ne, %10, %c0_i32_9 : i32
    scf.if %11 {
      %c0_10 = arith.constant 0 : index
      %c0_11 = arith.constant 0 : index
      %12 = vector.load %arg6[%c0_10, %c0_11] : memref<32x64xf32, #tpu.memory_space<vmem>>, vector<32x64xf32>
      %c0_12 = arith.constant 0 : index
      %c0_13 = arith.constant 0 : index
      %13 = vector.load %arg4[%c0_12, %c0_13] : memref<1x64xf32, #tpu.memory_space<vmem>>, vector<1x64xf32>
      %14 = vector.broadcast %13 : vector<1x64xf32> to vector<32x64xf32>
      %15 = arith.addf %12, %14 : vector<32x64xf32>
      %cst_14 = arith.constant 0.000000e+00 : f32
      %16 = vector.broadcast %cst_14 : f32 to vector<32x64xf32>
      %17 = arith.cmpf ogt, %15, %16 : vector<32x64xf32>
      %cst_15 = arith.constant 2.000000e-01 : f32
      %18 = vector.broadcast %cst_15 : f32 to vector<32x64xf32>
      %19 = arith.mulf %18, %15 : vector<32x64xf32>
      %20 = arith.select %17, %15, %19 : vector<32x64xi1>, vector<32x64xf32>
      %21 = arith.truncf %20 : vector<32x64xf32> to vector<32x64xbf16>
      %c0_16 = arith.constant 0 : index
      %c0_17 = arith.constant 0 : index
      %22 = vector.load %arg5[%c0_16, %c0_17] : memref<32x64xbf16, #tpu.memory_space<vmem>>, vector<32x64xbf16>
      tpu.vector_store %arg5[%c0_16, %c0_17], %21 {strides = array<i32>} : memref<32x64xbf16, #tpu.memory_space<vmem>>, vector<32x64xbf16>,
    } else {
    }
    return
  }
  func.func @transform_0(%arg0: i32, %arg1: i32) -> (i32, i32) {
    %c0_i32 = arith.constant 0 : i32
    return %arg0, %arg1 : i32, i32
  }
  func.func @transform_1(%arg0: i32, %arg1: i32) -> (i32, i32) {
    %c0_i32 = arith.constant 0 : i32
    %c0_i32_0 = arith.constant 0 : i32
    return %arg1, %c0_i32 : i32, i32
  }
  func.func @transform_2(%arg0: i32, %arg1: i32) -> (i32, i32) {
    %c0_i32 = arith.constant 0 : i32
    %c0_i32_0 = arith.constant 0 : i32
    %c0_i32_1 = arith.constant 0 : i32
    return %c0_i32, %c0_i32_0 : i32, i32
  }
  func.func @transform_3(%arg0: i32, %arg1: i32) -> (i32, i32) {
    %c0_i32 = arith.constant 0 : i32
    %c0_i32_0 = arith.constant 0 : i32
    return %arg0, %c0_i32 : i32, i32
  }
}

module attributes {stable_mosaic.version = 11 : i64} {
  func.func @_gemm_fused_kernel(%arg0: i32, %arg1: i32, %arg2: memref<16x1024xbf16, #tpu.memory_space<vmem>>, %arg3: memref<1024x2xbf16, #tpu.memory_space<vmem>>, %arg4: memref<1x2xf32, #tpu.memory_space<vmem>>, %arg5: memref<16x2xf32, #tpu.memory_space<vmem>>, %arg6: memref<16x2xf32, #tpu.memory_space<vmem>>) attributes {dimension_semantics = [#tpu.dimension_semantics<parallel>, #tpu.dimension_semantics<arbitrary>], iteration_bounds = array<i64: 1, 1>, scalar_prefetch = 0 : i64, scratch_operands = 1 : i64, tpu.core_type = #tpu.core_type<tc>, window_params = [{transform_indices = @transform_0, window_bounds = array<i64: 16, 1024>}, {transform_indices = @transform_1, window_bounds = array<i64: 1024, 2>}, {pipeline_mode = #tpu.pipeline_mode<synchronous>, transform_indices = @transform_2, window_bounds = array<i64: 1, 2>}, {transform_indices = @transform_3, window_bounds = array<i64: 16, 2>}]} {
    %c0_i32 = arith.constant 0 : i32
    %0 = arith.cmpi eq, %arg1, %c0_i32 : i32
    %1 = arith.extui %0 : i1 to i32
    %c0_i32_0 = arith.constant 0 : i32
    %2 = arith.cmpi ne, %1, %c0_i32_0 : i32
    scf.if %2 {
      %cst_10 = arith.constant 0.000000e+00 : f32
      %12 = vector.broadcast %cst_10 : f32 to vector<16x2xf32>
      %c0_11 = arith.constant 0 : index
      %c0_12 = arith.constant 0 : index
      %13 = vector.load %arg6[%c0_11, %c0_12] : memref<16x2xf32, #tpu.memory_space<vmem>>, vector<16x2xf32>
      tpu.vector_store %arg6[%c0_11, %c0_12], %12 {strides = array<i32>} : memref<16x2xf32, #tpu.memory_space<vmem>>, vector<16x2xf32>,
    } else {
    }
    %c0 = arith.constant 0 : index
    %c0_1 = arith.constant 0 : index
    %3 = vector.load %arg6[%c0, %c0_1] : memref<16x2xf32, #tpu.memory_space<vmem>>, vector<16x2xf32>
    %c0_2 = arith.constant 0 : index
    %c0_3 = arith.constant 0 : index
    %4 = vector.load %arg2[%c0_2, %c0_3] : memref<16x1024xbf16, #tpu.memory_space<vmem>>, vector<16x1024xbf16>
    %c0_4 = arith.constant 0 : index
    %c0_5 = arith.constant 0 : index
    %5 = vector.load %arg3[%c0_4, %c0_5] : memref<1024x2xbf16, #tpu.memory_space<vmem>>, vector<1024x2xbf16>
    %cst = arith.constant dense<0.000000e+00> : vector<16x2xf32>
    %6 = tpu.matmul %4, %5, %cst {dimension_numbers = #tpu.dot_dimension_numbers<[1], [0], [0], [1], [0, 0, 1, 1], [], []>} : vector<16x1024xbf16>, vector<1024x2xbf16>, vector<16x2xf32> -> vector<16x2xf32>
    %7 = arith.addf %3, %6 : vector<16x2xf32>
    %c0_6 = arith.constant 0 : index
    %c0_7 = arith.constant 0 : index
    %8 = vector.load %arg6[%c0_6, %c0_7] : memref<16x2xf32, #tpu.memory_space<vmem>>, vector<16x2xf32>
    tpu.vector_store %arg6[%c0_6, %c0_7], %7 {strides = array<i32>} : memref<16x2xf32, #tpu.memory_space<vmem>>, vector<16x2xf32>,
    %c0_i32_8 = arith.constant 0 : i32
    %9 = arith.cmpi eq, %arg1, %c0_i32_8 : i32
    %10 = arith.extui %9 : i1 to i32
    %c0_i32_9 = arith.constant 0 : i32
    %11 = arith.cmpi ne, %10, %c0_i32_9 : i32
    scf.if %11 {
      %c0_10 = arith.constant 0 : index
      %c0_11 = arith.constant 0 : index
      %12 = vector.load %arg6[%c0_10, %c0_11] : memref<16x2xf32, #tpu.memory_space<vmem>>, vector<16x2xf32>
      %c0_12 = arith.constant 0 : index
      %c0_13 = arith.constant 0 : index
      %13 = vector.load %arg4[%c0_12, %c0_13] : memref<1x2xf32, #tpu.memory_space<vmem>>, vector<1x2xf32>
      %14 = vector.broadcast %13 : vector<1x2xf32> to vector<16x2xf32>
      %15 = arith.addf %12, %14 : vector<16x2xf32>
      %16 = arith.negf %15 : vector<16x2xf32>
      %17 = math.exp %16 : vector<16x2xf32>
      %cst_14 = arith.constant 1.000000e+00 : f32
      %18 = vector.broadcast %cst_14 : f32 to vector<16x2xf32>
      %19 = arith.addf %18, %17 : vector<16x2xf32>
      %20 = arith.divf %18, %19 : vector<16x2xf32>
      %c0_15 = arith.constant 0 : index
      %c0_16 = arith.constant 0 : index
      %21 = vector.load %arg5[%c0_15, %c0_16] : memref<16x2xf32, #tpu.memory_space<vmem>>, vector<16x2xf32>
      tpu.vector_store %arg5[%c0_15, %c0_16], %20 {strides = array<i32>} : memref<16x2xf32, #tpu.memory_space<vmem>>, vector<16x2xf32>,
    } else {
    }
    return
  }
  func.func @transform_0(%arg0: i32, %arg1: i32) -> (i32, i32) {
    %c0_i32 = arith.constant 0 : i32
    return %arg0, %arg1 : i32, i32
  }
  func.func @transform_1(%arg0: i32, %arg1: i32) -> (i32, i32) {
    %c0_i32 = arith.constant 0 : i32
    %c0_i32_0 = arith.constant 0 : i32
    return %arg1, %c0_i32 : i32, i32
  }
  func.func @transform_2(%arg0: i32, %arg1: i32) -> (i32, i32) {
    %c0_i32 = arith.constant 0 : i32
    %c0_i32_0 = arith.constant 0 : i32
    %c0_i32_1 = arith.constant 0 : i32
    return %c0_i32, %c0_i32_0 : i32, i32
  }
  func.func @transform_3(%arg0: i32, %arg1: i32) -> (i32, i32) {
    %c0_i32 = arith.constant 0 : i32
    %c0_i32_0 = arith.constant 0 : i32
    return %arg0, %c0_i32 : i32, i32
  }
}

</mosaic_0001>

<llo_original>
// kernel: d_net64_forward.8
$region0: #{d_net64_forward.8}
  #allocation0 [shape = 'u32[]', space=smem, size = 0x4, offset = 0x4, fixed_abs, tag = 'smem constant byte address 0x4 - core index']
  #allocation1 [shape = 'u32[144,128]{1,0:T(1,128)}', space=vmem, size = 0x12000, scoped, tag = 'internal scratch']
  #allocation2 [shape = 'f32[512,8]{1,0:T(8,128)}', space=vmem, size = 0x40000, scoped, tag = 'scratch operand']
  %s0 = inlined_call_operand.vmem [shape: bf16[2048,48], index: 0, kind: input, shape index: {}]
  %s1 = inlined_call_operand.vmem [shape: bf16[48,8], index: 1, kind: input, shape index: {}]
  %s2 = inlined_call_operand.vmem [shape: f32[1,8], index: 2, kind: input, shape index: {}]
  %s3 = inlined_call_operand.vmem [shape: bf16[2048,8], index: 3, kind: output, shape index: {}]
  %s4 = sld [smem:[#allocation0]]
  $region53: #{d_net64_forward.8} parent=0
    _
  %s6 = ssub.s32 1, %s4
  %s7 = scalar_select 0, %s6, %s4
  loop: start=0, step=1, limit=6
  $region2: #{d_net64_forward.8} parent=0 // loop_pre_header
    _
  $region3: #{d_net64_forward.8} parent=0 // loop_header
    %s9 = sphi 0, %s13
    %p10 = scmp.ge.s32.totalorder %s9, 6
    %s16 = sphi 0, %s28
    %s17 = sphi 0, %s24
    %s18 = sphi 0, %s16
    %s19 = sphi 0, %s17
    %s20 = sphi 0, %s18
    %s21 = sphi 0, %s19
    %s33 = sphi 0, %s35
    %s36 = sphi 0, %s33
    %s37 = sphi 0, %s36
    %s53 = sphi 0, %s37
    %s59 = sphi 0, %s61
    %s62 = sphi 0, %s59
    %s63 = sphi 0, %s62
    %s79 = sphi 0, %s63
    %s83 = sphi 0, %s83
    %s85 = sphi 0, %s83
    %s86 = sphi 0, %s85
    %s100 = sphi 0, %s86
    %s106 = sphi 0, %s108
    %s109 = sphi 0, %s106
    %s110 = sphi 0, %s109
    %s126 = sphi 0, %s110
  $region4: #{d_net64_forward.8} parent=0 // loop_header_branch
    %12 = sbr.rel (%p10) target = $region8
  $region5: #{d_net64_forward.8} parent=0 // loop_body
    %s14 = ssub.s32 %s9, 1
    %s15 = ssub.s32 %s9, 2
    %s22 = sadd.s32 1, %s17
    %p23 = scmp.ge.s32.totalorder %s22, 1
    %s24 = scalar_select %p23, 0, %s22
    %s25 = sadd.s32 1, %s16
    %s26 = scalar_select %p23, %s25, %s16
    %p27 = scmp.ge.s32.totalorder %s26, 4
    %s28 = scalar_select %p27, 0, %s26
    %s29 = ssub.s32 %s16, %s28
    %s30 = ssub.s32 %s17, %s24
    %s31 = sor.u32 %s29, %s30
    %p32 = scmp.eq.s32.totalorder %s31, 0
    %s34 = sadd.s32 %s33, 1
    %s35 = scalar_select %p32, %s33, %s34
    %p38 = pneg %p32
    %p39 = scmp.eq.s32.totalorder %s9, 3
    %p40 = por %p38, %p39
    %p41 = scmp.ne.s32.totalorder %s33, %s36
    %p42 = scmp.eq.s32.totalorder %s9, 0
    %p43 = por %p41, %p42
    %p44 = scmp.ne.s32.totalorder %s33, %s36
    %p45 = scmp.eq.s32.totalorder %s14, 3
    %p46 = por %p44, %p45
    %p47 = scmp.ne.s32.totalorder %s36, %s37
    %p48 = scmp.eq.s32.totalorder %s14, 0
    %p49 = por %p47, %p48
    %p50 = scmp.ne.s32.totalorder %s36, %s37
    %p51 = scmp.eq.s32.totalorder %s15, 3
    %p52 = por %p50, %p51
    %p54 = scmp.ne.s32.totalorder %s37, %s53
    %p55 = scmp.eq.s32.totalorder %s15, 0
    %p56 = por %p54, %p55
    %s57 = ssub.s32 %s17, %s24
    %p58 = scmp.eq.s32.totalorder %s57, 0
    %s60 = sadd.s32 %s59, 1
    %s61 = scalar_select %p58, %s59, %s60
    %p64 = pneg %p58
    %p65 = scmp.eq.s32.totalorder %s9, 3
    %p66 = por %p64, %p65
    %p67 = scmp.ne.s32.totalorder %s59, %s62
    %p68 = scmp.eq.s32.totalorder %s9, 0
    %p69 = por %p67, %p68
    %p70 = scmp.ne.s32.totalorder %s59, %s62
    %p71 = scmp.eq.s32.totalorder %s14, 3
    %p72 = por %p70, %p71
    %p73 = scmp.ne.s32.totalorder %s62, %s63
    %p74 = scmp.eq.s32.totalorder %s14, 0
    %p75 = por %p73, %p74
    %p76 = scmp.ne.s32.totalorder %s62, %s63
    %p77 = scmp.eq.s32.totalorder %s15, 3
    %p78 = por %p76, %p77
    %p80 = scmp.ne.s32.totalorder %s63, %s79
    %p81 = scmp.eq.s32.totalorder %s15, 0
    %p82 = por %p80, %p81
    %s84 = sadd.s32 %s83, 1
    %p87 = scmp.eq.s32.totalorder %s9, 3
    %p88 = scmp.ne.s32.totalorder %s83, %s85
    %p89 = scmp.eq.s32.totalorder %s9, 0
    %p90 = por %p88, %p89
    %p91 = scmp.ne.s32.totalorder %s83, %s85
    %p92 = scmp.eq.s32.totalorder %s14, 3
    %p93 = por %p91, %p92
    %p94 = scmp.ne.s32.totalorder %s85, %s86
    %p95 = scmp.eq.s32.totalorder %s14, 0
    %p96 = por %p94, %p95
    %p97 = scmp.ne.s32.totalorder %s85, %s86
    %p98 = scmp.eq.s32.totalorder %s15, 3
    %p99 = por %p97, %p98
    %p101 = scmp.ne.s32.totalorder %s86, %s100
    %p102 = scmp.eq.s32.totalorder %s15, 0
    %p103 = por %p101, %p102
    %s104 = ssub.s32 %s16, %s28
    %p105 = scmp.eq.s32.totalorder %s104, 0
    %s107 = sadd.s32 %s106, 1
    %s108 = scalar_select %p105, %s106, %s107
    %p111 = pneg %p105
    %p112 = scmp.eq.s32.totalorder %s9, 3
    %p113 = por %p111, %p112
    %p114 = scmp.ne.s32.totalorder %s106, %s109
    %p115 = scmp.eq.s32.totalorder %s9, 0
    %p116 = por %p114, %p115
    %p117 = scmp.ne.s32.totalorder %s106, %s109
    %p118 = scmp.eq.s32.totalorder %s14, 3
    %p119 = por %p117, %p118
    %p120 = scmp.ne.s32.totalorder %s109, %s110
    %p121 = scmp.eq.s32.totalorder %s14, 0
    %p122 = por %p120, %p121
    %p123 = scmp.ne.s32.totalorder %s109, %s110
    %p124 = scmp.eq.s32.totalorder %s15, 3
    %p125 = por %p123, %p124
    %p127 = scmp.ne.s32.totalorder %s110, %s126
    %p128 = scmp.eq.s32.totalorder %s15, 0
    %p129 = por %p127, %p128
    %p130 = scmp.le.s32.totalorder 1, %s9
    %p131 = scmp.lt.s32.totalorder %s9, 5
    %p132 = pnand %p130, %p131
    %p133 = pneg %p132
    // Predicated region
    $region9: #{d_net64_forward.8} parent=5 // pred_check
      _
    $region10: #{d_net64_forward.8} parent=5 // pred_check_branch
      %135 = sbr.rel (%p132) target = $region12
    $region11: #{d_net64_forward.8} parent=5 // pred_region
      %s136 = ssub.s32 %s9, 1
      // Predicated region
      $region13: #{d_net64_forward.8} parent=11 // pred_check
        %p137 = pneg %p75
      $region14: #{d_net64_forward.8} parent=11 // pred_check_branch
        %139 = sbr.rel (%p137) target = $region16
      $region15: #{d_net64_forward.8} parent=11 // pred_region
        %s140 = smul.u32 6, %s19
        %p141 = scmp.lt.s32.totalorder %s140, 5
        %s142 = scalar_select %p141, %s140, 5
        %s143 = smul.addr %s142, 4
        %s144 = scalar_lea.vmem %s1, %s143
        %s145 = smul.u32 6, %s19
      $region16: #{d_net64_forward.8} parent=11 // pred_fallthru
        _
      // Predicated region
      $region17: #{d_net64_forward.8} parent=11 // pred_check
        %p146 = pneg %p96
      $region18: #{d_net64_forward.8} parent=11 // pred_check_branch
        %148 = sbr.rel (%p146) target = $region20
      $region19: #{d_net64_forward.8} parent=11 // pred_region
        _
      $region20: #{d_net64_forward.8} parent=11 // pred_fallthru
        _
    $region12: #{d_net64_forward.8} parent=5 // pred_fallthru
      _
    %p149 = scmp.lt.s32.totalorder %s9, 4
    // Predicated region
    $region21: #{d_net64_forward.8} parent=5 // pred_check
      %p150 = pneg %p149
    $region22: #{d_net64_forward.8} parent=5 // pred_check_branch
      %152 = sbr.rel (%p150) target = $region24
    $region23: #{d_net64_forward.8} parent=5 // pred_region
      // Predicated region
      $region25: #{d_net64_forward.8} parent=23 // pred_check
        %p153 = pneg %p43
      $region26: #{d_net64_forward.8} parent=23 // pred_check_branch
        %155 = sbr.rel (%p153) target = $region28
      $region27: #{d_net64_forward.8} parent=23 // pred_region
        %s156 = smul.u32 64, %s16
        %p157 = scmp.lt.s32.totalorder %s156, 255
        %s158 = scalar_select %p157, %s156, 255
        %p159 = scmp.lt.s32.totalorder %s17, 0
        %s160 = scalar_select %p159, %s17, 0
        %s161 = sadd.s32 %s160, %s158
        %s162 = smul.addr %s161, 4
        %s163 = scalar_lea.vmem %s0, %s162
        %s164 = smul.u32 64, %s16
      $region28: #{d_net64_forward.8} parent=23 // pred_fallthru
        _
    $region24: #{d_net64_forward.8} parent=5 // pred_fallthru
      _
    %p165 = scmp.le.s32.totalorder 1, %s9
    %p166 = scmp.lt.s32.totalorder %s9, 5
    %p167 = pnand %p165, %p166
    %p168 = pneg %p167
    // Predicated region
    $region29: #{d_net64_forward.8} parent=5 // pred_check
      _
    $region30: #{d_net64_forward.8} parent=5 // pred_check_branch
      %170 = sbr.rel (%p167) target = $region32
    $region31: #{d_net64_forward.8} parent=5 // pred_region
      %s171 = ssub.s32 %s9, 1
      %s172 = smul.u32 64, %s18
      %p173 = scmp.lt.s32.totalorder %s172, 255
      %s174 = scalar_select %p173, %s172, 255
      %p175 = scmp.lt.s32.totalorder %s19, 0
      %s176 = scalar_select %p175, %s19, 0
      %s177 = sadd.s32 %s176, %s174
      %s178 = smul.addr %s177, 4
      %s179 = scalar_lea.vmem %s0, %s178
      %p180 = pneg %p49
      %p181 = pneg %p46
      %s182 = smul.u32 6, %s19
      %p183 = scmp.lt.s32.totalorder %s182, 5
      %s184 = scalar_select %p183, %s182, 5
      %s185 = smul.addr %s184, 4
      %s186 = scalar_lea.vmem %s1, %s185
      %p187 = pneg %p75
      %p188 = pneg %p72
      %p189 = pneg %p96
      %p190 = pneg %p93
      %p191 = pneg %p122
      %p192 = pneg %p119
      %s193 = smul.u32 64, %s18
      %p194 = scmp.lt.s32.totalorder %s193, 255
      %s195 = scalar_select %p194, %s193, 255
      %s196 = smul.addr %s195, 4
      %s197 = scalar_lea.vmem %s3, %s196
      %s198 = smul.u32 64, %s18
      %p199 = scmp.lt.s32.totalorder %s198, 255
      %s200 = scalar_select %p199, %s198, 255
      %p201 = scmp.lt.s32.totalorder %s19, 0
      %s202 = scalar_select %p201, %s19, 0
      %s203 = sadd.s32 %s202, %s200
      %s204 = smul.addr %s203, 4
      %s205 = scalar_lea.vmem %s0, %s204
      %s206 = smul.u32 64, %s18
      %s207 = smul.u32 6, %s19
      %p208 = scmp.lt.s32.totalorder %s207, 5
      %s209 = scalar_select %p208, %s207, 5
      %s210 = smul.addr %s209, 4
      %s211 = scalar_lea.vmem %s1, %s210
      %s212 = smul.u32 6, %s19
      %s213 = smul.u32 64, %s18
      %p214 = scmp.lt.s32.totalorder %s213, 255
      %s215 = scalar_select %p214, %s213, 255
      %s216 = smul.addr %s215, 4
      %s217 = scalar_lea.vmem %s3, %s216
      %s218 = smul.u32 64, %s18
      %p220 = scmp.eq.s32.totalorder %s19, 0
      // Predicated region
      $region33: #{d_net64_forward.8} parent=31 // pred_check
        %p221 = pneg %p220
      $region34: #{d_net64_forward.8} parent=31 // pred_check_branch
        %223 = sbr.rel (%p221) target = $region36
      $region35: #{d_net64_forward.8} parent=31 // pred_region
        %vm224 = vcmask 64512
        %225 = vst.msk [vmem:[#allocation2] sm:$0xff] %vm224, 0.0
        %226 = vst.msk [vmem:[#allocation2 + $0x8] sm:$0xff] %vm224, 0.0
        %227 = vst.msk [vmem:[#allocation2 + $0x10] sm:$0xff] %vm224, 0.0
        %228 = vst.msk [vmem:[#allocation2 + $0x18] sm:$0xff] %vm224, 0.0
        %229 = vst.msk [vmem:[#allocation2 + $0x20] sm:$0xff] %vm224, 0.0
        %230 = vst.msk [vmem:[#allocation2 + $0x28] sm:$0xff] %vm224, 0.0
        %231 = vst.msk [vmem:[#allocation2 + $0x30] sm:$0xff] %vm224, 0.0
        %232 = vst.msk [vmem:[#allocation2 + $0x38] sm:$0xff] %vm224, 0.0
        %233 = vst.msk [vmem:[#allocation2 + $0x40] sm:$0xff] %vm224, 0.0
        %234 = vst.msk [vmem:[#allocation2 + $0x48] sm:$0xff] %vm224, 0.0
        %235 = vst.msk [vmem:[#allocation2 + $0x50] sm:$0xff] %vm224, 0.0
        %236 = vst.msk [vmem:[#allocation2 + $0x58] sm:$0xff] %vm224, 0.0
        %237 = vst.msk [vmem:[#allocation2 + $0x60] sm:$0xff] %vm224, 0.0
        %238 = vst.msk [vmem:[#allocation2 + $0x68] sm:$0xff] %vm224, 0.0
        %239 = vst.msk [vmem:[#allocation2 + $0x70] sm:$0xff] %vm224, 0.0
        %240 = vst.msk [vmem:[#allocation2 + $0x78] sm:$0xff] %vm224, 0.0
        %241 = vst.msk [vmem:[#allocation2 + $0x80] sm:$0xff] %vm224, 0.0
        %242 = vst.msk [vmem:[#allocation2 + $0x88] sm:$0xff] %vm224, 0.0
        %243 = vst.msk [vmem:[#allocation2 + $0x90] sm:$0xff] %vm224, 0.0
        %244 = vst.msk [vmem:[#allocation2 + $0x98] sm:$0xff] %vm224, 0.0
        %245 = vst.msk [vmem:[#allocation2 + $0xa0] sm:$0xff] %vm224, 0.0
        %246 = vst.msk [vmem:[#allocation2 + $0xa8] sm:$0xff] %vm224, 0.0
        %247 = vst.msk [vmem:[#allocation2 + $0xb0] sm:$0xff] %vm224, 0.0
        %248 = vst.msk [vmem:[#allocation2 + $0xb8] sm:$0xff] %vm224, 0.0
        %249 = vst.msk [vmem:[#allocation2 + $0xc0] sm:$0xff] %vm224, 0.0
        %250 = vst.msk [vmem:[#allocation2 + $0xc8] sm:$0xff] %vm224, 0.0
        %251 = vst.msk [vmem:[#allocation2 + $0xd0] sm:$0xff] %vm224, 0.0
        %252 = vst.msk [vmem:[#allocation2 + $0xd8] sm:$0xff] %vm224, 0.0
        %253 = vst.msk [vmem:[#allocation2 + $0xe0] sm:$0xff] %vm224, 0.0
        %254 = vst.msk [vmem:[#allocation2 + $0xe8] sm:$0xff] %vm224, 0.0
        %255 = vst.msk [vmem:[#allocation2 + $0xf0] sm:$0xff] %vm224, 0.0
        %256 = vst.msk [vmem:[#allocation2 + $0xf8] sm:$0xff] %vm224, 0.0
        %257 = vst.msk [vmem:[#allocation2 + $0x100] sm:$0xff] %vm224, 0.0
        %258 = vst.msk [vmem:[#allocation2 + $0x108] sm:$0xff] %vm224, 0.0
        %259 = vst.msk [vmem:[#allocation2 + $0x110] sm:$0xff] %vm224, 0.0
        %260 = vst.msk [vmem:[#allocation2 + $0x118] sm:$0xff] %vm224, 0.0
        %261 = vst.msk [vmem:[#allocation2 + $0x120] sm:$0xff] %vm224, 0.0
        %262 = vst.msk [vmem:[#allocation2 + $0x128] sm:$0xff] %vm224, 0.0
        %263 = vst.msk [vmem:[#allocation2 + $0x130] sm:$0xff] %vm224, 0.0
        %264 = vst.msk [vmem:[#allocation2 + $0x138] sm:$0xff] %vm224, 0.0
        %265 = vst.msk [vmem:[#allocation2 + $0x140] sm:$0xff] %vm224, 0.0
        %266 = vst.msk [vmem:[#allocation2 + $0x148] sm:$0xff] %vm224, 0.0
        %267 = vst.msk [vmem:[#allocation2 + $0x150] sm:$0xff] %vm224, 0.0
        %268 = vst.msk [vmem:[#allocation2 + $0x158] sm:$0xff] %vm224, 0.0
        %269 = vst.msk [vmem:[#allocation2 + $0x160] sm:$0xff] %vm224, 0.0
        %270 = vst.msk [vmem:[#allocation2 + $0x168] sm:$0xff] %vm224, 0.0
        %271 = vst.msk [vmem:[#allocation2 + $0x170] sm:$0xff] %vm224, 0.0
        %272 = vst.msk [vmem:[#allocation2 + $0x178] sm:$0xff] %vm224, 0.0
        %273 = vst.msk [vmem:[#allocation2 + $0x180] sm:$0xff] %vm224, 0.0
        %274 = vst.msk [vmem:[#allocation2 + $0x188] sm:$0xff] %vm224, 0.0
        %275 = vst.msk [vmem:[#allocation2 + $0x190] sm:$0xff] %vm224, 0.0
        %276 = vst.msk [vmem:[#allocation2 + $0x198] sm:$0xff] %vm224, 0.0
        %277 = vst.msk [vmem:[#allocation2 + $0x1a0] sm:$0xff] %vm224, 0.0
        %278 = vst.msk [vmem:[#allocation2 + $0x1a8] sm:$0xff] %vm224, 0.0
        %279 = vst.msk [vmem:[#allocation2 + $0x1b0] sm:$0xff] %vm224, 0.0
        %280 = vst.msk [vmem:[#allocation2 + $0x1b8] sm:$0xff] %vm224, 0.0
        %281 = vst.msk [vmem:[#allocation2 + $0x1c0] sm:$0xff] %vm224, 0.0
        %282 = vst.msk [vmem:[#allocation2 + $0x1c8] sm:$0xff] %vm224, 0.0
        %283 = vst.msk [vmem:[#allocation2 + $0x1d0] sm:$0xff] %vm224, 0.0
        %284 = vst.msk [vmem:[#allocation2 + $0x1d8] sm:$0xff] %vm224, 0.0
        %285 = vst.msk [vmem:[#allocation2 + $0x1e0] sm:$0xff] %vm224, 0.0
        %286 = vst.msk [vmem:[#allocation2 + $0x1e8] sm:$0xff] %vm224, 0.0
        %287 = vst.msk [vmem:[#allocation2 + $0x1f0] sm:$0xff] %vm224, 0.0
        %288 = vst.msk [vmem:[#allocation2 + $0x1f8] sm:$0xff] %vm224, 0.0
      $region36: #{d_net64_forward.8} parent=31 // pred_fallthru
        _
      %v289 = vld [vmem:[#allocation2] sm:$0xff]
      %v290 = vld [vmem:[#allocation2 + $0x8] sm:$0xff]
      %v291 = vld [vmem:[#allocation2 + $0x10] sm:$0xff]
      %v292 = vld [vmem:[#allocation2 + $0x18] sm:$0xff]
      %v293 = vld [vmem:[#allocation2 + $0x20] sm:$0xff]
      %v294 = vld [vmem:[#allocation2 + $0x28] sm:$0xff]
      %v295 = vld [vmem:[#allocation2 + $0x30] sm:$0xff]
      %v296 = vld [vmem:[#allocation2 + $0x38] sm:$0xff]
      %v297 = vld [vmem:[#allocation2 + $0x40] sm:$0xff]
      %v298 = vld [vmem:[#allocation2 + $0x48] sm:$0xff]
      %v299 = vld [vmem:[#allocation2 + $0x50] sm:$0xff]
      %v300 = vld [vmem:[#allocation2 + $0x58] sm:$0xff]
      %v301 = vld [vmem:[#allocation2 + $0x60] sm:$0xff]
      %v302 = vld [vmem:[#allocation2 + $0x68] sm:$0xff]
      %v303 = vld [vmem:[#allocation2 + $0x70] sm:$0xff]
      %v304 = vld [vmem:[#allocation2 + $0x78] sm:$0xff]
      %v305 = vld [vmem:[#allocation2 + $0x80] sm:$0xff]
      %v306 = vld [vmem:[#allocation2 + $0x88] sm:$0xff]
      %v307 = vld [vmem:[#allocation2 + $0x90] sm:$0xff]
      %v308 = vld [vmem:[#allocation2 + $0x98] sm:$0xff]
      %v309 = vld [vmem:[#allocation2 + $0xa0] sm:$0xff]
      %v310 = vld [vmem:[#allocation2 + $0xa8] sm:$0xff]
      %v311 = vld [vmem:[#allocation2 + $0xb0] sm:$0xff]
      %v312 = vld [vmem:[#allocation2 + $0xb8] sm:$0xff]
      %v313 = vld [vmem:[#allocation2 + $0xc0] sm:$0xff]
      %v314 = vld [vmem:[#allocation2 + $0xc8] sm:$0xff]
      %v315 = vld [vmem:[#allocation2 + $0xd0] sm:$0xff]
      %v316 = vld [vmem:[#allocation2 + $0xd8] sm:$0xff]
      %v317 = vld [vmem:[#allocation2 + $0xe0] sm:$0xff]
      %v318 = vld [vmem:[#allocation2 + $0xe8] sm:$0xff]
      %v319 = vld [vmem:[#allocation2 + $0xf0] sm:$0xff]
      %v320 = vld [vmem:[#allocation2 + $0xf8] sm:$0xff]
      %v321 = vld [vmem:[#allocation2 + $0x100] sm:$0xff]
      %v322 = vld [vmem:[#allocation2 + $0x108] sm:$0xff]
      %v323 = vld [vmem:[#allocation2 + $0x110] sm:$0xff]
      %v324 = vld [vmem:[#allocation2 + $0x118] sm:$0xff]
      %v325 = vld [vmem:[#allocation2 + $0x120] sm:$0xff]
      %v326 = vld [vmem:[#allocation2 + $0x128] sm:$0xff]
      %v327 = vld [vmem:[#allocation2 + $0x130] sm:$0xff]
      %v328 = vld [vmem:[#allocation2 + $0x138] sm:$0xff]
      %v329 = vld [vmem:[#allocation2 + $0x140] sm:$0xff]
      %v330 = vld [vmem:[#allocation2 + $0x148] sm:$0xff]
      %v331 = vld [vmem:[#allocation2 + $0x150] sm:$0xff]
      %v332 = vld [vmem:[#allocation2 + $0x158] sm:$0xff]
      %v333 = vld [vmem:[#allocation2 + $0x160] sm:$0xff]
      %v334 = vld [vmem:[#allocation2 + $0x168] sm:$0xff]
      %v335 = vld [vmem:[#allocation2 + $0x170] sm:$0xff]
      %v336 = vld [vmem:[#allocation2 + $0x178] sm:$0xff]
      %v337 = vld [vmem:[#allocation2 + $0x180] sm:$0xff]
      %v338 = vld [vmem:[#allocation2 + $0x188] sm:$0xff]
      %v339 = vld [vmem:[#allocation2 + $0x190] sm:$0xff]
      %v340 = vld [vmem:[#allocation2 + $0x198] sm:$0xff]
      %v341 = vld [vmem:[#allocation2 + $0x1a0] sm:$0xff]
      %v342 = vld [vmem:[#allocation2 + $0x1a8] sm:$0xff]
      %v343 = vld [vmem:[#allocation2 + $0x1b0] sm:$0xff]
      %v344 = vld [vmem:[#allocation2 + $0x1b8] sm:$0xff]
      %v345 = vld [vmem:[#allocation2 + $0x1c0] sm:$0xff]
      %v346 = vld [vmem:[#allocation2 + $0x1c8] sm:$0xff]
      %v347 = vld [vmem:[#allocation2 + $0x1d0] sm:$0xff]
      %v348 = vld [vmem:[#allocation2 + $0x1d8] sm:$0xff]
      %v349 = vld [vmem:[#allocation2 + $0x1e0] sm:$0xff]
      %v350 = vld [vmem:[#allocation2 + $0x1e8] sm:$0xff]
      %v351 = vld [vmem:[#allocation2 + $0x1f0] sm:$0xff]
      %v352 = vld [vmem:[#allocation2 + $0x1f8] sm:$0xff]
      %v353 = vld [vmem:[%s205] sm:$0xf]
      %v354 = vld [vmem:[%s205 + $0x4] sm:$0xf]
      %v355 = vld [vmem:[%s205 + $0x8] sm:$0xf]
      %v356 = vld [vmem:[%s205 + $0xc] sm:$0xf]
      %v357 = vld [vmem:[%s205 + $0x10] sm:$0xf]
      %v358 = vld [vmem:[%s205 + $0x14] sm:$0xf]
      %v359 = vld [vmem:[%s205 + $0x18] sm:$0xf]
      %v360 = vld [vmem:[%s205 + $0x1c] sm:$0xf]
      %v361 = vld [vmem:[%s205 + $0x20] sm:$0xf]
      %v362 = vld [vmem:[%s205 + $0x24] sm:$0xf]
      %v363 = vld [vmem:[%s205 + $0x28] sm:$0xf]
      %v364 = vld [vmem:[%s205 + $0x2c] sm:$0xf]
      %v365 = vld [vmem:[%s205 + $0x30] sm:$0xf]
      %v366 = vld [vmem:[%s205 + $0x34] sm:$0xf]
      %v367 = vld [vmem:[%s205 + $0x38] sm:$0xf]
      %v368 = vld [vmem:[%s205 + $0x3c] sm:$0xf]
      %v369 = vld [vmem:[%s205 + $0x40] sm:$0xf]
      %v370 = vld [vmem:[%s205 + $0x44] sm:$0xf]
      %v371 = vld [vmem:[%s205 + $0x48] sm:$0xf]
      %v372 = vld [vmem:[%s205 + $0x4c] sm:$0xf]
      %v373 = vld [vmem:[%s205 + $0x50] sm:$0xf]
      %v374 = vld [vmem:[%s205 + $0x54] sm:$0xf]
      %v375 = vld [vmem:[%s205 + $0x58] sm:$0xf]
      %v376 = vld [vmem:[%s205 + $0x5c] sm:$0xf]
      %v377 = vld [vmem:[%s205 + $0x60] sm:$0xf]
      %v378 = vld [vmem:[%s205 + $0x64] sm:$0xf]
      %v379 = vld [vmem:[%s205 + $0x68] sm:$0xf]
      %v380 = vld [vmem:[%s205 + $0x6c] sm:$0xf]
      %v381 = vld [vmem:[%s205 + $0x70] sm:$0xf]
      %v382 = vld [vmem:[%s205 + $0x74] sm:$0xf]
      %v383 = vld [vmem:[%s205 + $0x78] sm:$0xf]
      %v384 = vld [vmem:[%s205 + $0x7c] sm:$0xf]
      %v385 = vld [vmem:[%s205 + $0x80] sm:$0xf]
      %v386 = vld [vmem:[%s205 + $0x84] sm:$0xf]
      %v387 = vld [vmem:[%s205 + $0x88] sm:$0xf]
      %v388 = vld [vmem:[%s205 + $0x8c] sm:$0xf]
      %v389 = vld [vmem:[%s205 + $0x90] sm:$0xf]
      %v390 = vld [vmem:[%s205 + $0x94] sm:$0xf]
      %v391 = vld [vmem:[%s205 + $0x98] sm:$0xf]
      %v392 = vld [vmem:[%s205 + $0x9c] sm:$0xf]
      %v393 = vld [vmem:[%s205 + $0xa0] sm:$0xf]
      %v394 = vld [vmem:[%s205 + $0xa4] sm:$0xf]
      %v395 = vld [vmem:[%s205 + $0xa8] sm:$0xf]
      %v396 = vld [vmem:[%s205 + $0xac] sm:$0xf]
      %v397 = vld [vmem:[%s205 + $0xb0] sm:$0xf]
      %v398 = vld [vmem:[%s205 + $0xb4] sm:$0xf]
      %v399 = vld [vmem:[%s205 + $0xb8] sm:$0xf]
      %v400 = vld [vmem:[%s205 + $0xbc] sm:$0xf]
      %v401 = vld [vmem:[%s205 + $0xc0] sm:$0xf]
      %v402 = vld [vmem:[%s205 + $0xc4] sm:$0xf]
      %v403 = vld [vmem:[%s205 + $0xc8] sm:$0xf]
      %v404 = vld [vmem:[%s205 + $0xcc] sm:$0xf]
      %v405 = vld [vmem:[%s205 + $0xd0] sm:$0xf]
      %v406 = vld [vmem:[%s205 + $0xd4] sm:$0xf]
      %v407 = vld [vmem:[%s205 + $0xd8] sm:$0xf]
      %v408 = vld [vmem:[%s205 + $0xdc] sm:$0xf]
      %v409 = vld [vmem:[%s205 + $0xe0] sm:$0xf]
      %v410 = vld [vmem:[%s205 + $0xe4] sm:$0xf]
      %v411 = vld [vmem:[%s205 + $0xe8] sm:$0xf]
      %v412 = vld [vmem:[%s205 + $0xec] sm:$0xf]
      %v413 = vld [vmem:[%s205 + $0xf0] sm:$0xf]
      %v414 = vld [vmem:[%s205 + $0xf4] sm:$0xf]
      %v415 = vld [vmem:[%s205 + $0xf8] sm:$0xf]
      %v416 = vld [vmem:[%s205 + $0xfc] sm:$0xf]
      %v417 = vld [vmem:[%s211] sm:$0xf]
      %v418 = vld [vmem:[%s211 + $0x4] sm:$0xf]
      %v419 = vld [vmem:[%s211 + $0x8] sm:$0xf]
      %v420 = vld [vmem:[%s211 + $0xc] sm:$0xf]
      %v421 = vld [vmem:[%s211 + $0x10] sm:$0xf]
      %v422 = vld [vmem:[%s211 + $0x14] sm:$0xf]
      %v487 = vunpack.c.l.b16 %v353
      %v488 = vunpack.c.l.b16 %v354
      %v489 = vunpack.c.l.b16 %v355
      %v490 = vunpack.c.l.b16 %v356
      %v491 = vunpack.c.l.b16 %v357
      %v492 = vunpack.c.l.b16 %v358
      %v493 = vunpack.c.l.b16 %v359
      %v494 = vunpack.c.l.b16 %v360
      %v495 = vunpack.c.l.b16 %v361
      %v496 = vunpack.c.l.b16 %v362
      %v497 = vunpack.c.l.b16 %v363
      %v498 = vunpack.c.l.b16 %v364
      %v499 = vunpack.c.l.b16 %v365
      %v500 = vunpack.c.l.b16 %v366
      %v501 = vunpack.c.l.b16 %v367
      %v502 = vunpack.c.l.b16 %v368
      %v503 = vunpack.c.l.b16 %v369
      %v504 = vunpack.c.l.b16 %v370
      %v505 = vunpack.c.l.b16 %v371
      %v506 = vunpack.c.l.b16 %v372
      %v507 = vunpack.c.l.b16 %v373
      %v508 = vunpack.c.l.b16 %v374
      %v509 = vunpack.c.l.b16 %v375
      %v510 = vunpack.c.l.b16 %v376
      %v511 = vunpack.c.l.b16 %v377
      %v512 = vunpack.c.l.b16 %v378
      %v513 = vunpack.c.l.b16 %v379
      %v514 = vunpack.c.l.b16 %v380
      %v515 = vunpack.c.l.b16 %v381
      %v516 = vunpack.c.l.b16 %v382
      %v517 = vunpack.c.l.b16 %v383
      %v518 = vunpack.c.l.b16 %v384
      %v519 = vunpack.c.l.b16 %v385
      %v520 = vunpack.c.l.b16 %v386
      %v521 = vunpack.c.l.b16 %v387
      %v522 = vunpack.c.l.b16 %v388
      %v523 = vunpack.c.l.b16 %v389
      %v524 = vunpack.c.l.b16 %v390
      %v525 = vunpack.c.l.b16 %v391
      %v526 = vunpack.c.l.b16 %v392
      %v527 = vunpack.c.l.b16 %v393
      %v528 = vunpack.c.l.b16 %v394
      %v529 = vunpack.c.l.b16 %v395
      %v530 = vunpack.c.l.b16 %v396
      %v531 = vunpack.c.l.b16 %v397
      %v532 = vunpack.c.l.b16 %v398
      %v533 = vunpack.c.l.b16 %v399
      %v534 = vunpack.c.l.b16 %v400
      %v535 = vunpack.c.l.b16 %v401
      %v536 = vunpack.c.l.b16 %v402
      %v537 = vunpack.c.l.b16 %v403
      %v538 = vunpack.c.l.b16 %v404
      %v539 = vunpack.c.l.b16 %v405
      %v540 = vunpack.c.l.b16 %v406
      %v541 = vunpack.c.l.b16 %v407
      %v542 = vunpack.c.l.b16 %v408
      %v543 = vunpack.c.l.b16 %v409
      %v544 = vunpack.c.l.b16 %v410
      %v545 = vunpack.c.l.b16 %v411
      %v546 = vunpack.c.l.b16 %v412
      %v547 = vunpack.c.l.b16 %v413
      %v548 = vunpack.c.l.b16 %v414
      %v549 = vunpack.c.l.b16 %v415
      %v550 = vunpack.c.l.b16 %v416
      %v551 = vpack.c.b16 %v488, %v487
      %v552 = vpack.c.b16 %v490, %v489
      %v553 = vpack.c.b16 %v492, %v491
      %v554 = vpack.c.b16 %v494, %v493
      %v555 = vpack.c.b16 %v496, %v495
      %v556 = vpack.c.b16 %v498, %v497
      %v557 = vpack.c.b16 %v500, %v499
      %v558 = vpack.c.b16 %v502, %v501
      %v559 = vpack.c.b16 %v504, %v503
      %v560 = vpack.c.b16 %v506, %v505
      %v561 = vpack.c.b16 %v508, %v507
      %v562 = vpack.c.b16 %v510, %v509
      %v563 = vpack.c.b16 %v512, %v511
      %v564 = vpack.c.b16 %v514, %v513
      %v565 = vpack.c.b16 %v516, %v515
      %v566 = vpack.c.b16 %v518, %v517
      %v567 = vpack.c.b16 %v520, %v519
      %v568 = vpack.c.b16 %v522, %v521
      %v569 = vpack.c.b16 %v524, %v523
      %v570 = vpack.c.b16 %v526, %v525
      %v571 = vpack.c.b16 %v528, %v527
      %v572 = vpack.c.b16 %v530, %v529
      %v573 = vpack.c.b16 %v532, %v531
      %v574 = vpack.c.b16 %v534, %v533
      %v575 = vpack.c.b16 %v536, %v535
      %v576 = vpack.c.b16 %v538, %v537
      %v577 = vpack.c.b16 %v540, %v539
      %v578 = vpack.c.b16 %v542, %v541
      %v579 = vpack.c.b16 %v544, %v543
      %v580 = vpack.c.b16 %v546, %v545
      %v581 = vpack.c.b16 %v548, %v547
      %v582 = vpack.c.b16 %v550, %v549
      %v589 = vunpack.c.l.b16 %v417
      %v590 = vunpack.c.l.b16 %v418
      %v591 = vunpack.c.l.b16 %v419
      %v592 = vunpack.c.l.b16 %v420
      %v593 = vunpack.c.l.b16 %v421
      %v594 = vunpack.c.l.b16 %v422
      %v595 = vpack.c.b16 %v590, %v589
      %v596 = vpack.c.b16 %v592, %v591
      %v597 = vpack.c.b16 %v594, %v593
      %vm601 = vcmask 392192
      %v603 = vsel %vm601, %v551, 0
      %v606 = vsel %vm601, %v552, 0
      %v609 = vsel %vm601, %v553, 0
      %v612 = vsel %vm601, %v554, 0
      %v615 = vsel %vm601, %v555, 0
      %v618 = vsel %vm601, %v556, 0
      %v621 = vsel %vm601, %v557, 0
      %v624 = vsel %vm601, %v558, 0
      %v627 = vsel %vm601, %v559, 0
      %v630 = vsel %vm601, %v560, 0
      %v633 = vsel %vm601, %v561, 0
      %v636 = vsel %vm601, %v562, 0
      %v639 = vsel %vm601, %v563, 0
      %v642 = vsel %vm601, %v564, 0
      %v645 = vsel %vm601, %v565, 0
      %v648 = vsel %vm601, %v566, 0
      %v651 = vsel %vm601, %v567, 0
      %v654 = vsel %vm601, %v568, 0
      %v657 = vsel %vm601, %v569, 0
      %v660 = vsel %vm601, %v570, 0
      %v663 = vsel %vm601, %v571, 0
      %v666 = vsel %vm601, %v572, 0
      %v669 = vsel %vm601, %v573, 0
      %v672 = vsel %vm601, %v574, 0
      %v675 = vsel %vm601, %v575, 0
      %v678 = vsel %vm601, %v576, 0
      %v681 = vsel %vm601, %v577, 0
      %v684 = vsel %vm601, %v578, 0
      %v687 = vsel %vm601, %v579, 0
      %v690 = vsel %vm601, %v580, 0
      %v693 = vsel %vm601, %v581, 0
      %v696 = vsel %vm601, %v582, 0
      %698 = vmatprep.subr.bf16.mxu0 0
      %699 = vmatpush1.bf16.msra.mxu0 0
      %700 = vmatprep.subr.bf16.mxu0 0
      %701 = vmatpush1.bf16.msra.mxu0 0
      %702 = vmatprep.subr.bf16.mxu0 0
      %703 = vmatpush1.bf16.msra.mxu0 0
      %704 = vmatprep.subr.bf16.mxu0 0
      %705 = vmatpush1.bf16.msra.mxu0 0
      %706 = vmatprep.subr.bf16.mxu0 0
      %707 = vmatpush1.bf16.msra.mxu0 0
      %708 = vmatprep.subr.bf16.mxu0 0
      %709 = vmatpush1.bf16.msra.mxu0 %v597
      %710 = vmatprep.subr.bf16.mxu0 0
      %711 = vmatpush1.bf16.msra.mxu0 %v596
      %712 = vmatprep.subr.bf16.mxu0 0
      %713 = vmatpush1.bf16.msra.mxu0 %v595
      %714 = vmatprep.subr.bf16.mxu0 0
      %715 = vmatpush2.bf16.msra.mxu0 0
      %716 = vmatprep.subr.bf16.mxu0 0
      %717 = vmatpush2.bf16.msra.mxu0 0
      %718 = vmatprep.subr.bf16.mxu0 0
      %719 = vmatpush2.bf16.msra.mxu0 0
      %720 = vmatprep.subr.bf16.mxu0 0
      %721 = vmatpush2.bf16.msra.mxu0 0
      %722 = vmatprep.subr.bf16.mxu0 0
      %723 = vmatpush2.bf16.msra.mxu0 0
      %724 = vmatprep.subr.bf16.mxu0 0
      %725 = vmatpush2.bf16.msra.mxu0 0
      %726 = vmatprep.subr.bf16.mxu0 0
      %727 = vmatpush2.bf16.msra.mxu0 0
      %728 = vmatprep.subr.bf16.mxu0 0
      %729 = vmatpush2.bf16.msra.mxu0 0
      %730 = vmatprep.mubr.bf16.mxu0 0
      %731 = vmatmul.mubr.bf16.gmra.mxu0 %v603
      %v732 = vpop.f32.mrf.mxu0
      %v733 = vadd.f32 0.0, %v732
      %v734 = vpop.f32.mrf.mxu0
      %v735 = vpop.f32.mrf.mxu0
      %v736 = vadd.f32 0.0, %v735
      %v737 = vpop.f32.mrf.mxu0
      %738 = vmatprep.mubr.bf16.mxu0 0
      %739 = vmatmul.mubr.bf16.gmra.mxu0 %v606
      %v740 = vpop.f32.mrf.mxu0
      %v741 = vadd.f32 0.0, %v740
      %v742 = vpop.f32.mrf.mxu0
      %v743 = vpop.f32.mrf.mxu0
      %v744 = vadd.f32 0.0, %v743
      %v745 = vpop.f32.mrf.mxu0
      %746 = vmatprep.mubr.bf16.mxu0 0
      %747 = vmatmul.mubr.bf16.gmra.mxu0 %v609
      %v748 = vpop.f32.mrf.mxu0
      %v749 = vadd.f32 0.0, %v748
      %v750 = vpop.f32.mrf.mxu0
      %v751 = vpop.f32.mrf.mxu0
      %v752 = vadd.f32 0.0, %v751
      %v753 = vpop.f32.mrf.mxu0
      %754 = vmatprep.mubr.bf16.mxu0 0
      %755 = vmatmul.mubr.bf16.gmra.mxu0 %v612
      %v756 = vpop.f32.mrf.mxu0
      %v757 = vadd.f32 0.0, %v756
      %v758 = vpop.f32.mrf.mxu0
      %v759 = vpop.f32.mrf.mxu0
      %v760 = vadd.f32 0.0, %v759
      %v761 = vpop.f32.mrf.mxu0
      %762 = vmatprep.mubr.bf16.mxu0 0
      %763 = vmatmul.mubr.bf16.gmra.mxu0 %v615
      %v764 = vpop.f32.mrf.mxu0
      %v765 = vadd.f32 0.0, %v764
      %v766 = vpop.f32.mrf.mxu0
      %v767 = vpop.f32.mrf.mxu0
      %v768 = vadd.f32 0.0, %v767
      %v769 = vpop.f32.mrf.mxu0
      %770 = vmatprep.mubr.bf16.mxu0 0
      %771 = vmatmul.mubr.bf16.gmra.mxu0 %v618
      %v772 = vpop.f32.mrf.mxu0
      %v773 = vadd.f32 0.0, %v772
      %v774 = vpop.f32.mrf.mxu0
      %v775 = vpop.f32.mrf.mxu0
      %v776 = vadd.f32 0.0, %v775
      %v777 = vpop.f32.mrf.mxu0
      %778 = vmatprep.mubr.bf16.mxu0 0
      %779 = vmatmul.mubr.bf16.gmra.mxu0 %v621
      %v780 = vpop.f32.mrf.mxu0
      %v781 = vadd.f32 0.0, %v780
      %v782 = vpop.f32.mrf.mxu0
      %v783 = vpop.f32.mrf.mxu0
      %v784 = vadd.f32 0.0, %v783
      %v785 = vpop.f32.mrf.mxu0
      %786 = vmatprep.mubr.bf16.mxu0 0
      %787 = vmatmul.mubr.bf16.gmra.mxu0 %v624
      %v788 = vpop.f32.mrf.mxu0
      %v789 = vadd.f32 0.0, %v788
      %v790 = vpop.f32.mrf.mxu0
      %v791 = vpop.f32.mrf.mxu0
      %v792 = vadd.f32 0.0, %v791
      %v793 = vpop.f32.mrf.mxu0
      %794 = vmatprep.mubr.bf16.mxu0 0
      %795 = vmatmul.mubr.bf16.gmra.mxu0 %v627
      %v796 = vpop.f32.mrf.mxu0
      %v797 = vadd.f32 0.0, %v796
      %v798 = vpop.f32.mrf.mxu0
      %v799 = vpop.f32.mrf.mxu0
      %v800 = vadd.f32 0.0, %v799
      %v801 = vpop.f32.mrf.mxu0
      %802 = vmatprep.mubr.bf16.mxu0 0
      %803 = vmatmul.mubr.bf16.gmra.mxu0 %v630
      %v804 = vpop.f32.mrf.mxu0
      %v805 = vadd.f32 0.0, %v804
      %v806 = vpop.f32.mrf.mxu0
      %v807 = vpop.f32.mrf.mxu0
      %v808 = vadd.f32 0.0, %v807
      %v809 = vpop.f32.mrf.mxu0
      %810 = vmatprep.mubr.bf16.mxu0 0
      %811 = vmatmul.mubr.bf16.gmra.mxu0 %v633
      %v812 = vpop.f32.mrf.mxu0
      %v813 = vadd.f32 0.0, %v812
      %v814 = vpop.f32.mrf.mxu0
      %v815 = vpop.f32.mrf.mxu0
      %v816 = vadd.f32 0.0, %v815
      %v817 = vpop.f32.mrf.mxu0
      %818 = vmatprep.mubr.bf16.mxu0 0
      %819 = vmatmul.mubr.bf16.gmra.mxu0 %v636
      %v820 = vpop.f32.mrf.mxu0
      %v821 = vadd.f32 0.0, %v820
      %v822 = vpop.f32.mrf.mxu0
      %v823 = vpop.f32.mrf.mxu0
      %v824 = vadd.f32 0.0, %v823
      %v825 = vpop.f32.mrf.mxu0
      %826 = vmatprep.mubr.bf16.mxu0 0
      %827 = vmatmul.mubr.bf16.gmra.mxu0 %v639
      %v828 = vpop.f32.mrf.mxu0
      %v829 = vadd.f32 0.0, %v828
      %v830 = vpop.f32.mrf.mxu0
      %v831 = vpop.f32.mrf.mxu0
      %v832 = vadd.f32 0.0, %v831
      %v833 = vpop.f32.mrf.mxu0
      %834 = vmatprep.mubr.bf16.mxu0 0
      %835 = vmatmul.mubr.bf16.gmra.mxu0 %v642
      %v836 = vpop.f32.mrf.mxu0
      %v837 = vadd.f32 0.0, %v836
      %v838 = vpop.f32.mrf.mxu0
      %v839 = vpop.f32.mrf.mxu0
      %v840 = vadd.f32 0.0, %v839
      %v841 = vpop.f32.mrf.mxu0
      %842 = vmatprep.mubr.bf16.mxu0 0
      %843 = vmatmul.mubr.bf16.gmra.mxu0 %v645
      %v844 = vpop.f32.mrf.mxu0
      %v845 = vadd.f32 0.0, %v844
      %v846 = vpop.f32.mrf.mxu0
      %v847 = vpop.f32.mrf.mxu0
      %v848 = vadd.f32 0.0, %v847
      %v849 = vpop.f32.mrf.mxu0
      %850 = vmatprep.mubr.bf16.mxu0 0
      %851 = vmatmul.mubr.bf16.gmra.mxu0 %v648
      %v852 = vpop.f32.mrf.mxu0
      %v853 = vadd.f32 0.0, %v852
      %v854 = vpop.f32.mrf.mxu0
      %v855 = vpop.f32.mrf.mxu0
      %v856 = vadd.f32 0.0, %v855
      %v857 = vpop.f32.mrf.mxu0
      %858 = vmatprep.mubr.bf16.mxu0 0
      %859 = vmatmul.mubr.bf16.gmra.mxu0 %v651
      %v860 = vpop.f32.mrf.mxu0
      %v861 = vadd.f32 0.0, %v860
      %v862 = vpop.f32.mrf.mxu0
      %v863 = vpop.f32.mrf.mxu0
      %v864 = vadd.f32 0.0, %v863
      %v865 = vpop.f32.mrf.mxu0
      %866 = vmatprep.mubr.bf16.mxu0 0
      %867 = vmatmul.mubr.bf16.gmra.mxu0 %v654
      %v868 = vpop.f32.mrf.mxu0
      %v869 = vadd.f32 0.0, %v868
      %v870 = vpop.f32.mrf.mxu0
      %v871 = vpop.f32.mrf.mxu0
      %v872 = vadd.f32 0.0, %v871
      %v873 = vpop.f32.mrf.mxu0
      %874 = vmatprep.mubr.bf16.mxu0 0
      %875 = vmatmul.mubr.bf16.gmra.mxu0 %v657
      %v876 = vpop.f32.mrf.mxu0
      %v877 = vadd.f32 0.0, %v876
      %v878 = vpop.f32.mrf.mxu0
      %v879 = vpop.f32.mrf.mxu0
      %v880 = vadd.f32 0.0, %v879
      %v881 = vpop.f32.mrf.mxu0
      %882 = vmatprep.mubr.bf16.mxu0 0
      %883 = vmatmul.mubr.bf16.gmra.mxu0 %v660
      %v884 = vpop.f32.mrf.mxu0
      %v885 = vadd.f32 0.0, %v884
      %v886 = vpop.f32.mrf.mxu0
      %v887 = vpop.f32.mrf.mxu0
      %v888 = vadd.f32 0.0, %v887
      %v889 = vpop.f32.mrf.mxu0
      %890 = vmatprep.mubr.bf16.mxu0 0
      %891 = vmatmul.mubr.bf16.gmra.mxu0 %v663
      %v892 = vpop.f32.mrf.mxu0
      %v893 = vadd.f32 0.0, %v892
      %v894 = vpop.f32.mrf.mxu0
      %v895 = vpop.f32.mrf.mxu0
      %v896 = vadd.f32 0.0, %v895
      %v897 = vpop.f32.mrf.mxu0
      %898 = vmatprep.mubr.bf16.mxu0 0
      %899 = vmatmul.mubr.bf16.gmra.mxu0 %v666
      %v900 = vpop.f32.mrf.mxu0
      %v901 = vadd.f32 0.0, %v900
      %v902 = vpop.f32.mrf.mxu0
      %v903 = vpop.f32.mrf.mxu0
      %v904 = vadd.f32 0.0, %v903
      %v905 = vpop.f32.mrf.mxu0
      %906 = vmatprep.mubr.bf16.mxu0 0
      %907 = vmatmul.mubr.bf16.gmra.mxu0 %v669
      %v908 = vpop.f32.mrf.mxu0
      %v909 = vadd.f32 0.0, %v908
      %v910 = vpop.f32.mrf.mxu0
      %v911 = vpop.f32.mrf.mxu0
      %v912 = vadd.f32 0.0, %v911
      %v913 = vpop.f32.mrf.mxu0
      %914 = vmatprep.mubr.bf16.mxu0 0
      %915 = vmatmul.mubr.bf16.gmra.mxu0 %v672
      %v916 = vpop.f32.mrf.mxu0
      %v917 = vadd.f32 0.0, %v916
      %v918 = vpop.f32.mrf.mxu0
      %v919 = vpop.f32.mrf.mxu0
      %v920 = vadd.f32 0.0, %v919
      %v921 = vpop.f32.mrf.mxu0
      %922 = vmatprep.mubr.bf16.mxu0 0
      %923 = vmatmul.mubr.bf16.gmra.mxu0 %v675
      %v924 = vpop.f32.mrf.mxu0
      %v925 = vadd.f32 0.0, %v924
      %v926 = vpop.f32.mrf.mxu0
      %v927 = vpop.f32.mrf.mxu0
      %v928 = vadd.f32 0.0, %v927
      %v929 = vpop.f32.mrf.mxu0
      %930 = vmatprep.mubr.bf16.mxu0 0
      %931 = vmatmul.mubr.bf16.gmra.mxu0 %v678
      %v932 = vpop.f32.mrf.mxu0
      %v933 = vadd.f32 0.0, %v932
      %v934 = vpop.f32.mrf.mxu0
      %v935 = vpop.f32.mrf.mxu0
      %v936 = vadd.f32 0.0, %v935
      %v937 = vpop.f32.mrf.mxu0
      %938 = vmatprep.mubr.bf16.mxu0 0
      %939 = vmatmul.mubr.bf16.gmra.mxu0 %v681
      %v940 = vpop.f32.mrf.mxu0
      %v941 = vadd.f32 0.0, %v940
      %v942 = vpop.f32.mrf.mxu0
      %v943 = vpop.f32.mrf.mxu0
      %v944 = vadd.f32 0.0, %v943
      %v945 = vpop.f32.mrf.mxu0
      %946 = vmatprep.mubr.bf16.mxu0 0
      %947 = vmatmul.mubr.bf16.gmra.mxu0 %v684
      %v948 = vpop.f32.mrf.mxu0
      %v949 = vadd.f32 0.0, %v948
      %v950 = vpop.f32.mrf.mxu0
      %v951 = vpop.f32.mrf.mxu0
      %v952 = vadd.f32 0.0, %v951
      %v953 = vpop.f32.mrf.mxu0
      %954 = vmatprep.mubr.bf16.mxu0 0
      %955 = vmatmul.mubr.bf16.gmra.mxu0 %v687
      %v956 = vpop.f32.mrf.mxu0
      %v957 = vadd.f32 0.0, %v956
      %v958 = vpop.f32.mrf.mxu0
      %v959 = vpop.f32.mrf.mxu0
      %v960 = vadd.f32 0.0, %v959
      %v961 = vpop.f32.mrf.mxu0
      %962 = vmatprep.mubr.bf16.mxu0 0
      %963 = vmatmul.mubr.bf16.gmra.mxu0 %v690
      %v964 = vpop.f32.mrf.mxu0
      %v965 = vadd.f32 0.0, %v964
      %v966 = vpop.f32.mrf.mxu0
      %v967 = vpop.f32.mrf.mxu0
      %v968 = vadd.f32 0.0, %v967
      %v969 = vpop.f32.mrf.mxu0
      %970 = vmatprep.mubr.bf16.mxu0 0
      %971 = vmatmul.mubr.bf16.gmra.mxu0 %v693
      %v972 = vpop.f32.mrf.mxu0
      %v973 = vadd.f32 0.0, %v972
      %v974 = vpop.f32.mrf.mxu0
      %v975 = vpop.f32.mrf.mxu0
      %v976 = vadd.f32 0.0, %v975
      %v977 = vpop.f32.mrf.mxu0
      %978 = vmatprep.mubr.bf16.mxu0 0
      %979 = vmatmul.mubr.bf16.gmra.mxu0 %v696
      %v980 = vpop.f32.mrf.mxu0
      %v981 = vadd.f32 0.0, %v980
      %v982 = vpop.f32.mrf.mxu0
      %v983 = vpop.f32.mrf.mxu0
      %v984 = vadd.f32 0.0, %v983
      %v985 = vpop.f32.mrf.mxu0
      %986 = vdwg.mxu0
      %v987 = vadd.f32 %v289, %v733
      %v988 = vadd.f32 %v290, %v736
      %v989 = vadd.f32 %v291, %v741
      %v990 = vadd.f32 %v292, %v744
      %v991 = vadd.f32 %v293, %v749
      %v992 = vadd.f32 %v294, %v752
      %v993 = vadd.f32 %v295, %v757
      %v994 = vadd.f32 %v296, %v760
      %v995 = vadd.f32 %v297, %v765
      %v996 = vadd.f32 %v298, %v768
      %v997 = vadd.f32 %v299, %v773
      %v998 = vadd.f32 %v300, %v776
      %v999 = vadd.f32 %v301, %v781
      %v1000 = vadd.f32 %v302, %v784
      %v1001 = vadd.f32 %v303, %v789
      %v1002 = vadd.f32 %v304, %v792
      %v1003 = vadd.f32 %v305, %v797
      %v1004 = vadd.f32 %v306, %v800
      %v1005 = vadd.f32 %v307, %v805
      %v1006 = vadd.f32 %v308, %v808
      %v1007 = vadd.f32 %v309, %v813
      %v1008 = vadd.f32 %v310, %v816
      %v1009 = vadd.f32 %v311, %v821
      %v1010 = vadd.f32 %v312, %v824
      %v1011 = vadd.f32 %v313, %v829
      %v1012 = vadd.f32 %v314, %v832
      %v1013 = vadd.f32 %v315, %v837
      %v1014 = vadd.f32 %v316, %v840
      %v1015 = vadd.f32 %v317, %v845
      %v1016 = vadd.f32 %v318, %v848
      %v1017 = vadd.f32 %v319, %v853
      %v1018 = vadd.f32 %v320, %v856
      %v1019 = vadd.f32 %v321, %v861
      %v1020 = vadd.f32 %v322, %v864
      %v1021 = vadd.f32 %v323, %v869
      %v1022 = vadd.f32 %v324, %v872
      %v1023 = vadd.f32 %v325, %v877
      %v1024 = vadd.f32 %v326, %v880
      %v1025 = vadd.f32 %v327, %v885
      %v1026 = vadd.f32 %v328, %v888
      %v1027 = vadd.f32 %v329, %v893
      %v1028 = vadd.f32 %v330, %v896
      %v1029 = vadd.f32 %v331, %v901
      %v1030 = vadd.f32 %v332, %v904
      %v1031 = vadd.f32 %v333, %v909
      %v1032 = vadd.f32 %v334, %v912
      %v1033 = vadd.f32 %v335, %v917
      %v1034 = vadd.f32 %v336, %v920
      %v1035 = vadd.f32 %v337, %v925
      %v1036 = vadd.f32 %v338, %v928
      %v1037 = vadd.f32 %v339, %v933
      %v1038 = vadd.f32 %v340, %v936
      %v1039 = vadd.f32 %v341, %v941
      %v1040 = vadd.f32 %v342, %v944
      %v1041 = vadd.f32 %v343, %v949
      %v1042 = vadd.f32 %v344, %v952
      %v1043 = vadd.f32 %v345, %v957
      %v1044 = vadd.f32 %v346, %v960
      %v1045 = vadd.f32 %v347, %v965
      %v1046 = vadd.f32 %v348, %v968
      %v1047 = vadd.f32 %v349, %v973
      %v1048 = vadd.f32 %v350, %v976
      %v1049 = vadd.f32 %v351, %v981
      %v1050 = vadd.f32 %v352, %v984
      %vm1051 = vcmask 64512
      %1052 = vst.msk [vmem:[#allocation2] sm:$0xff] %vm1051, %v987
      %1053 = vst.msk [vmem:[#allocation2 + $0x8] sm:$0xff] %vm1051, %v988
      %1054 = vst.msk [vmem:[#allocation2 + $0x10] sm:$0xff] %vm1051, %v989
      %1055 = vst.msk [vmem:[#allocation2 + $0x18] sm:$0xff] %vm1051, %v990
      %1056 = vst.msk [vmem:[#allocation2 + $0x20] sm:$0xff] %vm1051, %v991
      %1057 = vst.msk [vmem:[#allocation2 + $0x28] sm:$0xff] %vm1051, %v992
      %1058 = vst.msk [vmem:[#allocation2 + $0x30] sm:$0xff] %vm1051, %v993
      %1059 = vst.msk [vmem:[#allocation2 + $0x38] sm:$0xff] %vm1051, %v994
      %1060 = vst.msk [vmem:[#allocation2 + $0x40] sm:$0xff] %vm1051, %v995
      %1061 = vst.msk [vmem:[#allocation2 + $0x48] sm:$0xff] %vm1051, %v996
      %1062 = vst.msk [vmem:[#allocation2 + $0x50] sm:$0xff] %vm1051, %v997
      %1063 = vst.msk [vmem:[#allocation2 + $0x58] sm:$0xff] %vm1051, %v998
      %1064 = vst.msk [vmem:[#allocation2 + $0x60] sm:$0xff] %vm1051, %v999
      %1065 = vst.msk [vmem:[#allocation2 + $0x68] sm:$0xff] %vm1051, %v1000
      %1066 = vst.msk [vmem:[#allocation2 + $0x70] sm:$0xff] %vm1051, %v1001
      %1067 = vst.msk [vmem:[#allocation2 + $0x78] sm:$0xff] %vm1051, %v1002
      %1068 = vst.msk [vmem:[#allocation2 + $0x80] sm:$0xff] %vm1051, %v1003
      %1069 = vst.msk [vmem:[#allocation2 + $0x88] sm:$0xff] %vm1051, %v1004
      %1070 = vst.msk [vmem:[#allocation2 + $0x90] sm:$0xff] %vm1051, %v1005
      %1071 = vst.msk [vmem:[#allocation2 + $0x98] sm:$0xff] %vm1051, %v1006
      %1072 = vst.msk [vmem:[#allocation2 + $0xa0] sm:$0xff] %vm1051, %v1007
      %1073 = vst.msk [vmem:[#allocation2 + $0xa8] sm:$0xff] %vm1051, %v1008
      %1074 = vst.msk [vmem:[#allocation2 + $0xb0] sm:$0xff] %vm1051, %v1009
      %1075 = vst.msk [vmem:[#allocation2 + $0xb8] sm:$0xff] %vm1051, %v1010
      %1076 = vst.msk [vmem:[#allocation2 + $0xc0] sm:$0xff] %vm1051, %v1011
      %1077 = vst.msk [vmem:[#allocation2 + $0xc8] sm:$0xff] %vm1051, %v1012
      %1078 = vst.msk [vmem:[#allocation2 + $0xd0] sm:$0xff] %vm1051, %v1013
      %1079 = vst.msk [vmem:[#allocation2 + $0xd8] sm:$0xff] %vm1051, %v1014
      %1080 = vst.msk [vmem:[#allocation2 + $0xe0] sm:$0xff] %vm1051, %v1015
      %1081 = vst.msk [vmem:[#allocation2 + $0xe8] sm:$0xff] %vm1051, %v1016
      %1082 = vst.msk [vmem:[#allocation2 + $0xf0] sm:$0xff] %vm1051, %v1017
      %1083 = vst.msk [vmem:[#allocation2 + $0xf8] sm:$0xff] %vm1051, %v1018
      %1084 = vst.msk [vmem:[#allocation2 + $0x100] sm:$0xff] %vm1051, %v1019
      %1085 = vst.msk [vmem:[#allocation2 + $0x108] sm:$0xff] %vm1051, %v1020
      %1086 = vst.msk [vmem:[#allocation2 + $0x110] sm:$0xff] %vm1051, %v1021
      %1087 = vst.msk [vmem:[#allocation2 + $0x118] sm:$0xff] %vm1051, %v1022
      %1088 = vst.msk [vmem:[#allocation2 + $0x120] sm:$0xff] %vm1051, %v1023
      %1089 = vst.msk [vmem:[#allocation2 + $0x128] sm:$0xff] %vm1051, %v1024
      %1090 = vst.msk [vmem:[#allocation2 + $0x130] sm:$0xff] %vm1051, %v1025
      %1091 = vst.msk [vmem:[#allocation2 + $0x138] sm:$0xff] %vm1051, %v1026
      %1092 = vst.msk [vmem:[#allocation2 + $0x140] sm:$0xff] %vm1051, %v1027
      %1093 = vst.msk [vmem:[#allocation2 + $0x148] sm:$0xff] %vm1051, %v1028
      %1094 = vst.msk [vmem:[#allocation2 + $0x150] sm:$0xff] %vm1051, %v1029
      %1095 = vst.msk [vmem:[#allocation2 + $0x158] sm:$0xff] %vm1051, %v1030
      %1096 = vst.msk [vmem:[#allocation2 + $0x160] sm:$0xff] %vm1051, %v1031
      %1097 = vst.msk [vmem:[#allocation2 + $0x168] sm:$0xff] %vm1051, %v1032
      %1098 = vst.msk [vmem:[#allocation2 + $0x170] sm:$0xff] %vm1051, %v1033
      %1099 = vst.msk [vmem:[#allocation2 + $0x178] sm:$0xff] %vm1051, %v1034
      %1100 = vst.msk [vmem:[#allocation2 + $0x180] sm:$0xff] %vm1051, %v1035
      %1101 = vst.msk [vmem:[#allocation2 + $0x188] sm:$0xff] %vm1051, %v1036
      %1102 = vst.msk [vmem:[#allocation2 + $0x190] sm:$0xff] %vm1051, %v1037
      %1103 = vst.msk [vmem:[#allocation2 + $0x198] sm:$0xff] %vm1051, %v1038
      %1104 = vst.msk [vmem:[#allocation2 + $0x1a0] sm:$0xff] %vm1051, %v1039
      %1105 = vst.msk [vmem:[#allocation2 + $0x1a8] sm:$0xff] %vm1051, %v1040
      %1106 = vst.msk [vmem:[#allocation2 + $0x1b0] sm:$0xff] %vm1051, %v1041
      %1107 = vst.msk [vmem:[#allocation2 + $0x1b8] sm:$0xff] %vm1051, %v1042
      %1108 = vst.msk [vmem:[#allocation2 + $0x1c0] sm:$0xff] %vm1051, %v1043
      %1109 = vst.msk [vmem:[#allocation2 + $0x1c8] sm:$0xff] %vm1051, %v1044
      %1110 = vst.msk [vmem:[#allocation2 + $0x1d0] sm:$0xff] %vm1051, %v1045
      %1111 = vst.msk [vmem:[#allocation2 + $0x1d8] sm:$0xff] %vm1051, %v1046
      %1112 = vst.msk [vmem:[#allocation2 + $0x1e0] sm:$0xff] %vm1051, %v1047
      %1113 = vst.msk [vmem:[#allocation2 + $0x1e8] sm:$0xff] %vm1051, %v1048
      %1114 = vst.msk [vmem:[#allocation2 + $0x1f0] sm:$0xff] %vm1051, %v1049
      %1115 = vst.msk [vmem:[#allocation2 + $0x1f8] sm:$0xff] %vm1051, %v1050
      // Predicated region
      $region37: #{d_net64_forward.8} parent=31 // pred_check
        %p1116 = pneg %p220
      $region38: #{d_net64_forward.8} parent=31 // pred_check_branch
        %1118 = sbr.rel (%p1116) target = $region40
      $region39: #{d_net64_forward.8} parent=31 // pred_region
        %v1119 = vld [vmem:[#allocation2] sm:$0xff]
        %v1120 = vld [vmem:[#allocation2 + $0x8] sm:$0xff]
        %v1121 = vld [vmem:[#allocation2 + $0x10] sm:$0xff]
        %v1122 = vld [vmem:[#allocation2 + $0x18] sm:$0xff]
        %v1123 = vld [vmem:[#allocation2 + $0x20] sm:$0xff]
        %v1124 = vld [vmem:[#allocation2 + $0x28] sm:$0xff]
        %v1125 = vld [vmem:[#allocation2 + $0x30] sm:$0xff]
        %v1126 = vld [vmem:[#allocation2 + $0x38] sm:$0xff]
        %v1127 = vld [vmem:[#allocation2 + $0x40] sm:$0xff]
        %v1128 = vld [vmem:[#allocation2 + $0x48] sm:$0xff]
        %v1129 = vld [vmem:[#allocation2 + $0x50] sm:$0xff]
        %v1130 = vld [vmem:[#allocation2 + $0x58] sm:$0xff]
        %v1131 = vld [vmem:[#allocation2 + $0x60] sm:$0xff]
        %v1132 = vld [vmem:[#allocation2 + $0x68] sm:$0xff]
        %v1133 = vld [vmem:[#allocation2 + $0x70] sm:$0xff]
        %v1134 = vld [vmem:[#allocation2 + $0x78] sm:$0xff]
        %v1135 = vld [vmem:[#allocation2 + $0x80] sm:$0xff]
        %v1136 = vld [vmem:[#allocation2 + $0x88] sm:$0xff]
        %v1137 = vld [vmem:[#allocation2 + $0x90] sm:$0xff]
        %v1138 = vld [vmem:[#allocation2 + $0x98] sm:$0xff]
        %v1139 = vld [vmem:[#allocation2 + $0xa0] sm:$0xff]
        %v1140 = vld [vmem:[#allocation2 + $0xa8] sm:$0xff]
        %v1141 = vld [vmem:[#allocation2 + $0xb0] sm:$0xff]
        %v1142 = vld [vmem:[#allocation2 + $0xb8] sm:$0xff]
        %v1143 = vld [vmem:[#allocation2 + $0xc0] sm:$0xff]
        %v1144 = vld [vmem:[#allocation2 + $0xc8] sm:$0xff]
        %v1145 = vld [vmem:[#allocation2 + $0xd0] sm:$0xff]
        %v1146 = vld [vmem:[#allocation2 + $0xd8] sm:$0xff]
        %v1147 = vld [vmem:[#allocation2 + $0xe0] sm:$0xff]
        %v1148 = vld [vmem:[#allocation2 + $0xe8] sm:$0xff]
        %v1149 = vld [vmem:[#allocation2 + $0xf0] sm:$0xff]
        %v1150 = vld [vmem:[#allocation2 + $0xf8] sm:$0xff]
        %v1151 = vld [vmem:[#allocation2 + $0x100] sm:$0xff]
        %v1152 = vld [vmem:[#allocation2 + $0x108] sm:$0xff]
        %v1153 = vld [vmem:[#allocation2 + $0x110] sm:$0xff]
        %v1154 = vld [vmem:[#allocation2 + $0x118] sm:$0xff]
        %v1155 = vld [vmem:[#allocation2 + $0x120] sm:$0xff]
        %v1156 = vld [vmem:[#allocation2 + $0x128] sm:$0xff]
        %v1157 = vld [vmem:[#allocation2 + $0x130] sm:$0xff]
        %v1158 = vld [vmem:[#allocation2 + $0x138] sm:$0xff]
        %v1159 = vld [vmem:[#allocation2 + $0x140] sm:$0xff]
        %v1160 = vld [vmem:[#allocation2 + $0x148] sm:$0xff]
        %v1161 = vld [vmem:[#allocation2 + $0x150] sm:$0xff]
        %v1162 = vld [vmem:[#allocation2 + $0x158] sm:$0xff]
        %v1163 = vld [vmem:[#allocation2 + $0x160] sm:$0xff]
        %v1164 = vld [vmem:[#allocation2 + $0x168] sm:$0xff]
        %v1165 = vld [vmem:[#allocation2 + $0x170] sm:$0xff]
        %v1166 = vld [vmem:[#allocation2 + $0x178] sm:$0xff]
        %v1167 = vld [vmem:[#allocation2 + $0x180] sm:$0xff]
        %v1168 = vld [vmem:[#allocation2 + $0x188] sm:$0xff]
        %v1169 = vld [vmem:[#allocation2 + $0x190] sm:$0xff]
        %v1170 = vld [vmem:[#allocation2 + $0x198] sm:$0xff]
        %v1171 = vld [vmem:[#allocation2 + $0x1a0] sm:$0xff]
        %v1172 = vld [vmem:[#allocation2 + $0x1a8] sm:$0xff]
        %v1173 = vld [vmem:[#allocation2 + $0x1b0] sm:$0xff]
        %v1174 = vld [vmem:[#allocation2 + $0x1b8] sm:$0xff]
        %v1175 = vld [vmem:[#allocation2 + $0x1c0] sm:$0xff]
        %v1176 = vld [vmem:[#allocation2 + $0x1c8] sm:$0xff]
        %v1177 = vld [vmem:[#allocation2 + $0x1d0] sm:$0xff]
        %v1178 = vld [vmem:[#allocation2 + $0x1d8] sm:$0xff]
        %v1179 = vld [vmem:[#allocation2 + $0x1e0] sm:$0xff]
        %v1180 = vld [vmem:[#allocation2 + $0x1e8] sm:$0xff]
        %v1181 = vld [vmem:[#allocation2 + $0x1f0] sm:$0xff]
        %v1182 = vld [vmem:[#allocation2 + $0x1f8] sm:$0xff]
        %v1183 = vld [vmem:[%s2] sm:$0x1]
        %v1185 = vlaneseq
        %v1186 = vshrl.u32 %v1185, 7
        %v1187 = vsub.s32 0, %v1186
        %v1188 = vrot.slane %v1183, %v1187
        %v1190 = vadd.f32 %v1119, %v1188
        %v1191 = vadd.f32 %v1120, %v1188
        %v1192 = vadd.f32 %v1121, %v1188
        %v1193 = vadd.f32 %v1122, %v1188
        %v1194 = vadd.f32 %v1123, %v1188
        %v1195 = vadd.f32 %v1124, %v1188
        %v1196 = vadd.f32 %v1125, %v1188
        %v1197 = vadd.f32 %v1126, %v1188
        %v1198 = vadd.f32 %v1127, %v1188
        %v1199 = vadd.f32 %v1128, %v1188
        %v1200 = vadd.f32 %v1129, %v1188
        %v1201 = vadd.f32 %v1130, %v1188
        %v1202 = vadd.f32 %v1131, %v1188
        %v1203 = vadd.f32 %v1132, %v1188
        %v1204 = vadd.f32 %v1133, %v1188
        %v1205 = vadd.f32 %v1134, %v1188
        %v1206 = vadd.f32 %v1135, %v1188
        %v1207 = vadd.f32 %v1136, %v1188
        %v1208 = vadd.f32 %v1137, %v1188
        %v1209 = vadd.f32 %v1138, %v1188
        %v1210 = vadd.f32 %v1139, %v1188
        %v1211 = vadd.f32 %v1140, %v1188
        %v1212 = vadd.f32 %v1141, %v1188
        %v1213 = vadd.f32 %v1142, %v1188
        %v1214 = vadd.f32 %v1143, %v1188
        %v1215 = vadd.f32 %v1144, %v1188
        %v1216 = vadd.f32 %v1145, %v1188
        %v1217 = vadd.f32 %v1146, %v1188
        %v1218 = vadd.f32 %v1147, %v1188
        %v1219 = vadd.f32 %v1148, %v1188
        %v1220 = vadd.f32 %v1149, %v1188
        %v1221 = vadd.f32 %v1150, %v1188
        %v1222 = vadd.f32 %v1151, %v1188
        %v1223 = vadd.f32 %v1152, %v1188
        %v1224 = vadd.f32 %v1153, %v1188
        %v1225 = vadd.f32 %v1154, %v1188
        %v1226 = vadd.f32 %v1155, %v1188
        %v1227 = vadd.f32 %v1156, %v1188
        %v1228 = vadd.f32 %v1157, %v1188
        %v1229 = vadd.f32 %v1158, %v1188
        %v1230 = vadd.f32 %v1159, %v1188
        %v1231 = vadd.f32 %v1160, %v1188
        %v1232 = vadd.f32 %v1161, %v1188
        %v1233 = vadd.f32 %v1162, %v1188
        %v1234 = vadd.f32 %v1163, %v1188
        %v1235 = vadd.f32 %v1164, %v1188
        %v1236 = vadd.f32 %v1165, %v1188
        %v1237 = vadd.f32 %v1166, %v1188
        %v1238 = vadd.f32 %v1167, %v1188
        %v1239 = vadd.f32 %v1168, %v1188
        %v1240 = vadd.f32 %v1169, %v1188
        %v1241 = vadd.f32 %v1170, %v1188
        %v1242 = vadd.f32 %v1171, %v1188
        %v1243 = vadd.f32 %v1172, %v1188
        %v1244 = vadd.f32 %v1173, %v1188
        %v1245 = vadd.f32 %v1174, %v1188
        %v1246 = vadd.f32 %v1175, %v1188
        %v1247 = vadd.f32 %v1176, %v1188
        %v1248 = vadd.f32 %v1177, %v1188
        %v1249 = vadd.f32 %v1178, %v1188
        %v1250 = vadd.f32 %v1179, %v1188
        %v1251 = vadd.f32 %v1180, %v1188
        %v1252 = vadd.f32 %v1181, %v1188
        %v1253 = vadd.f32 %v1182, %v1188
        %vm1254 = vcmp.gt.f32.partialorder %v1190, 0.0
        %vm1255 = vcmp.gt.f32.partialorder %v1191, 0.0
        %vm1256 = vcmp.gt.f32.partialorder %v1192, 0.0
        %vm1257 = vcmp.gt.f32.partialorder %v1193, 0.0
        %vm1258 = vcmp.gt.f32.partialorder %v1194, 0.0
        %vm1259 = vcmp.gt.f32.partialorder %v1195, 0.0
        %vm1260 = vcmp.gt.f32.partialorder %v1196, 0.0
        %vm1261 = vcmp.gt.f32.partialorder %v1197, 0.0
        %vm1262 = vcmp.gt.f32.partialorder %v1198, 0.0
        %vm1263 = vcmp.gt.f32.partialorder %v1199, 0.0
        %vm1264 = vcmp.gt.f32.partialorder %v1200, 0.0
        %vm1265 = vcmp.gt.f32.partialorder %v1201, 0.0
        %vm1266 = vcmp.gt.f32.partialorder %v1202, 0.0
        %vm1267 = vcmp.gt.f32.partialorder %v1203, 0.0
        %vm1268 = vcmp.gt.f32.partialorder %v1204, 0.0
        %vm1269 = vcmp.gt.f32.partialorder %v1205, 0.0
        %vm1270 = vcmp.gt.f32.partialorder %v1206, 0.0
        %vm1271 = vcmp.gt.f32.partialorder %v1207, 0.0
        %vm1272 = vcmp.gt.f32.partialorder %v1208, 0.0
        %vm1273 = vcmp.gt.f32.partialorder %v1209, 0.0
        %vm1274 = vcmp.gt.f32.partialorder %v1210, 0.0
        %vm1275 = vcmp.gt.f32.partialorder %v1211, 0.0
        %vm1276 = vcmp.gt.f32.partialorder %v1212, 0.0
        %vm1277 = vcmp.gt.f32.partialorder %v1213, 0.0
        %vm1278 = vcmp.gt.f32.partialorder %v1214, 0.0
        %vm1279 = vcmp.gt.f32.partialorder %v1215, 0.0
        %vm1280 = vcmp.gt.f32.partialorder %v1216, 0.0
        %vm1281 = vcmp.gt.f32.partialorder %v1217, 0.0
        %vm1282 = vcmp.gt.f32.partialorder %v1218, 0.0
        %vm1283 = vcmp.gt.f32.partialorder %v1219, 0.0
        %vm1284 = vcmp.gt.f32.partialorder %v1220, 0.0
        %vm1285 = vcmp.gt.f32.partialorder %v1221, 0.0
        %vm1286 = vcmp.gt.f32.partialorder %v1222, 0.0
        %vm1287 = vcmp.gt.f32.partialorder %v1223, 0.0
        %vm1288 = vcmp.gt.f32.partialorder %v1224, 0.0
        %vm1289 = vcmp.gt.f32.partialorder %v1225, 0.0
        %vm1290 = vcmp.gt.f32.partialorder %v1226, 0.0
        %vm1291 = vcmp.gt.f32.partialorder %v1227, 0.0
        %vm1292 = vcmp.gt.f32.partialorder %v1228, 0.0
        %vm1293 = vcmp.gt.f32.partialorder %v1229, 0.0
        %vm1294 = vcmp.gt.f32.partialorder %v1230, 0.0
        %vm1295 = vcmp.gt.f32.partialorder %v1231, 0.0
        %vm1296 = vcmp.gt.f32.partialorder %v1232, 0.0
        %vm1297 = vcmp.gt.f32.partialorder %v1233, 0.0
        %vm1298 = vcmp.gt.f32.partialorder %v1234, 0.0
        %vm1299 = vcmp.gt.f32.partialorder %v1235, 0.0
        %vm1300 = vcmp.gt.f32.partialorder %v1236, 0.0
        %vm1301 = vcmp.gt.f32.partialorder %v1237, 0.0
        %vm1302 = vcmp.gt.f32.partialorder %v1238, 0.0
        %vm1303 = vcmp.gt.f32.partialorder %v1239, 0.0
        %vm1304 = vcmp.gt.f32.partialorder %v1240, 0.0
        %vm1305 = vcmp.gt.f32.partialorder %v1241, 0.0
        %vm1306 = vcmp.gt.f32.partialorder %v1242, 0.0
        %vm1307 = vcmp.gt.f32.partialorder %v1243, 0.0
        %vm1308 = vcmp.gt.f32.partialorder %v1244, 0.0
        %vm1309 = vcmp.gt.f32.partialorder %v1245, 0.0
        %vm1310 = vcmp.gt.f32.partialorder %v1246, 0.0
        %vm1311 = vcmp.gt.f32.partialorder %v1247, 0.0
        %vm1312 = vcmp.gt.f32.partialorder %v1248, 0.0
        %vm1313 = vcmp.gt.f32.partialorder %v1249, 0.0
        %vm1314 = vcmp.gt.f32.partialorder %v1250, 0.0
        %vm1315 = vcmp.gt.f32.partialorder %v1251, 0.0
        %vm1316 = vcmp.gt.f32.partialorder %v1252, 0.0
        %vm1317 = vcmp.gt.f32.partialorder %v1253, 0.0
        %v1318 = vmul.f32 %v1190, 0.2
        %v1319 = vmul.f32 %v1191, 0.2
        %v1320 = vmul.f32 %v1192, 0.2
        %v1321 = vmul.f32 %v1193, 0.2
        %v1322 = vmul.f32 %v1194, 0.2
        %v1323 = vmul.f32 %v1195, 0.2
        %v1324 = vmul.f32 %v1196, 0.2
        %v1325 = vmul.f32 %v1197, 0.2
        %v1326 = vmul.f32 %v1198, 0.2
        %v1327 = vmul.f32 %v1199, 0.2
        %v1328 = vmul.f32 %v1200, 0.2
        %v1329 = vmul.f32 %v1201, 0.2
        %v1330 = vmul.f32 %v1202, 0.2
        %v1331 = vmul.f32 %v1203, 0.2
        %v1332 = vmul.f32 %v1204, 0.2
        %v1333 = vmul.f32 %v1205, 0.2
        %v1334 = vmul.f32 %v1206, 0.2
        %v1335 = vmul.f32 %v1207, 0.2
        %v1336 = vmul.f32 %v1208, 0.2
        %v1337 = vmul.f32 %v1209, 0.2
        %v1338 = vmul.f32 %v1210, 0.2
        %v1339 = vmul.f32 %v1211, 0.2
        %v1340 = vmul.f32 %v1212, 0.2
        %v1341 = vmul.f32 %v1213, 0.2
        %v1342 = vmul.f32 %v1214, 0.2
        %v1343 = vmul.f32 %v1215, 0.2
        %v1344 = vmul.f32 %v1216, 0.2
        %v1345 = vmul.f32 %v1217, 0.2
        %v1346 = vmul.f32 %v1218, 0.2
        %v1347 = vmul.f32 %v1219, 0.2
        %v1348 = vmul.f32 %v1220, 0.2
        %v1349 = vmul.f32 %v1221, 0.2
        %v1350 = vmul.f32 %v1222, 0.2
        %v1351 = vmul.f32 %v1223, 0.2
        %v1352 = vmul.f32 %v1224, 0.2
        %v1353 = vmul.f32 %v1225, 0.2
        %v1354 = vmul.f32 %v1226, 0.2
        %v1355 = vmul.f32 %v1227, 0.2
        %v1356 = vmul.f32 %v1228, 0.2
        %v1357 = vmul.f32 %v1229, 0.2
        %v1358 = vmul.f32 %v1230, 0.2
        %v1359 = vmul.f32 %v1231, 0.2
        %v1360 = vmul.f32 %v1232, 0.2
        %v1361 = vmul.f32 %v1233, 0.2
        %v1362 = vmul.f32 %v1234, 0.2
        %v1363 = vmul.f32 %v1235, 0.2
        %v1364 = vmul.f32 %v1236, 0.2
        %v1365 = vmul.f32 %v1237, 0.2
        %v1366 = vmul.f32 %v1238, 0.2
        %v1367 = vmul.f32 %v1239, 0.2
        %v1368 = vmul.f32 %v1240, 0.2
        %v1369 = vmul.f32 %v1241, 0.2
        %v1370 = vmul.f32 %v1242, 0.2
        %v1371 = vmul.f32 %v1243, 0.2
        %v1372 = vmul.f32 %v1244, 0.2
        %v1373 = vmul.f32 %v1245, 0.2
        %v1374 = vmul.f32 %v1246, 0.2
        %v1375 = vmul.f32 %v1247, 0.2
        %v1376 = vmul.f32 %v1248, 0.2
        %v1377 = vmul.f32 %v1249, 0.2
        %v1378 = vmul.f32 %v1250, 0.2
        %v1379 = vmul.f32 %v1251, 0.2
        %v1380 = vmul.f32 %v1252, 0.2
        %v1381 = vmul.f32 %v1253, 0.2
        %v1382 = vsel %vm1254, %v1190, %v1318
        %v1383 = vsel %vm1255, %v1191, %v1319
        %v1384 = vsel %vm1256, %v1192, %v1320
        %v1385 = vsel %vm1257, %v1193, %v1321
        %v1386 = vsel %vm1258, %v1194, %v1322
        %v1387 = vsel %vm1259, %v1195, %v1323
        %v1388 = vsel %vm1260, %v1196, %v1324
        %v1389 = vsel %vm1261, %v1197, %v1325
        %v1390 = vsel %vm1262, %v1198, %v1326
        %v1391 = vsel %vm1263, %v1199, %v1327
        %v1392 = vsel %vm1264, %v1200, %v1328
        %v1393 = vsel %vm1265, %v1201, %v1329
        %v1394 = vsel %vm1266, %v1202, %v1330
        %v1395 = vsel %vm1267, %v1203, %v1331
        %v1396 = vsel %vm1268, %v1204, %v1332
        %v1397 = vsel %vm1269, %v1205, %v1333
        %v1398 = vsel %vm1270, %v1206, %v1334
        %v1399 = vsel %vm1271, %v1207, %v1335
        %v1400 = vsel %vm1272, %v1208, %v1336
        %v1401 = vsel %vm1273, %v1209, %v1337
        %v1402 = vsel %vm1274, %v1210, %v1338
        %v1403 = vsel %vm1275, %v1211, %v1339
        %v1404 = vsel %vm1276, %v1212, %v1340
        %v1405 = vsel %vm1277, %v1213, %v1341
        %v1406 = vsel %vm1278, %v1214, %v1342
        %v1407 = vsel %vm1279, %v1215, %v1343
        %v1408 = vsel %vm1280, %v1216, %v1344
        %v1409 = vsel %vm1281, %v1217, %v1345
        %v1410 = vsel %vm1282, %v1218, %v1346
        %v1411 = vsel %vm1283, %v1219, %v1347
        %v1412 = vsel %vm1284, %v1220, %v1348
        %v1413 = vsel %vm1285, %v1221, %v1349
        %v1414 = vsel %vm1286, %v1222, %v1350
        %v1415 = vsel %vm1287, %v1223, %v1351
        %v1416 = vsel %vm1288, %v1224, %v1352
        %v1417 = vsel %vm1289, %v1225, %v1353
        %v1418 = vsel %vm1290, %v1226, %v1354
        %v1419 = vsel %vm1291, %v1227, %v1355
        %v1420 = vsel %vm1292, %v1228, %v1356
        %v1421 = vsel %vm1293, %v1229, %v1357
        %v1422 = vsel %vm1294, %v1230, %v1358
        %v1423 = vsel %vm1295, %v1231, %v1359
        %v1424 = vsel %vm1296, %v1232, %v1360
        %v1425 = vsel %vm1297, %v1233, %v1361
        %v1426 = vsel %vm1298, %v1234, %v1362
        %v1427 = vsel %vm1299, %v1235, %v1363
        %v1428 = vsel %vm1300, %v1236, %v1364
        %v1429 = vsel %vm1301, %v1237, %v1365
        %v1430 = vsel %vm1302, %v1238, %v1366
        %v1431 = vsel %vm1303, %v1239, %v1367
        %v1432 = vsel %vm1304, %v1240, %v1368
        %v1433 = vsel %vm1305, %v1241, %v1369
        %v1434 = vsel %vm1306, %v1242, %v1370
        %v1435 = vsel %vm1307, %v1243, %v1371
        %v1436 = vsel %vm1308, %v1244, %v1372
        %v1437 = vsel %vm1309, %v1245, %v1373
        %v1438 = vsel %vm1310, %v1246, %v1374
        %v1439 = vsel %vm1311, %v1247, %v1375
        %v1440 = vsel %vm1312, %v1248, %v1376
        %v1441 = vsel %vm1313, %v1249, %v1377
        %v1442 = vsel %vm1314, %v1250, %v1378
        %v1443 = vsel %vm1315, %v1251, %v1379
        %v1444 = vsel %vm1316, %v1252, %v1380
        %v1445 = vsel %vm1317, %v1253, %v1381
        %v1446 = vpack.c.bf16 %v1383, %v1382
        %v1447 = vpack.c.bf16 %v1385, %v1384
        %v1448 = vpack.c.bf16 %v1387, %v1386
        %v1449 = vpack.c.bf16 %v1389, %v1388
        %v1450 = vpack.c.bf16 %v1391, %v1390
        %v1451 = vpack.c.bf16 %v1393, %v1392
        %v1452 = vpack.c.bf16 %v1395, %v1394
        %v1453 = vpack.c.bf16 %v1397, %v1396
        %v1454 = vpack.c.bf16 %v1399, %v1398
        %v1455 = vpack.c.bf16 %v1401, %v1400
        %v1456 = vpack.c.bf16 %v1403, %v1402
        %v1457 = vpack.c.bf16 %v1405, %v1404
        %v1458 = vpack.c.bf16 %v1407, %v1406
        %v1459 = vpack.c.bf16 %v1409, %v1408
        %v1460 = vpack.c.bf16 %v1411, %v1410
        %v1461 = vpack.c.bf16 %v1413, %v1412
        %v1462 = vpack.c.bf16 %v1415, %v1414
        %v1463 = vpack.c.bf16 %v1417, %v1416
        %v1464 = vpack.c.bf16 %v1419, %v1418
        %v1465 = vpack.c.bf16 %v1421, %v1420
        %v1466 = vpack.c.bf16 %v1423, %v1422
        %v1467 = vpack.c.bf16 %v1425, %v1424
        %v1468 = vpack.c.bf16 %v1427, %v1426
        %v1469 = vpack.c.bf16 %v1429, %v1428
        %v1470 = vpack.c.bf16 %v1431, %v1430
        %v1471 = vpack.c.bf16 %v1433, %v1432
        %v1472 = vpack.c.bf16 %v1435, %v1434
        %v1473 = vpack.c.bf16 %v1437, %v1436
        %v1474 = vpack.c.bf16 %v1439, %v1438
        %v1475 = vpack.c.bf16 %v1441, %v1440
        %v1476 = vpack.c.bf16 %v1443, %v1442
        %v1477 = vpack.c.bf16 %v1445, %v1444
        %v1510 = vunpack.c.l.b16 %v1446
        %v1511 = vunpack.c.h.b16 %v1446
        %v1512 = vunpack.c.l.b16 %v1447
        %v1513 = vunpack.c.h.b16 %v1447
        %v1514 = vunpack.c.l.b16 %v1448
        %v1515 = vunpack.c.h.b16 %v1448
        %v1516 = vunpack.c.l.b16 %v1449
        %v1517 = vunpack.c.h.b16 %v1449
        %v1518 = vunpack.c.l.b16 %v1450
        %v1519 = vunpack.c.h.b16 %v1450
        %v1520 = vunpack.c.l.b16 %v1451
        %v1521 = vunpack.c.h.b16 %v1451
        %v1522 = vunpack.c.l.b16 %v1452
        %v1523 = vunpack.c.h.b16 %v1452
        %v1524 = vunpack.c.l.b16 %v1453
        %v1525 = vunpack.c.h.b16 %v1453
        %v1526 = vunpack.c.l.b16 %v1454
        %v1527 = vunpack.c.h.b16 %v1454
        %v1528 = vunpack.c.l.b16 %v1455
        %v1529 = vunpack.c.h.b16 %v1455
        %v1530 = vunpack.c.l.b16 %v1456
        %v1531 = vunpack.c.h.b16 %v1456
        %v1532 = vunpack.c.l.b16 %v1457
        %v1533 = vunpack.c.h.b16 %v1457
        %v1534 = vunpack.c.l.b16 %v1458
        %v1535 = vunpack.c.h.b16 %v1458
        %v1536 = vunpack.c.l.b16 %v1459
        %v1537 = vunpack.c.h.b16 %v1459
        %v1538 = vunpack.c.l.b16 %v1460
        %v1539 = vunpack.c.h.b16 %v1460
        %v1540 = vunpack.c.l.b16 %v1461
        %v1541 = vunpack.c.h.b16 %v1461
        %v1542 = vunpack.c.l.b16 %v1462
        %v1543 = vunpack.c.h.b16 %v1462
        %v1544 = vunpack.c.l.b16 %v1463
        %v1545 = vunpack.c.h.b16 %v1463
        %v1546 = vunpack.c.l.b16 %v1464
        %v1547 = vunpack.c.h.b16 %v1464
        %v1548 = vunpack.c.l.b16 %v1465
        %v1549 = vunpack.c.h.b16 %v1465
        %v1550 = vunpack.c.l.b16 %v1466
        %v1551 = vunpack.c.h.b16 %v1466
        %v1552 = vunpack.c.l.b16 %v1467
        %v1553 = vunpack.c.h.b16 %v1467
        %v1554 = vunpack.c.l.b16 %v1468
        %v1555 = vunpack.c.h.b16 %v1468
        %v1556 = vunpack.c.l.b16 %v1469
        %v1557 = vunpack.c.h.b16 %v1469
        %v1558 = vunpack.c.l.b16 %v1470
        %v1559 = vunpack.c.h.b16 %v1470
        %v1560 = vunpack.c.l.b16 %v1471
        %v1561 = vunpack.c.h.b16 %v1471
        %v1562 = vunpack.c.l.b16 %v1472
        %v1563 = vunpack.c.h.b16 %v1472
        %v1564 = vunpack.c.l.b16 %v1473
        %v1565 = vunpack.c.h.b16 %v1473
        %v1566 = vunpack.c.l.b16 %v1474
        %v1567 = vunpack.c.h.b16 %v1474
        %v1568 = vunpack.c.l.b16 %v1475
        %v1569 = vunpack.c.h.b16 %v1475
        %v1570 = vunpack.c.l.b16 %v1476
        %v1571 = vunpack.c.h.b16 %v1476
        %v1572 = vunpack.c.l.b16 %v1477
        %v1573 = vunpack.c.h.b16 %v1477
        %v1574 = vpack.c.b16 %v1510, %v1510
        %v1575 = vpack.c.b16 %v1511, %v1511
        %v1576 = vpack.c.b16 %v1512, %v1512
        %v1577 = vpack.c.b16 %v1513, %v1513
        %v1578 = vpack.c.b16 %v1514, %v1514
        %v1579 = vpack.c.b16 %v1515, %v1515
        %v1580 = vpack.c.b16 %v1516, %v1516
        %v1581 = vpack.c.b16 %v1517, %v1517
        %v1582 = vpack.c.b16 %v1518, %v1518
        %v1583 = vpack.c.b16 %v1519, %v1519
        %v1584 = vpack.c.b16 %v1520, %v1520
        %v1585 = vpack.c.b16 %v1521, %v1521
        %v1586 = vpack.c.b16 %v1522, %v1522
        %v1587 = vpack.c.b16 %v1523, %v1523
        %v1588 = vpack.c.b16 %v1524, %v1524
        %v1589 = vpack.c.b16 %v1525, %v1525
        %v1590 = vpack.c.b16 %v1526, %v1526
        %v1591 = vpack.c.b16 %v1527, %v1527
        %v1592 = vpack.c.b16 %v1528, %v1528
        %v1593 = vpack.c.b16 %v1529, %v1529
        %v1594 = vpack.c.b16 %v1530, %v1530
        %v1595 = vpack.c.b16 %v1531, %v1531
        %v1596 = vpack.c.b16 %v1532, %v1532
        %v1597 = vpack.c.b16 %v1533, %v1533
        %v1598 = vpack.c.b16 %v1534, %v1534
        %v1599 = vpack.c.b16 %v1535, %v1535
        %v1600 = vpack.c.b16 %v1536, %v1536
        %v1601 = vpack.c.b16 %v1537, %v1537
        %v1602 = vpack.c.b16 %v1538, %v1538
        %v1603 = vpack.c.b16 %v1539, %v1539
        %v1604 = vpack.c.b16 %v1540, %v1540
        %v1605 = vpack.c.b16 %v1541, %v1541
        %v1606 = vpack.c.b16 %v1542, %v1542
        %v1607 = vpack.c.b16 %v1543, %v1543
        %v1608 = vpack.c.b16 %v1544, %v1544
        %v1609 = vpack.c.b16 %v1545, %v1545
        %v1610 = vpack.c.b16 %v1546, %v1546
        %v1611 = vpack.c.b16 %v1547, %v1547
        %v1612 = vpack.c.b16 %v1548, %v1548
        %v1613 = vpack.c.b16 %v1549, %v1549
        %v1614 = vpack.c.b16 %v1550, %v1550
        %v1615 = vpack.c.b16 %v1551, %v1551
        %v1616 = vpack.c.b16 %v1552, %v1552
        %v1617 = vpack.c.b16 %v1553, %v1553
        %v1618 = vpack.c.b16 %v1554, %v1554
        %v1619 = vpack.c.b16 %v1555, %v1555
        %v1620 = vpack.c.b16 %v1556, %v1556
        %v1621 = vpack.c.b16 %v1557, %v1557
        %v1622 = vpack.c.b16 %v1558, %v1558
        %v1623 = vpack.c.b16 %v1559, %v1559
        %v1624 = vpack.c.b16 %v1560, %v1560
        %v1625 = vpack.c.b16 %v1561, %v1561
        %v1626 = vpack.c.b16 %v1562, %v1562
        %v1627 = vpack.c.b16 %v1563, %v1563
        %v1628 = vpack.c.b16 %v1564, %v1564
        %v1629 = vpack.c.b16 %v1565, %v1565
        %v1630 = vpack.c.b16 %v1566, %v1566
        %v1631 = vpack.c.b16 %v1567, %v1567
        %v1632 = vpack.c.b16 %v1568, %v1568
        %v1633 = vpack.c.b16 %v1569, %v1569
        %v1634 = vpack.c.b16 %v1570, %v1570
        %v1635 = vpack.c.b16 %v1571, %v1571
        %v1636 = vpack.c.b16 %v1572, %v1572
        %v1637 = vpack.c.b16 %v1573, %v1573
        %vm1702 = vcmask 60416
        %1703 = vst.msk [vmem:[%s217] sm:$0xf] %vm1702, %v1574
        %1704 = vst.msk [vmem:[%s217 + $0x4] sm:$0xf] %vm1702, %v1575
        %1705 = vst.msk [vmem:[%s217 + $0x8] sm:$0xf] %vm1702, %v1576
        %1706 = vst.msk [vmem:[%s217 + $0xc] sm:$0xf] %vm1702, %v1577
        %1707 = vst.msk [vmem:[%s217 + $0x10] sm:$0xf] %vm1702, %v1578
        %1708 = vst.msk [vmem:[%s217 + $0x14] sm:$0xf] %vm1702, %v1579
        %1709 = vst.msk [vmem:[%s217 + $0x18] sm:$0xf] %vm1702, %v1580
        %1710 = vst.msk [vmem:[%s217 + $0x1c] sm:$0xf] %vm1702, %v1581
        %1711 = vst.msk [vmem:[%s217 + $0x20] sm:$0xf] %vm1702, %v1582
        %1712 = vst.msk [vmem:[%s217 + $0x24] sm:$0xf] %vm1702, %v1583
        %1713 = vst.msk [vmem:[%s217 + $0x28] sm:$0xf] %vm1702, %v1584
        %1714 = vst.msk [vmem:[%s217 + $0x2c] sm:$0xf] %vm1702, %v1585
        %1715 = vst.msk [vmem:[%s217 + $0x30] sm:$0xf] %vm1702, %v1586
        %1716 = vst.msk [vmem:[%s217 + $0x34] sm:$0xf] %vm1702, %v1587
        %1717 = vst.msk [vmem:[%s217 + $0x38] sm:$0xf] %vm1702, %v1588
        %1718 = vst.msk [vmem:[%s217 + $0x3c] sm:$0xf] %vm1702, %v1589
        %1719 = vst.msk [vmem:[%s217 + $0x40] sm:$0xf] %vm1702, %v1590
        %1720 = vst.msk [vmem:[%s217 + $0x44] sm:$0xf] %vm1702, %v1591
        %1721 = vst.msk [vmem:[%s217 + $0x48] sm:$0xf] %vm1702, %v1592
        %1722 = vst.msk [vmem:[%s217 + $0x4c] sm:$0xf] %vm1702, %v1593
        %1723 = vst.msk [vmem:[%s217 + $0x50] sm:$0xf] %vm1702, %v1594
        %1724 = vst.msk [vmem:[%s217 + $0x54] sm:$0xf] %vm1702, %v1595
        %1725 = vst.msk [vmem:[%s217 + $0x58] sm:$0xf] %vm1702, %v1596
        %1726 = vst.msk [vmem:[%s217 + $0x5c] sm:$0xf] %vm1702, %v1597
        %1727 = vst.msk [vmem:[%s217 + $0x60] sm:$0xf] %vm1702, %v1598
        %1728 = vst.msk [vmem:[%s217 + $0x64] sm:$0xf] %vm1702, %v1599
        %1729 = vst.msk [vmem:[%s217 + $0x68] sm:$0xf] %vm1702, %v1600
        %1730 = vst.msk [vmem:[%s217 + $0x6c] sm:$0xf] %vm1702, %v1601
        %1731 = vst.msk [vmem:[%s217 + $0x70] sm:$0xf] %vm1702, %v1602
        %1732 = vst.msk [vmem:[%s217 + $0x74] sm:$0xf] %vm1702, %v1603
        %1733 = vst.msk [vmem:[%s217 + $0x78] sm:$0xf] %vm1702, %v1604
        %1734 = vst.msk [vmem:[%s217 + $0x7c] sm:$0xf] %vm1702, %v1605
        %1735 = vst.msk [vmem:[%s217 + $0x80] sm:$0xf] %vm1702, %v1606
        %1736 = vst.msk [vmem:[%s217 + $0x84] sm:$0xf] %vm1702, %v1607
        %1737 = vst.msk [vmem:[%s217 + $0x88] sm:$0xf] %vm1702, %v1608
        %1738 = vst.msk [vmem:[%s217 + $0x8c] sm:$0xf] %vm1702, %v1609
        %1739 = vst.msk [vmem:[%s217 + $0x90] sm:$0xf] %vm1702, %v1610
        %1740 = vst.msk [vmem:[%s217 + $0x94] sm:$0xf] %vm1702, %v1611
        %1741 = vst.msk [vmem:[%s217 + $0x98] sm:$0xf] %vm1702, %v1612
        %1742 = vst.msk [vmem:[%s217 + $0x9c] sm:$0xf] %vm1702, %v1613
        %1743 = vst.msk [vmem:[%s217 + $0xa0] sm:$0xf] %vm1702, %v1614
        %1744 = vst.msk [vmem:[%s217 + $0xa4] sm:$0xf] %vm1702, %v1615
        %1745 = vst.msk [vmem:[%s217 + $0xa8] sm:$0xf] %vm1702, %v1616
        %1746 = vst.msk [vmem:[%s217 + $0xac] sm:$0xf] %vm1702, %v1617
        %1747 = vst.msk [vmem:[%s217 + $0xb0] sm:$0xf] %vm1702, %v1618
        %1748 = vst.msk [vmem:[%s217 + $0xb4] sm:$0xf] %vm1702, %v1619
        %1749 = vst.msk [vmem:[%s217 + $0xb8] sm:$0xf] %vm1702, %v1620
        %1750 = vst.msk [vmem:[%s217 + $0xbc] sm:$0xf] %vm1702, %v1621
        %1751 = vst.msk [vmem:[%s217 + $0xc0] sm:$0xf] %vm1702, %v1622
        %1752 = vst.msk [vmem:[%s217 + $0xc4] sm:$0xf] %vm1702, %v1623
        %1753 = vst.msk [vmem:[%s217 + $0xc8] sm:$0xf] %vm1702, %v1624
        %1754 = vst.msk [vmem:[%s217 + $0xcc] sm:$0xf] %vm1702, %v1625
        %1755 = vst.msk [vmem:[%s217 + $0xd0] sm:$0xf] %vm1702, %v1626
        %1756 = vst.msk [vmem:[%s217 + $0xd4] sm:$0xf] %vm1702, %v1627
        %1757 = vst.msk [vmem:[%s217 + $0xd8] sm:$0xf] %vm1702, %v1628
        %1758 = vst.msk [vmem:[%s217 + $0xdc] sm:$0xf] %vm1702, %v1629
        %1759 = vst.msk [vmem:[%s217 + $0xe0] sm:$0xf] %vm1702, %v1630
        %1760 = vst.msk [vmem:[%s217 + $0xe4] sm:$0xf] %vm1702, %v1631
        %1761 = vst.msk [vmem:[%s217 + $0xe8] sm:$0xf] %vm1702, %v1632
        %1762 = vst.msk [vmem:[%s217 + $0xec] sm:$0xf] %vm1702, %v1633
        %1763 = vst.msk [vmem:[%s217 + $0xf0] sm:$0xf] %vm1702, %v1634
        %1764 = vst.msk [vmem:[%s217 + $0xf4] sm:$0xf] %vm1702, %v1635
        %1765 = vst.msk [vmem:[%s217 + $0xf8] sm:$0xf] %vm1702, %v1636
        %1766 = vst.msk [vmem:[%s217 + $0xfc] sm:$0xf] %vm1702, %v1637
      $region40: #{d_net64_forward.8} parent=31 // pred_fallthru
        _
      %s1767 = smul.u32 64, %s18
      %p1768 = scmp.lt.s32.totalorder %s1767, 255
      %s1769 = scalar_select %p1768, %s1767, 255
      %s1770 = smul.addr %s1769, 4
      %s1771 = scalar_lea.vmem %s3, %s1770
      // Predicated region
      $region41: #{d_net64_forward.8} parent=31 // pred_check
        %p1772 = pneg %p119
      $region42: #{d_net64_forward.8} parent=31 // pred_check_branch
        %1774 = sbr.rel (%p1772) target = $region44
      $region43: #{d_net64_forward.8} parent=31 // pred_region
        %s1775 = smul.u32 64, %s18
      $region44: #{d_net64_forward.8} parent=31 // pred_fallthru
        _
    $region32: #{d_net64_forward.8} parent=5 // pred_fallthru
      _
    %p1776 = scmp.le.s32.totalorder 2, %s9
    // Predicated region
    $region45: #{d_net64_forward.8} parent=5 // pred_check
      %p1777 = pneg %p1776
    $region46: #{d_net64_forward.8} parent=5 // pred_check_branch
      %1779 = sbr.rel (%p1777) target = $region48
    $region47: #{d_net64_forward.8} parent=5 // pred_region
      %s1780 = ssub.s32 %s9, 2
      // Predicated region
      $region49: #{d_net64_forward.8} parent=47 // pred_check
        %p1781 = pneg %p125
      $region50: #{d_net64_forward.8} parent=47 // pred_check_branch
        %1783 = sbr.rel (%p1781) target = $region52
      $region51: #{d_net64_forward.8} parent=47 // pred_region
        %s1784 = smul.u32 64, %s20
        %p1785 = scmp.lt.s32.totalorder %s1784, 255
        %s1786 = scalar_select %p1785, %s1784, 255
        %s1787 = smul.addr %s1786, 4
        %s1788 = scalar_lea.vmem %s3, %s1787
      $region52: #{d_net64_forward.8} parent=47 // pred_fallthru
        _
    $region48: #{d_net64_forward.8} parent=5 // pred_fallthru
      _
  $region6: #{d_net64_forward.8} parent=0 // loop_footer
    %s13 = sadd.s32 1, %s9
  $region7: #{d_net64_forward.8} parent=0 // loop_footer_branch
    %8 = sbr.rel target = $region3
  $region8: #{d_net64_forward.8} parent=0 // loop_exit
    _

// kernel: d_net64_forward.9
$region0: #{d_net64_forward.9}
  #allocation0 [shape = 'u32[]', space=smem, size = 0x4, offset = 0x4, fixed_abs, tag = 'smem constant byte address 0x4 - core index']
  #allocation1 [shape = 'u32[144,128]{1,0:T(1,128)}', space=vmem, size = 0x12000, scoped, tag = 'internal scratch']
  #allocation2 [shape = 'f32[512,16]{1,0:T(8,128)}', space=vmem, size = 0x40000, scoped, tag = 'scratch operand']
  %s0 = inlined_call_operand.vmem [shape: bf16[512,128], index: 0, kind: input, shape index: {}]
  %s1 = inlined_call_operand.vmem [shape: bf16[128,16], index: 1, kind: input, shape index: {}]
  %s2 = inlined_call_operand.vmem [shape: f32[1,16], index: 2, kind: input, shape index: {}]
  %s3 = inlined_call_operand.vmem [shape: bf16[512,16], index: 3, kind: output, shape index: {}]
  %s4 = sld [smem:[#allocation0]]
  $region30: #{d_net64_forward.9} parent=0
    _
  %s6 = ssub.s32 1, %s4
  %s7 = scalar_select 0, %s6, %s4
  // Predicated region
  $region2: #{d_net64_forward.9} parent=0 // pred_check
    _
  $region3: #{d_net64_forward.9} parent=0 // pred_check_branch
    %9 = sbr.rel (0) target = $region5
  $region4: #{d_net64_forward.9} parent=0 // pred_region
    _
  $region5: #{d_net64_forward.9} parent=0 // pred_fallthru
    _
  // Predicated region
  $region6: #{d_net64_forward.9} parent=0 // pred_check
    _
  $region7: #{d_net64_forward.9} parent=0 // pred_check_branch
    %11 = sbr.rel (0) target = $region9
  $region8: #{d_net64_forward.9} parent=0 // pred_region
    _
  $region9: #{d_net64_forward.9} parent=0 // pred_fallthru
    _
  // Predicated region
  $region10: #{d_net64_forward.9} parent=0 // pred_check
    _
  $region11: #{d_net64_forward.9} parent=0 // pred_check_branch
    %13 = sbr.rel (0) target = $region13
  $region12: #{d_net64_forward.9} parent=0 // pred_region
    _
  $region13: #{d_net64_forward.9} parent=0 // pred_fallthru
    _
  %p15 = scmp.eq.s32.totalorder 0, 0
  // Predicated region
  $region14: #{d_net64_forward.9} parent=0 // pred_check
    %p16 = pneg %p15
  $region15: #{d_net64_forward.9} parent=0 // pred_check_branch
    %18 = sbr.rel (%p16) target = $region17
  $region16: #{d_net64_forward.9} parent=0 // pred_region
    %vm19 = vcmask 130048
    %20 = vst.msk [vmem:[#allocation2] sm:$0xff] %vm19, 0.0
    %21 = vst.msk [vmem:[#allocation2 + $0x8] sm:$0xff] %vm19, 0.0
    %22 = vst.msk [vmem:[#allocation2 + $0x10] sm:$0xff] %vm19, 0.0
    %23 = vst.msk [vmem:[#allocation2 + $0x18] sm:$0xff] %vm19, 0.0
    %24 = vst.msk [vmem:[#allocation2 + $0x20] sm:$0xff] %vm19, 0.0
    %25 = vst.msk [vmem:[#allocation2 + $0x28] sm:$0xff] %vm19, 0.0
    %26 = vst.msk [vmem:[#allocation2 + $0x30] sm:$0xff] %vm19, 0.0
    %27 = vst.msk [vmem:[#allocation2 + $0x38] sm:$0xff] %vm19, 0.0
    %28 = vst.msk [vmem:[#allocation2 + $0x40] sm:$0xff] %vm19, 0.0
    %29 = vst.msk [vmem:[#allocation2 + $0x48] sm:$0xff] %vm19, 0.0
    %30 = vst.msk [vmem:[#allocation2 + $0x50] sm:$0xff] %vm19, 0.0
    %31 = vst.msk [vmem:[#allocation2 + $0x58] sm:$0xff] %vm19, 0.0
    %32 = vst.msk [vmem:[#allocation2 + $0x60] sm:$0xff] %vm19, 0.0
    %33 = vst.msk [vmem:[#allocation2 + $0x68] sm:$0xff] %vm19, 0.0
    %34 = vst.msk [vmem:[#allocation2 + $0x70] sm:$0xff] %vm19, 0.0
    %35 = vst.msk [vmem:[#allocation2 + $0x78] sm:$0xff] %vm19, 0.0
    %36 = vst.msk [vmem:[#allocation2 + $0x80] sm:$0xff] %vm19, 0.0
    %37 = vst.msk [vmem:[#allocation2 + $0x88] sm:$0xff] %vm19, 0.0
    %38 = vst.msk [vmem:[#allocation2 + $0x90] sm:$0xff] %vm19, 0.0
    %39 = vst.msk [vmem:[#allocation2 + $0x98] sm:$0xff] %vm19, 0.0
    %40 = vst.msk [vmem:[#allocation2 + $0xa0] sm:$0xff] %vm19, 0.0
    %41 = vst.msk [vmem:[#allocation2 + $0xa8] sm:$0xff] %vm19, 0.0
    %42 = vst.msk [vmem:[#allocation2 + $0xb0] sm:$0xff] %vm19, 0.0
    %43 = vst.msk [vmem:[#allocation2 + $0xb8] sm:$0xff] %vm19, 0.0
    %44 = vst.msk [vmem:[#allocation2 + $0xc0] sm:$0xff] %vm19, 0.0
    %45 = vst.msk [vmem:[#allocation2 + $0xc8] sm:$0xff] %vm19, 0.0
    %46 = vst.msk [vmem:[#allocation2 + $0xd0] sm:$0xff] %vm19, 0.0
    %47 = vst.msk [vmem:[#allocation2 + $0xd8] sm:$0xff] %vm19, 0.0
    %48 = vst.msk [vmem:[#allocation2 + $0xe0] sm:$0xff] %vm19, 0.0
    %49 = vst.msk [vmem:[#allocation2 + $0xe8] sm:$0xff] %vm19, 0.0
    %50 = vst.msk [vmem:[#allocation2 + $0xf0] sm:$0xff] %vm19, 0.0
    %51 = vst.msk [vmem:[#allocation2 + $0xf8] sm:$0xff] %vm19, 0.0
    %52 = vst.msk [vmem:[#allocation2 + $0x100] sm:$0xff] %vm19, 0.0
    %53 = vst.msk [vmem:[#allocation2 + $0x108] sm:$0xff] %vm19, 0.0
    %54 = vst.msk [vmem:[#allocation2 + $0x110] sm:$0xff] %vm19, 0.0
    %55 = vst.msk [vmem:[#allocation2 + $0x118] sm:$0xff] %vm19, 0.0
    %56 = vst.msk [vmem:[#allocation2 + $0x120] sm:$0xff] %vm19, 0.0
    %57 = vst.msk [vmem:[#allocation2 + $0x128] sm:$0xff] %vm19, 0.0
    %58 = vst.msk [vmem:[#allocation2 + $0x130] sm:$0xff] %vm19, 0.0
    %59 = vst.msk [vmem:[#allocation2 + $0x138] sm:$0xff] %vm19, 0.0
    %60 = vst.msk [vmem:[#allocation2 + $0x140] sm:$0xff] %vm19, 0.0
    %61 = vst.msk [vmem:[#allocation2 + $0x148] sm:$0xff] %vm19, 0.0
    %62 = vst.msk [vmem:[#allocation2 + $0x150] sm:$0xff] %vm19, 0.0
    %63 = vst.msk [vmem:[#allocation2 + $0x158] sm:$0xff] %vm19, 0.0
    %64 = vst.msk [vmem:[#allocation2 + $0x160] sm:$0xff] %vm19, 0.0
    %65 = vst.msk [vmem:[#allocation2 + $0x168] sm:$0xff] %vm19, 0.0
    %66 = vst.msk [vmem:[#allocation2 + $0x170] sm:$0xff] %vm19, 0.0
    %67 = vst.msk [vmem:[#allocation2 + $0x178] sm:$0xff] %vm19, 0.0
    %68 = vst.msk [vmem:[#allocation2 + $0x180] sm:$0xff] %vm19, 0.0
    %69 = vst.msk [vmem:[#allocation2 + $0x188] sm:$0xff] %vm19, 0.0
    %70 = vst.msk [vmem:[#allocation2 + $0x190] sm:$0xff] %vm19, 0.0
    %71 = vst.msk [vmem:[#allocation2 + $0x198] sm:$0xff] %vm19, 0.0
    %72 = vst.msk [vmem:[#allocation2 + $0x1a0] sm:$0xff] %vm19, 0.0
    %73 = vst.msk [vmem:[#allocation2 + $0x1a8] sm:$0xff] %vm19, 0.0
    %74 = vst.msk [vmem:[#allocation2 + $0x1b0] sm:$0xff] %vm19, 0.0
    %75 = vst.msk [vmem:[#allocation2 + $0x1b8] sm:$0xff] %vm19, 0.0
    %76 = vst.msk [vmem:[#allocation2 + $0x1c0] sm:$0xff] %vm19, 0.0
    %77 = vst.msk [vmem:[#allocation2 + $0x1c8] sm:$0xff] %vm19, 0.0
    %78 = vst.msk [vmem:[#allocation2 + $0x1d0] sm:$0xff] %vm19, 0.0
    %79 = vst.msk [vmem:[#allocation2 + $0x1d8] sm:$0xff] %vm19, 0.0
    %80 = vst.msk [vmem:[#allocation2 + $0x1e0] sm:$0xff] %vm19, 0.0
    %81 = vst.msk [vmem:[#allocation2 + $0x1e8] sm:$0xff] %vm19, 0.0
    %82 = vst.msk [vmem:[#allocation2 + $0x1f0] sm:$0xff] %vm19, 0.0
    %83 = vst.msk [vmem:[#allocation2 + $0x1f8] sm:$0xff] %vm19, 0.0
  $region17: #{d_net64_forward.9} parent=0 // pred_fallthru
    _
  %v84 = vld [vmem:[#allocation2] sm:$0xff]
  %v85 = vld [vmem:[#allocation2 + $0x8] sm:$0xff]
  %v86 = vld [vmem:[#allocation2 + $0x10] sm:$0xff]
  %v87 = vld [vmem:[#allocation2 + $0x18] sm:$0xff]
  %v88 = vld [vmem:[#allocation2 + $0x20] sm:$0xff]
  %v89 = vld [vmem:[#allocation2 + $0x28] sm:$0xff]
  %v90 = vld [vmem:[#allocation2 + $0x30] sm:$0xff]
  %v91 = vld [vmem:[#allocation2 + $0x38] sm:$0xff]
  %v92 = vld [vmem:[#allocation2 + $0x40] sm:$0xff]
  %v93 = vld [vmem:[#allocation2 + $0x48] sm:$0xff]
  %v94 = vld [vmem:[#allocation2 + $0x50] sm:$0xff]
  %v95 = vld [vmem:[#allocation2 + $0x58] sm:$0xff]
  %v96 = vld [vmem:[#allocation2 + $0x60] sm:$0xff]
  %v97 = vld [vmem:[#allocation2 + $0x68] sm:$0xff]
  %v98 = vld [vmem:[#allocation2 + $0x70] sm:$0xff]
  %v99 = vld [vmem:[#allocation2 + $0x78] sm:$0xff]
  %v100 = vld [vmem:[#allocation2 + $0x80] sm:$0xff]
  %v101 = vld [vmem:[#allocation2 + $0x88] sm:$0xff]
  %v102 = vld [vmem:[#allocation2 + $0x90] sm:$0xff]
  %v103 = vld [vmem:[#allocation2 + $0x98] sm:$0xff]
  %v104 = vld [vmem:[#allocation2 + $0xa0] sm:$0xff]
  %v105 = vld [vmem:[#allocation2 + $0xa8] sm:$0xff]
  %v106 = vld [vmem:[#allocation2 + $0xb0] sm:$0xff]
  %v107 = vld [vmem:[#allocation2 + $0xb8] sm:$0xff]
  %v108 = vld [vmem:[#allocation2 + $0xc0] sm:$0xff]
  %v109 = vld [vmem:[#allocation2 + $0xc8] sm:$0xff]
  %v110 = vld [vmem:[#allocation2 + $0xd0] sm:$0xff]
  %v111 = vld [vmem:[#allocation2 + $0xd8] sm:$0xff]
  %v112 = vld [vmem:[#allocation2 + $0xe0] sm:$0xff]
  %v113 = vld [vmem:[#allocation2 + $0xe8] sm:$0xff]
  %v114 = vld [vmem:[#allocation2 + $0xf0] sm:$0xff]
  %v115 = vld [vmem:[#allocation2 + $0xf8] sm:$0xff]
  %v116 = vld [vmem:[#allocation2 + $0x100] sm:$0xff]
  %v117 = vld [vmem:[#allocation2 + $0x108] sm:$0xff]
  %v118 = vld [vmem:[#allocation2 + $0x110] sm:$0xff]
  %v119 = vld [vmem:[#allocation2 + $0x118] sm:$0xff]
  %v120 = vld [vmem:[#allocation2 + $0x120] sm:$0xff]
  %v121 = vld [vmem:[#allocation2 + $0x128] sm:$0xff]
  %v122 = vld [vmem:[#allocation2 + $0x130] sm:$0xff]
  %v123 = vld [vmem:[#allocation2 + $0x138] sm:$0xff]
  %v124 = vld [vmem:[#allocation2 + $0x140] sm:$0xff]
  %v125 = vld [vmem:[#allocation2 + $0x148] sm:$0xff]
  %v126 = vld [vmem:[#allocation2 + $0x150] sm:$0xff]
  %v127 = vld [vmem:[#allocation2 + $0x158] sm:$0xff]
  %v128 = vld [vmem:[#allocation2 + $0x160] sm:$0xff]
  %v129 = vld [vmem:[#allocation2 + $0x168] sm:$0xff]
  %v130 = vld [vmem:[#allocation2 + $0x170] sm:$0xff]
  %v131 = vld [vmem:[#allocation2 + $0x178] sm:$0xff]
  %v132 = vld [vmem:[#allocation2 + $0x180] sm:$0xff]
  %v133 = vld [vmem:[#allocation2 + $0x188] sm:$0xff]
  %v134 = vld [vmem:[#allocation2 + $0x190] sm:$0xff]
  %v135 = vld [vmem:[#allocation2 + $0x198] sm:$0xff]
  %v136 = vld [vmem:[#allocation2 + $0x1a0] sm:$0xff]
  %v137 = vld [vmem:[#allocation2 + $0x1a8] sm:$0xff]
  %v138 = vld [vmem:[#allocation2 + $0x1b0] sm:$0xff]
  %v139 = vld [vmem:[#allocation2 + $0x1b8] sm:$0xff]
  %v140 = vld [vmem:[#allocation2 + $0x1c0] sm:$0xff]
  %v141 = vld [vmem:[#allocation2 + $0x1c8] sm:$0xff]
  %v142 = vld [vmem:[#allocation2 + $0x1d0] sm:$0xff]
  %v143 = vld [vmem:[#allocation2 + $0x1d8] sm:$0xff]
  %v144 = vld [vmem:[#allocation2 + $0x1e0] sm:$0xff]
  %v145 = vld [vmem:[#allocation2 + $0x1e8] sm:$0xff]
  %v146 = vld [vmem:[#allocation2 + $0x1f0] sm:$0xff]
  %v147 = vld [vmem:[#allocation2 + $0x1f8] sm:$0xff]
  %v148 = vld [vmem:[%s0] sm:$0xf]
  %v149 = vld [vmem:[%s0 + $0x4] sm:$0xf]
  %v150 = vld [vmem:[%s0 + $0x8] sm:$0xf]
  %v151 = vld [vmem:[%s0 + $0xc] sm:$0xf]
  %v152 = vld [vmem:[%s0 + $0x10] sm:$0xf]
  %v153 = vld [vmem:[%s0 + $0x14] sm:$0xf]
  %v154 = vld [vmem:[%s0 + $0x18] sm:$0xf]
  %v155 = vld [vmem:[%s0 + $0x1c] sm:$0xf]
  %v156 = vld [vmem:[%s0 + $0x20] sm:$0xf]
  %v157 = vld [vmem:[%s0 + $0x24] sm:$0xf]
  %v158 = vld [vmem:[%s0 + $0x28] sm:$0xf]
  %v159 = vld [vmem:[%s0 + $0x2c] sm:$0xf]
  %v160 = vld [vmem:[%s0 + $0x30] sm:$0xf]
  %v161 = vld [vmem:[%s0 + $0x34] sm:$0xf]
  %v162 = vld [vmem:[%s0 + $0x38] sm:$0xf]
  %v163 = vld [vmem:[%s0 + $0x3c] sm:$0xf]
  %v164 = vld [vmem:[%s0 + $0x40] sm:$0xf]
  %v165 = vld [vmem:[%s0 + $0x44] sm:$0xf]
  %v166 = vld [vmem:[%s0 + $0x48] sm:$0xf]
  %v167 = vld [vmem:[%s0 + $0x4c] sm:$0xf]
  %v168 = vld [vmem:[%s0 + $0x50] sm:$0xf]
  %v169 = vld [vmem:[%s0 + $0x54] sm:$0xf]
  %v170 = vld [vmem:[%s0 + $0x58] sm:$0xf]
  %v171 = vld [vmem:[%s0 + $0x5c] sm:$0xf]
  %v172 = vld [vmem:[%s0 + $0x60] sm:$0xf]
  %v173 = vld [vmem:[%s0 + $0x64] sm:$0xf]
  %v174 = vld [vmem:[%s0 + $0x68] sm:$0xf]
  %v175 = vld [vmem:[%s0 + $0x6c] sm:$0xf]
  %v176 = vld [vmem:[%s0 + $0x70] sm:$0xf]
  %v177 = vld [vmem:[%s0 + $0x74] sm:$0xf]
  %v178 = vld [vmem:[%s0 + $0x78] sm:$0xf]
  %v179 = vld [vmem:[%s0 + $0x7c] sm:$0xf]
  %v180 = vld [vmem:[%s0 + $0x80] sm:$0xf]
  %v181 = vld [vmem:[%s0 + $0x84] sm:$0xf]
  %v182 = vld [vmem:[%s0 + $0x88] sm:$0xf]
  %v183 = vld [vmem:[%s0 + $0x8c] sm:$0xf]
  %v184 = vld [vmem:[%s0 + $0x90] sm:$0xf]
  %v185 = vld [vmem:[%s0 + $0x94] sm:$0xf]
  %v186 = vld [vmem:[%s0 + $0x98] sm:$0xf]
  %v187 = vld [vmem:[%s0 + $0x9c] sm:$0xf]
  %v188 = vld [vmem:[%s0 + $0xa0] sm:$0xf]
  %v189 = vld [vmem:[%s0 + $0xa4] sm:$0xf]
  %v190 = vld [vmem:[%s0 + $0xa8] sm:$0xf]
  %v191 = vld [vmem:[%s0 + $0xac] sm:$0xf]
  %v192 = vld [vmem:[%s0 + $0xb0] sm:$0xf]
  %v193 = vld [vmem:[%s0 + $0xb4] sm:$0xf]
  %v194 = vld [vmem:[%s0 + $0xb8] sm:$0xf]
  %v195 = vld [vmem:[%s0 + $0xbc] sm:$0xf]
  %v196 = vld [vmem:[%s0 + $0xc0] sm:$0xf]
  %v197 = vld [vmem:[%s0 + $0xc4] sm:$0xf]
  %v198 = vld [vmem:[%s0 + $0xc8] sm:$0xf]
  %v199 = vld [vmem:[%s0 + $0xcc] sm:$0xf]
  %v200 = vld [vmem:[%s0 + $0xd0] sm:$0xf]
  %v201 = vld [vmem:[%s0 + $0xd4] sm:$0xf]
  %v202 = vld [vmem:[%s0 + $0xd8] sm:$0xf]
  %v203 = vld [vmem:[%s0 + $0xdc] sm:$0xf]
  %v204 = vld [vmem:[%s0 + $0xe0] sm:$0xf]
  %v205 = vld [vmem:[%s0 + $0xe4] sm:$0xf]
  %v206 = vld [vmem:[%s0 + $0xe8] sm:$0xf]
  %v207 = vld [vmem:[%s0 + $0xec] sm:$0xf]
  %v208 = vld [vmem:[%s0 + $0xf0] sm:$0xf]
  %v209 = vld [vmem:[%s0 + $0xf4] sm:$0xf]
  %v210 = vld [vmem:[%s0 + $0xf8] sm:$0xf]
  %v211 = vld [vmem:[%s0 + $0xfc] sm:$0xf]
  %v212 = vld [vmem:[%s1] sm:$0xf]
  %v213 = vld [vmem:[%s1 + $0x4] sm:$0xf]
  %v214 = vld [vmem:[%s1 + $0x8] sm:$0xf]
  %v215 = vld [vmem:[%s1 + $0xc] sm:$0xf]
  %v216 = vld [vmem:[%s1 + $0x10] sm:$0xf]
  %v217 = vld [vmem:[%s1 + $0x14] sm:$0xf]
  %v218 = vld [vmem:[%s1 + $0x18] sm:$0xf]
  %v219 = vld [vmem:[%s1 + $0x1c] sm:$0xf]
  %v220 = vld [vmem:[%s1 + $0x20] sm:$0xf]
  %v221 = vld [vmem:[%s1 + $0x24] sm:$0xf]
  %v222 = vld [vmem:[%s1 + $0x28] sm:$0xf]
  %v223 = vld [vmem:[%s1 + $0x2c] sm:$0xf]
  %v224 = vld [vmem:[%s1 + $0x30] sm:$0xf]
  %v225 = vld [vmem:[%s1 + $0x34] sm:$0xf]
  %v226 = vld [vmem:[%s1 + $0x38] sm:$0xf]
  %v227 = vld [vmem:[%s1 + $0x3c] sm:$0xf]
  %v292 = vunpack.c.l.b16 %v148
  %v293 = vunpack.c.l.b16 %v149
  %v294 = vunpack.c.l.b16 %v150
  %v295 = vunpack.c.l.b16 %v151
  %v296 = vunpack.c.l.b16 %v152
  %v297 = vunpack.c.l.b16 %v153
  %v298 = vunpack.c.l.b16 %v154
  %v299 = vunpack.c.l.b16 %v155
  %v300 = vunpack.c.l.b16 %v156
  %v301 = vunpack.c.l.b16 %v157
  %v302 = vunpack.c.l.b16 %v158
  %v303 = vunpack.c.l.b16 %v159
  %v304 = vunpack.c.l.b16 %v160
  %v305 = vunpack.c.l.b16 %v161
  %v306 = vunpack.c.l.b16 %v162
  %v307 = vunpack.c.l.b16 %v163
  %v308 = vunpack.c.l.b16 %v164
  %v309 = vunpack.c.l.b16 %v165
  %v310 = vunpack.c.l.b16 %v166
  %v311 = vunpack.c.l.b16 %v167
  %v312 = vunpack.c.l.b16 %v168
  %v313 = vunpack.c.l.b16 %v169
  %v314 = vunpack.c.l.b16 %v170
  %v315 = vunpack.c.l.b16 %v171
  %v316 = vunpack.c.l.b16 %v172
  %v317 = vunpack.c.l.b16 %v173
  %v318 = vunpack.c.l.b16 %v174
  %v319 = vunpack.c.l.b16 %v175
  %v320 = vunpack.c.l.b16 %v176
  %v321 = vunpack.c.l.b16 %v177
  %v322 = vunpack.c.l.b16 %v178
  %v323 = vunpack.c.l.b16 %v179
  %v324 = vunpack.c.l.b16 %v180
  %v325 = vunpack.c.l.b16 %v181
  %v326 = vunpack.c.l.b16 %v182
  %v327 = vunpack.c.l.b16 %v183
  %v328 = vunpack.c.l.b16 %v184
  %v329 = vunpack.c.l.b16 %v185
  %v330 = vunpack.c.l.b16 %v186
  %v331 = vunpack.c.l.b16 %v187
  %v332 = vunpack.c.l.b16 %v188
  %v333 = vunpack.c.l.b16 %v189
  %v334 = vunpack.c.l.b16 %v190
  %v335 = vunpack.c.l.b16 %v191
  %v336 = vunpack.c.l.b16 %v192
  %v337 = vunpack.c.l.b16 %v193
  %v338 = vunpack.c.l.b16 %v194
  %v339 = vunpack.c.l.b16 %v195
  %v340 = vunpack.c.l.b16 %v196
  %v341 = vunpack.c.l.b16 %v197
  %v342 = vunpack.c.l.b16 %v198
  %v343 = vunpack.c.l.b16 %v199
  %v344 = vunpack.c.l.b16 %v200
  %v345 = vunpack.c.l.b16 %v201
  %v346 = vunpack.c.l.b16 %v202
  %v347 = vunpack.c.l.b16 %v203
  %v348 = vunpack.c.l.b16 %v204
  %v349 = vunpack.c.l.b16 %v205
  %v350 = vunpack.c.l.b16 %v206
  %v351 = vunpack.c.l.b16 %v207
  %v352 = vunpack.c.l.b16 %v208
  %v353 = vunpack.c.l.b16 %v209
  %v354 = vunpack.c.l.b16 %v210
  %v355 = vunpack.c.l.b16 %v211
  %v356 = vpack.c.b16 %v293, %v292
  %v357 = vpack.c.b16 %v295, %v294
  %v358 = vpack.c.b16 %v297, %v296
  %v359 = vpack.c.b16 %v299, %v298
  %v360 = vpack.c.b16 %v301, %v300
  %v361 = vpack.c.b16 %v303, %v302
  %v362 = vpack.c.b16 %v305, %v304
  %v363 = vpack.c.b16 %v307, %v306
  %v364 = vpack.c.b16 %v309, %v308
  %v365 = vpack.c.b16 %v311, %v310
  %v366 = vpack.c.b16 %v313, %v312
  %v367 = vpack.c.b16 %v315, %v314
  %v368 = vpack.c.b16 %v317, %v316
  %v369 = vpack.c.b16 %v319, %v318
  %v370 = vpack.c.b16 %v321, %v320
  %v371 = vpack.c.b16 %v323, %v322
  %v372 = vpack.c.b16 %v325, %v324
  %v373 = vpack.c.b16 %v327, %v326
  %v374 = vpack.c.b16 %v329, %v328
  %v375 = vpack.c.b16 %v331, %v330
  %v376 = vpack.c.b16 %v333, %v332
  %v377 = vpack.c.b16 %v335, %v334
  %v378 = vpack.c.b16 %v337, %v336
  %v379 = vpack.c.b16 %v339, %v338
  %v380 = vpack.c.b16 %v341, %v340
  %v381 = vpack.c.b16 %v343, %v342
  %v382 = vpack.c.b16 %v345, %v344
  %v383 = vpack.c.b16 %v347, %v346
  %v384 = vpack.c.b16 %v349, %v348
  %v385 = vpack.c.b16 %v351, %v350
  %v386 = vpack.c.b16 %v353, %v352
  %v387 = vpack.c.b16 %v355, %v354
  %v436 = vunpack.c.l.b16 %v212
  %v437 = vunpack.c.l.b16 %v213
  %v438 = vunpack.c.l.b16 %v214
  %v439 = vunpack.c.l.b16 %v215
  %v440 = vunpack.c.l.b16 %v216
  %v441 = vunpack.c.l.b16 %v217
  %v442 = vunpack.c.l.b16 %v218
  %v443 = vunpack.c.l.b16 %v219
  %v444 = vunpack.c.l.b16 %v220
  %v445 = vunpack.c.l.b16 %v221
  %v446 = vunpack.c.l.b16 %v222
  %v447 = vunpack.c.l.b16 %v223
  %v448 = vunpack.c.l.b16 %v224
  %v449 = vunpack.c.l.b16 %v225
  %v450 = vunpack.c.l.b16 %v226
  %v451 = vunpack.c.l.b16 %v227
  %v452 = vpack.c.b16 %v437, %v436
  %v453 = vpack.c.b16 %v439, %v438
  %v454 = vpack.c.b16 %v441, %v440
  %v455 = vpack.c.b16 %v443, %v442
  %v456 = vpack.c.b16 %v445, %v444
  %v457 = vpack.c.b16 %v447, %v446
  %v458 = vpack.c.b16 %v449, %v448
  %v459 = vpack.c.b16 %v451, %v450
  %468 = vmatprep.subr.bf16.mxu0 0
  %469 = vmatpush1.bf16.msra.mxu0 %v459
  %470 = vmatprep.subr.bf16.mxu0 0
  %471 = vmatpush1.bf16.msra.mxu0 %v458
  %472 = vmatprep.subr.bf16.mxu0 0
  %473 = vmatpush1.bf16.msra.mxu0 %v457
  %474 = vmatprep.subr.bf16.mxu0 0
  %475 = vmatpush1.bf16.msra.mxu0 %v456
  %476 = vmatprep.subr.bf16.mxu0 0
  %477 = vmatpush1.bf16.msra.mxu0 %v455
  %478 = vmatprep.subr.bf16.mxu0 0
  %479 = vmatpush1.bf16.msra.mxu0 %v454
  %480 = vmatprep.subr.bf16.mxu0 0
  %481 = vmatpush1.bf16.msra.mxu0 %v453
  %482 = vmatprep.subr.bf16.mxu0 0
  %483 = vmatpush1.bf16.msra.mxu0 %v452
  %484 = vmatprep.subr.bf16.mxu0 0
  %485 = vmatpush2.bf16.msra.mxu0 0
  %486 = vmatprep.subr.bf16.mxu0 0
  %487 = vmatpush2.bf16.msra.mxu0 0
  %488 = vmatprep.subr.bf16.mxu0 0
  %489 = vmatpush2.bf16.msra.mxu0 0
  %490 = vmatprep.subr.bf16.mxu0 0
  %491 = vmatpush2.bf16.msra.mxu0 0
  %492 = vmatprep.subr.bf16.mxu0 0
  %493 = vmatpush2.bf16.msra.mxu0 0
  %494 = vmatprep.subr.bf16.mxu0 0
  %495 = vmatpush2.bf16.msra.mxu0 0
  %496 = vmatprep.subr.bf16.mxu0 0
  %497 = vmatpush2.bf16.msra.mxu0 0
  %498 = vmatprep.subr.bf16.mxu0 0
  %499 = vmatpush2.bf16.msra.mxu0 0
  %500 = vmatprep.mubr.bf16.mxu0 0
  %501 = vmatmul.mubr.bf16.gmra.mxu0 %v356
  %v502 = vpop.f32.mrf.mxu0
  %v503 = vadd.f32 0.0, %v502
  %v504 = vpop.f32.mrf.mxu0
  %v505 = vpop.f32.mrf.mxu0
  %v506 = vadd.f32 0.0, %v505
  %v507 = vpop.f32.mrf.mxu0
  %508 = vmatprep.mubr.bf16.mxu0 0
  %509 = vmatmul.mubr.bf16.gmra.mxu0 %v357
  %v510 = vpop.f32.mrf.mxu0
  %v511 = vadd.f32 0.0, %v510
  %v512 = vpop.f32.mrf.mxu0
  %v513 = vpop.f32.mrf.mxu0
  %v514 = vadd.f32 0.0, %v513
  %v515 = vpop.f32.mrf.mxu0
  %516 = vmatprep.mubr.bf16.mxu0 0
  %517 = vmatmul.mubr.bf16.gmra.mxu0 %v358
  %v518 = vpop.f32.mrf.mxu0
  %v519 = vadd.f32 0.0, %v518
  %v520 = vpop.f32.mrf.mxu0
  %v521 = vpop.f32.mrf.mxu0
  %v522 = vadd.f32 0.0, %v521
  %v523 = vpop.f32.mrf.mxu0
  %524 = vmatprep.mubr.bf16.mxu0 0
  %525 = vmatmul.mubr.bf16.gmra.mxu0 %v359
  %v526 = vpop.f32.mrf.mxu0
  %v527 = vadd.f32 0.0, %v526
  %v528 = vpop.f32.mrf.mxu0
  %v529 = vpop.f32.mrf.mxu0
  %v530 = vadd.f32 0.0, %v529
  %v531 = vpop.f32.mrf.mxu0
  %532 = vmatprep.mubr.bf16.mxu0 0
  %533 = vmatmul.mubr.bf16.gmra.mxu0 %v360
  %v534 = vpop.f32.mrf.mxu0
  %v535 = vadd.f32 0.0, %v534
  %v536 = vpop.f32.mrf.mxu0
  %v537 = vpop.f32.mrf.mxu0
  %v538 = vadd.f32 0.0, %v537
  %v539 = vpop.f32.mrf.mxu0
  %540 = vmatprep.mubr.bf16.mxu0 0
  %541 = vmatmul.mubr.bf16.gmra.mxu0 %v361
  %v542 = vpop.f32.mrf.mxu0
  %v543 = vadd.f32 0.0, %v542
  %v544 = vpop.f32.mrf.mxu0
  %v545 = vpop.f32.mrf.mxu0
  %v546 = vadd.f32 0.0, %v545
  %v547 = vpop.f32.mrf.mxu0
  %548 = vmatprep.mubr.bf16.mxu0 0
  %549 = vmatmul.mubr.bf16.gmra.mxu0 %v362
  %v550 = vpop.f32.mrf.mxu0
  %v551 = vadd.f32 0.0, %v550
  %v552 = vpop.f32.mrf.mxu0
  %v553 = vpop.f32.mrf.mxu0
  %v554 = vadd.f32 0.0, %v553
  %v555 = vpop.f32.mrf.mxu0
  %556 = vmatprep.mubr.bf16.mxu0 0
  %557 = vmatmul.mubr.bf16.gmra.mxu0 %v363
  %v558 = vpop.f32.mrf.mxu0
  %v559 = vadd.f32 0.0, %v558
  %v560 = vpop.f32.mrf.mxu0
  %v561 = vpop.f32.mrf.mxu0
  %v562 = vadd.f32 0.0, %v561
  %v563 = vpop.f32.mrf.mxu0
  %564 = vmatprep.mubr.bf16.mxu0 0
  %565 = vmatmul.mubr.bf16.gmra.mxu0 %v364
  %v566 = vpop.f32.mrf.mxu0
  %v567 = vadd.f32 0.0, %v566
  %v568 = vpop.f32.mrf.mxu0
  %v569 = vpop.f32.mrf.mxu0
  %v570 = vadd.f32 0.0, %v569
  %v571 = vpop.f32.mrf.mxu0
  %572 = vmatprep.mubr.bf16.mxu0 0
  %573 = vmatmul.mubr.bf16.gmra.mxu0 %v365
  %v574 = vpop.f32.mrf.mxu0
  %v575 = vadd.f32 0.0, %v574
  %v576 = vpop.f32.mrf.mxu0
  %v577 = vpop.f32.mrf.mxu0
  %v578 = vadd.f32 0.0, %v577
  %v579 = vpop.f32.mrf.mxu0
  %580 = vmatprep.mubr.bf16.mxu0 0
  %581 = vmatmul.mubr.bf16.gmra.mxu0 %v366
  %v582 = vpop.f32.mrf.mxu0
  %v583 = vadd.f32 0.0, %v582
  %v584 = vpop.f32.mrf.mxu0
  %v585 = vpop.f32.mrf.mxu0
  %v586 = vadd.f32 0.0, %v585
  %v587 = vpop.f32.mrf.mxu0
  %588 = vmatprep.mubr.bf16.mxu0 0
  %589 = vmatmul.mubr.bf16.gmra.mxu0 %v367
  %v590 = vpop.f32.mrf.mxu0
  %v591 = vadd.f32 0.0, %v590
  %v592 = vpop.f32.mrf.mxu0
  %v593 = vpop.f32.mrf.mxu0
  %v594 = vadd.f32 0.0, %v593
  %v595 = vpop.f32.mrf.mxu0
  %596 = vmatprep.mubr.bf16.mxu0 0
  %597 = vmatmul.mubr.bf16.gmra.mxu0 %v368
  %v598 = vpop.f32.mrf.mxu0
  %v599 = vadd.f32 0.0, %v598
  %v600 = vpop.f32.mrf.mxu0
  %v601 = vpop.f32.mrf.mxu0
  %v602 = vadd.f32 0.0, %v601
  %v603 = vpop.f32.mrf.mxu0
  %604 = vmatprep.mubr.bf16.mxu0 0
  %605 = vmatmul.mubr.bf16.gmra.mxu0 %v369
  %v606 = vpop.f32.mrf.mxu0
  %v607 = vadd.f32 0.0, %v606
  %v608 = vpop.f32.mrf.mxu0
  %v609 = vpop.f32.mrf.mxu0
  %v610 = vadd.f32 0.0, %v609
  %v611 = vpop.f32.mrf.mxu0
  %612 = vmatprep.mubr.bf16.mxu0 0
  %613 = vmatmul.mubr.bf16.gmra.mxu0 %v370
  %v614 = vpop.f32.mrf.mxu0
  %v615 = vadd.f32 0.0, %v614
  %v616 = vpop.f32.mrf.mxu0
  %v617 = vpop.f32.mrf.mxu0
  %v618 = vadd.f32 0.0, %v617
  %v619 = vpop.f32.mrf.mxu0
  %620 = vmatprep.mubr.bf16.mxu0 0
  %621 = vmatmul.mubr.bf16.gmra.mxu0 %v371
  %v622 = vpop.f32.mrf.mxu0
  %v623 = vadd.f32 0.0, %v622
  %v624 = vpop.f32.mrf.mxu0
  %v625 = vpop.f32.mrf.mxu0
  %v626 = vadd.f32 0.0, %v625
  %v627 = vpop.f32.mrf.mxu0
  %628 = vmatprep.mubr.bf16.mxu0 0
  %629 = vmatmul.mubr.bf16.gmra.mxu0 %v372
  %v630 = vpop.f32.mrf.mxu0
  %v631 = vadd.f32 0.0, %v630
  %v632 = vpop.f32.mrf.mxu0
  %v633 = vpop.f32.mrf.mxu0
  %v634 = vadd.f32 0.0, %v633
  %v635 = vpop.f32.mrf.mxu0
  %636 = vmatprep.mubr.bf16.mxu0 0
  %637 = vmatmul.mubr.bf16.gmra.mxu0 %v373
  %v638 = vpop.f32.mrf.mxu0
  %v639 = vadd.f32 0.0, %v638
  %v640 = vpop.f32.mrf.mxu0
  %v641 = vpop.f32.mrf.mxu0
  %v642 = vadd.f32 0.0, %v641
  %v643 = vpop.f32.mrf.mxu0
  %644 = vmatprep.mubr.bf16.mxu0 0
  %645 = vmatmul.mubr.bf16.gmra.mxu0 %v374
  %v646 = vpop.f32.mrf.mxu0
  %v647 = vadd.f32 0.0, %v646
  %v648 = vpop.f32.mrf.mxu0
  %v649 = vpop.f32.mrf.mxu0
  %v650 = vadd.f32 0.0, %v649
  %v651 = vpop.f32.mrf.mxu0
  %652 = vmatprep.mubr.bf16.mxu0 0
  %653 = vmatmul.mubr.bf16.gmra.mxu0 %v375
  %v654 = vpop.f32.mrf.mxu0
  %v655 = vadd.f32 0.0, %v654
  %v656 = vpop.f32.mrf.mxu0
  %v657 = vpop.f32.mrf.mxu0
  %v658 = vadd.f32 0.0, %v657
  %v659 = vpop.f32.mrf.mxu0
  %660 = vmatprep.mubr.bf16.mxu0 0
  %661 = vmatmul.mubr.bf16.gmra.mxu0 %v376
  %v662 = vpop.f32.mrf.mxu0
  %v663 = vadd.f32 0.0, %v662
  %v664 = vpop.f32.mrf.mxu0
  %v665 = vpop.f32.mrf.mxu0
  %v666 = vadd.f32 0.0, %v665
  %v667 = vpop.f32.mrf.mxu0
  %668 = vmatprep.mubr.bf16.mxu0 0
  %669 = vmatmul.mubr.bf16.gmra.mxu0 %v377
  %v670 = vpop.f32.mrf.mxu0
  %v671 = vadd.f32 0.0, %v670
  %v672 = vpop.f32.mrf.mxu0
  %v673 = vpop.f32.mrf.mxu0
  %v674 = vadd.f32 0.0, %v673
  %v675 = vpop.f32.mrf.mxu0
  %676 = vmatprep.mubr.bf16.mxu0 0
  %677 = vmatmul.mubr.bf16.gmra.mxu0 %v378
  %v678 = vpop.f32.mrf.mxu0
  %v679 = vadd.f32 0.0, %v678
  %v680 = vpop.f32.mrf.mxu0
  %v681 = vpop.f32.mrf.mxu0
  %v682 = vadd.f32 0.0, %v681
  %v683 = vpop.f32.mrf.mxu0
  %684 = vmatprep.mubr.bf16.mxu0 0
  %685 = vmatmul.mubr.bf16.gmra.mxu0 %v379
  %v686 = vpop.f32.mrf.mxu0
  %v687 = vadd.f32 0.0, %v686
  %v688 = vpop.f32.mrf.mxu0
  %v689 = vpop.f32.mrf.mxu0
  %v690 = vadd.f32 0.0, %v689
  %v691 = vpop.f32.mrf.mxu0
  %692 = vmatprep.mubr.bf16.mxu0 0
  %693 = vmatmul.mubr.bf16.gmra.mxu0 %v380
  %v694 = vpop.f32.mrf.mxu0
  %v695 = vadd.f32 0.0, %v694
  %v696 = vpop.f32.mrf.mxu0
  %v697 = vpop.f32.mrf.mxu0
  %v698 = vadd.f32 0.0, %v697
  %v699 = vpop.f32.mrf.mxu0
  %700 = vmatprep.mubr.bf16.mxu0 0
  %701 = vmatmul.mubr.bf16.gmra.mxu0 %v381
  %v702 = vpop.f32.mrf.mxu0
  %v703 = vadd.f32 0.0, %v702
  %v704 = vpop.f32.mrf.mxu0
  %v705 = vpop.f32.mrf.mxu0
  %v706 = vadd.f32 0.0, %v705
  %v707 = vpop.f32.mrf.mxu0
  %708 = vmatprep.mubr.bf16.mxu0 0
  %709 = vmatmul.mubr.bf16.gmra.mxu0 %v382
  %v710 = vpop.f32.mrf.mxu0
  %v711 = vadd.f32 0.0, %v710
  %v712 = vpop.f32.mrf.mxu0
  %v713 = vpop.f32.mrf.mxu0
  %v714 = vadd.f32 0.0, %v713
  %v715 = vpop.f32.mrf.mxu0
  %716 = vmatprep.mubr.bf16.mxu0 0
  %717 = vmatmul.mubr.bf16.gmra.mxu0 %v383
  %v718 = vpop.f32.mrf.mxu0
  %v719 = vadd.f32 0.0, %v718
  %v720 = vpop.f32.mrf.mxu0
  %v721 = vpop.f32.mrf.mxu0
  %v722 = vadd.f32 0.0, %v721
  %v723 = vpop.f32.mrf.mxu0
  %724 = vmatprep.mubr.bf16.mxu0 0
  %725 = vmatmul.mubr.bf16.gmra.mxu0 %v384
  %v726 = vpop.f32.mrf.mxu0
  %v727 = vadd.f32 0.0, %v726
  %v728 = vpop.f32.mrf.mxu0
  %v729 = vpop.f32.mrf.mxu0
  %v730 = vadd.f32 0.0, %v729
  %v731 = vpop.f32.mrf.mxu0
  %732 = vmatprep.mubr.bf16.mxu0 0
  %733 = vmatmul.mubr.bf16.gmra.mxu0 %v385
  %v734 = vpop.f32.mrf.mxu0
  %v735 = vadd.f32 0.0, %v734
  %v736 = vpop.f32.mrf.mxu0
  %v737 = vpop.f32.mrf.mxu0
  %v738 = vadd.f32 0.0, %v737
  %v739 = vpop.f32.mrf.mxu0
  %740 = vmatprep.mubr.bf16.mxu0 0
  %741 = vmatmul.mubr.bf16.gmra.mxu0 %v386
  %v742 = vpop.f32.mrf.mxu0
  %v743 = vadd.f32 0.0, %v742
  %v744 = vpop.f32.mrf.mxu0
  %v745 = vpop.f32.mrf.mxu0
  %v746 = vadd.f32 0.0, %v745
  %v747 = vpop.f32.mrf.mxu0
  %748 = vmatprep.mubr.bf16.mxu0 0
  %749 = vmatmul.mubr.bf16.gmra.mxu0 %v387
  %v750 = vpop.f32.mrf.mxu0
  %v751 = vadd.f32 0.0, %v750
  %v752 = vpop.f32.mrf.mxu0
  %v753 = vpop.f32.mrf.mxu0
  %v754 = vadd.f32 0.0, %v753
  %v755 = vpop.f32.mrf.mxu0
  %756 = vdwg.mxu0
  %v757 = vadd.f32 %v84, %v503
  %v758 = vadd.f32 %v85, %v506
  %v759 = vadd.f32 %v86, %v511
  %v760 = vadd.f32 %v87, %v514
  %v761 = vadd.f32 %v88, %v519
  %v762 = vadd.f32 %v89, %v522
  %v763 = vadd.f32 %v90, %v527
  %v764 = vadd.f32 %v91, %v530
  %v765 = vadd.f32 %v92, %v535
  %v766 = vadd.f32 %v93, %v538
  %v767 = vadd.f32 %v94, %v543
  %v768 = vadd.f32 %v95, %v546
  %v769 = vadd.f32 %v96, %v551
  %v770 = vadd.f32 %v97, %v554
  %v771 = vadd.f32 %v98, %v559
  %v772 = vadd.f32 %v99, %v562
  %v773 = vadd.f32 %v100, %v567
  %v774 = vadd.f32 %v101, %v570
  %v775 = vadd.f32 %v102, %v575
  %v776 = vadd.f32 %v103, %v578
  %v777 = vadd.f32 %v104, %v583
  %v778 = vadd.f32 %v105, %v586
  %v779 = vadd.f32 %v106, %v591
  %v780 = vadd.f32 %v107, %v594
  %v781 = vadd.f32 %v108, %v599
  %v782 = vadd.f32 %v109, %v602
  %v783 = vadd.f32 %v110, %v607
  %v784 = vadd.f32 %v111, %v610
  %v785 = vadd.f32 %v112, %v615
  %v786 = vadd.f32 %v113, %v618
  %v787 = vadd.f32 %v114, %v623
  %v788 = vadd.f32 %v115, %v626
  %v789 = vadd.f32 %v116, %v631
  %v790 = vadd.f32 %v117, %v634
  %v791 = vadd.f32 %v118, %v639
  %v792 = vadd.f32 %v119, %v642
  %v793 = vadd.f32 %v120, %v647
  %v794 = vadd.f32 %v121, %v650
  %v795 = vadd.f32 %v122, %v655
  %v796 = vadd.f32 %v123, %v658
  %v797 = vadd.f32 %v124, %v663
  %v798 = vadd.f32 %v125, %v666
  %v799 = vadd.f32 %v126, %v671
  %v800 = vadd.f32 %v127, %v674
  %v801 = vadd.f32 %v128, %v679
  %v802 = vadd.f32 %v129, %v682
  %v803 = vadd.f32 %v130, %v687
  %v804 = vadd.f32 %v131, %v690
  %v805 = vadd.f32 %v132, %v695
  %v806 = vadd.f32 %v133, %v698
  %v807 = vadd.f32 %v134, %v703
  %v808 = vadd.f32 %v135, %v706
  %v809 = vadd.f32 %v136, %v711
  %v810 = vadd.f32 %v137, %v714
  %v811 = vadd.f32 %v138, %v719
  %v812 = vadd.f32 %v139, %v722
  %v813 = vadd.f32 %v140, %v727
  %v814 = vadd.f32 %v141, %v730
  %v815 = vadd.f32 %v142, %v735
  %v816 = vadd.f32 %v143, %v738
  %v817 = vadd.f32 %v144, %v743
  %v818 = vadd.f32 %v145, %v746
  %v819 = vadd.f32 %v146, %v751
  %v820 = vadd.f32 %v147, %v754
  %vm821 = vcmask 130048
  %822 = vst.msk [vmem:[#allocation2] sm:$0xff] %vm821, %v757
  %823 = vst.msk [vmem:[#allocation2 + $0x8] sm:$0xff] %vm821, %v758
  %824 = vst.msk [vmem:[#allocation2 + $0x10] sm:$0xff] %vm821, %v759
  %825 = vst.msk [vmem:[#allocation2 + $0x18] sm:$0xff] %vm821, %v760
  %826 = vst.msk [vmem:[#allocation2 + $0x20] sm:$0xff] %vm821, %v761
  %827 = vst.msk [vmem:[#allocation2 + $0x28] sm:$0xff] %vm821, %v762
  %828 = vst.msk [vmem:[#allocation2 + $0x30] sm:$0xff] %vm821, %v763
  %829 = vst.msk [vmem:[#allocation2 + $0x38] sm:$0xff] %vm821, %v764
  %830 = vst.msk [vmem:[#allocation2 + $0x40] sm:$0xff] %vm821, %v765
  %831 = vst.msk [vmem:[#allocation2 + $0x48] sm:$0xff] %vm821, %v766
  %832 = vst.msk [vmem:[#allocation2 + $0x50] sm:$0xff] %vm821, %v767
  %833 = vst.msk [vmem:[#allocation2 + $0x58] sm:$0xff] %vm821, %v768
  %834 = vst.msk [vmem:[#allocation2 + $0x60] sm:$0xff] %vm821, %v769
  %835 = vst.msk [vmem:[#allocation2 + $0x68] sm:$0xff] %vm821, %v770
  %836 = vst.msk [vmem:[#allocation2 + $0x70] sm:$0xff] %vm821, %v771
  %837 = vst.msk [vmem:[#allocation2 + $0x78] sm:$0xff] %vm821, %v772
  %838 = vst.msk [vmem:[#allocation2 + $0x80] sm:$0xff] %vm821, %v773
  %839 = vst.msk [vmem:[#allocation2 + $0x88] sm:$0xff] %vm821, %v774
  %840 = vst.msk [vmem:[#allocation2 + $0x90] sm:$0xff] %vm821, %v775
  %841 = vst.msk [vmem:[#allocation2 + $0x98] sm:$0xff] %vm821, %v776
  %842 = vst.msk [vmem:[#allocation2 + $0xa0] sm:$0xff] %vm821, %v777
  %843 = vst.msk [vmem:[#allocation2 + $0xa8] sm:$0xff] %vm821, %v778
  %844 = vst.msk [vmem:[#allocation2 + $0xb0] sm:$0xff] %vm821, %v779
  %845 = vst.msk [vmem:[#allocation2 + $0xb8] sm:$0xff] %vm821, %v780
  %846 = vst.msk [vmem:[#allocation2 + $0xc0] sm:$0xff] %vm821, %v781
  %847 = vst.msk [vmem:[#allocation2 + $0xc8] sm:$0xff] %vm821, %v782
  %848 = vst.msk [vmem:[#allocation2 + $0xd0] sm:$0xff] %vm821, %v783
  %849 = vst.msk [vmem:[#allocation2 + $0xd8] sm:$0xff] %vm821, %v784
  %850 = vst.msk [vmem:[#allocation2 + $0xe0] sm:$0xff] %vm821, %v785
  %851 = vst.msk [vmem:[#allocation2 + $0xe8] sm:$0xff] %vm821, %v786
  %852 = vst.msk [vmem:[#allocation2 + $0xf0] sm:$0xff] %vm821, %v787
  %853 = vst.msk [vmem:[#allocation2 + $0xf8] sm:$0xff] %vm821, %v788
  %854 = vst.msk [vmem:[#allocation2 + $0x100] sm:$0xff] %vm821, %v789
  %855 = vst.msk [vmem:[#allocation2 + $0x108] sm:$0xff] %vm821, %v790
  %856 = vst.msk [vmem:[#allocation2 + $0x110] sm:$0xff] %vm821, %v791
  %857 = vst.msk [vmem:[#allocation2 + $0x118] sm:$0xff] %vm821, %v792
  %858 = vst.msk [vmem:[#allocation2 + $0x120] sm:$0xff] %vm821, %v793
  %859 = vst.msk [vmem:[#allocation2 + $0x128] sm:$0xff] %vm821, %v794
  %860 = vst.msk [vmem:[#allocation2 + $0x130] sm:$0xff] %vm821, %v795
  %861 = vst.msk [vmem:[#allocation2 + $0x138] sm:$0xff] %vm821, %v796
  %862 = vst.msk [vmem:[#allocation2 + $0x140] sm:$0xff] %vm821, %v797
  %863 = vst.msk [vmem:[#allocation2 + $0x148] sm:$0xff] %vm821, %v798
  %864 = vst.msk [vmem:[#allocation2 + $0x150] sm:$0xff] %vm821, %v799
  %865 = vst.msk [vmem:[#allocation2 + $0x158] sm:$0xff] %vm821, %v800
  %866 = vst.msk [vmem:[#allocation2 + $0x160] sm:$0xff] %vm821, %v801
  %867 = vst.msk [vmem:[#allocation2 + $0x168] sm:$0xff] %vm821, %v802
  %868 = vst.msk [vmem:[#allocation2 + $0x170] sm:$0xff] %vm821, %v803
  %869 = vst.msk [vmem:[#allocation2 + $0x178] sm:$0xff] %vm821, %v804
  %870 = vst.msk [vmem:[#allocation2 + $0x180] sm:$0xff] %vm821, %v805
  %871 = vst.msk [vmem:[#allocation2 + $0x188] sm:$0xff] %vm821, %v806
  %872 = vst.msk [vmem:[#allocation2 + $0x190] sm:$0xff] %vm821, %v807
  %873 = vst.msk [vmem:[#allocation2 + $0x198] sm:$0xff] %vm821, %v808
  %874 = vst.msk [vmem:[#allocation2 + $0x1a0] sm:$0xff] %vm821, %v809
  %875 = vst.msk [vmem:[#allocation2 + $0x1a8] sm:$0xff] %vm821, %v810
  %876 = vst.msk [vmem:[#allocation2 + $0x1b0] sm:$0xff] %vm821, %v811
  %877 = vst.msk [vmem:[#allocation2 + $0x1b8] sm:$0xff] %vm821, %v812
  %878 = vst.msk [vmem:[#allocation2 + $0x1c0] sm:$0xff] %vm821, %v813
  %879 = vst.msk [vmem:[#allocation2 + $0x1c8] sm:$0xff] %vm821, %v814
  %880 = vst.msk [vmem:[#allocation2 + $0x1d0] sm:$0xff] %vm821, %v815
  %881 = vst.msk [vmem:[#allocation2 + $0x1d8] sm:$0xff] %vm821, %v816
  %882 = vst.msk [vmem:[#allocation2 + $0x1e0] sm:$0xff] %vm821, %v817
  %883 = vst.msk [vmem:[#allocation2 + $0x1e8] sm:$0xff] %vm821, %v818
  %884 = vst.msk [vmem:[#allocation2 + $0x1f0] sm:$0xff] %vm821, %v819
  %885 = vst.msk [vmem:[#allocation2 + $0x1f8] sm:$0xff] %vm821, %v820
  // Predicated region
  $region18: #{d_net64_forward.9} parent=0 // pred_check
    %p886 = pneg %p15
  $region19: #{d_net64_forward.9} parent=0 // pred_check_branch
    %888 = sbr.rel (%p886) target = $region21
  $region20: #{d_net64_forward.9} parent=0 // pred_region
    %v889 = vld [vmem:[#allocation2] sm:$0xff]
    %v890 = vld [vmem:[#allocation2 + $0x8] sm:$0xff]
    %v891 = vld [vmem:[#allocation2 + $0x10] sm:$0xff]
    %v892 = vld [vmem:[#allocation2 + $0x18] sm:$0xff]
    %v893 = vld [vmem:[#allocation2 + $0x20] sm:$0xff]
    %v894 = vld [vmem:[#allocation2 + $0x28] sm:$0xff]
    %v895 = vld [vmem:[#allocation2 + $0x30] sm:$0xff]
    %v896 = vld [vmem:[#allocation2 + $0x38] sm:$0xff]
    %v897 = vld [vmem:[#allocation2 + $0x40] sm:$0xff]
    %v898 = vld [vmem:[#allocation2 + $0x48] sm:$0xff]
    %v899 = vld [vmem:[#allocation2 + $0x50] sm:$0xff]
    %v900 = vld [vmem:[#allocation2 + $0x58] sm:$0xff]
    %v901 = vld [vmem:[#allocation2 + $0x60] sm:$0xff]
    %v902 = vld [vmem:[#allocation2 + $0x68] sm:$0xff]
    %v903 = vld [vmem:[#allocation2 + $0x70] sm:$0xff]
    %v904 = vld [vmem:[#allocation2 + $0x78] sm:$0xff]
    %v905 = vld [vmem:[#allocation2 + $0x80] sm:$0xff]
    %v906 = vld [vmem:[#allocation2 + $0x88] sm:$0xff]
    %v907 = vld [vmem:[#allocation2 + $0x90] sm:$0xff]
    %v908 = vld [vmem:[#allocation2 + $0x98] sm:$0xff]
    %v909 = vld [vmem:[#allocation2 + $0xa0] sm:$0xff]
    %v910 = vld [vmem:[#allocation2 + $0xa8] sm:$0xff]
    %v911 = vld [vmem:[#allocation2 + $0xb0] sm:$0xff]
    %v912 = vld [vmem:[#allocation2 + $0xb8] sm:$0xff]
    %v913 = vld [vmem:[#allocation2 + $0xc0] sm:$0xff]
    %v914 = vld [vmem:[#allocation2 + $0xc8] sm:$0xff]
    %v915 = vld [vmem:[#allocation2 + $0xd0] sm:$0xff]
    %v916 = vld [vmem:[#allocation2 + $0xd8] sm:$0xff]
    %v917 = vld [vmem:[#allocation2 + $0xe0] sm:$0xff]
    %v918 = vld [vmem:[#allocation2 + $0xe8] sm:$0xff]
    %v919 = vld [vmem:[#allocation2 + $0xf0] sm:$0xff]
    %v920 = vld [vmem:[#allocation2 + $0xf8] sm:$0xff]
    %v921 = vld [vmem:[#allocation2 + $0x100] sm:$0xff]
    %v922 = vld [vmem:[#allocation2 + $0x108] sm:$0xff]
    %v923 = vld [vmem:[#allocation2 + $0x110] sm:$0xff]
    %v924 = vld [vmem:[#allocation2 + $0x118] sm:$0xff]
    %v925 = vld [vmem:[#allocation2 + $0x120] sm:$0xff]
    %v926 = vld [vmem:[#allocation2 + $0x128] sm:$0xff]
    %v927 = vld [vmem:[#allocation2 + $0x130] sm:$0xff]
    %v928 = vld [vmem:[#allocation2 + $0x138] sm:$0xff]
    %v929 = vld [vmem:[#allocation2 + $0x140] sm:$0xff]
    %v930 = vld [vmem:[#allocation2 + $0x148] sm:$0xff]
    %v931 = vld [vmem:[#allocation2 + $0x150] sm:$0xff]
    %v932 = vld [vmem:[#allocation2 + $0x158] sm:$0xff]
    %v933 = vld [vmem:[#allocation2 + $0x160] sm:$0xff]
    %v934 = vld [vmem:[#allocation2 + $0x168] sm:$0xff]
    %v935 = vld [vmem:[#allocation2 + $0x170] sm:$0xff]
    %v936 = vld [vmem:[#allocation2 + $0x178] sm:$0xff]
    %v937 = vld [vmem:[#allocation2 + $0x180] sm:$0xff]
    %v938 = vld [vmem:[#allocation2 + $0x188] sm:$0xff]
    %v939 = vld [vmem:[#allocation2 + $0x190] sm:$0xff]
    %v940 = vld [vmem:[#allocation2 + $0x198] sm:$0xff]
    %v941 = vld [vmem:[#allocation2 + $0x1a0] sm:$0xff]
    %v942 = vld [vmem:[#allocation2 + $0x1a8] sm:$0xff]
    %v943 = vld [vmem:[#allocation2 + $0x1b0] sm:$0xff]
    %v944 = vld [vmem:[#allocation2 + $0x1b8] sm:$0xff]
    %v945 = vld [vmem:[#allocation2 + $0x1c0] sm:$0xff]
    %v946 = vld [vmem:[#allocation2 + $0x1c8] sm:$0xff]
    %v947 = vld [vmem:[#allocation2 + $0x1d0] sm:$0xff]
    %v948 = vld [vmem:[#allocation2 + $0x1d8] sm:$0xff]
    %v949 = vld [vmem:[#allocation2 + $0x1e0] sm:$0xff]
    %v950 = vld [vmem:[#allocation2 + $0x1e8] sm:$0xff]
    %v951 = vld [vmem:[#allocation2 + $0x1f0] sm:$0xff]
    %v952 = vld [vmem:[#allocation2 + $0x1f8] sm:$0xff]
    %v953 = vld [vmem:[%s2] sm:$0x1]
    %v955 = vlaneseq
    %v956 = vshrl.u32 %v955, 7
    %v957 = vsub.s32 0, %v956
    %v958 = vrot.slane %v953, %v957
    %v960 = vadd.f32 %v889, %v958
    %v961 = vadd.f32 %v890, %v958
    %v962 = vadd.f32 %v891, %v958
    %v963 = vadd.f32 %v892, %v958
    %v964 = vadd.f32 %v893, %v958
    %v965 = vadd.f32 %v894, %v958
    %v966 = vadd.f32 %v895, %v958
    %v967 = vadd.f32 %v896, %v958
    %v968 = vadd.f32 %v897, %v958
    %v969 = vadd.f32 %v898, %v958
    %v970 = vadd.f32 %v899, %v958
    %v971 = vadd.f32 %v900, %v958
    %v972 = vadd.f32 %v901, %v958
    %v973 = vadd.f32 %v902, %v958
    %v974 = vadd.f32 %v903, %v958
    %v975 = vadd.f32 %v904, %v958
    %v976 = vadd.f32 %v905, %v958
    %v977 = vadd.f32 %v906, %v958
    %v978 = vadd.f32 %v907, %v958
    %v979 = vadd.f32 %v908, %v958
    %v980 = vadd.f32 %v909, %v958
    %v981 = vadd.f32 %v910, %v958
    %v982 = vadd.f32 %v911, %v958
    %v983 = vadd.f32 %v912, %v958
    %v984 = vadd.f32 %v913, %v958
    %v985 = vadd.f32 %v914, %v958
    %v986 = vadd.f32 %v915, %v958
    %v987 = vadd.f32 %v916, %v958
    %v988 = vadd.f32 %v917, %v958
    %v989 = vadd.f32 %v918, %v958
    %v990 = vadd.f32 %v919, %v958
    %v991 = vadd.f32 %v920, %v958
    %v992 = vadd.f32 %v921, %v958
    %v993 = vadd.f32 %v922, %v958
    %v994 = vadd.f32 %v923, %v958
    %v995 = vadd.f32 %v924, %v958
    %v996 = vadd.f32 %v925, %v958
    %v997 = vadd.f32 %v926, %v958
    %v998 = vadd.f32 %v927, %v958
    %v999 = vadd.f32 %v928, %v958
    %v1000 = vadd.f32 %v929, %v958
    %v1001 = vadd.f32 %v930, %v958
    %v1002 = vadd.f32 %v931, %v958
    %v1003 = vadd.f32 %v932, %v958
    %v1004 = vadd.f32 %v933, %v958
    %v1005 = vadd.f32 %v934, %v958
    %v1006 = vadd.f32 %v935, %v958
    %v1007 = vadd.f32 %v936, %v958
    %v1008 = vadd.f32 %v937, %v958
    %v1009 = vadd.f32 %v938, %v958
    %v1010 = vadd.f32 %v939, %v958
    %v1011 = vadd.f32 %v940, %v958
    %v1012 = vadd.f32 %v941, %v958
    %v1013 = vadd.f32 %v942, %v958
    %v1014 = vadd.f32 %v943, %v958
    %v1015 = vadd.f32 %v944, %v958
    %v1016 = vadd.f32 %v945, %v958
    %v1017 = vadd.f32 %v946, %v958
    %v1018 = vadd.f32 %v947, %v958
    %v1019 = vadd.f32 %v948, %v958
    %v1020 = vadd.f32 %v949, %v958
    %v1021 = vadd.f32 %v950, %v958
    %v1022 = vadd.f32 %v951, %v958
    %v1023 = vadd.f32 %v952, %v958
    %vm1024 = vcmp.gt.f32.partialorder %v960, 0.0
    %vm1025 = vcmp.gt.f32.partialorder %v961, 0.0
    %vm1026 = vcmp.gt.f32.partialorder %v962, 0.0
    %vm1027 = vcmp.gt.f32.partialorder %v963, 0.0
    %vm1028 = vcmp.gt.f32.partialorder %v964, 0.0
    %vm1029 = vcmp.gt.f32.partialorder %v965, 0.0
    %vm1030 = vcmp.gt.f32.partialorder %v966, 0.0
    %vm1031 = vcmp.gt.f32.partialorder %v967, 0.0
    %vm1032 = vcmp.gt.f32.partialorder %v968, 0.0
    %vm1033 = vcmp.gt.f32.partialorder %v969, 0.0
    %vm1034 = vcmp.gt.f32.partialorder %v970, 0.0
    %vm1035 = vcmp.gt.f32.partialorder %v971, 0.0
    %vm1036 = vcmp.gt.f32.partialorder %v972, 0.0
    %vm1037 = vcmp.gt.f32.partialorder %v973, 0.0
    %vm1038 = vcmp.gt.f32.partialorder %v974, 0.0
    %vm1039 = vcmp.gt.f32.partialorder %v975, 0.0
    %vm1040 = vcmp.gt.f32.partialorder %v976, 0.0
    %vm1041 = vcmp.gt.f32.partialorder %v977, 0.0
    %vm1042 = vcmp.gt.f32.partialorder %v978, 0.0
    %vm1043 = vcmp.gt.f32.partialorder %v979, 0.0
    %vm1044 = vcmp.gt.f32.partialorder %v980, 0.0
    %vm1045 = vcmp.gt.f32.partialorder %v981, 0.0
    %vm1046 = vcmp.gt.f32.partialorder %v982, 0.0
    %vm1047 = vcmp.gt.f32.partialorder %v983, 0.0
    %vm1048 = vcmp.gt.f32.partialorder %v984, 0.0
    %vm1049 = vcmp.gt.f32.partialorder %v985, 0.0
    %vm1050 = vcmp.gt.f32.partialorder %v986, 0.0
    %vm1051 = vcmp.gt.f32.partialorder %v987, 0.0
    %vm1052 = vcmp.gt.f32.partialorder %v988, 0.0
    %vm1053 = vcmp.gt.f32.partialorder %v989, 0.0
    %vm1054 = vcmp.gt.f32.partialorder %v990, 0.0
    %vm1055 = vcmp.gt.f32.partialorder %v991, 0.0
    %vm1056 = vcmp.gt.f32.partialorder %v992, 0.0
    %vm1057 = vcmp.gt.f32.partialorder %v993, 0.0
    %vm1058 = vcmp.gt.f32.partialorder %v994, 0.0
    %vm1059 = vcmp.gt.f32.partialorder %v995, 0.0
    %vm1060 = vcmp.gt.f32.partialorder %v996, 0.0
    %vm1061 = vcmp.gt.f32.partialorder %v997, 0.0
    %vm1062 = vcmp.gt.f32.partialorder %v998, 0.0
    %vm1063 = vcmp.gt.f32.partialorder %v999, 0.0
    %vm1064 = vcmp.gt.f32.partialorder %v1000, 0.0
    %vm1065 = vcmp.gt.f32.partialorder %v1001, 0.0
    %vm1066 = vcmp.gt.f32.partialorder %v1002, 0.0
    %vm1067 = vcmp.gt.f32.partialorder %v1003, 0.0
    %vm1068 = vcmp.gt.f32.partialorder %v1004, 0.0
    %vm1069 = vcmp.gt.f32.partialorder %v1005, 0.0
    %vm1070 = vcmp.gt.f32.partialorder %v1006, 0.0
    %vm1071 = vcmp.gt.f32.partialorder %v1007, 0.0
    %vm1072 = vcmp.gt.f32.partialorder %v1008, 0.0
    %vm1073 = vcmp.gt.f32.partialorder %v1009, 0.0
    %vm1074 = vcmp.gt.f32.partialorder %v1010, 0.0
    %vm1075 = vcmp.gt.f32.partialorder %v1011, 0.0
    %vm1076 = vcmp.gt.f32.partialorder %v1012, 0.0
    %vm1077 = vcmp.gt.f32.partialorder %v1013, 0.0
    %vm1078 = vcmp.gt.f32.partialorder %v1014, 0.0
    %vm1079 = vcmp.gt.f32.partialorder %v1015, 0.0
    %vm1080 = vcmp.gt.f32.partialorder %v1016, 0.0
    %vm1081 = vcmp.gt.f32.partialorder %v1017, 0.0
    %vm1082 = vcmp.gt.f32.partialorder %v1018, 0.0
    %vm1083 = vcmp.gt.f32.partialorder %v1019, 0.0
    %vm1084 = vcmp.gt.f32.partialorder %v1020, 0.0
    %vm1085 = vcmp.gt.f32.partialorder %v1021, 0.0
    %vm1086 = vcmp.gt.f32.partialorder %v1022, 0.0
    %vm1087 = vcmp.gt.f32.partialorder %v1023, 0.0
    %v1088 = vmul.f32 %v960, 0.2
    %v1089 = vmul.f32 %v961, 0.2
    %v1090 = vmul.f32 %v962, 0.2
    %v1091 = vmul.f32 %v963, 0.2
    %v1092 = vmul.f32 %v964, 0.2
    %v1093 = vmul.f32 %v965, 0.2
    %v1094 = vmul.f32 %v966, 0.2
    %v1095 = vmul.f32 %v967, 0.2
    %v1096 = vmul.f32 %v968, 0.2
    %v1097 = vmul.f32 %v969, 0.2
    %v1098 = vmul.f32 %v970, 0.2
    %v1099 = vmul.f32 %v971, 0.2
    %v1100 = vmul.f32 %v972, 0.2
    %v1101 = vmul.f32 %v973, 0.2
    %v1102 = vmul.f32 %v974, 0.2
    %v1103 = vmul.f32 %v975, 0.2
    %v1104 = vmul.f32 %v976, 0.2
    %v1105 = vmul.f32 %v977, 0.2
    %v1106 = vmul.f32 %v978, 0.2
    %v1107 = vmul.f32 %v979, 0.2
    %v1108 = vmul.f32 %v980, 0.2
    %v1109 = vmul.f32 %v981, 0.2
    %v1110 = vmul.f32 %v982, 0.2
    %v1111 = vmul.f32 %v983, 0.2
    %v1112 = vmul.f32 %v984, 0.2
    %v1113 = vmul.f32 %v985, 0.2
    %v1114 = vmul.f32 %v986, 0.2
    %v1115 = vmul.f32 %v987, 0.2
    %v1116 = vmul.f32 %v988, 0.2
    %v1117 = vmul.f32 %v989, 0.2
    %v1118 = vmul.f32 %v990, 0.2
    %v1119 = vmul.f32 %v991, 0.2
    %v1120 = vmul.f32 %v992, 0.2
    %v1121 = vmul.f32 %v993, 0.2
    %v1122 = vmul.f32 %v994, 0.2
    %v1123 = vmul.f32 %v995, 0.2
    %v1124 = vmul.f32 %v996, 0.2
    %v1125 = vmul.f32 %v997, 0.2
    %v1126 = vmul.f32 %v998, 0.2
    %v1127 = vmul.f32 %v999, 0.2
    %v1128 = vmul.f32 %v1000, 0.2
    %v1129 = vmul.f32 %v1001, 0.2
    %v1130 = vmul.f32 %v1002, 0.2
    %v1131 = vmul.f32 %v1003, 0.2
    %v1132 = vmul.f32 %v1004, 0.2
    %v1133 = vmul.f32 %v1005, 0.2
    %v1134 = vmul.f32 %v1006, 0.2
    %v1135 = vmul.f32 %v1007, 0.2
    %v1136 = vmul.f32 %v1008, 0.2
    %v1137 = vmul.f32 %v1009, 0.2
    %v1138 = vmul.f32 %v1010, 0.2
    %v1139 = vmul.f32 %v1011, 0.2
    %v1140 = vmul.f32 %v1012, 0.2
    %v1141 = vmul.f32 %v1013, 0.2
    %v1142 = vmul.f32 %v1014, 0.2
    %v1143 = vmul.f32 %v1015, 0.2
    %v1144 = vmul.f32 %v1016, 0.2
    %v1145 = vmul.f32 %v1017, 0.2
    %v1146 = vmul.f32 %v1018, 0.2
    %v1147 = vmul.f32 %v1019, 0.2
    %v1148 = vmul.f32 %v1020, 0.2
    %v1149 = vmul.f32 %v1021, 0.2
    %v1150 = vmul.f32 %v1022, 0.2
    %v1151 = vmul.f32 %v1023, 0.2
    %v1152 = vsel %vm1024, %v960, %v1088
    %v1153 = vsel %vm1025, %v961, %v1089
    %v1154 = vsel %vm1026, %v962, %v1090
    %v1155 = vsel %vm1027, %v963, %v1091
    %v1156 = vsel %vm1028, %v964, %v1092
    %v1157 = vsel %vm1029, %v965, %v1093
    %v1158 = vsel %vm1030, %v966, %v1094
    %v1159 = vsel %vm1031, %v967, %v1095
    %v1160 = vsel %vm1032, %v968, %v1096
    %v1161 = vsel %vm1033, %v969, %v1097
    %v1162 = vsel %vm1034, %v970, %v1098
    %v1163 = vsel %vm1035, %v971, %v1099
    %v1164 = vsel %vm1036, %v972, %v1100
    %v1165 = vsel %vm1037, %v973, %v1101
    %v1166 = vsel %vm1038, %v974, %v1102
    %v1167 = vsel %vm1039, %v975, %v1103
    %v1168 = vsel %vm1040, %v976, %v1104
    %v1169 = vsel %vm1041, %v977, %v1105
    %v1170 = vsel %vm1042, %v978, %v1106
    %v1171 = vsel %vm1043, %v979, %v1107
    %v1172 = vsel %vm1044, %v980, %v1108
    %v1173 = vsel %vm1045, %v981, %v1109
    %v1174 = vsel %vm1046, %v982, %v1110
    %v1175 = vsel %vm1047, %v983, %v1111
    %v1176 = vsel %vm1048, %v984, %v1112
    %v1177 = vsel %vm1049, %v985, %v1113
    %v1178 = vsel %vm1050, %v986, %v1114
    %v1179 = vsel %vm1051, %v987, %v1115
    %v1180 = vsel %vm1052, %v988, %v1116
    %v1181 = vsel %vm1053, %v989, %v1117
    %v1182 = vsel %vm1054, %v990, %v1118
    %v1183 = vsel %vm1055, %v991, %v1119
    %v1184 = vsel %vm1056, %v992, %v1120
    %v1185 = vsel %vm1057, %v993, %v1121
    %v1186 = vsel %vm1058, %v994, %v1122
    %v1187 = vsel %vm1059, %v995, %v1123
    %v1188 = vsel %vm1060, %v996, %v1124
    %v1189 = vsel %vm1061, %v997, %v1125
    %v1190 = vsel %vm1062, %v998, %v1126
    %v1191 = vsel %vm1063, %v999, %v1127
    %v1192 = vsel %vm1064, %v1000, %v1128
    %v1193 = vsel %vm1065, %v1001, %v1129
    %v1194 = vsel %vm1066, %v1002, %v1130
    %v1195 = vsel %vm1067, %v1003, %v1131
    %v1196 = vsel %vm1068, %v1004, %v1132
    %v1197 = vsel %vm1069, %v1005, %v1133
    %v1198 = vsel %vm1070, %v1006, %v1134
    %v1199 = vsel %vm1071, %v1007, %v1135
    %v1200 = vsel %vm1072, %v1008, %v1136
    %v1201 = vsel %vm1073, %v1009, %v1137
    %v1202 = vsel %vm1074, %v1010, %v1138
    %v1203 = vsel %vm1075, %v1011, %v1139
    %v1204 = vsel %vm1076, %v1012, %v1140
    %v1205 = vsel %vm1077, %v1013, %v1141
    %v1206 = vsel %vm1078, %v1014, %v1142
    %v1207 = vsel %vm1079, %v1015, %v1143
    %v1208 = vsel %vm1080, %v1016, %v1144
    %v1209 = vsel %vm1081, %v1017, %v1145
    %v1210 = vsel %vm1082, %v1018, %v1146
    %v1211 = vsel %vm1083, %v1019, %v1147
    %v1212 = vsel %vm1084, %v1020, %v1148
    %v1213 = vsel %vm1085, %v1021, %v1149
    %v1214 = vsel %vm1086, %v1022, %v1150
    %v1215 = vsel %vm1087, %v1023, %v1151
    %v1216 = vpack.c.bf16 %v1153, %v1152
    %v1217 = vpack.c.bf16 %v1155, %v1154
    %v1218 = vpack.c.bf16 %v1157, %v1156
    %v1219 = vpack.c.bf16 %v1159, %v1158
    %v1220 = vpack.c.bf16 %v1161, %v1160
    %v1221 = vpack.c.bf16 %v1163, %v1162
    %v1222 = vpack.c.bf16 %v1165, %v1164
    %v1223 = vpack.c.bf16 %v1167, %v1166
    %v1224 = vpack.c.bf16 %v1169, %v1168
    %v1225 = vpack.c.bf16 %v1171, %v1170
    %v1226 = vpack.c.bf16 %v1173, %v1172
    %v1227 = vpack.c.bf16 %v1175, %v1174
    %v1228 = vpack.c.bf16 %v1177, %v1176
    %v1229 = vpack.c.bf16 %v1179, %v1178
    %v1230 = vpack.c.bf16 %v1181, %v1180
    %v1231 = vpack.c.bf16 %v1183, %v1182
    %v1232 = vpack.c.bf16 %v1185, %v1184
    %v1233 = vpack.c.bf16 %v1187, %v1186
    %v1234 = vpack.c.bf16 %v1189, %v1188
    %v1235 = vpack.c.bf16 %v1191, %v1190
    %v1236 = vpack.c.bf16 %v1193, %v1192
    %v1237 = vpack.c.bf16 %v1195, %v1194
    %v1238 = vpack.c.bf16 %v1197, %v1196
    %v1239 = vpack.c.bf16 %v1199, %v1198
    %v1240 = vpack.c.bf16 %v1201, %v1200
    %v1241 = vpack.c.bf16 %v1203, %v1202
    %v1242 = vpack.c.bf16 %v1205, %v1204
    %v1243 = vpack.c.bf16 %v1207, %v1206
    %v1244 = vpack.c.bf16 %v1209, %v1208
    %v1245 = vpack.c.bf16 %v1211, %v1210
    %v1246 = vpack.c.bf16 %v1213, %v1212
    %v1247 = vpack.c.bf16 %v1215, %v1214
    %v1280 = vunpack.c.l.b16 %v1216
    %v1281 = vunpack.c.h.b16 %v1216
    %v1282 = vunpack.c.l.b16 %v1217
    %v1283 = vunpack.c.h.b16 %v1217
    %v1284 = vunpack.c.l.b16 %v1218
    %v1285 = vunpack.c.h.b16 %v1218
    %v1286 = vunpack.c.l.b16 %v1219
    %v1287 = vunpack.c.h.b16 %v1219
    %v1288 = vunpack.c.l.b16 %v1220
    %v1289 = vunpack.c.h.b16 %v1220
    %v1290 = vunpack.c.l.b16 %v1221
    %v1291 = vunpack.c.h.b16 %v1221
    %v1292 = vunpack.c.l.b16 %v1222
    %v1293 = vunpack.c.h.b16 %v1222
    %v1294 = vunpack.c.l.b16 %v1223
    %v1295 = vunpack.c.h.b16 %v1223
    %v1296 = vunpack.c.l.b16 %v1224
    %v1297 = vunpack.c.h.b16 %v1224
    %v1298 = vunpack.c.l.b16 %v1225
    %v1299 = vunpack.c.h.b16 %v1225
    %v1300 = vunpack.c.l.b16 %v1226
    %v1301 = vunpack.c.h.b16 %v1226
    %v1302 = vunpack.c.l.b16 %v1227
    %v1303 = vunpack.c.h.b16 %v1227
    %v1304 = vunpack.c.l.b16 %v1228
    %v1305 = vunpack.c.h.b16 %v1228
    %v1306 = vunpack.c.l.b16 %v1229
    %v1307 = vunpack.c.h.b16 %v1229
    %v1308 = vunpack.c.l.b16 %v1230
    %v1309 = vunpack.c.h.b16 %v1230
    %v1310 = vunpack.c.l.b16 %v1231
    %v1311 = vunpack.c.h.b16 %v1231
    %v1312 = vunpack.c.l.b16 %v1232
    %v1313 = vunpack.c.h.b16 %v1232
    %v1314 = vunpack.c.l.b16 %v1233
    %v1315 = vunpack.c.h.b16 %v1233
    %v1316 = vunpack.c.l.b16 %v1234
    %v1317 = vunpack.c.h.b16 %v1234
    %v1318 = vunpack.c.l.b16 %v1235
    %v1319 = vunpack.c.h.b16 %v1235
    %v1320 = vunpack.c.l.b16 %v1236
    %v1321 = vunpack.c.h.b16 %v1236
    %v1322 = vunpack.c.l.b16 %v1237
    %v1323 = vunpack.c.h.b16 %v1237
    %v1324 = vunpack.c.l.b16 %v1238
    %v1325 = vunpack.c.h.b16 %v1238
    %v1326 = vunpack.c.l.b16 %v1239
    %v1327 = vunpack.c.h.b16 %v1239
    %v1328 = vunpack.c.l.b16 %v1240
    %v1329 = vunpack.c.h.b16 %v1240
    %v1330 = vunpack.c.l.b16 %v1241
    %v1331 = vunpack.c.h.b16 %v1241
    %v1332 = vunpack.c.l.b16 %v1242
    %v1333 = vunpack.c.h.b16 %v1242
    %v1334 = vunpack.c.l.b16 %v1243
    %v1335 = vunpack.c.h.b16 %v1243
    %v1336 = vunpack.c.l.b16 %v1244
    %v1337 = vunpack.c.h.b16 %v1244
    %v1338 = vunpack.c.l.b16 %v1245
    %v1339 = vunpack.c.h.b16 %v1245
    %v1340 = vunpack.c.l.b16 %v1246
    %v1341 = vunpack.c.h.b16 %v1246
    %v1342 = vunpack.c.l.b16 %v1247
    %v1343 = vunpack.c.h.b16 %v1247
    %v1344 = vpack.c.b16 %v1280, %v1280
    %v1345 = vpack.c.b16 %v1281, %v1281
    %v1346 = vpack.c.b16 %v1282, %v1282
    %v1347 = vpack.c.b16 %v1283, %v1283
    %v1348 = vpack.c.b16 %v1284, %v1284
    %v1349 = vpack.c.b16 %v1285, %v1285
    %v1350 = vpack.c.b16 %v1286, %v1286
    %v1351 = vpack.c.b16 %v1287, %v1287
    %v1352 = vpack.c.b16 %v1288, %v1288
    %v1353 = vpack.c.b16 %v1289, %v1289
    %v1354 = vpack.c.b16 %v1290, %v1290
    %v1355 = vpack.c.b16 %v1291, %v1291
    %v1356 = vpack.c.b16 %v1292, %v1292
    %v1357 = vpack.c.b16 %v1293, %v1293
    %v1358 = vpack.c.b16 %v1294, %v1294
    %v1359 = vpack.c.b16 %v1295, %v1295
    %v1360 = vpack.c.b16 %v1296, %v1296
    %v1361 = vpack.c.b16 %v1297, %v1297
    %v1362 = vpack.c.b16 %v1298, %v1298
    %v1363 = vpack.c.b16 %v1299, %v1299
    %v1364 = vpack.c.b16 %v1300, %v1300
    %v1365 = vpack.c.b16 %v1301, %v1301
    %v1366 = vpack.c.b16 %v1302, %v1302
    %v1367 = vpack.c.b16 %v1303, %v1303
    %v1368 = vpack.c.b16 %v1304, %v1304
    %v1369 = vpack.c.b16 %v1305, %v1305
    %v1370 = vpack.c.b16 %v1306, %v1306
    %v1371 = vpack.c.b16 %v1307, %v1307
    %v1372 = vpack.c.b16 %v1308, %v1308
    %v1373 = vpack.c.b16 %v1309, %v1309
    %v1374 = vpack.c.b16 %v1310, %v1310
    %v1375 = vpack.c.b16 %v1311, %v1311
    %v1376 = vpack.c.b16 %v1312, %v1312
    %v1377 = vpack.c.b16 %v1313, %v1313
    %v1378 = vpack.c.b16 %v1314, %v1314
    %v1379 = vpack.c.b16 %v1315, %v1315
    %v1380 = vpack.c.b16 %v1316, %v1316
    %v1381 = vpack.c.b16 %v1317, %v1317
    %v1382 = vpack.c.b16 %v1318, %v1318
    %v1383 = vpack.c.b16 %v1319, %v1319
    %v1384 = vpack.c.b16 %v1320, %v1320
    %v1385 = vpack.c.b16 %v1321, %v1321
    %v1386 = vpack.c.b16 %v1322, %v1322
    %v1387 = vpack.c.b16 %v1323, %v1323
    %v1388 = vpack.c.b16 %v1324, %v1324
    %v1389 = vpack.c.b16 %v1325, %v1325
    %v1390 = vpack.c.b16 %v1326, %v1326
    %v1391 = vpack.c.b16 %v1327, %v1327
    %v1392 = vpack.c.b16 %v1328, %v1328
    %v1393 = vpack.c.b16 %v1329, %v1329
    %v1394 = vpack.c.b16 %v1330, %v1330
    %v1395 = vpack.c.b16 %v1331, %v1331
    %v1396 = vpack.c.b16 %v1332, %v1332
    %v1397 = vpack.c.b16 %v1333, %v1333
    %v1398 = vpack.c.b16 %v1334, %v1334
    %v1399 = vpack.c.b16 %v1335, %v1335
    %v1400 = vpack.c.b16 %v1336, %v1336
    %v1401 = vpack.c.b16 %v1337, %v1337
    %v1402 = vpack.c.b16 %v1338, %v1338
    %v1403 = vpack.c.b16 %v1339, %v1339
    %v1404 = vpack.c.b16 %v1340, %v1340
    %v1405 = vpack.c.b16 %v1341, %v1341
    %v1406 = vpack.c.b16 %v1342, %v1342
    %v1407 = vpack.c.b16 %v1343, %v1343
    %vm1472 = vcmask 125952
    %1473 = vst.msk [vmem:[%s3] sm:$0xf] %vm1472, %v1344
    %1474 = vst.msk [vmem:[%s3 + $0x4] sm:$0xf] %vm1472, %v1345
    %1475 = vst.msk [vmem:[%s3 + $0x8] sm:$0xf] %vm1472, %v1346
    %1476 = vst.msk [vmem:[%s3 + $0xc] sm:$0xf] %vm1472, %v1347
    %1477 = vst.msk [vmem:[%s3 + $0x10] sm:$0xf] %vm1472, %v1348
    %1478 = vst.msk [vmem:[%s3 + $0x14] sm:$0xf] %vm1472, %v1349
    %1479 = vst.msk [vmem:[%s3 + $0x18] sm:$0xf] %vm1472, %v1350
    %1480 = vst.msk [vmem:[%s3 + $0x1c] sm:$0xf] %vm1472, %v1351
    %1481 = vst.msk [vmem:[%s3 + $0x20] sm:$0xf] %vm1472, %v1352
    %1482 = vst.msk [vmem:[%s3 + $0x24] sm:$0xf] %vm1472, %v1353
    %1483 = vst.msk [vmem:[%s3 + $0x28] sm:$0xf] %vm1472, %v1354
    %1484 = vst.msk [vmem:[%s3 + $0x2c] sm:$0xf] %vm1472, %v1355
    %1485 = vst.msk [vmem:[%s3 + $0x30] sm:$0xf] %vm1472, %v1356
    %1486 = vst.msk [vmem:[%s3 + $0x34] sm:$0xf] %vm1472, %v1357
    %1487 = vst.msk [vmem:[%s3 + $0x38] sm:$0xf] %vm1472, %v1358
    %1488 = vst.msk [vmem:[%s3 + $0x3c] sm:$0xf] %vm1472, %v1359
    %1489 = vst.msk [vmem:[%s3 + $0x40] sm:$0xf] %vm1472, %v1360
    %1490 = vst.msk [vmem:[%s3 + $0x44] sm:$0xf] %vm1472, %v1361
    %1491 = vst.msk [vmem:[%s3 + $0x48] sm:$0xf] %vm1472, %v1362
    %1492 = vst.msk [vmem:[%s3 + $0x4c] sm:$0xf] %vm1472, %v1363
    %1493 = vst.msk [vmem:[%s3 + $0x50] sm:$0xf] %vm1472, %v1364
    %1494 = vst.msk [vmem:[%s3 + $0x54] sm:$0xf] %vm1472, %v1365
    %1495 = vst.msk [vmem:[%s3 + $0x58] sm:$0xf] %vm1472, %v1366
    %1496 = vst.msk [vmem:[%s3 + $0x5c] sm:$0xf] %vm1472, %v1367
    %1497 = vst.msk [vmem:[%s3 + $0x60] sm:$0xf] %vm1472, %v1368
    %1498 = vst.msk [vmem:[%s3 + $0x64] sm:$0xf] %vm1472, %v1369
    %1499 = vst.msk [vmem:[%s3 + $0x68] sm:$0xf] %vm1472, %v1370
    %1500 = vst.msk [vmem:[%s3 + $0x6c] sm:$0xf] %vm1472, %v1371
    %1501 = vst.msk [vmem:[%s3 + $0x70] sm:$0xf] %vm1472, %v1372
    %1502 = vst.msk [vmem:[%s3 + $0x74] sm:$0xf] %vm1472, %v1373
    %1503 = vst.msk [vmem:[%s3 + $0x78] sm:$0xf] %vm1472, %v1374
    %1504 = vst.msk [vmem:[%s3 + $0x7c] sm:$0xf] %vm1472, %v1375
    %1505 = vst.msk [vmem:[%s3 + $0x80] sm:$0xf] %vm1472, %v1376
    %1506 = vst.msk [vmem:[%s3 + $0x84] sm:$0xf] %vm1472, %v1377
    %1507 = vst.msk [vmem:[%s3 + $0x88] sm:$0xf] %vm1472, %v1378
    %1508 = vst.msk [vmem:[%s3 + $0x8c] sm:$0xf] %vm1472, %v1379
    %1509 = vst.msk [vmem:[%s3 + $0x90] sm:$0xf] %vm1472, %v1380
    %1510 = vst.msk [vmem:[%s3 + $0x94] sm:$0xf] %vm1472, %v1381
    %1511 = vst.msk [vmem:[%s3 + $0x98] sm:$0xf] %vm1472, %v1382
    %1512 = vst.msk [vmem:[%s3 + $0x9c] sm:$0xf] %vm1472, %v1383
    %1513 = vst.msk [vmem:[%s3 + $0xa0] sm:$0xf] %vm1472, %v1384
    %1514 = vst.msk [vmem:[%s3 + $0xa4] sm:$0xf] %vm1472, %v1385
    %1515 = vst.msk [vmem:[%s3 + $0xa8] sm:$0xf] %vm1472, %v1386
    %1516 = vst.msk [vmem:[%s3 + $0xac] sm:$0xf] %vm1472, %v1387
    %1517 = vst.msk [vmem:[%s3 + $0xb0] sm:$0xf] %vm1472, %v1388
    %1518 = vst.msk [vmem:[%s3 + $0xb4] sm:$0xf] %vm1472, %v1389
    %1519 = vst.msk [vmem:[%s3 + $0xb8] sm:$0xf] %vm1472, %v1390
    %1520 = vst.msk [vmem:[%s3 + $0xbc] sm:$0xf] %vm1472, %v1391
    %1521 = vst.msk [vmem:[%s3 + $0xc0] sm:$0xf] %vm1472, %v1392
    %1522 = vst.msk [vmem:[%s3 + $0xc4] sm:$0xf] %vm1472, %v1393
    %1523 = vst.msk [vmem:[%s3 + $0xc8] sm:$0xf] %vm1472, %v1394
    %1524 = vst.msk [vmem:[%s3 + $0xcc] sm:$0xf] %vm1472, %v1395
    %1525 = vst.msk [vmem:[%s3 + $0xd0] sm:$0xf] %vm1472, %v1396
    %1526 = vst.msk [vmem:[%s3 + $0xd4] sm:$0xf] %vm1472, %v1397
    %1527 = vst.msk [vmem:[%s3 + $0xd8] sm:$0xf] %vm1472, %v1398
    %1528 = vst.msk [vmem:[%s3 + $0xdc] sm:$0xf] %vm1472, %v1399
    %1529 = vst.msk [vmem:[%s3 + $0xe0] sm:$0xf] %vm1472, %v1400
    %1530 = vst.msk [vmem:[%s3 + $0xe4] sm:$0xf] %vm1472, %v1401
    %1531 = vst.msk [vmem:[%s3 + $0xe8] sm:$0xf] %vm1472, %v1402
    %1532 = vst.msk [vmem:[%s3 + $0xec] sm:$0xf] %vm1472, %v1403
    %1533 = vst.msk [vmem:[%s3 + $0xf0] sm:$0xf] %vm1472, %v1404
    %1534 = vst.msk [vmem:[%s3 + $0xf4] sm:$0xf] %vm1472, %v1405
    %1535 = vst.msk [vmem:[%s3 + $0xf8] sm:$0xf] %vm1472, %v1406
    %1536 = vst.msk [vmem:[%s3 + $0xfc] sm:$0xf] %vm1472, %v1407
  $region21: #{d_net64_forward.9} parent=0 // pred_fallthru
    _
  // Predicated region
  $region22: #{d_net64_forward.9} parent=0 // pred_check
    _
  $region23: #{d_net64_forward.9} parent=0 // pred_check_branch
    %1538 = sbr.rel (0) target = $region25
  $region24: #{d_net64_forward.9} parent=0 // pred_region
    _
  $region25: #{d_net64_forward.9} parent=0 // pred_fallthru
    _
  // Predicated region
  $region26: #{d_net64_forward.9} parent=0 // pred_check
    _
  $region27: #{d_net64_forward.9} parent=0 // pred_check_branch
    %1540 = sbr.rel (0) target = $region29
  $region28: #{d_net64_forward.9} parent=0 // pred_region
    _
  $region29: #{d_net64_forward.9} parent=0 // pred_fallthru
    _

// kernel: d_net64_forward.10
$region0: #{d_net64_forward.10}
  #allocation0 [shape = 'u32[]', space=smem, size = 0x4, offset = 0x4, fixed_abs, tag = 'smem constant byte address 0x4 - core index']
  #allocation1 [shape = 'u32[144,128]{1,0:T(1,128)}', space=vmem, size = 0x12000, scoped, tag = 'internal scratch']
  #allocation2 [shape = 'f32[128,32]{1,0:T(8,128)}', space=vmem, size = 0x10000, scoped, tag = 'scratch operand']
  %s0 = inlined_call_operand.vmem [shape: bf16[128,256], index: 0, kind: input, shape index: {}]
  %s1 = inlined_call_operand.vmem [shape: bf16[256,32], index: 1, kind: input, shape index: {}]
  %s2 = inlined_call_operand.vmem [shape: f32[1,32], index: 2, kind: input, shape index: {}]
  %s3 = inlined_call_operand.vmem [shape: bf16[128,32], index: 3, kind: output, shape index: {}]
  %s4 = sld [smem:[#allocation0]]
  $region30: #{d_net64_forward.10} parent=0
    _
  %s6 = ssub.s32 1, %s4
  %s7 = scalar_select 0, %s6, %s4
  // Predicated region
  $region2: #{d_net64_forward.10} parent=0 // pred_check
    _
  $region3: #{d_net64_forward.10} parent=0 // pred_check_branch
    %9 = sbr.rel (0) target = $region5
  $region4: #{d_net64_forward.10} parent=0 // pred_region
    _
  $region5: #{d_net64_forward.10} parent=0 // pred_fallthru
    _
  // Predicated region
  $region6: #{d_net64_forward.10} parent=0 // pred_check
    _
  $region7: #{d_net64_forward.10} parent=0 // pred_check_branch
    %11 = sbr.rel (0) target = $region9
  $region8: #{d_net64_forward.10} parent=0 // pred_region
    _
  $region9: #{d_net64_forward.10} parent=0 // pred_fallthru
    _
  // Predicated region
  $region10: #{d_net64_forward.10} parent=0 // pred_check
    _
  $region11: #{d_net64_forward.10} parent=0 // pred_check_branch
    %13 = sbr.rel (0) target = $region13
  $region12: #{d_net64_forward.10} parent=0 // pred_region
    _
  $region13: #{d_net64_forward.10} parent=0 // pred_fallthru
    _
  %p15 = scmp.eq.s32.totalorder 0, 0
  // Predicated region
  $region14: #{d_net64_forward.10} parent=0 // pred_check
    %p16 = pneg %p15
  $region15: #{d_net64_forward.10} parent=0 // pred_check_branch
    %18 = sbr.rel (%p16) target = $region17
  $region16: #{d_net64_forward.10} parent=0 // pred_region
    %vm19 = vcmask 261120
    %20 = vst.msk [vmem:[#allocation2] sm:$0xff] %vm19, 0.0
    %21 = vst.msk [vmem:[#allocation2 + $0x8] sm:$0xff] %vm19, 0.0
    %22 = vst.msk [vmem:[#allocation2 + $0x10] sm:$0xff] %vm19, 0.0
    %23 = vst.msk [vmem:[#allocation2 + $0x18] sm:$0xff] %vm19, 0.0
    %24 = vst.msk [vmem:[#allocation2 + $0x20] sm:$0xff] %vm19, 0.0
    %25 = vst.msk [vmem:[#allocation2 + $0x28] sm:$0xff] %vm19, 0.0
    %26 = vst.msk [vmem:[#allocation2 + $0x30] sm:$0xff] %vm19, 0.0
    %27 = vst.msk [vmem:[#allocation2 + $0x38] sm:$0xff] %vm19, 0.0
    %28 = vst.msk [vmem:[#allocation2 + $0x40] sm:$0xff] %vm19, 0.0
    %29 = vst.msk [vmem:[#allocation2 + $0x48] sm:$0xff] %vm19, 0.0
    %30 = vst.msk [vmem:[#allocation2 + $0x50] sm:$0xff] %vm19, 0.0
    %31 = vst.msk [vmem:[#allocation2 + $0x58] sm:$0xff] %vm19, 0.0
    %32 = vst.msk [vmem:[#allocation2 + $0x60] sm:$0xff] %vm19, 0.0
    %33 = vst.msk [vmem:[#allocation2 + $0x68] sm:$0xff] %vm19, 0.0
    %34 = vst.msk [vmem:[#allocation2 + $0x70] sm:$0xff] %vm19, 0.0
    %35 = vst.msk [vmem:[#allocation2 + $0x78] sm:$0xff] %vm19, 0.0
  $region17: #{d_net64_forward.10} parent=0 // pred_fallthru
    _
  %v36 = vld [vmem:[#allocation2] sm:$0xff]
  %v37 = vld [vmem:[#allocation2 + $0x8] sm:$0xff]
  %v38 = vld [vmem:[#allocation2 + $0x10] sm:$0xff]
  %v39 = vld [vmem:[#allocation2 + $0x18] sm:$0xff]
  %v40 = vld [vmem:[#allocation2 + $0x20] sm:$0xff]
  %v41 = vld [vmem:[#allocation2 + $0x28] sm:$0xff]
  %v42 = vld [vmem:[#allocation2 + $0x30] sm:$0xff]
  %v43 = vld [vmem:[#allocation2 + $0x38] sm:$0xff]
  %v44 = vld [vmem:[#allocation2 + $0x40] sm:$0xff]
  %v45 = vld [vmem:[#allocation2 + $0x48] sm:$0xff]
  %v46 = vld [vmem:[#allocation2 + $0x50] sm:$0xff]
  %v47 = vld [vmem:[#allocation2 + $0x58] sm:$0xff]
  %v48 = vld [vmem:[#allocation2 + $0x60] sm:$0xff]
  %v49 = vld [vmem:[#allocation2 + $0x68] sm:$0xff]
  %v50 = vld [vmem:[#allocation2 + $0x70] sm:$0xff]
  %v51 = vld [vmem:[#allocation2 + $0x78] sm:$0xff]
  %v52 = vld [vmem:[%s0] sm:$0xff]
  %v53 = vld [vmem:[%s0 + $0x8] sm:$0xff]
  %v54 = vld [vmem:[%s0 + $0x10] sm:$0xff]
  %v55 = vld [vmem:[%s0 + $0x18] sm:$0xff]
  %v56 = vld [vmem:[%s0 + $0x20] sm:$0xff]
  %v57 = vld [vmem:[%s0 + $0x28] sm:$0xff]
  %v58 = vld [vmem:[%s0 + $0x30] sm:$0xff]
  %v59 = vld [vmem:[%s0 + $0x38] sm:$0xff]
  %v60 = vld [vmem:[%s0 + $0x40] sm:$0xff]
  %v61 = vld [vmem:[%s0 + $0x48] sm:$0xff]
  %v62 = vld [vmem:[%s0 + $0x50] sm:$0xff]
  %v63 = vld [vmem:[%s0 + $0x58] sm:$0xff]
  %v64 = vld [vmem:[%s0 + $0x60] sm:$0xff]
  %v65 = vld [vmem:[%s0 + $0x68] sm:$0xff]
  %v66 = vld [vmem:[%s0 + $0x70] sm:$0xff]
  %v67 = vld [vmem:[%s0 + $0x78] sm:$0xff]
  %v68 = vld [vmem:[%s1] sm:$0xf]
  %v69 = vld [vmem:[%s1 + $0x4] sm:$0xf]
  %v70 = vld [vmem:[%s1 + $0x8] sm:$0xf]
  %v71 = vld [vmem:[%s1 + $0xc] sm:$0xf]
  %v72 = vld [vmem:[%s1 + $0x10] sm:$0xf]
  %v73 = vld [vmem:[%s1 + $0x14] sm:$0xf]
  %v74 = vld [vmem:[%s1 + $0x18] sm:$0xf]
  %v75 = vld [vmem:[%s1 + $0x1c] sm:$0xf]
  %v76 = vld [vmem:[%s1 + $0x20] sm:$0xf]
  %v77 = vld [vmem:[%s1 + $0x24] sm:$0xf]
  %v78 = vld [vmem:[%s1 + $0x28] sm:$0xf]
  %v79 = vld [vmem:[%s1 + $0x2c] sm:$0xf]
  %v80 = vld [vmem:[%s1 + $0x30] sm:$0xf]
  %v81 = vld [vmem:[%s1 + $0x34] sm:$0xf]
  %v82 = vld [vmem:[%s1 + $0x38] sm:$0xf]
  %v83 = vld [vmem:[%s1 + $0x3c] sm:$0xf]
  %v84 = vld [vmem:[%s1 + $0x40] sm:$0xf]
  %v85 = vld [vmem:[%s1 + $0x44] sm:$0xf]
  %v86 = vld [vmem:[%s1 + $0x48] sm:$0xf]
  %v87 = vld [vmem:[%s1 + $0x4c] sm:$0xf]
  %v88 = vld [vmem:[%s1 + $0x50] sm:$0xf]
  %v89 = vld [vmem:[%s1 + $0x54] sm:$0xf]
  %v90 = vld [vmem:[%s1 + $0x58] sm:$0xf]
  %v91 = vld [vmem:[%s1 + $0x5c] sm:$0xf]
  %v92 = vld [vmem:[%s1 + $0x60] sm:$0xf]
  %v93 = vld [vmem:[%s1 + $0x64] sm:$0xf]
  %v94 = vld [vmem:[%s1 + $0x68] sm:$0xf]
  %v95 = vld [vmem:[%s1 + $0x6c] sm:$0xf]
  %v96 = vld [vmem:[%s1 + $0x70] sm:$0xf]
  %v97 = vld [vmem:[%s1 + $0x74] sm:$0xf]
  %v98 = vld [vmem:[%s1 + $0x78] sm:$0xf]
  %v99 = vld [vmem:[%s1 + $0x7c] sm:$0xf]
  %v116 = vunpack.c.l.b16 %v52
  %v117 = vunpack.c.h.b16 %v52
  %v118 = vunpack.c.l.b16 %v53
  %v119 = vunpack.c.h.b16 %v53
  %v120 = vunpack.c.l.b16 %v54
  %v121 = vunpack.c.h.b16 %v54
  %v122 = vunpack.c.l.b16 %v55
  %v123 = vunpack.c.h.b16 %v55
  %v124 = vunpack.c.l.b16 %v56
  %v125 = vunpack.c.h.b16 %v56
  %v126 = vunpack.c.l.b16 %v57
  %v127 = vunpack.c.h.b16 %v57
  %v128 = vunpack.c.l.b16 %v58
  %v129 = vunpack.c.h.b16 %v58
  %v130 = vunpack.c.l.b16 %v59
  %v131 = vunpack.c.h.b16 %v59
  %v132 = vunpack.c.l.b16 %v60
  %v133 = vunpack.c.h.b16 %v60
  %v134 = vunpack.c.l.b16 %v61
  %v135 = vunpack.c.h.b16 %v61
  %v136 = vunpack.c.l.b16 %v62
  %v137 = vunpack.c.h.b16 %v62
  %v138 = vunpack.c.l.b16 %v63
  %v139 = vunpack.c.h.b16 %v63
  %v140 = vunpack.c.l.b16 %v64
  %v141 = vunpack.c.h.b16 %v64
  %v142 = vunpack.c.l.b16 %v65
  %v143 = vunpack.c.h.b16 %v65
  %v144 = vunpack.c.l.b16 %v66
  %v145 = vunpack.c.h.b16 %v66
  %v146 = vunpack.c.l.b16 %v67
  %v147 = vunpack.c.h.b16 %v67
  %v148 = vpack.c.b16 %v118, %v116
  %v149 = vpack.c.b16 %v119, %v117
  %v150 = vpack.c.b16 %v122, %v120
  %v151 = vpack.c.b16 %v123, %v121
  %v152 = vpack.c.b16 %v126, %v124
  %v153 = vpack.c.b16 %v127, %v125
  %v154 = vpack.c.b16 %v130, %v128
  %v155 = vpack.c.b16 %v131, %v129
  %v156 = vpack.c.b16 %v134, %v132
  %v157 = vpack.c.b16 %v135, %v133
  %v158 = vpack.c.b16 %v138, %v136
  %v159 = vpack.c.b16 %v139, %v137
  %v160 = vpack.c.b16 %v142, %v140
  %v161 = vpack.c.b16 %v143, %v141
  %v162 = vpack.c.b16 %v146, %v144
  %v163 = vpack.c.b16 %v147, %v145
  %v212 = vunpack.c.l.b16 %v68
  %v213 = vunpack.c.l.b16 %v69
  %v214 = vunpack.c.l.b16 %v70
  %v215 = vunpack.c.l.b16 %v71
  %v216 = vunpack.c.l.b16 %v72
  %v217 = vunpack.c.l.b16 %v73
  %v218 = vunpack.c.l.b16 %v74
  %v219 = vunpack.c.l.b16 %v75
  %v220 = vunpack.c.l.b16 %v76
  %v221 = vunpack.c.l.b16 %v77
  %v222 = vunpack.c.l.b16 %v78
  %v223 = vunpack.c.l.b16 %v79
  %v224 = vunpack.c.l.b16 %v80
  %v225 = vunpack.c.l.b16 %v81
  %v226 = vunpack.c.l.b16 %v82
  %v227 = vunpack.c.l.b16 %v83
  %v228 = vunpack.c.l.b16 %v84
  %v229 = vunpack.c.l.b16 %v85
  %v230 = vunpack.c.l.b16 %v86
  %v231 = vunpack.c.l.b16 %v87
  %v232 = vunpack.c.l.b16 %v88
  %v233 = vunpack.c.l.b16 %v89
  %v234 = vunpack.c.l.b16 %v90
  %v235 = vunpack.c.l.b16 %v91
  %v236 = vunpack.c.l.b16 %v92
  %v237 = vunpack.c.l.b16 %v93
  %v238 = vunpack.c.l.b16 %v94
  %v239 = vunpack.c.l.b16 %v95
  %v240 = vunpack.c.l.b16 %v96
  %v241 = vunpack.c.l.b16 %v97
  %v242 = vunpack.c.l.b16 %v98
  %v243 = vunpack.c.l.b16 %v99
  %v244 = vpack.c.b16 %v213, %v212
  %v245 = vpack.c.b16 %v215, %v214
  %v246 = vpack.c.b16 %v217, %v216
  %v247 = vpack.c.b16 %v219, %v218
  %v248 = vpack.c.b16 %v221, %v220
  %v249 = vpack.c.b16 %v223, %v222
  %v250 = vpack.c.b16 %v225, %v224
  %v251 = vpack.c.b16 %v227, %v226
  %v252 = vpack.c.b16 %v229, %v228
  %v253 = vpack.c.b16 %v231, %v230
  %v254 = vpack.c.b16 %v233, %v232
  %v255 = vpack.c.b16 %v235, %v234
  %v256 = vpack.c.b16 %v237, %v236
  %v257 = vpack.c.b16 %v239, %v238
  %v258 = vpack.c.b16 %v241, %v240
  %v259 = vpack.c.b16 %v243, %v242
  %276 = vmatprep.subr.bf16.mxu0 0
  %277 = vmatpush1.bf16.msra.mxu0 %v251
  %278 = vmatprep.subr.bf16.mxu0 0
  %279 = vmatpush1.bf16.msra.mxu0 %v250
  %280 = vmatprep.subr.bf16.mxu0 0
  %281 = vmatpush1.bf16.msra.mxu0 %v249
  %282 = vmatprep.subr.bf16.mxu0 0
  %283 = vmatpush1.bf16.msra.mxu0 %v248
  %284 = vmatprep.subr.bf16.mxu0 0
  %285 = vmatpush1.bf16.msra.mxu0 %v247
  %286 = vmatprep.subr.bf16.mxu0 0
  %287 = vmatpush1.bf16.msra.mxu0 %v246
  %288 = vmatprep.subr.bf16.mxu0 0
  %289 = vmatpush1.bf16.msra.mxu0 %v245
  %290 = vmatprep.subr.bf16.mxu0 0
  %291 = vmatpush1.bf16.msra.mxu0 %v244
  %292 = vmatprep.subr.bf16.mxu0 0
  %293 = vmatpush2.bf16.msra.mxu0 %v259
  %294 = vmatprep.subr.bf16.mxu0 0
  %295 = vmatpush2.bf16.msra.mxu0 %v258
  %296 = vmatprep.subr.bf16.mxu0 0
  %297 = vmatpush2.bf16.msra.mxu0 %v257
  %298 = vmatprep.subr.bf16.mxu0 0
  %299 = vmatpush2.bf16.msra.mxu0 %v256
  %300 = vmatprep.subr.bf16.mxu0 0
  %301 = vmatpush2.bf16.msra.mxu0 %v255
  %302 = vmatprep.subr.bf16.mxu0 0
  %303 = vmatpush2.bf16.msra.mxu0 %v254
  %304 = vmatprep.subr.bf16.mxu0 0
  %305 = vmatpush2.bf16.msra.mxu0 %v253
  %306 = vmatprep.subr.bf16.mxu0 0
  %307 = vmatpush2.bf16.msra.mxu0 %v252
  %308 = vmatprep.mubr.bf16.mxu0 %v149
  %309 = vmatmul.mubr.bf16.gmra.mxu0 %v148
  %v310 = vpop.f32.mrf.mxu0
  %v311 = vadd.f32 0.0, %v310
  %v312 = vpop.f32.mrf.mxu0
  %v313 = vpop.f32.mrf.mxu0
  %v314 = vadd.f32 0.0, %v313
  %v315 = vpop.f32.mrf.mxu0
  %316 = vmatprep.mubr.bf16.mxu0 %v151
  %317 = vmatmul.mubr.bf16.gmra.mxu0 %v150
  %v318 = vpop.f32.mrf.mxu0
  %v319 = vadd.f32 0.0, %v318
  %v320 = vpop.f32.mrf.mxu0
  %v321 = vpop.f32.mrf.mxu0
  %v322 = vadd.f32 0.0, %v321
  %v323 = vpop.f32.mrf.mxu0
  %324 = vmatprep.mubr.bf16.mxu0 %v153
  %325 = vmatmul.mubr.bf16.gmra.mxu0 %v152
  %v326 = vpop.f32.mrf.mxu0
  %v327 = vadd.f32 0.0, %v326
  %v328 = vpop.f32.mrf.mxu0
  %v329 = vpop.f32.mrf.mxu0
  %v330 = vadd.f32 0.0, %v329
  %v331 = vpop.f32.mrf.mxu0
  %332 = vmatprep.mubr.bf16.mxu0 %v155
  %333 = vmatmul.mubr.bf16.gmra.mxu0 %v154
  %v334 = vpop.f32.mrf.mxu0
  %v335 = vadd.f32 0.0, %v334
  %v336 = vpop.f32.mrf.mxu0
  %v337 = vpop.f32.mrf.mxu0
  %v338 = vadd.f32 0.0, %v337
  %v339 = vpop.f32.mrf.mxu0
  %340 = vmatprep.mubr.bf16.mxu0 %v157
  %341 = vmatmul.mubr.bf16.gmra.mxu0 %v156
  %v342 = vpop.f32.mrf.mxu0
  %v343 = vadd.f32 0.0, %v342
  %v344 = vpop.f32.mrf.mxu0
  %v345 = vpop.f32.mrf.mxu0
  %v346 = vadd.f32 0.0, %v345
  %v347 = vpop.f32.mrf.mxu0
  %348 = vmatprep.mubr.bf16.mxu0 %v159
  %349 = vmatmul.mubr.bf16.gmra.mxu0 %v158
  %v350 = vpop.f32.mrf.mxu0
  %v351 = vadd.f32 0.0, %v350
  %v352 = vpop.f32.mrf.mxu0
  %v353 = vpop.f32.mrf.mxu0
  %v354 = vadd.f32 0.0, %v353
  %v355 = vpop.f32.mrf.mxu0
  %356 = vmatprep.mubr.bf16.mxu0 %v161
  %357 = vmatmul.mubr.bf16.gmra.mxu0 %v160
  %v358 = vpop.f32.mrf.mxu0
  %v359 = vadd.f32 0.0, %v358
  %v360 = vpop.f32.mrf.mxu0
  %v361 = vpop.f32.mrf.mxu0
  %v362 = vadd.f32 0.0, %v361
  %v363 = vpop.f32.mrf.mxu0
  %364 = vmatprep.mubr.bf16.mxu0 %v163
  %365 = vmatmul.mubr.bf16.gmra.mxu0 %v162
  %v366 = vpop.f32.mrf.mxu0
  %v367 = vadd.f32 0.0, %v366
  %v368 = vpop.f32.mrf.mxu0
  %v369 = vpop.f32.mrf.mxu0
  %v370 = vadd.f32 0.0, %v369
  %v371 = vpop.f32.mrf.mxu0
  %372 = vdwg.mxu0
  %v373 = vadd.f32 %v36, %v311
  %v374 = vadd.f32 %v37, %v314
  %v375 = vadd.f32 %v38, %v319
  %v376 = vadd.f32 %v39, %v322
  %v377 = vadd.f32 %v40, %v327
  %v378 = vadd.f32 %v41, %v330
  %v379 = vadd.f32 %v42, %v335
  %v380 = vadd.f32 %v43, %v338
  %v381 = vadd.f32 %v44, %v343
  %v382 = vadd.f32 %v45, %v346
  %v383 = vadd.f32 %v46, %v351
  %v384 = vadd.f32 %v47, %v354
  %v385 = vadd.f32 %v48, %v359
  %v386 = vadd.f32 %v49, %v362
  %v387 = vadd.f32 %v50, %v367
  %v388 = vadd.f32 %v51, %v370
  %vm389 = vcmask 261120
  %390 = vst.msk [vmem:[#allocation2] sm:$0xff] %vm389, %v373
  %391 = vst.msk [vmem:[#allocation2 + $0x8] sm:$0xff] %vm389, %v374
  %392 = vst.msk [vmem:[#allocation2 + $0x10] sm:$0xff] %vm389, %v375
  %393 = vst.msk [vmem:[#allocation2 + $0x18] sm:$0xff] %vm389, %v376
  %394 = vst.msk [vmem:[#allocation2 + $0x20] sm:$0xff] %vm389, %v377
  %395 = vst.msk [vmem:[#allocation2 + $0x28] sm:$0xff] %vm389, %v378
  %396 = vst.msk [vmem:[#allocation2 + $0x30] sm:$0xff] %vm389, %v379
  %397 = vst.msk [vmem:[#allocation2 + $0x38] sm:$0xff] %vm389, %v380
  %398 = vst.msk [vmem:[#allocation2 + $0x40] sm:$0xff] %vm389, %v381
  %399 = vst.msk [vmem:[#allocation2 + $0x48] sm:$0xff] %vm389, %v382
  %400 = vst.msk [vmem:[#allocation2 + $0x50] sm:$0xff] %vm389, %v383
  %401 = vst.msk [vmem:[#allocation2 + $0x58] sm:$0xff] %vm389, %v384
  %402 = vst.msk [vmem:[#allocation2 + $0x60] sm:$0xff] %vm389, %v385
  %403 = vst.msk [vmem:[#allocation2 + $0x68] sm:$0xff] %vm389, %v386
  %404 = vst.msk [vmem:[#allocation2 + $0x70] sm:$0xff] %vm389, %v387
  %405 = vst.msk [vmem:[#allocation2 + $0x78] sm:$0xff] %vm389, %v388
  // Predicated region
  $region18: #{d_net64_forward.10} parent=0 // pred_check
    %p406 = pneg %p15
  $region19: #{d_net64_forward.10} parent=0 // pred_check_branch
    %408 = sbr.rel (%p406) target = $region21
  $region20: #{d_net64_forward.10} parent=0 // pred_region
    %v409 = vld [vmem:[#allocation2] sm:$0xff]
    %v410 = vld [vmem:[#allocation2 + $0x8] sm:$0xff]
    %v411 = vld [vmem:[#allocation2 + $0x10] sm:$0xff]
    %v412 = vld [vmem:[#allocation2 + $0x18] sm:$0xff]
    %v413 = vld [vmem:[#allocation2 + $0x20] sm:$0xff]
    %v414 = vld [vmem:[#allocation2 + $0x28] sm:$0xff]
    %v415 = vld [vmem:[#allocation2 + $0x30] sm:$0xff]
    %v416 = vld [vmem:[#allocation2 + $0x38] sm:$0xff]
    %v417 = vld [vmem:[#allocation2 + $0x40] sm:$0xff]
    %v418 = vld [vmem:[#allocation2 + $0x48] sm:$0xff]
    %v419 = vld [vmem:[#allocation2 + $0x50] sm:$0xff]
    %v420 = vld [vmem:[#allocation2 + $0x58] sm:$0xff]
    %v421 = vld [vmem:[#allocation2 + $0x60] sm:$0xff]
    %v422 = vld [vmem:[#allocation2 + $0x68] sm:$0xff]
    %v423 = vld [vmem:[#allocation2 + $0x70] sm:$0xff]
    %v424 = vld [vmem:[#allocation2 + $0x78] sm:$0xff]
    %v425 = vld [vmem:[%s2] sm:$0x1]
    %v427 = vlaneseq
    %v428 = vshrl.u32 %v427, 7
    %v429 = vsub.s32 0, %v428
    %v430 = vrot.slane %v425, %v429
    %v432 = vadd.f32 %v409, %v430
    %v433 = vadd.f32 %v410, %v430
    %v434 = vadd.f32 %v411, %v430
    %v435 = vadd.f32 %v412, %v430
    %v436 = vadd.f32 %v413, %v430
    %v437 = vadd.f32 %v414, %v430
    %v438 = vadd.f32 %v415, %v430
    %v439 = vadd.f32 %v416, %v430
    %v440 = vadd.f32 %v417, %v430
    %v441 = vadd.f32 %v418, %v430
    %v442 = vadd.f32 %v419, %v430
    %v443 = vadd.f32 %v420, %v430
    %v444 = vadd.f32 %v421, %v430
    %v445 = vadd.f32 %v422, %v430
    %v446 = vadd.f32 %v423, %v430
    %v447 = vadd.f32 %v424, %v430
    %vm448 = vcmp.gt.f32.partialorder %v432, 0.0
    %vm449 = vcmp.gt.f32.partialorder %v433, 0.0
    %vm450 = vcmp.gt.f32.partialorder %v434, 0.0
    %vm451 = vcmp.gt.f32.partialorder %v435, 0.0
    %vm452 = vcmp.gt.f32.partialorder %v436, 0.0
    %vm453 = vcmp.gt.f32.partialorder %v437, 0.0
    %vm454 = vcmp.gt.f32.partialorder %v438, 0.0
    %vm455 = vcmp.gt.f32.partialorder %v439, 0.0
    %vm456 = vcmp.gt.f32.partialorder %v440, 0.0
    %vm457 = vcmp.gt.f32.partialorder %v441, 0.0
    %vm458 = vcmp.gt.f32.partialorder %v442, 0.0
    %vm459 = vcmp.gt.f32.partialorder %v443, 0.0
    %vm460 = vcmp.gt.f32.partialorder %v444, 0.0
    %vm461 = vcmp.gt.f32.partialorder %v445, 0.0
    %vm462 = vcmp.gt.f32.partialorder %v446, 0.0
    %vm463 = vcmp.gt.f32.partialorder %v447, 0.0
    %v464 = vmul.f32 %v432, 0.2
    %v465 = vmul.f32 %v433, 0.2
    %v466 = vmul.f32 %v434, 0.2
    %v467 = vmul.f32 %v435, 0.2
    %v468 = vmul.f32 %v436, 0.2
    %v469 = vmul.f32 %v437, 0.2
    %v470 = vmul.f32 %v438, 0.2
    %v471 = vmul.f32 %v439, 0.2
    %v472 = vmul.f32 %v440, 0.2
    %v473 = vmul.f32 %v441, 0.2
    %v474 = vmul.f32 %v442, 0.2
    %v475 = vmul.f32 %v443, 0.2
    %v476 = vmul.f32 %v444, 0.2
    %v477 = vmul.f32 %v445, 0.2
    %v478 = vmul.f32 %v446, 0.2
    %v479 = vmul.f32 %v447, 0.2
    %v480 = vsel %vm448, %v432, %v464
    %v481 = vsel %vm449, %v433, %v465
    %v482 = vsel %vm450, %v434, %v466
    %v483 = vsel %vm451, %v435, %v467
    %v484 = vsel %vm452, %v436, %v468
    %v485 = vsel %vm453, %v437, %v469
    %v486 = vsel %vm454, %v438, %v470
    %v487 = vsel %vm455, %v439, %v471
    %v488 = vsel %vm456, %v440, %v472
    %v489 = vsel %vm457, %v441, %v473
    %v490 = vsel %vm458, %v442, %v474
    %v491 = vsel %vm459, %v443, %v475
    %v492 = vsel %vm460, %v444, %v476
    %v493 = vsel %vm461, %v445, %v477
    %v494 = vsel %vm462, %v446, %v478
    %v495 = vsel %vm463, %v447, %v479
    %v496 = vpack.c.bf16 %v481, %v480
    %v497 = vpack.c.bf16 %v483, %v482
    %v498 = vpack.c.bf16 %v485, %v484
    %v499 = vpack.c.bf16 %v487, %v486
    %v500 = vpack.c.bf16 %v489, %v488
    %v501 = vpack.c.bf16 %v491, %v490
    %v502 = vpack.c.bf16 %v493, %v492
    %v503 = vpack.c.bf16 %v495, %v494
    %v512 = vunpack.c.l.b16 %v496
    %v513 = vunpack.c.h.b16 %v496
    %v514 = vunpack.c.l.b16 %v497
    %v515 = vunpack.c.h.b16 %v497
    %v516 = vunpack.c.l.b16 %v498
    %v517 = vunpack.c.h.b16 %v498
    %v518 = vunpack.c.l.b16 %v499
    %v519 = vunpack.c.h.b16 %v499
    %v520 = vunpack.c.l.b16 %v500
    %v521 = vunpack.c.h.b16 %v500
    %v522 = vunpack.c.l.b16 %v501
    %v523 = vunpack.c.h.b16 %v501
    %v524 = vunpack.c.l.b16 %v502
    %v525 = vunpack.c.h.b16 %v502
    %v526 = vunpack.c.l.b16 %v503
    %v527 = vunpack.c.h.b16 %v503
    %v528 = vpack.c.b16 %v512, %v512
    %v529 = vpack.c.b16 %v513, %v513
    %v530 = vpack.c.b16 %v514, %v514
    %v531 = vpack.c.b16 %v515, %v515
    %v532 = vpack.c.b16 %v516, %v516
    %v533 = vpack.c.b16 %v517, %v517
    %v534 = vpack.c.b16 %v518, %v518
    %v535 = vpack.c.b16 %v519, %v519
    %v536 = vpack.c.b16 %v520, %v520
    %v537 = vpack.c.b16 %v521, %v521
    %v538 = vpack.c.b16 %v522, %v522
    %v539 = vpack.c.b16 %v523, %v523
    %v540 = vpack.c.b16 %v524, %v524
    %v541 = vpack.c.b16 %v525, %v525
    %v542 = vpack.c.b16 %v526, %v526
    %v543 = vpack.c.b16 %v527, %v527
    %vm560 = vcmask 257024
    %561 = vst.msk [vmem:[%s3] sm:$0xf] %vm560, %v528
    %562 = vst.msk [vmem:[%s3 + $0x4] sm:$0xf] %vm560, %v529
    %563 = vst.msk [vmem:[%s3 + $0x8] sm:$0xf] %vm560, %v530
    %564 = vst.msk [vmem:[%s3 + $0xc] sm:$0xf] %vm560, %v531
    %565 = vst.msk [vmem:[%s3 + $0x10] sm:$0xf] %vm560, %v532
    %566 = vst.msk [vmem:[%s3 + $0x14] sm:$0xf] %vm560, %v533
    %567 = vst.msk [vmem:[%s3 + $0x18] sm:$0xf] %vm560, %v534
    %568 = vst.msk [vmem:[%s3 + $0x1c] sm:$0xf] %vm560, %v535
    %569 = vst.msk [vmem:[%s3 + $0x20] sm:$0xf] %vm560, %v536
    %570 = vst.msk [vmem:[%s3 + $0x24] sm:$0xf] %vm560, %v537
    %571 = vst.msk [vmem:[%s3 + $0x28] sm:$0xf] %vm560, %v538
    %572 = vst.msk [vmem:[%s3 + $0x2c] sm:$0xf] %vm560, %v539
    %573 = vst.msk [vmem:[%s3 + $0x30] sm:$0xf] %vm560, %v540
    %574 = vst.msk [vmem:[%s3 + $0x34] sm:$0xf] %vm560, %v541
    %575 = vst.msk [vmem:[%s3 + $0x38] sm:$0xf] %vm560, %v542
    %576 = vst.msk [vmem:[%s3 + $0x3c] sm:$0xf] %vm560, %v543
  $region21: #{d_net64_forward.10} parent=0 // pred_fallthru
    _
  // Predicated region
  $region22: #{d_net64_forward.10} parent=0 // pred_check
    _
  $region23: #{d_net64_forward.10} parent=0 // pred_check_branch
    %578 = sbr.rel (0) target = $region25
  $region24: #{d_net64_forward.10} parent=0 // pred_region
    _
  $region25: #{d_net64_forward.10} parent=0 // pred_fallthru
    _
  // Predicated region
  $region26: #{d_net64_forward.10} parent=0 // pred_check
    _
  $region27: #{d_net64_forward.10} parent=0 // pred_check_branch
    %580 = sbr.rel (0) target = $region29
  $region28: #{d_net64_forward.10} parent=0 // pred_region
    _
  $region29: #{d_net64_forward.10} parent=0 // pred_fallthru
    _

// kernel: d_net64_forward.11
$region0: #{d_net64_forward.11}
  #allocation0 [shape = 'u32[]', space=smem, size = 0x4, offset = 0x4, fixed_abs, tag = 'smem constant byte address 0x4 - core index']
  #allocation1 [shape = 'u32[144,128]{1,0:T(1,128)}', space=vmem, size = 0x12000, scoped, tag = 'internal scratch']
  #allocation2 [shape = 'f32[128,64]{1,0:T(8,128)}', space=vmem, size = 0x10000, scoped, tag = 'scratch operand']
  %s0 = inlined_call_operand.vmem [shape: bf16[128,288], index: 0, kind: input, shape index: {}]
  %s1 = inlined_call_operand.vmem [shape: bf16[288,64], index: 1, kind: input, shape index: {}]
  %s2 = inlined_call_operand.vmem [shape: f32[1,64], index: 2, kind: input, shape index: {}]
  %s3 = inlined_call_operand.vmem [shape: bf16[128,64], index: 3, kind: output, shape index: {}]
  %s4 = sld [smem:[#allocation0]]
  $region30: #{d_net64_forward.11} parent=0
    _
  %s6 = ssub.s32 1, %s4
  %s7 = scalar_select 0, %s6, %s4
  // Predicated region
  $region2: #{d_net64_forward.11} parent=0 // pred_check
    _
  $region3: #{d_net64_forward.11} parent=0 // pred_check_branch
    %9 = sbr.rel (0) target = $region5
  $region4: #{d_net64_forward.11} parent=0 // pred_region
    _
  $region5: #{d_net64_forward.11} parent=0 // pred_fallthru
    _
  // Predicated region
  $region6: #{d_net64_forward.11} parent=0 // pred_check
    _
  $region7: #{d_net64_forward.11} parent=0 // pred_check_branch
    %11 = sbr.rel (0) target = $region9
  $region8: #{d_net64_forward.11} parent=0 // pred_region
    _
  $region9: #{d_net64_forward.11} parent=0 // pred_fallthru
    _
  // Predicated region
  $region10: #{d_net64_forward.11} parent=0 // pred_check
    _
  $region11: #{d_net64_forward.11} parent=0 // pred_check_branch
    %13 = sbr.rel (0) target = $region13
  $region12: #{d_net64_forward.11} parent=0 // pred_region
    _
  $region13: #{d_net64_forward.11} parent=0 // pred_fallthru
    _
  %p15 = scmp.eq.s32.totalorder 0, 0
  // Predicated region
  $region14: #{d_net64_forward.11} parent=0 // pred_check
    %p16 = pneg %p15
  $region15: #{d_net64_forward.11} parent=0 // pred_check_branch
    %18 = sbr.rel (%p16) target = $region17
  $region16: #{d_net64_forward.11} parent=0 // pred_region
    %vm19 = vcmask 523264
    %20 = vst.msk [vmem:[#allocation2] sm:$0xff] %vm19, 0.0
    %21 = vst.msk [vmem:[#allocation2 + $0x8] sm:$0xff] %vm19, 0.0
    %22 = vst.msk [vmem:[#allocation2 + $0x10] sm:$0xff] %vm19, 0.0
    %23 = vst.msk [vmem:[#allocation2 + $0x18] sm:$0xff] %vm19, 0.0
    %24 = vst.msk [vmem:[#allocation2 + $0x20] sm:$0xff] %vm19, 0.0
    %25 = vst.msk [vmem:[#allocation2 + $0x28] sm:$0xff] %vm19, 0.0
    %26 = vst.msk [vmem:[#allocation2 + $0x30] sm:$0xff] %vm19, 0.0
    %27 = vst.msk [vmem:[#allocation2 + $0x38] sm:$0xff] %vm19, 0.0
    %28 = vst.msk [vmem:[#allocation2 + $0x40] sm:$0xff] %vm19, 0.0
    %29 = vst.msk [vmem:[#allocation2 + $0x48] sm:$0xff] %vm19, 0.0
    %30 = vst.msk [vmem:[#allocation2 + $0x50] sm:$0xff] %vm19, 0.0
    %31 = vst.msk [vmem:[#allocation2 + $0x58] sm:$0xff] %vm19, 0.0
    %32 = vst.msk [vmem:[#allocation2 + $0x60] sm:$0xff] %vm19, 0.0
    %33 = vst.msk [vmem:[#allocation2 + $0x68] sm:$0xff] %vm19, 0.0
    %34 = vst.msk [vmem:[#allocation2 + $0x70] sm:$0xff] %vm19, 0.0
    %35 = vst.msk [vmem:[#allocation2 + $0x78] sm:$0xff] %vm19, 0.0
  $region17: #{d_net64_forward.11} parent=0 // pred_fallthru
    _
  %v36 = vld [vmem:[#allocation2] sm:$0xff]
  %v37 = vld [vmem:[#allocation2 + $0x8] sm:$0xff]
  %v38 = vld [vmem:[#allocation2 + $0x10] sm:$0xff]
  %v39 = vld [vmem:[#allocation2 + $0x18] sm:$0xff]
  %v40 = vld [vmem:[#allocation2 + $0x20] sm:$0xff]
  %v41 = vld [vmem:[#allocation2 + $0x28] sm:$0xff]
  %v42 = vld [vmem:[#allocation2 + $0x30] sm:$0xff]
  %v43 = vld [vmem:[#allocation2 + $0x38] sm:$0xff]
  %v44 = vld [vmem:[#allocation2 + $0x40] sm:$0xff]
  %v45 = vld [vmem:[#allocation2 + $0x48] sm:$0xff]
  %v46 = vld [vmem:[#allocation2 + $0x50] sm:$0xff]
  %v47 = vld [vmem:[#allocation2 + $0x58] sm:$0xff]
  %v48 = vld [vmem:[#allocation2 + $0x60] sm:$0xff]
  %v49 = vld [vmem:[#allocation2 + $0x68] sm:$0xff]
  %v50 = vld [vmem:[#allocation2 + $0x70] sm:$0xff]
  %v51 = vld [vmem:[#allocation2 + $0x78] sm:$0xff]
  %v52 = vld [vmem:[%s0] sm:$0xff]
  %v53 = vld [vmem:[%s0 + $0x8] sm:$0xf]
  %v54 = vld [vmem:[%s0 + $0xc] sm:$0xff]
  %v55 = vld [vmem:[%s0 + $0x14] sm:$0xf]
  %v56 = vld [vmem:[%s0 + $0x18] sm:$0xff]
  %v57 = vld [vmem:[%s0 + $0x20] sm:$0xf]
  %v58 = vld [vmem:[%s0 + $0x24] sm:$0xff]
  %v59 = vld [vmem:[%s0 + $0x2c] sm:$0xf]
  %v60 = vld [vmem:[%s0 + $0x30] sm:$0xff]
  %v61 = vld [vmem:[%s0 + $0x38] sm:$0xf]
  %v62 = vld [vmem:[%s0 + $0x3c] sm:$0xff]
  %v63 = vld [vmem:[%s0 + $0x44] sm:$0xf]
  %v64 = vld [vmem:[%s0 + $0x48] sm:$0xff]
  %v65 = vld [vmem:[%s0 + $0x50] sm:$0xf]
  %v66 = vld [vmem:[%s0 + $0x54] sm:$0xff]
  %v67 = vld [vmem:[%s0 + $0x5c] sm:$0xf]
  %v68 = vld [vmem:[%s0 + $0x60] sm:$0xff]
  %v69 = vld [vmem:[%s0 + $0x68] sm:$0xf]
  %v70 = vld [vmem:[%s0 + $0x6c] sm:$0xff]
  %v71 = vld [vmem:[%s0 + $0x74] sm:$0xf]
  %v72 = vld [vmem:[%s0 + $0x78] sm:$0xff]
  %v73 = vld [vmem:[%s0 + $0x80] sm:$0xf]
  %v74 = vld [vmem:[%s0 + $0x84] sm:$0xff]
  %v75 = vld [vmem:[%s0 + $0x8c] sm:$0xf]
  %v76 = vld [vmem:[%s0 + $0x90] sm:$0xff]
  %v77 = vld [vmem:[%s0 + $0x98] sm:$0xf]
  %v78 = vld [vmem:[%s0 + $0x9c] sm:$0xff]
  %v79 = vld [vmem:[%s0 + $0xa4] sm:$0xf]
  %v80 = vld [vmem:[%s0 + $0xa8] sm:$0xff]
  %v81 = vld [vmem:[%s0 + $0xb0] sm:$0xf]
  %v82 = vld [vmem:[%s0 + $0xb4] sm:$0xff]
  %v83 = vld [vmem:[%s0 + $0xbc] sm:$0xf]
  %v84 = vld [vmem:[%s1] sm:$0xf]
  %v85 = vld [vmem:[%s1 + $0x4] sm:$0xf]
  %v86 = vld [vmem:[%s1 + $0x8] sm:$0xf]
  %v87 = vld [vmem:[%s1 + $0xc] sm:$0xf]
  %v88 = vld [vmem:[%s1 + $0x10] sm:$0xf]
  %v89 = vld [vmem:[%s1 + $0x14] sm:$0xf]
  %v90 = vld [vmem:[%s1 + $0x18] sm:$0xf]
  %v91 = vld [vmem:[%s1 + $0x1c] sm:$0xf]
  %v92 = vld [vmem:[%s1 + $0x20] sm:$0xf]
  %v93 = vld [vmem:[%s1 + $0x24] sm:$0xf]
  %v94 = vld [vmem:[%s1 + $0x28] sm:$0xf]
  %v95 = vld [vmem:[%s1 + $0x2c] sm:$0xf]
  %v96 = vld [vmem:[%s1 + $0x30] sm:$0xf]
  %v97 = vld [vmem:[%s1 + $0x34] sm:$0xf]
  %v98 = vld [vmem:[%s1 + $0x38] sm:$0xf]
  %v99 = vld [vmem:[%s1 + $0x3c] sm:$0xf]
  %v100 = vld [vmem:[%s1 + $0x40] sm:$0xf]
  %v101 = vld [vmem:[%s1 + $0x44] sm:$0xf]
  %v102 = vld [vmem:[%s1 + $0x48] sm:$0xf]
  %v103 = vld [vmem:[%s1 + $0x4c] sm:$0xf]
  %v104 = vld [vmem:[%s1 + $0x50] sm:$0xf]
  %v105 = vld [vmem:[%s1 + $0x54] sm:$0xf]
  %v106 = vld [vmem:[%s1 + $0x58] sm:$0xf]
  %v107 = vld [vmem:[%s1 + $0x5c] sm:$0xf]
  %v108 = vld [vmem:[%s1 + $0x60] sm:$0xf]
  %v109 = vld [vmem:[%s1 + $0x64] sm:$0xf]
  %v110 = vld [vmem:[%s1 + $0x68] sm:$0xf]
  %v111 = vld [vmem:[%s1 + $0x6c] sm:$0xf]
  %v112 = vld [vmem:[%s1 + $0x70] sm:$0xf]
  %v113 = vld [vmem:[%s1 + $0x74] sm:$0xf]
  %v114 = vld [vmem:[%s1 + $0x78] sm:$0xf]
  %v115 = vld [vmem:[%s1 + $0x7c] sm:$0xf]
  %v116 = vld [vmem:[%s1 + $0x80] sm:$0xf]
  %v117 = vld [vmem:[%s1 + $0x84] sm:$0xf]
  %v118 = vld [vmem:[%s1 + $0x88] sm:$0xf]
  %v119 = vld [vmem:[%s1 + $0x8c] sm:$0xf]
  %v152 = vunpack.c.l.b16 %v52
  %v153 = vunpack.c.h.b16 %v52
  %v154 = vunpack.c.l.b16 %v53
  %v155 = vunpack.c.l.b16 %v54
  %v156 = vunpack.c.h.b16 %v54
  %v157 = vunpack.c.l.b16 %v55
  %v158 = vunpack.c.l.b16 %v56
  %v159 = vunpack.c.h.b16 %v56
  %v160 = vunpack.c.l.b16 %v57
  %v161 = vunpack.c.l.b16 %v58
  %v162 = vunpack.c.h.b16 %v58
  %v163 = vunpack.c.l.b16 %v59
  %v164 = vunpack.c.l.b16 %v60
  %v165 = vunpack.c.h.b16 %v60
  %v166 = vunpack.c.l.b16 %v61
  %v167 = vunpack.c.l.b16 %v62
  %v168 = vunpack.c.h.b16 %v62
  %v169 = vunpack.c.l.b16 %v63
  %v170 = vunpack.c.l.b16 %v64
  %v171 = vunpack.c.h.b16 %v64
  %v172 = vunpack.c.l.b16 %v65
  %v173 = vunpack.c.l.b16 %v66
  %v174 = vunpack.c.h.b16 %v66
  %v175 = vunpack.c.l.b16 %v67
  %v176 = vunpack.c.l.b16 %v68
  %v177 = vunpack.c.h.b16 %v68
  %v178 = vunpack.c.l.b16 %v69
  %v179 = vunpack.c.l.b16 %v70
  %v180 = vunpack.c.h.b16 %v70
  %v181 = vunpack.c.l.b16 %v71
  %v182 = vunpack.c.l.b16 %v72
  %v183 = vunpack.c.h.b16 %v72
  %v184 = vunpack.c.l.b16 %v73
  %v185 = vunpack.c.l.b16 %v74
  %v186 = vunpack.c.h.b16 %v74
  %v187 = vunpack.c.l.b16 %v75
  %v188 = vunpack.c.l.b16 %v76
  %v189 = vunpack.c.h.b16 %v76
  %v190 = vunpack.c.l.b16 %v77
  %v191 = vunpack.c.l.b16 %v78
  %v192 = vunpack.c.h.b16 %v78
  %v193 = vunpack.c.l.b16 %v79
  %v194 = vunpack.c.l.b16 %v80
  %v195 = vunpack.c.h.b16 %v80
  %v196 = vunpack.c.l.b16 %v81
  %v197 = vunpack.c.l.b16 %v82
  %v198 = vunpack.c.h.b16 %v82
  %v199 = vunpack.c.l.b16 %v83
  %v200 = vpack.c.b16 %v155, %v152
  %v201 = vpack.c.b16 %v156, %v153
  %v202 = vpack.c.b16 %v157, %v154
  %v203 = vpack.c.b16 %v161, %v158
  %v204 = vpack.c.b16 %v162, %v159
  %v205 = vpack.c.b16 %v163, %v160
  %v206 = vpack.c.b16 %v167, %v164
  %v207 = vpack.c.b16 %v168, %v165
  %v208 = vpack.c.b16 %v169, %v166
  %v209 = vpack.c.b16 %v173, %v170
  %v210 = vpack.c.b16 %v174, %v171
  %v211 = vpack.c.b16 %v175, %v172
  %v212 = vpack.c.b16 %v179, %v176
  %v213 = vpack.c.b16 %v180, %v177
  %v214 = vpack.c.b16 %v181, %v178
  %v215 = vpack.c.b16 %v185, %v182
  %v216 = vpack.c.b16 %v186, %v183
  %v217 = vpack.c.b16 %v187, %v184
  %v218 = vpack.c.b16 %v191, %v188
  %v219 = vpack.c.b16 %v192, %v189
  %v220 = vpack.c.b16 %v193, %v190
  %v221 = vpack.c.b16 %v197, %v194
  %v222 = vpack.c.b16 %v198, %v195
  %v223 = vpack.c.b16 %v199, %v196
  %v276 = vunpack.c.l.b16 %v84
  %v277 = vunpack.c.l.b16 %v85
  %v278 = vunpack.c.l.b16 %v86
  %v279 = vunpack.c.l.b16 %v87
  %v280 = vunpack.c.l.b16 %v88
  %v281 = vunpack.c.l.b16 %v89
  %v282 = vunpack.c.l.b16 %v90
  %v283 = vunpack.c.l.b16 %v91
  %v284 = vunpack.c.l.b16 %v92
  %v285 = vunpack.c.l.b16 %v93
  %v286 = vunpack.c.l.b16 %v94
  %v287 = vunpack.c.l.b16 %v95
  %v288 = vunpack.c.l.b16 %v96
  %v289 = vunpack.c.l.b16 %v97
  %v290 = vunpack.c.l.b16 %v98
  %v291 = vunpack.c.l.b16 %v99
  %v292 = vunpack.c.l.b16 %v100
  %v293 = vunpack.c.l.b16 %v101
  %v294 = vunpack.c.l.b16 %v102
  %v295 = vunpack.c.l.b16 %v103
  %v296 = vunpack.c.l.b16 %v104
  %v297 = vunpack.c.l.b16 %v105
  %v298 = vunpack.c.l.b16 %v106
  %v299 = vunpack.c.l.b16 %v107
  %v300 = vunpack.c.l.b16 %v108
  %v301 = vunpack.c.l.b16 %v109
  %v302 = vunpack.c.l.b16 %v110
  %v303 = vunpack.c.l.b16 %v111
  %v304 = vunpack.c.l.b16 %v112
  %v305 = vunpack.c.l.b16 %v113
  %v306 = vunpack.c.l.b16 %v114
  %v307 = vunpack.c.l.b16 %v115
  %v308 = vunpack.c.l.b16 %v116
  %v309 = vunpack.c.l.b16 %v117
  %v310 = vunpack.c.l.b16 %v118
  %v311 = vunpack.c.l.b16 %v119
  %v312 = vpack.c.b16 %v277, %v276
  %v313 = vpack.c.b16 %v279, %v278
  %v314 = vpack.c.b16 %v281, %v280
  %v315 = vpack.c.b16 %v283, %v282
  %v316 = vpack.c.b16 %v285, %v284
  %v317 = vpack.c.b16 %v287, %v286
  %v318 = vpack.c.b16 %v289, %v288
  %v319 = vpack.c.b16 %v291, %v290
  %v320 = vpack.c.b16 %v293, %v292
  %v321 = vpack.c.b16 %v295, %v294
  %v322 = vpack.c.b16 %v297, %v296
  %v323 = vpack.c.b16 %v299, %v298
  %v324 = vpack.c.b16 %v301, %v300
  %v325 = vpack.c.b16 %v303, %v302
  %v326 = vpack.c.b16 %v305, %v304
  %v327 = vpack.c.b16 %v307, %v306
  %v328 = vpack.c.b16 %v309, %v308
  %v329 = vpack.c.b16 %v311, %v310
  %vm348 = vcmask 261120
  %v350 = vsel %vm348, %v202, 0
  %v353 = vsel %vm348, %v205, 0
  %v356 = vsel %vm348, %v208, 0
  %v359 = vsel %vm348, %v211, 0
  %v362 = vsel %vm348, %v214, 0
  %v365 = vsel %vm348, %v217, 0
  %v368 = vsel %vm348, %v220, 0
  %v371 = vsel %vm348, %v223, 0
  %373 = vmatprep.subr.bf16.mxu0 0
  %374 = vmatpush1.bf16.msra.mxu0 %v319
  %375 = vmatprep.subr.bf16.mxu0 0
  %376 = vmatpush1.bf16.msra.mxu0 %v318
  %377 = vmatprep.subr.bf16.mxu0 0
  %378 = vmatpush1.bf16.msra.mxu0 %v317
  %379 = vmatprep.subr.bf16.mxu0 0
  %380 = vmatpush1.bf16.msra.mxu0 %v316
  %381 = vmatprep.subr.bf16.mxu0 0
  %382 = vmatpush1.bf16.msra.mxu0 %v315
  %383 = vmatprep.subr.bf16.mxu0 0
  %384 = vmatpush1.bf16.msra.mxu0 %v314
  %385 = vmatprep.subr.bf16.mxu0 0
  %386 = vmatpush1.bf16.msra.mxu0 %v313
  %387 = vmatprep.subr.bf16.mxu0 0
  %388 = vmatpush1.bf16.msra.mxu0 %v312
  %389 = vmatprep.subr.bf16.mxu0 0
  %390 = vmatpush2.bf16.msra.mxu0 %v327
  %391 = vmatprep.subr.bf16.mxu0 0
  %392 = vmatpush2.bf16.msra.mxu0 %v326
  %393 = vmatprep.subr.bf16.mxu0 0
  %394 = vmatpush2.bf16.msra.mxu0 %v325
  %395 = vmatprep.subr.bf16.mxu0 0
  %396 = vmatpush2.bf16.msra.mxu0 %v324
  %397 = vmatprep.subr.bf16.mxu0 0
  %398 = vmatpush2.bf16.msra.mxu0 %v323
  %399 = vmatprep.subr.bf16.mxu0 0
  %400 = vmatpush2.bf16.msra.mxu0 %v322
  %401 = vmatprep.subr.bf16.mxu0 0
  %402 = vmatpush2.bf16.msra.mxu0 %v321
  %403 = vmatprep.subr.bf16.mxu0 0
  %404 = vmatpush2.bf16.msra.mxu0 %v320
  %405 = vmatprep.mubr.bf16.mxu0 %v201
  %406 = vmatmul.mubr.bf16.gmra.mxu0 %v200
  %v407 = vpop.f32.mrf.mxu0
  %v408 = vadd.f32 0.0, %v407
  %v409 = vpop.f32.mrf.mxu0
  %v410 = vpop.f32.mrf.mxu0
  %v411 = vadd.f32 0.0, %v410
  %v412 = vpop.f32.mrf.mxu0
  %413 = vmatprep.mubr.bf16.mxu0 %v204
  %414 = vmatmul.mubr.bf16.gmra.mxu0 %v203
  %v415 = vpop.f32.mrf.mxu0
  %v416 = vadd.f32 0.0, %v415
  %v417 = vpop.f32.mrf.mxu0
  %v418 = vpop.f32.mrf.mxu0
  %v419 = vadd.f32 0.0, %v418
  %v420 = vpop.f32.mrf.mxu0
  %421 = vmatprep.mubr.bf16.mxu0 %v207
  %422 = vmatmul.mubr.bf16.gmra.mxu0 %v206
  %v423 = vpop.f32.mrf.mxu0
  %v424 = vadd.f32 0.0, %v423
  %v425 = vpop.f32.mrf.mxu0
  %v426 = vpop.f32.mrf.mxu0
  %v427 = vadd.f32 0.0, %v426
  %v428 = vpop.f32.mrf.mxu0
  %429 = vmatprep.mubr.bf16.mxu0 %v210
  %430 = vmatmul.mubr.bf16.gmra.mxu0 %v209
  %v431 = vpop.f32.mrf.mxu0
  %v432 = vadd.f32 0.0, %v431
  %v433 = vpop.f32.mrf.mxu0
  %v434 = vpop.f32.mrf.mxu0
  %v435 = vadd.f32 0.0, %v434
  %v436 = vpop.f32.mrf.mxu0
  %437 = vmatprep.mubr.bf16.mxu0 %v213
  %438 = vmatmul.mubr.bf16.gmra.mxu0 %v212
  %v439 = vpop.f32.mrf.mxu0
  %v440 = vadd.f32 0.0, %v439
  %v441 = vpop.f32.mrf.mxu0
  %v442 = vpop.f32.mrf.mxu0
  %v443 = vadd.f32 0.0, %v442
  %v444 = vpop.f32.mrf.mxu0
  %445 = vmatprep.mubr.bf16.mxu0 %v216
  %446 = vmatmul.mubr.bf16.gmra.mxu0 %v215
  %v447 = vpop.f32.mrf.mxu0
  %v448 = vadd.f32 0.0, %v447
  %v449 = vpop.f32.mrf.mxu0
  %v450 = vpop.f32.mrf.mxu0
  %v451 = vadd.f32 0.0, %v450
  %v452 = vpop.f32.mrf.mxu0
  %453 = vmatprep.mubr.bf16.mxu0 %v219
  %454 = vmatmul.mubr.bf16.gmra.mxu0 %v218
  %v455 = vpop.f32.mrf.mxu0
  %v456 = vadd.f32 0.0, %v455
  %v457 = vpop.f32.mrf.mxu0
  %v458 = vpop.f32.mrf.mxu0
  %v459 = vadd.f32 0.0, %v458
  %v460 = vpop.f32.mrf.mxu0
  %461 = vmatprep.mubr.bf16.mxu0 %v222
  %462 = vmatmul.mubr.bf16.gmra.mxu0 %v221
  %v463 = vpop.f32.mrf.mxu0
  %v464 = vadd.f32 0.0, %v463
  %v465 = vpop.f32.mrf.mxu0
  %v466 = vpop.f32.mrf.mxu0
  %v467 = vadd.f32 0.0, %v466
  %v468 = vpop.f32.mrf.mxu0
  %469 = vdwg.mxu0
  %470 = vmatprep.subr.bf16.mxu0 0
  %471 = vmatpush1.bf16.msra.mxu0 0
  %472 = vmatprep.subr.bf16.mxu0 0
  %473 = vmatpush1.bf16.msra.mxu0 0
  %474 = vmatprep.subr.bf16.mxu0 0
  %475 = vmatpush1.bf16.msra.mxu0 0
  %476 = vmatprep.subr.bf16.mxu0 0
  %477 = vmatpush1.bf16.msra.mxu0 0
  %478 = vmatprep.subr.bf16.mxu0 0
  %479 = vmatpush1.bf16.msra.mxu0 0
  %480 = vmatprep.subr.bf16.mxu0 0
  %481 = vmatpush1.bf16.msra.mxu0 0
  %482 = vmatprep.subr.bf16.mxu0 0
  %483 = vmatpush1.bf16.msra.mxu0 %v329
  %484 = vmatprep.subr.bf16.mxu0 0
  %485 = vmatpush1.bf16.msra.mxu0 %v328
  %486 = vmatprep.subr.bf16.mxu0 0
  %487 = vmatpush2.bf16.msra.mxu0 0
  %488 = vmatprep.subr.bf16.mxu0 0
  %489 = vmatpush2.bf16.msra.mxu0 0
  %490 = vmatprep.subr.bf16.mxu0 0
  %491 = vmatpush2.bf16.msra.mxu0 0
  %492 = vmatprep.subr.bf16.mxu0 0
  %493 = vmatpush2.bf16.msra.mxu0 0
  %494 = vmatprep.subr.bf16.mxu0 0
  %495 = vmatpush2.bf16.msra.mxu0 0
  %496 = vmatprep.subr.bf16.mxu0 0
  %497 = vmatpush2.bf16.msra.mxu0 0
  %498 = vmatprep.subr.bf16.mxu0 0
  %499 = vmatpush2.bf16.msra.mxu0 0
  %500 = vmatprep.subr.bf16.mxu0 0
  %501 = vmatpush2.bf16.msra.mxu0 0
  %502 = vmatprep.mubr.bf16.mxu0 0
  %503 = vmatmul.mubr.bf16.gmra.mxu0 %v350
  %v504 = vpop.f32.mrf.mxu0
  %v505 = vadd.f32 %v408, %v504
  %v506 = vpop.f32.mrf.mxu0
  %v507 = vpop.f32.mrf.mxu0
  %v508 = vadd.f32 %v411, %v507
  %v509 = vpop.f32.mrf.mxu0
  %510 = vmatprep.mubr.bf16.mxu0 0
  %511 = vmatmul.mubr.bf16.gmra.mxu0 %v353
  %v512 = vpop.f32.mrf.mxu0
  %v513 = vadd.f32 %v416, %v512
  %v514 = vpop.f32.mrf.mxu0
  %v515 = vpop.f32.mrf.mxu0
  %v516 = vadd.f32 %v419, %v515
  %v517 = vpop.f32.mrf.mxu0
  %518 = vmatprep.mubr.bf16.mxu0 0
  %519 = vmatmul.mubr.bf16.gmra.mxu0 %v356
  %v520 = vpop.f32.mrf.mxu0
  %v521 = vadd.f32 %v424, %v520
  %v522 = vpop.f32.mrf.mxu0
  %v523 = vpop.f32.mrf.mxu0
  %v524 = vadd.f32 %v427, %v523
  %v525 = vpop.f32.mrf.mxu0
  %526 = vmatprep.mubr.bf16.mxu0 0
  %527 = vmatmul.mubr.bf16.gmra.mxu0 %v359
  %v528 = vpop.f32.mrf.mxu0
  %v529 = vadd.f32 %v432, %v528
  %v530 = vpop.f32.mrf.mxu0
  %v531 = vpop.f32.mrf.mxu0
  %v532 = vadd.f32 %v435, %v531
  %v533 = vpop.f32.mrf.mxu0
  %534 = vmatprep.mubr.bf16.mxu0 0
  %535 = vmatmul.mubr.bf16.gmra.mxu0 %v362
  %v536 = vpop.f32.mrf.mxu0
  %v537 = vadd.f32 %v440, %v536
  %v538 = vpop.f32.mrf.mxu0
  %v539 = vpop.f32.mrf.mxu0
  %v540 = vadd.f32 %v443, %v539
  %v541 = vpop.f32.mrf.mxu0
  %542 = vmatprep.mubr.bf16.mxu0 0
  %543 = vmatmul.mubr.bf16.gmra.mxu0 %v365
  %v544 = vpop.f32.mrf.mxu0
  %v545 = vadd.f32 %v448, %v544
  %v546 = vpop.f32.mrf.mxu0
  %v547 = vpop.f32.mrf.mxu0
  %v548 = vadd.f32 %v451, %v547
  %v549 = vpop.f32.mrf.mxu0
  %550 = vmatprep.mubr.bf16.mxu0 0
  %551 = vmatmul.mubr.bf16.gmra.mxu0 %v368
  %v552 = vpop.f32.mrf.mxu0
  %v553 = vadd.f32 %v456, %v552
  %v554 = vpop.f32.mrf.mxu0
  %v555 = vpop.f32.mrf.mxu0
  %v556 = vadd.f32 %v459, %v555
  %v557 = vpop.f32.mrf.mxu0
  %558 = vmatprep.mubr.bf16.mxu0 0
  %559 = vmatmul.mubr.bf16.gmra.mxu0 %v371
  %v560 = vpop.f32.mrf.mxu0
  %v561 = vadd.f32 %v464, %v560
  %v562 = vpop.f32.mrf.mxu0
  %v563 = vpop.f32.mrf.mxu0
  %v564 = vadd.f32 %v467, %v563
  %v565 = vpop.f32.mrf.mxu0
  %566 = vdwg.mxu0
  %v567 = vadd.f32 %v36, %v505
  %v568 = vadd.f32 %v37, %v508
  %v569 = vadd.f32 %v38, %v513
  %v570 = vadd.f32 %v39, %v516
  %v571 = vadd.f32 %v40, %v521
  %v572 = vadd.f32 %v41, %v524
  %v573 = vadd.f32 %v42, %v529
  %v574 = vadd.f32 %v43, %v532
  %v575 = vadd.f32 %v44, %v537
  %v576 = vadd.f32 %v45, %v540
  %v577 = vadd.f32 %v46, %v545
  %v578 = vadd.f32 %v47, %v548
  %v579 = vadd.f32 %v48, %v553
  %v580 = vadd.f32 %v49, %v556
  %v581 = vadd.f32 %v50, %v561
  %v582 = vadd.f32 %v51, %v564
  %vm583 = vcmask 523264
  %584 = vst.msk [vmem:[#allocation2] sm:$0xff] %vm583, %v567
  %585 = vst.msk [vmem:[#allocation2 + $0x8] sm:$0xff] %vm583, %v568
  %586 = vst.msk [vmem:[#allocation2 + $0x10] sm:$0xff] %vm583, %v569
  %587 = vst.msk [vmem:[#allocation2 + $0x18] sm:$0xff] %vm583, %v570
  %588 = vst.msk [vmem:[#allocation2 + $0x20] sm:$0xff] %vm583, %v571
  %589 = vst.msk [vmem:[#allocation2 + $0x28] sm:$0xff] %vm583, %v572
  %590 = vst.msk [vmem:[#allocation2 + $0x30] sm:$0xff] %vm583, %v573
  %591 = vst.msk [vmem:[#allocation2 + $0x38] sm:$0xff] %vm583, %v574
  %592 = vst.msk [vmem:[#allocation2 + $0x40] sm:$0xff] %vm583, %v575
  %593 = vst.msk [vmem:[#allocation2 + $0x48] sm:$0xff] %vm583, %v576
  %594 = vst.msk [vmem:[#allocation2 + $0x50] sm:$0xff] %vm583, %v577
  %595 = vst.msk [vmem:[#allocation2 + $0x58] sm:$0xff] %vm583, %v578
  %596 = vst.msk [vmem:[#allocation2 + $0x60] sm:$0xff] %vm583, %v579
  %597 = vst.msk [vmem:[#allocation2 + $0x68] sm:$0xff] %vm583, %v580
  %598 = vst.msk [vmem:[#allocation2 + $0x70] sm:$0xff] %vm583, %v581
  %599 = vst.msk [vmem:[#allocation2 + $0x78] sm:$0xff] %vm583, %v582
  // Predicated region
  $region18: #{d_net64_forward.11} parent=0 // pred_check
    %p600 = pneg %p15
  $region19: #{d_net64_forward.11} parent=0 // pred_check_branch
    %602 = sbr.rel (%p600) target = $region21
  $region20: #{d_net64_forward.11} parent=0 // pred_region
    %v603 = vld [vmem:[#allocation2] sm:$0xff]
    %v604 = vld [vmem:[#allocation2 + $0x8] sm:$0xff]
    %v605 = vld [vmem:[#allocation2 + $0x10] sm:$0xff]
    %v606 = vld [vmem:[#allocation2 + $0x18] sm:$0xff]
    %v607 = vld [vmem:[#allocation2 + $0x20] sm:$0xff]
    %v608 = vld [vmem:[#allocation2 + $0x28] sm:$0xff]
    %v609 = vld [vmem:[#allocation2 + $0x30] sm:$0xff]
    %v610 = vld [vmem:[#allocation2 + $0x38] sm:$0xff]
    %v611 = vld [vmem:[#allocation2 + $0x40] sm:$0xff]
    %v612 = vld [vmem:[#allocation2 + $0x48] sm:$0xff]
    %v613 = vld [vmem:[#allocation2 + $0x50] sm:$0xff]
    %v614 = vld [vmem:[#allocation2 + $0x58] sm:$0xff]
    %v615 = vld [vmem:[#allocation2 + $0x60] sm:$0xff]
    %v616 = vld [vmem:[#allocation2 + $0x68] sm:$0xff]
    %v617 = vld [vmem:[#allocation2 + $0x70] sm:$0xff]
    %v618 = vld [vmem:[#allocation2 + $0x78] sm:$0xff]
    %v619 = vld [vmem:[%s2] sm:$0x1]
    %v621 = vlaneseq
    %v622 = vshrl.u32 %v621, 7
    %v623 = vsub.s32 0, %v622
    %v624 = vrot.slane %v619, %v623
    %v626 = vadd.f32 %v603, %v624
    %v627 = vadd.f32 %v604, %v624
    %v628 = vadd.f32 %v605, %v624
    %v629 = vadd.f32 %v606, %v624
    %v630 = vadd.f32 %v607, %v624
    %v631 = vadd.f32 %v608, %v624
    %v632 = vadd.f32 %v609, %v624
    %v633 = vadd.f32 %v610, %v624
    %v634 = vadd.f32 %v611, %v624
    %v635 = vadd.f32 %v612, %v624
    %v636 = vadd.f32 %v613, %v624
    %v637 = vadd.f32 %v614, %v624
    %v638 = vadd.f32 %v615, %v624
    %v639 = vadd.f32 %v616, %v624
    %v640 = vadd.f32 %v617, %v624
    %v641 = vadd.f32 %v618, %v624
    %vm642 = vcmp.gt.f32.partialorder %v626, 0.0
    %vm643 = vcmp.gt.f32.partialorder %v627, 0.0
    %vm644 = vcmp.gt.f32.partialorder %v628, 0.0
    %vm645 = vcmp.gt.f32.partialorder %v629, 0.0
    %vm646 = vcmp.gt.f32.partialorder %v630, 0.0
    %vm647 = vcmp.gt.f32.partialorder %v631, 0.0
    %vm648 = vcmp.gt.f32.partialorder %v632, 0.0
    %vm649 = vcmp.gt.f32.partialorder %v633, 0.0
    %vm650 = vcmp.gt.f32.partialorder %v634, 0.0
    %vm651 = vcmp.gt.f32.partialorder %v635, 0.0
    %vm652 = vcmp.gt.f32.partialorder %v636, 0.0
    %vm653 = vcmp.gt.f32.partialorder %v637, 0.0
    %vm654 = vcmp.gt.f32.partialorder %v638, 0.0
    %vm655 = vcmp.gt.f32.partialorder %v639, 0.0
    %vm656 = vcmp.gt.f32.partialorder %v640, 0.0
    %vm657 = vcmp.gt.f32.partialorder %v641, 0.0
    %v658 = vmul.f32 %v626, 0.2
    %v659 = vmul.f32 %v627, 0.2
    %v660 = vmul.f32 %v628, 0.2
    %v661 = vmul.f32 %v629, 0.2
    %v662 = vmul.f32 %v630, 0.2
    %v663 = vmul.f32 %v631, 0.2
    %v664 = vmul.f32 %v632, 0.2
    %v665 = vmul.f32 %v633, 0.2
    %v666 = vmul.f32 %v634, 0.2
    %v667 = vmul.f32 %v635, 0.2
    %v668 = vmul.f32 %v636, 0.2
    %v669 = vmul.f32 %v637, 0.2
    %v670 = vmul.f32 %v638, 0.2
    %v671 = vmul.f32 %v639, 0.2
    %v672 = vmul.f32 %v640, 0.2
    %v673 = vmul.f32 %v641, 0.2
    %v674 = vsel %vm642, %v626, %v658
    %v675 = vsel %vm643, %v627, %v659
    %v676 = vsel %vm644, %v628, %v660
    %v677 = vsel %vm645, %v629, %v661
    %v678 = vsel %vm646, %v630, %v662
    %v679 = vsel %vm647, %v631, %v663
    %v680 = vsel %vm648, %v632, %v664
    %v681 = vsel %vm649, %v633, %v665
    %v682 = vsel %vm650, %v634, %v666
    %v683 = vsel %vm651, %v635, %v667
    %v684 = vsel %vm652, %v636, %v668
    %v685 = vsel %vm653, %v637, %v669
    %v686 = vsel %vm654, %v638, %v670
    %v687 = vsel %vm655, %v639, %v671
    %v688 = vsel %vm656, %v640, %v672
    %v689 = vsel %vm657, %v641, %v673
    %v690 = vpack.c.bf16 %v675, %v674
    %v691 = vpack.c.bf16 %v677, %v676
    %v692 = vpack.c.bf16 %v679, %v678
    %v693 = vpack.c.bf16 %v681, %v680
    %v694 = vpack.c.bf16 %v683, %v682
    %v695 = vpack.c.bf16 %v685, %v684
    %v696 = vpack.c.bf16 %v687, %v686
    %v697 = vpack.c.bf16 %v689, %v688
    %v706 = vunpack.c.l.b16 %v690
    %v707 = vunpack.c.h.b16 %v690
    %v708 = vunpack.c.l.b16 %v691
    %v709 = vunpack.c.h.b16 %v691
    %v710 = vunpack.c.l.b16 %v692
    %v711 = vunpack.c.h.b16 %v692
    %v712 = vunpack.c.l.b16 %v693
    %v713 = vunpack.c.h.b16 %v693
    %v714 = vunpack.c.l.b16 %v694
    %v715 = vunpack.c.h.b16 %v694
    %v716 = vunpack.c.l.b16 %v695
    %v717 = vunpack.c.h.b16 %v695
    %v718 = vunpack.c.l.b16 %v696
    %v719 = vunpack.c.h.b16 %v696
    %v720 = vunpack.c.l.b16 %v697
    %v721 = vunpack.c.h.b16 %v697
    %v722 = vpack.c.b16 %v706, %v706
    %v723 = vpack.c.b16 %v707, %v707
    %v724 = vpack.c.b16 %v708, %v708
    %v725 = vpack.c.b16 %v709, %v709
    %v726 = vpack.c.b16 %v710, %v710
    %v727 = vpack.c.b16 %v711, %v711
    %v728 = vpack.c.b16 %v712, %v712
    %v729 = vpack.c.b16 %v713, %v713
    %v730 = vpack.c.b16 %v714, %v714
    %v731 = vpack.c.b16 %v715, %v715
    %v732 = vpack.c.b16 %v716, %v716
    %v733 = vpack.c.b16 %v717, %v717
    %v734 = vpack.c.b16 %v718, %v718
    %v735 = vpack.c.b16 %v719, %v719
    %v736 = vpack.c.b16 %v720, %v720
    %v737 = vpack.c.b16 %v721, %v721
    %vm754 = vcmask 519168
    %755 = vst.msk [vmem:[%s3] sm:$0xf] %vm754, %v722
    %756 = vst.msk [vmem:[%s3 + $0x4] sm:$0xf] %vm754, %v723
    %757 = vst.msk [vmem:[%s3 + $0x8] sm:$0xf] %vm754, %v724
    %758 = vst.msk [vmem:[%s3 + $0xc] sm:$0xf] %vm754, %v725
    %759 = vst.msk [vmem:[%s3 + $0x10] sm:$0xf] %vm754, %v726
    %760 = vst.msk [vmem:[%s3 + $0x14] sm:$0xf] %vm754, %v727
    %761 = vst.msk [vmem:[%s3 + $0x18] sm:$0xf] %vm754, %v728
    %762 = vst.msk [vmem:[%s3 + $0x1c] sm:$0xf] %vm754, %v729
    %763 = vst.msk [vmem:[%s3 + $0x20] sm:$0xf] %vm754, %v730
    %764 = vst.msk [vmem:[%s3 + $0x24] sm:$0xf] %vm754, %v731
    %765 = vst.msk [vmem:[%s3 + $0x28] sm:$0xf] %vm754, %v732
    %766 = vst.msk [vmem:[%s3 + $0x2c] sm:$0xf] %vm754, %v733
    %767 = vst.msk [vmem:[%s3 + $0x30] sm:$0xf] %vm754, %v734
    %768 = vst.msk [vmem:[%s3 + $0x34] sm:$0xf] %vm754, %v735
    %769 = vst.msk [vmem:[%s3 + $0x38] sm:$0xf] %vm754, %v736
    %770 = vst.msk [vmem:[%s3 + $0x3c] sm:$0xf] %vm754, %v737
  $region21: #{d_net64_forward.11} parent=0 // pred_fallthru
    _
  // Predicated region
  $region22: #{d_net64_forward.11} parent=0 // pred_check
    _
  $region23: #{d_net64_forward.11} parent=0 // pred_check_branch
    %772 = sbr.rel (0) target = $region25
  $region24: #{d_net64_forward.11} parent=0 // pred_region
    _
  $region25: #{d_net64_forward.11} parent=0 // pred_fallthru
    _
  // Predicated region
  $region26: #{d_net64_forward.11} parent=0 // pred_check
    _
  $region27: #{d_net64_forward.11} parent=0 // pred_check_branch
    %774 = sbr.rel (0) target = $region29
  $region28: #{d_net64_forward.11} parent=0 // pred_region
    _
  $region29: #{d_net64_forward.11} parent=0 // pred_fallthru
    _

// kernel: d_net64_forward.12
$region0: #{d_net64_forward.12}
  #allocation0 [shape = 'u32[]', space=smem, size = 0x4, offset = 0x4, fixed_abs, tag = 'smem constant byte address 0x4 - core index']
  #allocation1 [shape = 'u32[144,128]{1,0:T(1,128)}', space=vmem, size = 0x12000, scoped, tag = 'internal scratch']
  #allocation2 [shape = 'f32[32,128]{1,0:T(8,128)}', space=vmem, size = 0x4000, scoped, tag = 'scratch operand']
  %s0 = inlined_call_operand.vmem [shape: bf16[32,1024], index: 0, kind: input, shape index: {}]
  %s1 = inlined_call_operand.vmem [shape: bf16[1024,128], index: 1, kind: input, shape index: {}]
  %s2 = inlined_call_operand.vmem [shape: f32[1,128], index: 2, kind: input, shape index: {}]
  %s3 = inlined_call_operand.vmem [shape: bf16[32,128], index: 3, kind: output, shape index: {}]
  %s4 = sld [smem:[#allocation0]]
  $region30: #{d_net64_forward.12} parent=0
    _
  %s6 = ssub.s32 1, %s4
  %s7 = scalar_select 0, %s6, %s4
  // Predicated region
  $region2: #{d_net64_forward.12} parent=0 // pred_check
    _
  $region3: #{d_net64_forward.12} parent=0 // pred_check_branch
    %9 = sbr.rel (0) target = $region5
  $region4: #{d_net64_forward.12} parent=0 // pred_region
    _
  $region5: #{d_net64_forward.12} parent=0 // pred_fallthru
    _
  // Predicated region
  $region6: #{d_net64_forward.12} parent=0 // pred_check
    _
  $region7: #{d_net64_forward.12} parent=0 // pred_check_branch
    %11 = sbr.rel (0) target = $region9
  $region8: #{d_net64_forward.12} parent=0 // pred_region
    _
  $region9: #{d_net64_forward.12} parent=0 // pred_fallthru
    _
  // Predicated region
  $region10: #{d_net64_forward.12} parent=0 // pred_check
    _
  $region11: #{d_net64_forward.12} parent=0 // pred_check_branch
    %13 = sbr.rel (0) target = $region13
  $region12: #{d_net64_forward.12} parent=0 // pred_region
    _
  $region13: #{d_net64_forward.12} parent=0 // pred_fallthru
    _
  %p15 = scmp.eq.s32.totalorder 0, 0
  // Predicated region
  $region14: #{d_net64_forward.12} parent=0 // pred_check
    %p16 = pneg %p15
  $region15: #{d_net64_forward.12} parent=0 // pred_check_branch
    %18 = sbr.rel (%p16) target = $region17
  $region16: #{d_net64_forward.12} parent=0 // pred_region
    %19 = vst [vmem:[#allocation2] sm:$0xff] 0.0
    %20 = vst [vmem:[#allocation2 + $0x8] sm:$0xff] 0.0
    %21 = vst [vmem:[#allocation2 + $0x10] sm:$0xff] 0.0
    %22 = vst [vmem:[#allocation2 + $0x18] sm:$0xff] 0.0
  $region17: #{d_net64_forward.12} parent=0 // pred_fallthru
    _
  %v23 = vld [vmem:[#allocation2] sm:$0xff]
  %v24 = vld [vmem:[#allocation2 + $0x8] sm:$0xff]
  %v25 = vld [vmem:[#allocation2 + $0x10] sm:$0xff]
  %v26 = vld [vmem:[#allocation2 + $0x18] sm:$0xff]
  %v27 = vld [vmem:[%s0] sm:$0xff]
  %v28 = vld [vmem:[%s0 + $0x8] sm:$0xff]
  %v29 = vld [vmem:[%s0 + $0x10] sm:$0xff]
  %v30 = vld [vmem:[%s0 + $0x18] sm:$0xff]
  %v31 = vld [vmem:[%s0 + $0x20] sm:$0xff]
  %v32 = vld [vmem:[%s0 + $0x28] sm:$0xff]
  %v33 = vld [vmem:[%s0 + $0x30] sm:$0xff]
  %v34 = vld [vmem:[%s0 + $0x38] sm:$0xff]
  %v35 = vld [vmem:[%s0 + $0x40] sm:$0xff]
  %v36 = vld [vmem:[%s0 + $0x48] sm:$0xff]
  %v37 = vld [vmem:[%s0 + $0x50] sm:$0xff]
  %v38 = vld [vmem:[%s0 + $0x58] sm:$0xff]
  %v39 = vld [vmem:[%s0 + $0x60] sm:$0xff]
  %v40 = vld [vmem:[%s0 + $0x68] sm:$0xff]
  %v41 = vld [vmem:[%s0 + $0x70] sm:$0xff]
  %v42 = vld [vmem:[%s0 + $0x78] sm:$0xff]
  %v43 = vld [vmem:[%s1] sm:$0xf]
  %v44 = vld [vmem:[%s1 + $0x4] sm:$0xf]
  %v45 = vld [vmem:[%s1 + $0x8] sm:$0xf]
  %v46 = vld [vmem:[%s1 + $0xc] sm:$0xf]
  %v47 = vld [vmem:[%s1 + $0x10] sm:$0xf]
  %v48 = vld [vmem:[%s1 + $0x14] sm:$0xf]
  %v49 = vld [vmem:[%s1 + $0x18] sm:$0xf]
  %v50 = vld [vmem:[%s1 + $0x1c] sm:$0xf]
  %v51 = vld [vmem:[%s1 + $0x20] sm:$0xf]
  %v52 = vld [vmem:[%s1 + $0x24] sm:$0xf]
  %v53 = vld [vmem:[%s1 + $0x28] sm:$0xf]
  %v54 = vld [vmem:[%s1 + $0x2c] sm:$0xf]
  %v55 = vld [vmem:[%s1 + $0x30] sm:$0xf]
  %v56 = vld [vmem:[%s1 + $0x34] sm:$0xf]
  %v57 = vld [vmem:[%s1 + $0x38] sm:$0xf]
  %v58 = vld [vmem:[%s1 + $0x3c] sm:$0xf]
  %v59 = vld [vmem:[%s1 + $0x40] sm:$0xf]
  %v60 = vld [vmem:[%s1 + $0x44] sm:$0xf]
  %v61 = vld [vmem:[%s1 + $0x48] sm:$0xf]
  %v62 = vld [vmem:[%s1 + $0x4c] sm:$0xf]
  %v63 = vld [vmem:[%s1 + $0x50] sm:$0xf]
  %v64 = vld [vmem:[%s1 + $0x54] sm:$0xf]
  %v65 = vld [vmem:[%s1 + $0x58] sm:$0xf]
  %v66 = vld [vmem:[%s1 + $0x5c] sm:$0xf]
  %v67 = vld [vmem:[%s1 + $0x60] sm:$0xf]
  %v68 = vld [vmem:[%s1 + $0x64] sm:$0xf]
  %v69 = vld [vmem:[%s1 + $0x68] sm:$0xf]
  %v70 = vld [vmem:[%s1 + $0x6c] sm:$0xf]
  %v71 = vld [vmem:[%s1 + $0x70] sm:$0xf]
  %v72 = vld [vmem:[%s1 + $0x74] sm:$0xf]
  %v73 = vld [vmem:[%s1 + $0x78] sm:$0xf]
  %v74 = vld [vmem:[%s1 + $0x7c] sm:$0xf]
  %v75 = vld [vmem:[%s1 + $0x80] sm:$0xf]
  %v76 = vld [vmem:[%s1 + $0x84] sm:$0xf]
  %v77 = vld [vmem:[%s1 + $0x88] sm:$0xf]
  %v78 = vld [vmem:[%s1 + $0x8c] sm:$0xf]
  %v79 = vld [vmem:[%s1 + $0x90] sm:$0xf]
  %v80 = vld [vmem:[%s1 + $0x94] sm:$0xf]
  %v81 = vld [vmem:[%s1 + $0x98] sm:$0xf]
  %v82 = vld [vmem:[%s1 + $0x9c] sm:$0xf]
  %v83 = vld [vmem:[%s1 + $0xa0] sm:$0xf]
  %v84 = vld [vmem:[%s1 + $0xa4] sm:$0xf]
  %v85 = vld [vmem:[%s1 + $0xa8] sm:$0xf]
  %v86 = vld [vmem:[%s1 + $0xac] sm:$0xf]
  %v87 = vld [vmem:[%s1 + $0xb0] sm:$0xf]
  %v88 = vld [vmem:[%s1 + $0xb4] sm:$0xf]
  %v89 = vld [vmem:[%s1 + $0xb8] sm:$0xf]
  %v90 = vld [vmem:[%s1 + $0xbc] sm:$0xf]
  %v91 = vld [vmem:[%s1 + $0xc0] sm:$0xf]
  %v92 = vld [vmem:[%s1 + $0xc4] sm:$0xf]
  %v93 = vld [vmem:[%s1 + $0xc8] sm:$0xf]
  %v94 = vld [vmem:[%s1 + $0xcc] sm:$0xf]
  %v95 = vld [vmem:[%s1 + $0xd0] sm:$0xf]
  %v96 = vld [vmem:[%s1 + $0xd4] sm:$0xf]
  %v97 = vld [vmem:[%s1 + $0xd8] sm:$0xf]
  %v98 = vld [vmem:[%s1 + $0xdc] sm:$0xf]
  %v99 = vld [vmem:[%s1 + $0xe0] sm:$0xf]
  %v100 = vld [vmem:[%s1 + $0xe4] sm:$0xf]
  %v101 = vld [vmem:[%s1 + $0xe8] sm:$0xf]
  %v102 = vld [vmem:[%s1 + $0xec] sm:$0xf]
  %v103 = vld [vmem:[%s1 + $0xf0] sm:$0xf]
  %v104 = vld [vmem:[%s1 + $0xf4] sm:$0xf]
  %v105 = vld [vmem:[%s1 + $0xf8] sm:$0xf]
  %v106 = vld [vmem:[%s1 + $0xfc] sm:$0xf]
  %v107 = vld [vmem:[%s1 + $0x100] sm:$0xf]
  %v108 = vld [vmem:[%s1 + $0x104] sm:$0xf]
  %v109 = vld [vmem:[%s1 + $0x108] sm:$0xf]
  %v110 = vld [vmem:[%s1 + $0x10c] sm:$0xf]
  %v111 = vld [vmem:[%s1 + $0x110] sm:$0xf]
  %v112 = vld [vmem:[%s1 + $0x114] sm:$0xf]
  %v113 = vld [vmem:[%s1 + $0x118] sm:$0xf]
  %v114 = vld [vmem:[%s1 + $0x11c] sm:$0xf]
  %v115 = vld [vmem:[%s1 + $0x120] sm:$0xf]
  %v116 = vld [vmem:[%s1 + $0x124] sm:$0xf]
  %v117 = vld [vmem:[%s1 + $0x128] sm:$0xf]
  %v118 = vld [vmem:[%s1 + $0x12c] sm:$0xf]
  %v119 = vld [vmem:[%s1 + $0x130] sm:$0xf]
  %v120 = vld [vmem:[%s1 + $0x134] sm:$0xf]
  %v121 = vld [vmem:[%s1 + $0x138] sm:$0xf]
  %v122 = vld [vmem:[%s1 + $0x13c] sm:$0xf]
  %v123 = vld [vmem:[%s1 + $0x140] sm:$0xf]
  %v124 = vld [vmem:[%s1 + $0x144] sm:$0xf]
  %v125 = vld [vmem:[%s1 + $0x148] sm:$0xf]
  %v126 = vld [vmem:[%s1 + $0x14c] sm:$0xf]
  %v127 = vld [vmem:[%s1 + $0x150] sm:$0xf]
  %v128 = vld [vmem:[%s1 + $0x154] sm:$0xf]
  %v129 = vld [vmem:[%s1 + $0x158] sm:$0xf]
  %v130 = vld [vmem:[%s1 + $0x15c] sm:$0xf]
  %v131 = vld [vmem:[%s1 + $0x160] sm:$0xf]
  %v132 = vld [vmem:[%s1 + $0x164] sm:$0xf]
  %v133 = vld [vmem:[%s1 + $0x168] sm:$0xf]
  %v134 = vld [vmem:[%s1 + $0x16c] sm:$0xf]
  %v135 = vld [vmem:[%s1 + $0x170] sm:$0xf]
  %v136 = vld [vmem:[%s1 + $0x174] sm:$0xf]
  %v137 = vld [vmem:[%s1 + $0x178] sm:$0xf]
  %v138 = vld [vmem:[%s1 + $0x17c] sm:$0xf]
  %v139 = vld [vmem:[%s1 + $0x180] sm:$0xf]
  %v140 = vld [vmem:[%s1 + $0x184] sm:$0xf]
  %v141 = vld [vmem:[%s1 + $0x188] sm:$0xf]
  %v142 = vld [vmem:[%s1 + $0x18c] sm:$0xf]
  %v143 = vld [vmem:[%s1 + $0x190] sm:$0xf]
  %v144 = vld [vmem:[%s1 + $0x194] sm:$0xf]
  %v145 = vld [vmem:[%s1 + $0x198] sm:$0xf]
  %v146 = vld [vmem:[%s1 + $0x19c] sm:$0xf]
  %v147 = vld [vmem:[%s1 + $0x1a0] sm:$0xf]
  %v148 = vld [vmem:[%s1 + $0x1a4] sm:$0xf]
  %v149 = vld [vmem:[%s1 + $0x1a8] sm:$0xf]
  %v150 = vld [vmem:[%s1 + $0x1ac] sm:$0xf]
  %v151 = vld [vmem:[%s1 + $0x1b0] sm:$0xf]
  %v152 = vld [vmem:[%s1 + $0x1b4] sm:$0xf]
  %v153 = vld [vmem:[%s1 + $0x1b8] sm:$0xf]
  %v154 = vld [vmem:[%s1 + $0x1bc] sm:$0xf]
  %v155 = vld [vmem:[%s1 + $0x1c0] sm:$0xf]
  %v156 = vld [vmem:[%s1 + $0x1c4] sm:$0xf]
  %v157 = vld [vmem:[%s1 + $0x1c8] sm:$0xf]
  %v158 = vld [vmem:[%s1 + $0x1cc] sm:$0xf]
  %v159 = vld [vmem:[%s1 + $0x1d0] sm:$0xf]
  %v160 = vld [vmem:[%s1 + $0x1d4] sm:$0xf]
  %v161 = vld [vmem:[%s1 + $0x1d8] sm:$0xf]
  %v162 = vld [vmem:[%s1 + $0x1dc] sm:$0xf]
  %v163 = vld [vmem:[%s1 + $0x1e0] sm:$0xf]
  %v164 = vld [vmem:[%s1 + $0x1e4] sm:$0xf]
  %v165 = vld [vmem:[%s1 + $0x1e8] sm:$0xf]
  %v166 = vld [vmem:[%s1 + $0x1ec] sm:$0xf]
  %v167 = vld [vmem:[%s1 + $0x1f0] sm:$0xf]
  %v168 = vld [vmem:[%s1 + $0x1f4] sm:$0xf]
  %v169 = vld [vmem:[%s1 + $0x1f8] sm:$0xf]
  %v170 = vld [vmem:[%s1 + $0x1fc] sm:$0xf]
  %v187 = vunpack.c.l.b16 %v27
  %v188 = vunpack.c.h.b16 %v27
  %v189 = vunpack.c.l.b16 %v28
  %v190 = vunpack.c.h.b16 %v28
  %v191 = vunpack.c.l.b16 %v29
  %v192 = vunpack.c.h.b16 %v29
  %v193 = vunpack.c.l.b16 %v30
  %v194 = vunpack.c.h.b16 %v30
  %v195 = vunpack.c.l.b16 %v31
  %v196 = vunpack.c.h.b16 %v31
  %v197 = vunpack.c.l.b16 %v32
  %v198 = vunpack.c.h.b16 %v32
  %v199 = vunpack.c.l.b16 %v33
  %v200 = vunpack.c.h.b16 %v33
  %v201 = vunpack.c.l.b16 %v34
  %v202 = vunpack.c.h.b16 %v34
  %v203 = vunpack.c.l.b16 %v35
  %v204 = vunpack.c.h.b16 %v35
  %v205 = vunpack.c.l.b16 %v36
  %v206 = vunpack.c.h.b16 %v36
  %v207 = vunpack.c.l.b16 %v37
  %v208 = vunpack.c.h.b16 %v37
  %v209 = vunpack.c.l.b16 %v38
  %v210 = vunpack.c.h.b16 %v38
  %v211 = vunpack.c.l.b16 %v39
  %v212 = vunpack.c.h.b16 %v39
  %v213 = vunpack.c.l.b16 %v40
  %v214 = vunpack.c.h.b16 %v40
  %v215 = vunpack.c.l.b16 %v41
  %v216 = vunpack.c.h.b16 %v41
  %v217 = vunpack.c.l.b16 %v42
  %v218 = vunpack.c.h.b16 %v42
  %v219 = vpack.c.b16 %v195, %v187
  %v220 = vpack.c.b16 %v196, %v188
  %v221 = vpack.c.b16 %v197, %v189
  %v222 = vpack.c.b16 %v198, %v190
  %v223 = vpack.c.b16 %v199, %v191
  %v224 = vpack.c.b16 %v200, %v192
  %v225 = vpack.c.b16 %v201, %v193
  %v226 = vpack.c.b16 %v202, %v194
  %v227 = vpack.c.b16 %v211, %v203
  %v228 = vpack.c.b16 %v212, %v204
  %v229 = vpack.c.b16 %v213, %v205
  %v230 = vpack.c.b16 %v214, %v206
  %v231 = vpack.c.b16 %v215, %v207
  %v232 = vpack.c.b16 %v216, %v208
  %v233 = vpack.c.b16 %v217, %v209
  %v234 = vpack.c.b16 %v218, %v210
  %v379 = vunpack.c.l.b16 %v43
  %v380 = vunpack.c.l.b16 %v44
  %v381 = vunpack.c.l.b16 %v45
  %v382 = vunpack.c.l.b16 %v46
  %v383 = vunpack.c.l.b16 %v47
  %v384 = vunpack.c.l.b16 %v48
  %v385 = vunpack.c.l.b16 %v49
  %v386 = vunpack.c.l.b16 %v50
  %v387 = vunpack.c.l.b16 %v51
  %v388 = vunpack.c.l.b16 %v52
  %v389 = vunpack.c.l.b16 %v53
  %v390 = vunpack.c.l.b16 %v54
  %v391 = vunpack.c.l.b16 %v55
  %v392 = vunpack.c.l.b16 %v56
  %v393 = vunpack.c.l.b16 %v57
  %v394 = vunpack.c.l.b16 %v58
  %v395 = vunpack.c.l.b16 %v59
  %v396 = vunpack.c.l.b16 %v60
  %v397 = vunpack.c.l.b16 %v61
  %v398 = vunpack.c.l.b16 %v62
  %v399 = vunpack.c.l.b16 %v63
  %v400 = vunpack.c.l.b16 %v64
  %v401 = vunpack.c.l.b16 %v65
  %v402 = vunpack.c.l.b16 %v66
  %v403 = vunpack.c.l.b16 %v67
  %v404 = vunpack.c.l.b16 %v68
  %v405 = vunpack.c.l.b16 %v69
  %v406 = vunpack.c.l.b16 %v70
  %v407 = vunpack.c.l.b16 %v71
  %v408 = vunpack.c.l.b16 %v72
  %v409 = vunpack.c.l.b16 %v73
  %v410 = vunpack.c.l.b16 %v74
  %v411 = vunpack.c.l.b16 %v75
  %v412 = vunpack.c.l.b16 %v76
  %v413 = vunpack.c.l.b16 %v77
  %v414 = vunpack.c.l.b16 %v78
  %v415 = vunpack.c.l.b16 %v79
  %v416 = vunpack.c.l.b16 %v80
  %v417 = vunpack.c.l.b16 %v81
  %v418 = vunpack.c.l.b16 %v82
  %v419 = vunpack.c.l.b16 %v83
  %v420 = vunpack.c.l.b16 %v84
  %v421 = vunpack.c.l.b16 %v85
  %v422 = vunpack.c.l.b16 %v86
  %v423 = vunpack.c.l.b16 %v87
  %v424 = vunpack.c.l.b16 %v88
  %v425 = vunpack.c.l.b16 %v89
  %v426 = vunpack.c.l.b16 %v90
  %v427 = vunpack.c.l.b16 %v91
  %v428 = vunpack.c.l.b16 %v92
  %v429 = vunpack.c.l.b16 %v93
  %v430 = vunpack.c.l.b16 %v94
  %v431 = vunpack.c.l.b16 %v95
  %v432 = vunpack.c.l.b16 %v96
  %v433 = vunpack.c.l.b16 %v97
  %v434 = vunpack.c.l.b16 %v98
  %v435 = vunpack.c.l.b16 %v99
  %v436 = vunpack.c.l.b16 %v100
  %v437 = vunpack.c.l.b16 %v101
  %v438 = vunpack.c.l.b16 %v102
  %v439 = vunpack.c.l.b16 %v103
  %v440 = vunpack.c.l.b16 %v104
  %v441 = vunpack.c.l.b16 %v105
  %v442 = vunpack.c.l.b16 %v106
  %v443 = vunpack.c.l.b16 %v107
  %v444 = vunpack.c.l.b16 %v108
  %v445 = vunpack.c.l.b16 %v109
  %v446 = vunpack.c.l.b16 %v110
  %v447 = vunpack.c.l.b16 %v111
  %v448 = vunpack.c.l.b16 %v112
  %v449 = vunpack.c.l.b16 %v113
  %v450 = vunpack.c.l.b16 %v114
  %v451 = vunpack.c.l.b16 %v115
  %v452 = vunpack.c.l.b16 %v116
  %v453 = vunpack.c.l.b16 %v117
  %v454 = vunpack.c.l.b16 %v118
  %v455 = vunpack.c.l.b16 %v119
  %v456 = vunpack.c.l.b16 %v120
  %v457 = vunpack.c.l.b16 %v121
  %v458 = vunpack.c.l.b16 %v122
  %v459 = vunpack.c.l.b16 %v123
  %v460 = vunpack.c.l.b16 %v124
  %v461 = vunpack.c.l.b16 %v125
  %v462 = vunpack.c.l.b16 %v126
  %v463 = vunpack.c.l.b16 %v127
  %v464 = vunpack.c.l.b16 %v128
  %v465 = vunpack.c.l.b16 %v129
  %v466 = vunpack.c.l.b16 %v130
  %v467 = vunpack.c.l.b16 %v131
  %v468 = vunpack.c.l.b16 %v132
  %v469 = vunpack.c.l.b16 %v133
  %v470 = vunpack.c.l.b16 %v134
  %v471 = vunpack.c.l.b16 %v135
  %v472 = vunpack.c.l.b16 %v136
  %v473 = vunpack.c.l.b16 %v137
  %v474 = vunpack.c.l.b16 %v138
  %v475 = vunpack.c.l.b16 %v139
  %v476 = vunpack.c.l.b16 %v140
  %v477 = vunpack.c.l.b16 %v141
  %v478 = vunpack.c.l.b16 %v142
  %v479 = vunpack.c.l.b16 %v143
  %v480 = vunpack.c.l.b16 %v144
  %v481 = vunpack.c.l.b16 %v145
  %v482 = vunpack.c.l.b16 %v146
  %v483 = vunpack.c.l.b16 %v147
  %v484 = vunpack.c.l.b16 %v148
  %v485 = vunpack.c.l.b16 %v149
  %v486 = vunpack.c.l.b16 %v150
  %v487 = vunpack.c.l.b16 %v151
  %v488 = vunpack.c.l.b16 %v152
  %v489 = vunpack.c.l.b16 %v153
  %v490 = vunpack.c.l.b16 %v154
  %v491 = vunpack.c.l.b16 %v155
  %v492 = vunpack.c.l.b16 %v156
  %v493 = vunpack.c.l.b16 %v157
  %v494 = vunpack.c.l.b16 %v158
  %v495 = vunpack.c.l.b16 %v159
  %v496 = vunpack.c.l.b16 %v160
  %v497 = vunpack.c.l.b16 %v161
  %v498 = vunpack.c.l.b16 %v162
  %v499 = vunpack.c.l.b16 %v163
  %v500 = vunpack.c.l.b16 %v164
  %v501 = vunpack.c.l.b16 %v165
  %v502 = vunpack.c.l.b16 %v166
  %v503 = vunpack.c.l.b16 %v167
  %v504 = vunpack.c.l.b16 %v168
  %v505 = vunpack.c.l.b16 %v169
  %v506 = vunpack.c.l.b16 %v170
  %v507 = vpack.c.b16 %v380, %v379
  %v508 = vpack.c.b16 %v382, %v381
  %v509 = vpack.c.b16 %v384, %v383
  %v510 = vpack.c.b16 %v386, %v385
  %v511 = vpack.c.b16 %v388, %v387
  %v512 = vpack.c.b16 %v390, %v389
  %v513 = vpack.c.b16 %v392, %v391
  %v514 = vpack.c.b16 %v394, %v393
  %v515 = vpack.c.b16 %v396, %v395
  %v516 = vpack.c.b16 %v398, %v397
  %v517 = vpack.c.b16 %v400, %v399
  %v518 = vpack.c.b16 %v402, %v401
  %v519 = vpack.c.b16 %v404, %v403
  %v520 = vpack.c.b16 %v406, %v405
  %v521 = vpack.c.b16 %v408, %v407
  %v522 = vpack.c.b16 %v410, %v409
  %v523 = vpack.c.b16 %v412, %v411
  %v524 = vpack.c.b16 %v414, %v413
  %v525 = vpack.c.b16 %v416, %v415
  %v526 = vpack.c.b16 %v418, %v417
  %v527 = vpack.c.b16 %v420, %v419
  %v528 = vpack.c.b16 %v422, %v421
  %v529 = vpack.c.b16 %v424, %v423
  %v530 = vpack.c.b16 %v426, %v425
  %v531 = vpack.c.b16 %v428, %v427
  %v532 = vpack.c.b16 %v430, %v429
  %v533 = vpack.c.b16 %v432, %v431
  %v534 = vpack.c.b16 %v434, %v433
  %v535 = vpack.c.b16 %v436, %v435
  %v536 = vpack.c.b16 %v438, %v437
  %v537 = vpack.c.b16 %v440, %v439
  %v538 = vpack.c.b16 %v442, %v441
  %v539 = vpack.c.b16 %v444, %v443
  %v540 = vpack.c.b16 %v446, %v445
  %v541 = vpack.c.b16 %v448, %v447
  %v542 = vpack.c.b16 %v450, %v449
  %v543 = vpack.c.b16 %v452, %v451
  %v544 = vpack.c.b16 %v454, %v453
  %v545 = vpack.c.b16 %v456, %v455
  %v546 = vpack.c.b16 %v458, %v457
  %v547 = vpack.c.b16 %v460, %v459
  %v548 = vpack.c.b16 %v462, %v461
  %v549 = vpack.c.b16 %v464, %v463
  %v550 = vpack.c.b16 %v466, %v465
  %v551 = vpack.c.b16 %v468, %v467
  %v552 = vpack.c.b16 %v470, %v469
  %v553 = vpack.c.b16 %v472, %v471
  %v554 = vpack.c.b16 %v474, %v473
  %v555 = vpack.c.b16 %v476, %v475
  %v556 = vpack.c.b16 %v478, %v477
  %v557 = vpack.c.b16 %v480, %v479
  %v558 = vpack.c.b16 %v482, %v481
  %v559 = vpack.c.b16 %v484, %v483
  %v560 = vpack.c.b16 %v486, %v485
  %v561 = vpack.c.b16 %v488, %v487
  %v562 = vpack.c.b16 %v490, %v489
  %v563 = vpack.c.b16 %v492, %v491
  %v564 = vpack.c.b16 %v494, %v493
  %v565 = vpack.c.b16 %v496, %v495
  %v566 = vpack.c.b16 %v498, %v497
  %v567 = vpack.c.b16 %v500, %v499
  %v568 = vpack.c.b16 %v502, %v501
  %v569 = vpack.c.b16 %v504, %v503
  %v570 = vpack.c.b16 %v506, %v505
  %635 = vmatprep.subr.bf16.mxu0 0
  %636 = vmatpush1.bf16.msra.mxu0 %v514
  %637 = vmatprep.subr.bf16.mxu0 0
  %638 = vmatpush1.bf16.msra.mxu0 %v513
  %639 = vmatprep.subr.bf16.mxu0 0
  %640 = vmatpush1.bf16.msra.mxu0 %v512
  %641 = vmatprep.subr.bf16.mxu0 0
  %642 = vmatpush1.bf16.msra.mxu0 %v511
  %643 = vmatprep.subr.bf16.mxu0 0
  %644 = vmatpush1.bf16.msra.mxu0 %v510
  %645 = vmatprep.subr.bf16.mxu0 0
  %646 = vmatpush1.bf16.msra.mxu0 %v509
  %647 = vmatprep.subr.bf16.mxu0 0
  %648 = vmatpush1.bf16.msra.mxu0 %v508
  %649 = vmatprep.subr.bf16.mxu0 0
  %650 = vmatpush1.bf16.msra.mxu0 %v507
  %651 = vmatprep.subr.bf16.mxu0 0
  %652 = vmatpush2.bf16.msra.mxu0 %v522
  %653 = vmatprep.subr.bf16.mxu0 0
  %654 = vmatpush2.bf16.msra.mxu0 %v521
  %655 = vmatprep.subr.bf16.mxu0 0
  %656 = vmatpush2.bf16.msra.mxu0 %v520
  %657 = vmatprep.subr.bf16.mxu0 0
  %658 = vmatpush2.bf16.msra.mxu0 %v519
  %659 = vmatprep.subr.bf16.mxu0 0
  %660 = vmatpush2.bf16.msra.mxu0 %v518
  %661 = vmatprep.subr.bf16.mxu0 0
  %662 = vmatpush2.bf16.msra.mxu0 %v517
  %663 = vmatprep.subr.bf16.mxu0 0
  %664 = vmatpush2.bf16.msra.mxu0 %v516
  %665 = vmatprep.subr.bf16.mxu0 0
  %666 = vmatpush2.bf16.msra.mxu0 %v515
  %667 = vmatprep.mubr.bf16.mxu0 %v220
  %668 = vmatmul.mubr.bf16.gmra.mxu0 %v219
  %v669 = vpop.f32.mrf.mxu0
  %v670 = vadd.f32 0.0, %v669
  %v671 = vpop.f32.mrf.mxu0
  %v672 = vpop.f32.mrf.mxu0
  %v673 = vadd.f32 0.0, %v672
  %v674 = vpop.f32.mrf.mxu0
  %675 = vmatprep.mubr.bf16.mxu0 %v228
  %676 = vmatmul.mubr.bf16.gmra.mxu0 %v227
  %v677 = vpop.f32.mrf.mxu0
  %v678 = vadd.f32 0.0, %v677
  %v679 = vpop.f32.mrf.mxu0
  %v680 = vpop.f32.mrf.mxu0
  %v681 = vadd.f32 0.0, %v680
  %v682 = vpop.f32.mrf.mxu0
  %683 = vdwg.mxu0
  %684 = vmatprep.subr.bf16.mxu0 0
  %685 = vmatpush1.bf16.msra.mxu0 %v530
  %686 = vmatprep.subr.bf16.mxu0 0
  %687 = vmatpush1.bf16.msra.mxu0 %v529
  %688 = vmatprep.subr.bf16.mxu0 0
  %689 = vmatpush1.bf16.msra.mxu0 %v528
  %690 = vmatprep.subr.bf16.mxu0 0
  %691 = vmatpush1.bf16.msra.mxu0 %v527
  %692 = vmatprep.subr.bf16.mxu0 0
  %693 = vmatpush1.bf16.msra.mxu0 %v526
  %694 = vmatprep.subr.bf16.mxu0 0
  %695 = vmatpush1.bf16.msra.mxu0 %v525
  %696 = vmatprep.subr.bf16.mxu0 0
  %697 = vmatpush1.bf16.msra.mxu0 %v524
  %698 = vmatprep.subr.bf16.mxu0 0
  %699 = vmatpush1.bf16.msra.mxu0 %v523
  %700 = vmatprep.subr.bf16.mxu0 0
  %701 = vmatpush2.bf16.msra.mxu0 %v538
  %702 = vmatprep.subr.bf16.mxu0 0
  %703 = vmatpush2.bf16.msra.mxu0 %v537
  %704 = vmatprep.subr.bf16.mxu0 0
  %705 = vmatpush2.bf16.msra.mxu0 %v536
  %706 = vmatprep.subr.bf16.mxu0 0
  %707 = vmatpush2.bf16.msra.mxu0 %v535
  %708 = vmatprep.subr.bf16.mxu0 0
  %709 = vmatpush2.bf16.msra.mxu0 %v534
  %710 = vmatprep.subr.bf16.mxu0 0
  %711 = vmatpush2.bf16.msra.mxu0 %v533
  %712 = vmatprep.subr.bf16.mxu0 0
  %713 = vmatpush2.bf16.msra.mxu0 %v532
  %714 = vmatprep.subr.bf16.mxu0 0
  %715 = vmatpush2.bf16.msra.mxu0 %v531
  %716 = vmatprep.mubr.bf16.mxu0 %v222
  %717 = vmatmul.mubr.bf16.gmra.mxu0 %v221
  %v718 = vpop.f32.mrf.mxu0
  %v719 = vadd.f32 %v670, %v718
  %v720 = vpop.f32.mrf.mxu0
  %v721 = vpop.f32.mrf.mxu0
  %v722 = vadd.f32 %v673, %v721
  %v723 = vpop.f32.mrf.mxu0
  %724 = vmatprep.mubr.bf16.mxu0 %v230
  %725 = vmatmul.mubr.bf16.gmra.mxu0 %v229
  %v726 = vpop.f32.mrf.mxu0
  %v727 = vadd.f32 %v678, %v726
  %v728 = vpop.f32.mrf.mxu0
  %v729 = vpop.f32.mrf.mxu0
  %v730 = vadd.f32 %v681, %v729
  %v731 = vpop.f32.mrf.mxu0
  %732 = vdwg.mxu0
  %733 = vmatprep.subr.bf16.mxu0 0
  %734 = vmatpush1.bf16.msra.mxu0 %v546
  %735 = vmatprep.subr.bf16.mxu0 0
  %736 = vmatpush1.bf16.msra.mxu0 %v545
  %737 = vmatprep.subr.bf16.mxu0 0
  %738 = vmatpush1.bf16.msra.mxu0 %v544
  %739 = vmatprep.subr.bf16.mxu0 0
  %740 = vmatpush1.bf16.msra.mxu0 %v543
  %741 = vmatprep.subr.bf16.mxu0 0
  %742 = vmatpush1.bf16.msra.mxu0 %v542
  %743 = vmatprep.subr.bf16.mxu0 0
  %744 = vmatpush1.bf16.msra.mxu0 %v541
  %745 = vmatprep.subr.bf16.mxu0 0
  %746 = vmatpush1.bf16.msra.mxu0 %v540
  %747 = vmatprep.subr.bf16.mxu0 0
  %748 = vmatpush1.bf16.msra.mxu0 %v539
  %749 = vmatprep.subr.bf16.mxu0 0
  %750 = vmatpush2.bf16.msra.mxu0 %v554
  %751 = vmatprep.subr.bf16.mxu0 0
  %752 = vmatpush2.bf16.msra.mxu0 %v553
  %753 = vmatprep.subr.bf16.mxu0 0
  %754 = vmatpush2.bf16.msra.mxu0 %v552
  %755 = vmatprep.subr.bf16.mxu0 0
  %756 = vmatpush2.bf16.msra.mxu0 %v551
  %757 = vmatprep.subr.bf16.mxu0 0
  %758 = vmatpush2.bf16.msra.mxu0 %v550
  %759 = vmatprep.subr.bf16.mxu0 0
  %760 = vmatpush2.bf16.msra.mxu0 %v549
  %761 = vmatprep.subr.bf16.mxu0 0
  %762 = vmatpush2.bf16.msra.mxu0 %v548
  %763 = vmatprep.subr.bf16.mxu0 0
  %764 = vmatpush2.bf16.msra.mxu0 %v547
  %765 = vmatprep.mubr.bf16.mxu0 %v224
  %766 = vmatmul.mubr.bf16.gmra.mxu0 %v223
  %v767 = vpop.f32.mrf.mxu0
  %v768 = vadd.f32 %v719, %v767
  %v769 = vpop.f32.mrf.mxu0
  %v770 = vpop.f32.mrf.mxu0
  %v771 = vadd.f32 %v722, %v770
  %v772 = vpop.f32.mrf.mxu0
  %773 = vmatprep.mubr.bf16.mxu0 %v232
  %774 = vmatmul.mubr.bf16.gmra.mxu0 %v231
  %v775 = vpop.f32.mrf.mxu0
  %v776 = vadd.f32 %v727, %v775
  %v777 = vpop.f32.mrf.mxu0
  %v778 = vpop.f32.mrf.mxu0
  %v779 = vadd.f32 %v730, %v778
  %v780 = vpop.f32.mrf.mxu0
  %781 = vdwg.mxu0
  %782 = vmatprep.subr.bf16.mxu0 0
  %783 = vmatpush1.bf16.msra.mxu0 %v562
  %784 = vmatprep.subr.bf16.mxu0 0
  %785 = vmatpush1.bf16.msra.mxu0 %v561
  %786 = vmatprep.subr.bf16.mxu0 0
  %787 = vmatpush1.bf16.msra.mxu0 %v560
  %788 = vmatprep.subr.bf16.mxu0 0
  %789 = vmatpush1.bf16.msra.mxu0 %v559
  %790 = vmatprep.subr.bf16.mxu0 0
  %791 = vmatpush1.bf16.msra.mxu0 %v558
  %792 = vmatprep.subr.bf16.mxu0 0
  %793 = vmatpush1.bf16.msra.mxu0 %v557
  %794 = vmatprep.subr.bf16.mxu0 0
  %795 = vmatpush1.bf16.msra.mxu0 %v556
  %796 = vmatprep.subr.bf16.mxu0 0
  %797 = vmatpush1.bf16.msra.mxu0 %v555
  %798 = vmatprep.subr.bf16.mxu0 0
  %799 = vmatpush2.bf16.msra.mxu0 %v570
  %800 = vmatprep.subr.bf16.mxu0 0
  %801 = vmatpush2.bf16.msra.mxu0 %v569
  %802 = vmatprep.subr.bf16.mxu0 0
  %803 = vmatpush2.bf16.msra.mxu0 %v568
  %804 = vmatprep.subr.bf16.mxu0 0
  %805 = vmatpush2.bf16.msra.mxu0 %v567
  %806 = vmatprep.subr.bf16.mxu0 0
  %807 = vmatpush2.bf16.msra.mxu0 %v566
  %808 = vmatprep.subr.bf16.mxu0 0
  %809 = vmatpush2.bf16.msra.mxu0 %v565
  %810 = vmatprep.subr.bf16.mxu0 0
  %811 = vmatpush2.bf16.msra.mxu0 %v564
  %812 = vmatprep.subr.bf16.mxu0 0
  %813 = vmatpush2.bf16.msra.mxu0 %v563
  %814 = vmatprep.mubr.bf16.mxu0 %v226
  %815 = vmatmul.mubr.bf16.gmra.mxu0 %v225
  %v816 = vpop.f32.mrf.mxu0
  %v817 = vadd.f32 %v768, %v816
  %v818 = vpop.f32.mrf.mxu0
  %v819 = vpop.f32.mrf.mxu0
  %v820 = vadd.f32 %v771, %v819
  %v821 = vpop.f32.mrf.mxu0
  %822 = vmatprep.mubr.bf16.mxu0 %v234
  %823 = vmatmul.mubr.bf16.gmra.mxu0 %v233
  %v824 = vpop.f32.mrf.mxu0
  %v825 = vadd.f32 %v776, %v824
  %v826 = vpop.f32.mrf.mxu0
  %v827 = vpop.f32.mrf.mxu0
  %v828 = vadd.f32 %v779, %v827
  %v829 = vpop.f32.mrf.mxu0
  %830 = vdwg.mxu0
  %v831 = vadd.f32 %v23, %v817
  %v832 = vadd.f32 %v24, %v820
  %v833 = vadd.f32 %v25, %v825
  %v834 = vadd.f32 %v26, %v828
  %835 = vst [vmem:[#allocation2] sm:$0xff] %v831
  %836 = vst [vmem:[#allocation2 + $0x8] sm:$0xff] %v832
  %837 = vst [vmem:[#allocation2 + $0x10] sm:$0xff] %v833
  %838 = vst [vmem:[#allocation2 + $0x18] sm:$0xff] %v834
  // Predicated region
  $region18: #{d_net64_forward.12} parent=0 // pred_check
    %p839 = pneg %p15
  $region19: #{d_net64_forward.12} parent=0 // pred_check_branch
    %841 = sbr.rel (%p839) target = $region21
  $region20: #{d_net64_forward.12} parent=0 // pred_region
    %v842 = vld [vmem:[#allocation2] sm:$0xff]
    %v843 = vld [vmem:[#allocation2 + $0x8] sm:$0xff]
    %v844 = vld [vmem:[#allocation2 + $0x10] sm:$0xff]
    %v845 = vld [vmem:[#allocation2 + $0x18] sm:$0xff]
    %v846 = vld [vmem:[%s2] sm:$0x1]
    %v848 = vlaneseq
    %v849 = vshrl.u32 %v848, 7
    %v850 = vsub.s32 0, %v849
    %v851 = vrot.slane %v846, %v850
    %v853 = vadd.f32 %v842, %v851
    %v854 = vadd.f32 %v843, %v851
    %v855 = vadd.f32 %v844, %v851
    %v856 = vadd.f32 %v845, %v851
    %vm857 = vcmp.gt.f32.partialorder %v853, 0.0
    %vm858 = vcmp.gt.f32.partialorder %v854, 0.0
    %vm859 = vcmp.gt.f32.partialorder %v855, 0.0
    %vm860 = vcmp.gt.f32.partialorder %v856, 0.0
    %v861 = vmul.f32 %v853, 0.2
    %v862 = vmul.f32 %v854, 0.2
    %v863 = vmul.f32 %v855, 0.2
    %v864 = vmul.f32 %v856, 0.2
    %v865 = vsel %vm857, %v853, %v861
    %v866 = vsel %vm858, %v854, %v862
    %v867 = vsel %vm859, %v855, %v863
    %v868 = vsel %vm860, %v856, %v864
    %v869 = vpack.c.bf16 %v866, %v865
    %v870 = vpack.c.bf16 %v868, %v867
    %v873 = vunpack.c.l.b16 %v869
    %v874 = vunpack.c.h.b16 %v869
    %v875 = vunpack.c.l.b16 %v870
    %v876 = vunpack.c.h.b16 %v870
    %v877 = vpack.c.b16 %v873, %v873
    %v878 = vpack.c.b16 %v874, %v874
    %v879 = vpack.c.b16 %v875, %v875
    %v880 = vpack.c.b16 %v876, %v876
    %885 = vst [vmem:[%s3] sm:$0xf] %v877
    %886 = vst [vmem:[%s3 + $0x4] sm:$0xf] %v878
    %887 = vst [vmem:[%s3 + $0x8] sm:$0xf] %v879
    %888 = vst [vmem:[%s3 + $0xc] sm:$0xf] %v880
  $region21: #{d_net64_forward.12} parent=0 // pred_fallthru
    _
  // Predicated region
  $region22: #{d_net64_forward.12} parent=0 // pred_check
    _
  $region23: #{d_net64_forward.12} parent=0 // pred_check_branch
    %890 = sbr.rel (0) target = $region25
  $region24: #{d_net64_forward.12} parent=0 // pred_region
    _
  $region25: #{d_net64_forward.12} parent=0 // pred_fallthru
    _
  // Predicated region
  $region26: #{d_net64_forward.12} parent=0 // pred_check
    _
  $region27: #{d_net64_forward.12} parent=0 // pred_check_branch
    %892 = sbr.rel (0) target = $region29
  $region28: #{d_net64_forward.12} parent=0 // pred_region
    _
  $region29: #{d_net64_forward.12} parent=0 // pred_fallthru
    _

// kernel: d_net64_forward.13
$region0: #{d_net64_forward.13}
  #allocation0 [shape = 'u32[]', space=smem, size = 0x4, offset = 0x4, fixed_abs, tag = 'smem constant byte address 0x4 - core index']
  #allocation1 [shape = 'u32[144,128]{1,0:T(1,128)}', space=vmem, size = 0x12000, scoped, tag = 'internal scratch']
  #allocation2 [shape = 'f32[32,64]{1,0:T(8,128)}', space=vmem, size = 0x4000, scoped, tag = 'scratch operand']
  %s0 = inlined_call_operand.vmem [shape: bf16[32,1152], index: 0, kind: input, shape index: {}]
  %s1 = inlined_call_operand.vmem [shape: bf16[1152,64], index: 1, kind: input, shape index: {}]
  %s2 = inlined_call_operand.vmem [shape: f32[1,64], index: 2, kind: input, shape index: {}]
  %s3 = inlined_call_operand.vmem [shape: bf16[32,64], index: 3, kind: output, shape index: {}]
  %s4 = sld [smem:[#allocation0]]
  $region30: #{d_net64_forward.13} parent=0
    _
  %s6 = ssub.s32 1, %s4
  %s7 = scalar_select 0, %s6, %s4
  // Predicated region
  $region2: #{d_net64_forward.13} parent=0 // pred_check
    _
  $region3: #{d_net64_forward.13} parent=0 // pred_check_branch
    %9 = sbr.rel (0) target = $region5
  $region4: #{d_net64_forward.13} parent=0 // pred_region
    _
  $region5: #{d_net64_forward.13} parent=0 // pred_fallthru
    _
  // Predicated region
  $region6: #{d_net64_forward.13} parent=0 // pred_check
    _
  $region7: #{d_net64_forward.13} parent=0 // pred_check_branch
    %11 = sbr.rel (0) target = $region9
  $region8: #{d_net64_forward.13} parent=0 // pred_region
    _
  $region9: #{d_net64_forward.13} parent=0 // pred_fallthru
    _
  // Predicated region
  $region10: #{d_net64_forward.13} parent=0 // pred_check
    _
  $region11: #{d_net64_forward.13} parent=0 // pred_check_branch
    %13 = sbr.rel (0) target = $region13
  $region12: #{d_net64_forward.13} parent=0 // pred_region
    _
  $region13: #{d_net64_forward.13} parent=0 // pred_fallthru
    _
  %p15 = scmp.eq.s32.totalorder 0, 0
  // Predicated region
  $region14: #{d_net64_forward.13} parent=0 // pred_check
    %p16 = pneg %p15
  $region15: #{d_net64_forward.13} parent=0 // pred_check_branch
    %18 = sbr.rel (%p16) target = $region17
  $region16: #{d_net64_forward.13} parent=0 // pred_region
    %vm19 = vcmask 523264
    %20 = vst.msk [vmem:[#allocation2] sm:$0xff] %vm19, 0.0
    %21 = vst.msk [vmem:[#allocation2 + $0x8] sm:$0xff] %vm19, 0.0
    %22 = vst.msk [vmem:[#allocation2 + $0x10] sm:$0xff] %vm19, 0.0
    %23 = vst.msk [vmem:[#allocation2 + $0x18] sm:$0xff] %vm19, 0.0
  $region17: #{d_net64_forward.13} parent=0 // pred_fallthru
    _
  %v24 = vld [vmem:[#allocation2] sm:$0xff]
  %v25 = vld [vmem:[#allocation2 + $0x8] sm:$0xff]
  %v26 = vld [vmem:[#allocation2 + $0x10] sm:$0xff]
  %v27 = vld [vmem:[#allocation2 + $0x18] sm:$0xff]
  %v28 = vld [vmem:[%s0] sm:$0xff]
  %v29 = vld [vmem:[%s0 + $0x8] sm:$0xff]
  %v30 = vld [vmem:[%s0 + $0x10] sm:$0xff]
  %v31 = vld [vmem:[%s0 + $0x18] sm:$0xff]
  %v32 = vld [vmem:[%s0 + $0x20] sm:$0xf]
  %v33 = vld [vmem:[%s0 + $0x24] sm:$0xff]
  %v34 = vld [vmem:[%s0 + $0x2c] sm:$0xff]
  %v35 = vld [vmem:[%s0 + $0x34] sm:$0xff]
  %v36 = vld [vmem:[%s0 + $0x3c] sm:$0xff]
  %v37 = vld [vmem:[%s0 + $0x44] sm:$0xf]
  %v38 = vld [vmem:[%s0 + $0x48] sm:$0xff]
  %v39 = vld [vmem:[%s0 + $0x50] sm:$0xff]
  %v40 = vld [vmem:[%s0 + $0x58] sm:$0xff]
  %v41 = vld [vmem:[%s0 + $0x60] sm:$0xff]
  %v42 = vld [vmem:[%s0 + $0x68] sm:$0xf]
  %v43 = vld [vmem:[%s0 + $0x6c] sm:$0xff]
  %v44 = vld [vmem:[%s0 + $0x74] sm:$0xff]
  %v45 = vld [vmem:[%s0 + $0x7c] sm:$0xff]
  %v46 = vld [vmem:[%s0 + $0x84] sm:$0xff]
  %v47 = vld [vmem:[%s0 + $0x8c] sm:$0xf]
  %v48 = vld [vmem:[%s1] sm:$0xf]
  %v49 = vld [vmem:[%s1 + $0x4] sm:$0xf]
  %v50 = vld [vmem:[%s1 + $0x8] sm:$0xf]
  %v51 = vld [vmem:[%s1 + $0xc] sm:$0xf]
  %v52 = vld [vmem:[%s1 + $0x10] sm:$0xf]
  %v53 = vld [vmem:[%s1 + $0x14] sm:$0xf]
  %v54 = vld [vmem:[%s1 + $0x18] sm:$0xf]
  %v55 = vld [vmem:[%s1 + $0x1c] sm:$0xf]
  %v56 = vld [vmem:[%s1 + $0x20] sm:$0xf]
  %v57 = vld [vmem:[%s1 + $0x24] sm:$0xf]
  %v58 = vld [vmem:[%s1 + $0x28] sm:$0xf]
  %v59 = vld [vmem:[%s1 + $0x2c] sm:$0xf]
  %v60 = vld [vmem:[%s1 + $0x30] sm:$0xf]
  %v61 = vld [vmem:[%s1 + $0x34] sm:$0xf]
  %v62 = vld [vmem:[%s1 + $0x38] sm:$0xf]
  %v63 = vld [vmem:[%s1 + $0x3c] sm:$0xf]
  %v64 = vld [vmem:[%s1 + $0x40] sm:$0xf]
  %v65 = vld [vmem:[%s1 + $0x44] sm:$0xf]
  %v66 = vld [vmem:[%s1 + $0x48] sm:$0xf]
  %v67 = vld [vmem:[%s1 + $0x4c] sm:$0xf]
  %v68 = vld [vmem:[%s1 + $0x50] sm:$0xf]
  %v69 = vld [vmem:[%s1 + $0x54] sm:$0xf]
  %v70 = vld [vmem:[%s1 + $0x58] sm:$0xf]
  %v71 = vld [vmem:[%s1 + $0x5c] sm:$0xf]
  %v72 = vld [vmem:[%s1 + $0x60] sm:$0xf]
  %v73 = vld [vmem:[%s1 + $0x64] sm:$0xf]
  %v74 = vld [vmem:[%s1 + $0x68] sm:$0xf]
  %v75 = vld [vmem:[%s1 + $0x6c] sm:$0xf]
  %v76 = vld [vmem:[%s1 + $0x70] sm:$0xf]
  %v77 = vld [vmem:[%s1 + $0x74] sm:$0xf]
  %v78 = vld [vmem:[%s1 + $0x78] sm:$0xf]
  %v79 = vld [vmem:[%s1 + $0x7c] sm:$0xf]
  %v80 = vld [vmem:[%s1 + $0x80] sm:$0xf]
  %v81 = vld [vmem:[%s1 + $0x84] sm:$0xf]
  %v82 = vld [vmem:[%s1 + $0x88] sm:$0xf]
  %v83 = vld [vmem:[%s1 + $0x8c] sm:$0xf]
  %v84 = vld [vmem:[%s1 + $0x90] sm:$0xf]
  %v85 = vld [vmem:[%s1 + $0x94] sm:$0xf]
  %v86 = vld [vmem:[%s1 + $0x98] sm:$0xf]
  %v87 = vld [vmem:[%s1 + $0x9c] sm:$0xf]
  %v88 = vld [vmem:[%s1 + $0xa0] sm:$0xf]
  %v89 = vld [vmem:[%s1 + $0xa4] sm:$0xf]
  %v90 = vld [vmem:[%s1 + $0xa8] sm:$0xf]
  %v91 = vld [vmem:[%s1 + $0xac] sm:$0xf]
  %v92 = vld [vmem:[%s1 + $0xb0] sm:$0xf]
  %v93 = vld [vmem:[%s1 + $0xb4] sm:$0xf]
  %v94 = vld [vmem:[%s1 + $0xb8] sm:$0xf]
  %v95 = vld [vmem:[%s1 + $0xbc] sm:$0xf]
  %v96 = vld [vmem:[%s1 + $0xc0] sm:$0xf]
  %v97 = vld [vmem:[%s1 + $0xc4] sm:$0xf]
  %v98 = vld [vmem:[%s1 + $0xc8] sm:$0xf]
  %v99 = vld [vmem:[%s1 + $0xcc] sm:$0xf]
  %v100 = vld [vmem:[%s1 + $0xd0] sm:$0xf]
  %v101 = vld [vmem:[%s1 + $0xd4] sm:$0xf]
  %v102 = vld [vmem:[%s1 + $0xd8] sm:$0xf]
  %v103 = vld [vmem:[%s1 + $0xdc] sm:$0xf]
  %v104 = vld [vmem:[%s1 + $0xe0] sm:$0xf]
  %v105 = vld [vmem:[%s1 + $0xe4] sm:$0xf]
  %v106 = vld [vmem:[%s1 + $0xe8] sm:$0xf]
  %v107 = vld [vmem:[%s1 + $0xec] sm:$0xf]
  %v108 = vld [vmem:[%s1 + $0xf0] sm:$0xf]
  %v109 = vld [vmem:[%s1 + $0xf4] sm:$0xf]
  %v110 = vld [vmem:[%s1 + $0xf8] sm:$0xf]
  %v111 = vld [vmem:[%s1 + $0xfc] sm:$0xf]
  %v112 = vld [vmem:[%s1 + $0x100] sm:$0xf]
  %v113 = vld [vmem:[%s1 + $0x104] sm:$0xf]
  %v114 = vld [vmem:[%s1 + $0x108] sm:$0xf]
  %v115 = vld [vmem:[%s1 + $0x10c] sm:$0xf]
  %v116 = vld [vmem:[%s1 + $0x110] sm:$0xf]
  %v117 = vld [vmem:[%s1 + $0x114] sm:$0xf]
  %v118 = vld [vmem:[%s1 + $0x118] sm:$0xf]
  %v119 = vld [vmem:[%s1 + $0x11c] sm:$0xf]
  %v120 = vld [vmem:[%s1 + $0x120] sm:$0xf]
  %v121 = vld [vmem:[%s1 + $0x124] sm:$0xf]
  %v122 = vld [vmem:[%s1 + $0x128] sm:$0xf]
  %v123 = vld [vmem:[%s1 + $0x12c] sm:$0xf]
  %v124 = vld [vmem:[%s1 + $0x130] sm:$0xf]
  %v125 = vld [vmem:[%s1 + $0x134] sm:$0xf]
  %v126 = vld [vmem:[%s1 + $0x138] sm:$0xf]
  %v127 = vld [vmem:[%s1 + $0x13c] sm:$0xf]
  %v128 = vld [vmem:[%s1 + $0x140] sm:$0xf]
  %v129 = vld [vmem:[%s1 + $0x144] sm:$0xf]
  %v130 = vld [vmem:[%s1 + $0x148] sm:$0xf]
  %v131 = vld [vmem:[%s1 + $0x14c] sm:$0xf]
  %v132 = vld [vmem:[%s1 + $0x150] sm:$0xf]
  %v133 = vld [vmem:[%s1 + $0x154] sm:$0xf]
  %v134 = vld [vmem:[%s1 + $0x158] sm:$0xf]
  %v135 = vld [vmem:[%s1 + $0x15c] sm:$0xf]
  %v136 = vld [vmem:[%s1 + $0x160] sm:$0xf]
  %v137 = vld [vmem:[%s1 + $0x164] sm:$0xf]
  %v138 = vld [vmem:[%s1 + $0x168] sm:$0xf]
  %v139 = vld [vmem:[%s1 + $0x16c] sm:$0xf]
  %v140 = vld [vmem:[%s1 + $0x170] sm:$0xf]
  %v141 = vld [vmem:[%s1 + $0x174] sm:$0xf]
  %v142 = vld [vmem:[%s1 + $0x178] sm:$0xf]
  %v143 = vld [vmem:[%s1 + $0x17c] sm:$0xf]
  %v144 = vld [vmem:[%s1 + $0x180] sm:$0xf]
  %v145 = vld [vmem:[%s1 + $0x184] sm:$0xf]
  %v146 = vld [vmem:[%s1 + $0x188] sm:$0xf]
  %v147 = vld [vmem:[%s1 + $0x18c] sm:$0xf]
  %v148 = vld [vmem:[%s1 + $0x190] sm:$0xf]
  %v149 = vld [vmem:[%s1 + $0x194] sm:$0xf]
  %v150 = vld [vmem:[%s1 + $0x198] sm:$0xf]
  %v151 = vld [vmem:[%s1 + $0x19c] sm:$0xf]
  %v152 = vld [vmem:[%s1 + $0x1a0] sm:$0xf]
  %v153 = vld [vmem:[%s1 + $0x1a4] sm:$0xf]
  %v154 = vld [vmem:[%s1 + $0x1a8] sm:$0xf]
  %v155 = vld [vmem:[%s1 + $0x1ac] sm:$0xf]
  %v156 = vld [vmem:[%s1 + $0x1b0] sm:$0xf]
  %v157 = vld [vmem:[%s1 + $0x1b4] sm:$0xf]
  %v158 = vld [vmem:[%s1 + $0x1b8] sm:$0xf]
  %v159 = vld [vmem:[%s1 + $0x1bc] sm:$0xf]
  %v160 = vld [vmem:[%s1 + $0x1c0] sm:$0xf]
  %v161 = vld [vmem:[%s1 + $0x1c4] sm:$0xf]
  %v162 = vld [vmem:[%s1 + $0x1c8] sm:$0xf]
  %v163 = vld [vmem:[%s1 + $0x1cc] sm:$0xf]
  %v164 = vld [vmem:[%s1 + $0x1d0] sm:$0xf]
  %v165 = vld [vmem:[%s1 + $0x1d4] sm:$0xf]
  %v166 = vld [vmem:[%s1 + $0x1d8] sm:$0xf]
  %v167 = vld [vmem:[%s1 + $0x1dc] sm:$0xf]
  %v168 = vld [vmem:[%s1 + $0x1e0] sm:$0xf]
  %v169 = vld [vmem:[%s1 + $0x1e4] sm:$0xf]
  %v170 = vld [vmem:[%s1 + $0x1e8] sm:$0xf]
  %v171 = vld [vmem:[%s1 + $0x1ec] sm:$0xf]
  %v172 = vld [vmem:[%s1 + $0x1f0] sm:$0xf]
  %v173 = vld [vmem:[%s1 + $0x1f4] sm:$0xf]
  %v174 = vld [vmem:[%s1 + $0x1f8] sm:$0xf]
  %v175 = vld [vmem:[%s1 + $0x1fc] sm:$0xf]
  %v176 = vld [vmem:[%s1 + $0x200] sm:$0xf]
  %v177 = vld [vmem:[%s1 + $0x204] sm:$0xf]
  %v178 = vld [vmem:[%s1 + $0x208] sm:$0xf]
  %v179 = vld [vmem:[%s1 + $0x20c] sm:$0xf]
  %v180 = vld [vmem:[%s1 + $0x210] sm:$0xf]
  %v181 = vld [vmem:[%s1 + $0x214] sm:$0xf]
  %v182 = vld [vmem:[%s1 + $0x218] sm:$0xf]
  %v183 = vld [vmem:[%s1 + $0x21c] sm:$0xf]
  %v184 = vld [vmem:[%s1 + $0x220] sm:$0xf]
  %v185 = vld [vmem:[%s1 + $0x224] sm:$0xf]
  %v186 = vld [vmem:[%s1 + $0x228] sm:$0xf]
  %v187 = vld [vmem:[%s1 + $0x22c] sm:$0xf]
  %v188 = vld [vmem:[%s1 + $0x230] sm:$0xf]
  %v189 = vld [vmem:[%s1 + $0x234] sm:$0xf]
  %v190 = vld [vmem:[%s1 + $0x238] sm:$0xf]
  %v191 = vld [vmem:[%s1 + $0x23c] sm:$0xf]
  %v212 = vunpack.c.l.b16 %v28
  %v213 = vunpack.c.h.b16 %v28
  %v214 = vunpack.c.l.b16 %v29
  %v215 = vunpack.c.h.b16 %v29
  %v216 = vunpack.c.l.b16 %v30
  %v217 = vunpack.c.h.b16 %v30
  %v218 = vunpack.c.l.b16 %v31
  %v219 = vunpack.c.h.b16 %v31
  %v220 = vunpack.c.l.b16 %v32
  %v221 = vunpack.c.l.b16 %v33
  %v222 = vunpack.c.h.b16 %v33
  %v223 = vunpack.c.l.b16 %v34
  %v224 = vunpack.c.h.b16 %v34
  %v225 = vunpack.c.l.b16 %v35
  %v226 = vunpack.c.h.b16 %v35
  %v227 = vunpack.c.l.b16 %v36
  %v228 = vunpack.c.h.b16 %v36
  %v229 = vunpack.c.l.b16 %v37
  %v230 = vunpack.c.l.b16 %v38
  %v231 = vunpack.c.h.b16 %v38
  %v232 = vunpack.c.l.b16 %v39
  %v233 = vunpack.c.h.b16 %v39
  %v234 = vunpack.c.l.b16 %v40
  %v235 = vunpack.c.h.b16 %v40
  %v236 = vunpack.c.l.b16 %v41
  %v237 = vunpack.c.h.b16 %v41
  %v238 = vunpack.c.l.b16 %v42
  %v239 = vunpack.c.l.b16 %v43
  %v240 = vunpack.c.h.b16 %v43
  %v241 = vunpack.c.l.b16 %v44
  %v242 = vunpack.c.h.b16 %v44
  %v243 = vunpack.c.l.b16 %v45
  %v244 = vunpack.c.h.b16 %v45
  %v245 = vunpack.c.l.b16 %v46
  %v246 = vunpack.c.h.b16 %v46
  %v247 = vunpack.c.l.b16 %v47
  %v248 = vpack.c.b16 %v221, %v212
  %v249 = vpack.c.b16 %v222, %v213
  %v250 = vpack.c.b16 %v223, %v214
  %v251 = vpack.c.b16 %v224, %v215
  %v252 = vpack.c.b16 %v225, %v216
  %v253 = vpack.c.b16 %v226, %v217
  %v254 = vpack.c.b16 %v227, %v218
  %v255 = vpack.c.b16 %v228, %v219
  %v256 = vpack.c.b16 %v229, %v220
  %v257 = vpack.c.b16 %v239, %v230
  %v258 = vpack.c.b16 %v240, %v231
  %v259 = vpack.c.b16 %v241, %v232
  %v260 = vpack.c.b16 %v242, %v233
  %v261 = vpack.c.b16 %v243, %v234
  %v262 = vpack.c.b16 %v244, %v235
  %v263 = vpack.c.b16 %v245, %v236
  %v264 = vpack.c.b16 %v246, %v237
  %v265 = vpack.c.b16 %v247, %v238
  %v428 = vunpack.c.l.b16 %v48
  %v429 = vunpack.c.l.b16 %v49
  %v430 = vunpack.c.l.b16 %v50
  %v431 = vunpack.c.l.b16 %v51
  %v432 = vunpack.c.l.b16 %v52
  %v433 = vunpack.c.l.b16 %v53
  %v434 = vunpack.c.l.b16 %v54
  %v435 = vunpack.c.l.b16 %v55
  %v436 = vunpack.c.l.b16 %v56
  %v437 = vunpack.c.l.b16 %v57
  %v438 = vunpack.c.l.b16 %v58
  %v439 = vunpack.c.l.b16 %v59
  %v440 = vunpack.c.l.b16 %v60
  %v441 = vunpack.c.l.b16 %v61
  %v442 = vunpack.c.l.b16 %v62
  %v443 = vunpack.c.l.b16 %v63
  %v444 = vunpack.c.l.b16 %v64
  %v445 = vunpack.c.l.b16 %v65
  %v446 = vunpack.c.l.b16 %v66
  %v447 = vunpack.c.l.b16 %v67
  %v448 = vunpack.c.l.b16 %v68
  %v449 = vunpack.c.l.b16 %v69
  %v450 = vunpack.c.l.b16 %v70
  %v451 = vunpack.c.l.b16 %v71
  %v452 = vunpack.c.l.b16 %v72
  %v453 = vunpack.c.l.b16 %v73
  %v454 = vunpack.c.l.b16 %v74
  %v455 = vunpack.c.l.b16 %v75
  %v456 = vunpack.c.l.b16 %v76
  %v457 = vunpack.c.l.b16 %v77
  %v458 = vunpack.c.l.b16 %v78
  %v459 = vunpack.c.l.b16 %v79
  %v460 = vunpack.c.l.b16 %v80
  %v461 = vunpack.c.l.b16 %v81
  %v462 = vunpack.c.l.b16 %v82
  %v463 = vunpack.c.l.b16 %v83
  %v464 = vunpack.c.l.b16 %v84
  %v465 = vunpack.c.l.b16 %v85
  %v466 = vunpack.c.l.b16 %v86
  %v467 = vunpack.c.l.b16 %v87
  %v468 = vunpack.c.l.b16 %v88
  %v469 = vunpack.c.l.b16 %v89
  %v470 = vunpack.c.l.b16 %v90
  %v471 = vunpack.c.l.b16 %v91
  %v472 = vunpack.c.l.b16 %v92
  %v473 = vunpack.c.l.b16 %v93
  %v474 = vunpack.c.l.b16 %v94
  %v475 = vunpack.c.l.b16 %v95
  %v476 = vunpack.c.l.b16 %v96
  %v477 = vunpack.c.l.b16 %v97
  %v478 = vunpack.c.l.b16 %v98
  %v479 = vunpack.c.l.b16 %v99
  %v480 = vunpack.c.l.b16 %v100
  %v481 = vunpack.c.l.b16 %v101
  %v482 = vunpack.c.l.b16 %v102
  %v483 = vunpack.c.l.b16 %v103
  %v484 = vunpack.c.l.b16 %v104
  %v485 = vunpack.c.l.b16 %v105
  %v486 = vunpack.c.l.b16 %v106
  %v487 = vunpack.c.l.b16 %v107
  %v488 = vunpack.c.l.b16 %v108
  %v489 = vunpack.c.l.b16 %v109
  %v490 = vunpack.c.l.b16 %v110
  %v491 = vunpack.c.l.b16 %v111
  %v492 = vunpack.c.l.b16 %v112
  %v493 = vunpack.c.l.b16 %v113
  %v494 = vunpack.c.l.b16 %v114
  %v495 = vunpack.c.l.b16 %v115
  %v496 = vunpack.c.l.b16 %v116
  %v497 = vunpack.c.l.b16 %v117
  %v498 = vunpack.c.l.b16 %v118
  %v499 = vunpack.c.l.b16 %v119
  %v500 = vunpack.c.l.b16 %v120
  %v501 = vunpack.c.l.b16 %v121
  %v502 = vunpack.c.l.b16 %v122
  %v503 = vunpack.c.l.b16 %v123
  %v504 = vunpack.c.l.b16 %v124
  %v505 = vunpack.c.l.b16 %v125
  %v506 = vunpack.c.l.b16 %v126
  %v507 = vunpack.c.l.b16 %v127
  %v508 = vunpack.c.l.b16 %v128
  %v509 = vunpack.c.l.b16 %v129
  %v510 = vunpack.c.l.b16 %v130
  %v511 = vunpack.c.l.b16 %v131
  %v512 = vunpack.c.l.b16 %v132
  %v513 = vunpack.c.l.b16 %v133
  %v514 = vunpack.c.l.b16 %v134
  %v515 = vunpack.c.l.b16 %v135
  %v516 = vunpack.c.l.b16 %v136
  %v517 = vunpack.c.l.b16 %v137
  %v518 = vunpack.c.l.b16 %v138
  %v519 = vunpack.c.l.b16 %v139
  %v520 = vunpack.c.l.b16 %v140
  %v521 = vunpack.c.l.b16 %v141
  %v522 = vunpack.c.l.b16 %v142
  %v523 = vunpack.c.l.b16 %v143
  %v524 = vunpack.c.l.b16 %v144
  %v525 = vunpack.c.l.b16 %v145
  %v526 = vunpack.c.l.b16 %v146
  %v527 = vunpack.c.l.b16 %v147
  %v528 = vunpack.c.l.b16 %v148
  %v529 = vunpack.c.l.b16 %v149
  %v530 = vunpack.c.l.b16 %v150
  %v531 = vunpack.c.l.b16 %v151
  %v532 = vunpack.c.l.b16 %v152
  %v533 = vunpack.c.l.b16 %v153
  %v534 = vunpack.c.l.b16 %v154
  %v535 = vunpack.c.l.b16 %v155
  %v536 = vunpack.c.l.b16 %v156
  %v537 = vunpack.c.l.b16 %v157
  %v538 = vunpack.c.l.b16 %v158
  %v539 = vunpack.c.l.b16 %v159
  %v540 = vunpack.c.l.b16 %v160
  %v541 = vunpack.c.l.b16 %v161
  %v542 = vunpack.c.l.b16 %v162
  %v543 = vunpack.c.l.b16 %v163
  %v544 = vunpack.c.l.b16 %v164
  %v545 = vunpack.c.l.b16 %v165
  %v546 = vunpack.c.l.b16 %v166
  %v547 = vunpack.c.l.b16 %v167
  %v548 = vunpack.c.l.b16 %v168
  %v549 = vunpack.c.l.b16 %v169
  %v550 = vunpack.c.l.b16 %v170
  %v551 = vunpack.c.l.b16 %v171
  %v552 = vunpack.c.l.b16 %v172
  %v553 = vunpack.c.l.b16 %v173
  %v554 = vunpack.c.l.b16 %v174
  %v555 = vunpack.c.l.b16 %v175
  %v556 = vunpack.c.l.b16 %v176
  %v557 = vunpack.c.l.b16 %v177
  %v558 = vunpack.c.l.b16 %v178
  %v559 = vunpack.c.l.b16 %v179
  %v560 = vunpack.c.l.b16 %v180
  %v561 = vunpack.c.l.b16 %v181
  %v562 = vunpack.c.l.b16 %v182
  %v563 = vunpack.c.l.b16 %v183
  %v564 = vunpack.c.l.b16 %v184
  %v565 = vunpack.c.l.b16 %v185
  %v566 = vunpack.c.l.b16 %v186
  %v567 = vunpack.c.l.b16 %v187
  %v568 = vunpack.c.l.b16 %v188
  %v569 = vunpack.c.l.b16 %v189
  %v570 = vunpack.c.l.b16 %v190
  %v571 = vunpack.c.l.b16 %v191
  %v572 = vpack.c.b16 %v429, %v428
  %v573 = vpack.c.b16 %v431, %v430
  %v574 = vpack.c.b16 %v433, %v432
  %v575 = vpack.c.b16 %v435, %v434
  %v576 = vpack.c.b16 %v437, %v436
  %v577 = vpack.c.b16 %v439, %v438
  %v578 = vpack.c.b16 %v441, %v440
  %v579 = vpack.c.b16 %v443, %v442
  %v580 = vpack.c.b16 %v445, %v444
  %v581 = vpack.c.b16 %v447, %v446
  %v582 = vpack.c.b16 %v449, %v448
  %v583 = vpack.c.b16 %v451, %v450
  %v584 = vpack.c.b16 %v453, %v452
  %v585 = vpack.c.b16 %v455, %v454
  %v586 = vpack.c.b16 %v457, %v456
  %v587 = vpack.c.b16 %v459, %v458
  %v588 = vpack.c.b16 %v461, %v460
  %v589 = vpack.c.b16 %v463, %v462
  %v590 = vpack.c.b16 %v465, %v464
  %v591 = vpack.c.b16 %v467, %v466
  %v592 = vpack.c.b16 %v469, %v468
  %v593 = vpack.c.b16 %v471, %v470
  %v594 = vpack.c.b16 %v473, %v472
  %v595 = vpack.c.b16 %v475, %v474
  %v596 = vpack.c.b16 %v477, %v476
  %v597 = vpack.c.b16 %v479, %v478
  %v598 = vpack.c.b16 %v481, %v480
  %v599 = vpack.c.b16 %v483, %v482
  %v600 = vpack.c.b16 %v485, %v484
  %v601 = vpack.c.b16 %v487, %v486
  %v602 = vpack.c.b16 %v489, %v488
  %v603 = vpack.c.b16 %v491, %v490
  %v604 = vpack.c.b16 %v493, %v492
  %v605 = vpack.c.b16 %v495, %v494
  %v606 = vpack.c.b16 %v497, %v496
  %v607 = vpack.c.b16 %v499, %v498
  %v608 = vpack.c.b16 %v501, %v500
  %v609 = vpack.c.b16 %v503, %v502
  %v610 = vpack.c.b16 %v505, %v504
  %v611 = vpack.c.b16 %v507, %v506
  %v612 = vpack.c.b16 %v509, %v508
  %v613 = vpack.c.b16 %v511, %v510
  %v614 = vpack.c.b16 %v513, %v512
  %v615 = vpack.c.b16 %v515, %v514
  %v616 = vpack.c.b16 %v517, %v516
  %v617 = vpack.c.b16 %v519, %v518
  %v618 = vpack.c.b16 %v521, %v520
  %v619 = vpack.c.b16 %v523, %v522
  %v620 = vpack.c.b16 %v525, %v524
  %v621 = vpack.c.b16 %v527, %v526
  %v622 = vpack.c.b16 %v529, %v528
  %v623 = vpack.c.b16 %v531, %v530
  %v624 = vpack.c.b16 %v533, %v532
  %v625 = vpack.c.b16 %v535, %v534
  %v626 = vpack.c.b16 %v537, %v536
  %v627 = vpack.c.b16 %v539, %v538
  %v628 = vpack.c.b16 %v541, %v540
  %v629 = vpack.c.b16 %v543, %v542
  %v630 = vpack.c.b16 %v545, %v544
  %v631 = vpack.c.b16 %v547, %v546
  %v632 = vpack.c.b16 %v549, %v548
  %v633 = vpack.c.b16 %v551, %v550
  %v634 = vpack.c.b16 %v553, %v552
  %v635 = vpack.c.b16 %v555, %v554
  %v636 = vpack.c.b16 %v557, %v556
  %v637 = vpack.c.b16 %v559, %v558
  %v638 = vpack.c.b16 %v561, %v560
  %v639 = vpack.c.b16 %v563, %v562
  %v640 = vpack.c.b16 %v565, %v564
  %v641 = vpack.c.b16 %v567, %v566
  %v642 = vpack.c.b16 %v569, %v568
  %v643 = vpack.c.b16 %v571, %v570
  %716 = vmatprep.subr.bf16.mxu0 0
  %717 = vmatpush1.bf16.msra.mxu0 %v579
  %718 = vmatprep.subr.bf16.mxu0 0
  %719 = vmatpush1.bf16.msra.mxu0 %v578
  %720 = vmatprep.subr.bf16.mxu0 0
  %721 = vmatpush1.bf16.msra.mxu0 %v577
  %722 = vmatprep.subr.bf16.mxu0 0
  %723 = vmatpush1.bf16.msra.mxu0 %v576
  %724 = vmatprep.subr.bf16.mxu0 0
  %725 = vmatpush1.bf16.msra.mxu0 %v575
  %726 = vmatprep.subr.bf16.mxu0 0
  %727 = vmatpush1.bf16.msra.mxu0 %v574
  %728 = vmatprep.subr.bf16.mxu0 0
  %729 = vmatpush1.bf16.msra.mxu0 %v573
  %730 = vmatprep.subr.bf16.mxu0 0
  %731 = vmatpush1.bf16.msra.mxu0 %v572
  %732 = vmatprep.subr.bf16.mxu0 0
  %733 = vmatpush2.bf16.msra.mxu0 %v587
  %734 = vmatprep.subr.bf16.mxu0 0
  %735 = vmatpush2.bf16.msra.mxu0 %v586
  %736 = vmatprep.subr.bf16.mxu0 0
  %737 = vmatpush2.bf16.msra.mxu0 %v585
  %738 = vmatprep.subr.bf16.mxu0 0
  %739 = vmatpush2.bf16.msra.mxu0 %v584
  %740 = vmatprep.subr.bf16.mxu0 0
  %741 = vmatpush2.bf16.msra.mxu0 %v583
  %742 = vmatprep.subr.bf16.mxu0 0
  %743 = vmatpush2.bf16.msra.mxu0 %v582
  %744 = vmatprep.subr.bf16.mxu0 0
  %745 = vmatpush2.bf16.msra.mxu0 %v581
  %746 = vmatprep.subr.bf16.mxu0 0
  %747 = vmatpush2.bf16.msra.mxu0 %v580
  %748 = vmatprep.mubr.bf16.mxu0 %v249
  %749 = vmatmul.mubr.bf16.gmra.mxu0 %v248
  %v750 = vpop.f32.mrf.mxu0
  %v751 = vadd.f32 0.0, %v750
  %v752 = vpop.f32.mrf.mxu0
  %v753 = vpop.f32.mrf.mxu0
  %v754 = vadd.f32 0.0, %v753
  %v755 = vpop.f32.mrf.mxu0
  %756 = vmatprep.mubr.bf16.mxu0 %v258
  %757 = vmatmul.mubr.bf16.gmra.mxu0 %v257
  %v758 = vpop.f32.mrf.mxu0
  %v759 = vadd.f32 0.0, %v758
  %v760 = vpop.f32.mrf.mxu0
  %v761 = vpop.f32.mrf.mxu0
  %v762 = vadd.f32 0.0, %v761
  %v763 = vpop.f32.mrf.mxu0
  %764 = vdwg.mxu0
  %765 = vmatprep.subr.bf16.mxu0 0
  %766 = vmatpush1.bf16.msra.mxu0 %v595
  %767 = vmatprep.subr.bf16.mxu0 0
  %768 = vmatpush1.bf16.msra.mxu0 %v594
  %769 = vmatprep.subr.bf16.mxu0 0
  %770 = vmatpush1.bf16.msra.mxu0 %v593
  %771 = vmatprep.subr.bf16.mxu0 0
  %772 = vmatpush1.bf16.msra.mxu0 %v592
  %773 = vmatprep.subr.bf16.mxu0 0
  %774 = vmatpush1.bf16.msra.mxu0 %v591
  %775 = vmatprep.subr.bf16.mxu0 0
  %776 = vmatpush1.bf16.msra.mxu0 %v590
  %777 = vmatprep.subr.bf16.mxu0 0
  %778 = vmatpush1.bf16.msra.mxu0 %v589
  %779 = vmatprep.subr.bf16.mxu0 0
  %780 = vmatpush1.bf16.msra.mxu0 %v588
  %781 = vmatprep.subr.bf16.mxu0 0
  %782 = vmatpush2.bf16.msra.mxu0 %v603
  %783 = vmatprep.subr.bf16.mxu0 0
  %784 = vmatpush2.bf16.msra.mxu0 %v602
  %785 = vmatprep.subr.bf16.mxu0 0
  %786 = vmatpush2.bf16.msra.mxu0 %v601
  %787 = vmatprep.subr.bf16.mxu0 0
  %788 = vmatpush2.bf16.msra.mxu0 %v600
  %789 = vmatprep.subr.bf16.mxu0 0
  %790 = vmatpush2.bf16.msra.mxu0 %v599
  %791 = vmatprep.subr.bf16.mxu0 0
  %792 = vmatpush2.bf16.msra.mxu0 %v598
  %793 = vmatprep.subr.bf16.mxu0 0
  %794 = vmatpush2.bf16.msra.mxu0 %v597
  %795 = vmatprep.subr.bf16.mxu0 0
  %796 = vmatpush2.bf16.msra.mxu0 %v596
  %797 = vmatprep.mubr.bf16.mxu0 %v251
  %798 = vmatmul.mubr.bf16.gmra.mxu0 %v250
  %v799 = vpop.f32.mrf.mxu0
  %v800 = vadd.f32 %v751, %v799
  %v801 = vpop.f32.mrf.mxu0
  %v802 = vpop.f32.mrf.mxu0
  %v803 = vadd.f32 %v754, %v802
  %v804 = vpop.f32.mrf.mxu0
  %805 = vmatprep.mubr.bf16.mxu0 %v260
  %806 = vmatmul.mubr.bf16.gmra.mxu0 %v259
  %v807 = vpop.f32.mrf.mxu0
  %v808 = vadd.f32 %v759, %v807
  %v809 = vpop.f32.mrf.mxu0
  %v810 = vpop.f32.mrf.mxu0
  %v811 = vadd.f32 %v762, %v810
  %v812 = vpop.f32.mrf.mxu0
  %813 = vdwg.mxu0
  %814 = vmatprep.subr.bf16.mxu0 0
  %815 = vmatpush1.bf16.msra.mxu0 %v611
  %816 = vmatprep.subr.bf16.mxu0 0
  %817 = vmatpush1.bf16.msra.mxu0 %v610
  %818 = vmatprep.subr.bf16.mxu0 0
  %819 = vmatpush1.bf16.msra.mxu0 %v609
  %820 = vmatprep.subr.bf16.mxu0 0
  %821 = vmatpush1.bf16.msra.mxu0 %v608
  %822 = vmatprep.subr.bf16.mxu0 0
  %823 = vmatpush1.bf16.msra.mxu0 %v607
  %824 = vmatprep.subr.bf16.mxu0 0
  %825 = vmatpush1.bf16.msra.mxu0 %v606
  %826 = vmatprep.subr.bf16.mxu0 0
  %827 = vmatpush1.bf16.msra.mxu0 %v605
  %828 = vmatprep.subr.bf16.mxu0 0
  %829 = vmatpush1.bf16.msra.mxu0 %v604
  %830 = vmatprep.subr.bf16.mxu0 0
  %831 = vmatpush2.bf16.msra.mxu0 %v619
  %832 = vmatprep.subr.bf16.mxu0 0
  %833 = vmatpush2.bf16.msra.mxu0 %v618
  %834 = vmatprep.subr.bf16.mxu0 0
  %835 = vmatpush2.bf16.msra.mxu0 %v617
  %836 = vmatprep.subr.bf16.mxu0 0
  %837 = vmatpush2.bf16.msra.mxu0 %v616
  %838 = vmatprep.subr.bf16.mxu0 0
  %839 = vmatpush2.bf16.msra.mxu0 %v615
  %840 = vmatprep.subr.bf16.mxu0 0
  %841 = vmatpush2.bf16.msra.mxu0 %v614
  %842 = vmatprep.subr.bf16.mxu0 0
  %843 = vmatpush2.bf16.msra.mxu0 %v613
  %844 = vmatprep.subr.bf16.mxu0 0
  %845 = vmatpush2.bf16.msra.mxu0 %v612
  %846 = vmatprep.mubr.bf16.mxu0 %v253
  %847 = vmatmul.mubr.bf16.gmra.mxu0 %v252
  %v848 = vpop.f32.mrf.mxu0
  %v849 = vadd.f32 %v800, %v848
  %v850 = vpop.f32.mrf.mxu0
  %v851 = vpop.f32.mrf.mxu0
  %v852 = vadd.f32 %v803, %v851
  %v853 = vpop.f32.mrf.mxu0
  %854 = vmatprep.mubr.bf16.mxu0 %v262
  %855 = vmatmul.mubr.bf16.gmra.mxu0 %v261
  %v856 = vpop.f32.mrf.mxu0
  %v857 = vadd.f32 %v808, %v856
  %v858 = vpop.f32.mrf.mxu0
  %v859 = vpop.f32.mrf.mxu0
  %v860 = vadd.f32 %v811, %v859
  %v861 = vpop.f32.mrf.mxu0
  %862 = vdwg.mxu0
  %863 = vmatprep.subr.bf16.mxu0 0
  %864 = vmatpush1.bf16.msra.mxu0 %v627
  %865 = vmatprep.subr.bf16.mxu0 0
  %866 = vmatpush1.bf16.msra.mxu0 %v626
  %867 = vmatprep.subr.bf16.mxu0 0
  %868 = vmatpush1.bf16.msra.mxu0 %v625
  %869 = vmatprep.subr.bf16.mxu0 0
  %870 = vmatpush1.bf16.msra.mxu0 %v624
  %871 = vmatprep.subr.bf16.mxu0 0
  %872 = vmatpush1.bf16.msra.mxu0 %v623
  %873 = vmatprep.subr.bf16.mxu0 0
  %874 = vmatpush1.bf16.msra.mxu0 %v622
  %875 = vmatprep.subr.bf16.mxu0 0
  %876 = vmatpush1.bf16.msra.mxu0 %v621
  %877 = vmatprep.subr.bf16.mxu0 0
  %878 = vmatpush1.bf16.msra.mxu0 %v620
  %879 = vmatprep.subr.bf16.mxu0 0
  %880 = vmatpush2.bf16.msra.mxu0 %v635
  %881 = vmatprep.subr.bf16.mxu0 0
  %882 = vmatpush2.bf16.msra.mxu0 %v634
  %883 = vmatprep.subr.bf16.mxu0 0
  %884 = vmatpush2.bf16.msra.mxu0 %v633
  %885 = vmatprep.subr.bf16.mxu0 0
  %886 = vmatpush2.bf16.msra.mxu0 %v632
  %887 = vmatprep.subr.bf16.mxu0 0
  %888 = vmatpush2.bf16.msra.mxu0 %v631
  %889 = vmatprep.subr.bf16.mxu0 0
  %890 = vmatpush2.bf16.msra.mxu0 %v630
  %891 = vmatprep.subr.bf16.mxu0 0
  %892 = vmatpush2.bf16.msra.mxu0 %v629
  %893 = vmatprep.subr.bf16.mxu0 0
  %894 = vmatpush2.bf16.msra.mxu0 %v628
  %895 = vmatprep.mubr.bf16.mxu0 %v255
  %896 = vmatmul.mubr.bf16.gmra.mxu0 %v254
  %v897 = vpop.f32.mrf.mxu0
  %v898 = vadd.f32 %v849, %v897
  %v899 = vpop.f32.mrf.mxu0
  %v900 = vpop.f32.mrf.mxu0
  %v901 = vadd.f32 %v852, %v900
  %v902 = vpop.f32.mrf.mxu0
  %903 = vmatprep.mubr.bf16.mxu0 %v264
  %904 = vmatmul.mubr.bf16.gmra.mxu0 %v263
  %v905 = vpop.f32.mrf.mxu0
  %v906 = vadd.f32 %v857, %v905
  %v907 = vpop.f32.mrf.mxu0
  %v908 = vpop.f32.mrf.mxu0
  %v909 = vadd.f32 %v860, %v908
  %v910 = vpop.f32.mrf.mxu0
  %911 = vdwg.mxu0
  %912 = vmatprep.subr.bf16.mxu0 0
  %913 = vmatpush1.bf16.msra.mxu0 %v643
  %914 = vmatprep.subr.bf16.mxu0 0
  %915 = vmatpush1.bf16.msra.mxu0 %v642
  %916 = vmatprep.subr.bf16.mxu0 0
  %917 = vmatpush1.bf16.msra.mxu0 %v641
  %918 = vmatprep.subr.bf16.mxu0 0
  %919 = vmatpush1.bf16.msra.mxu0 %v640
  %920 = vmatprep.subr.bf16.mxu0 0
  %921 = vmatpush1.bf16.msra.mxu0 %v639
  %922 = vmatprep.subr.bf16.mxu0 0
  %923 = vmatpush1.bf16.msra.mxu0 %v638
  %924 = vmatprep.subr.bf16.mxu0 0
  %925 = vmatpush1.bf16.msra.mxu0 %v637
  %926 = vmatprep.subr.bf16.mxu0 0
  %927 = vmatpush1.bf16.msra.mxu0 %v636
  %928 = vmatprep.subr.bf16.mxu0 0
  %929 = vmatpush2.bf16.msra.mxu0 0
  %930 = vmatprep.subr.bf16.mxu0 0
  %931 = vmatpush2.bf16.msra.mxu0 0
  %932 = vmatprep.subr.bf16.mxu0 0
  %933 = vmatpush2.bf16.msra.mxu0 0
  %934 = vmatprep.subr.bf16.mxu0 0
  %935 = vmatpush2.bf16.msra.mxu0 0
  %936 = vmatprep.subr.bf16.mxu0 0
  %937 = vmatpush2.bf16.msra.mxu0 0
  %938 = vmatprep.subr.bf16.mxu0 0
  %939 = vmatpush2.bf16.msra.mxu0 0
  %940 = vmatprep.subr.bf16.mxu0 0
  %941 = vmatpush2.bf16.msra.mxu0 0
  %942 = vmatprep.subr.bf16.mxu0 0
  %943 = vmatpush2.bf16.msra.mxu0 0
  %944 = vmatprep.mubr.bf16.mxu0 0
  %945 = vmatmul.mubr.bf16.gmra.mxu0 %v256
  %v946 = vpop.f32.mrf.mxu0
  %v947 = vadd.f32 %v898, %v946
  %v948 = vpop.f32.mrf.mxu0
  %v949 = vpop.f32.mrf.mxu0
  %v950 = vadd.f32 %v901, %v949
  %v951 = vpop.f32.mrf.mxu0
  %952 = vmatprep.mubr.bf16.mxu0 0
  %953 = vmatmul.mubr.bf16.gmra.mxu0 %v265
  %v954 = vpop.f32.mrf.mxu0
  %v955 = vadd.f32 %v906, %v954
  %v956 = vpop.f32.mrf.mxu0
  %v957 = vpop.f32.mrf.mxu0
  %v958 = vadd.f32 %v909, %v957
  %v959 = vpop.f32.mrf.mxu0
  %960 = vdwg.mxu0
  %v961 = vadd.f32 %v24, %v947
  %v962 = vadd.f32 %v25, %v950
  %v963 = vadd.f32 %v26, %v955
  %v964 = vadd.f32 %v27, %v958
  %vm965 = vcmask 523264
  %966 = vst.msk [vmem:[#allocation2] sm:$0xff] %vm965, %v961
  %967 = vst.msk [vmem:[#allocation2 + $0x8] sm:$0xff] %vm965, %v962
  %968 = vst.msk [vmem:[#allocation2 + $0x10] sm:$0xff] %vm965, %v963
  %969 = vst.msk [vmem:[#allocation2 + $0x18] sm:$0xff] %vm965, %v964
  // Predicated region
  $region18: #{d_net64_forward.13} parent=0 // pred_check
    %p970 = pneg %p15
  $region19: #{d_net64_forward.13} parent=0 // pred_check_branch
    %972 = sbr.rel (%p970) target = $region21
  $region20: #{d_net64_forward.13} parent=0 // pred_region
    %v973 = vld [vmem:[#allocation2] sm:$0xff]
    %v974 = vld [vmem:[#allocation2 + $0x8] sm:$0xff]
    %v975 = vld [vmem:[#allocation2 + $0x10] sm:$0xff]
    %v976 = vld [vmem:[#allocation2 + $0x18] sm:$0xff]
    %v977 = vld [vmem:[%s2] sm:$0x1]
    %v979 = vlaneseq
    %v980 = vshrl.u32 %v979, 7
    %v981 = vsub.s32 0, %v980
    %v982 = vrot.slane %v977, %v981
    %v984 = vadd.f32 %v973, %v982
    %v985 = vadd.f32 %v974, %v982
    %v986 = vadd.f32 %v975, %v982
    %v987 = vadd.f32 %v976, %v982
    %vm988 = vcmp.gt.f32.partialorder %v984, 0.0
    %vm989 = vcmp.gt.f32.partialorder %v985, 0.0
    %vm990 = vcmp.gt.f32.partialorder %v986, 0.0
    %vm991 = vcmp.gt.f32.partialorder %v987, 0.0
    %v992 = vmul.f32 %v984, 0.2
    %v993 = vmul.f32 %v985, 0.2
    %v994 = vmul.f32 %v986, 0.2
    %v995 = vmul.f32 %v987, 0.2
    %v996 = vsel %vm988, %v984, %v992
    %v997 = vsel %vm989, %v985, %v993
    %v998 = vsel %vm990, %v986, %v994
    %v999 = vsel %vm991, %v987, %v995
    %v1000 = vpack.c.bf16 %v997, %v996
    %v1001 = vpack.c.bf16 %v999, %v998
    %v1004 = vunpack.c.l.b16 %v1000
    %v1005 = vunpack.c.h.b16 %v1000
    %v1006 = vunpack.c.l.b16 %v1001
    %v1007 = vunpack.c.h.b16 %v1001
    %v1008 = vpack.c.b16 %v1004, %v1004
    %v1009 = vpack.c.b16 %v1005, %v1005
    %v1010 = vpack.c.b16 %v1006, %v1006
    %v1011 = vpack.c.b16 %v1007, %v1007
    %vm1016 = vcmask 519168
    %1017 = vst.msk [vmem:[%s3] sm:$0xf] %vm1016, %v1008
    %1018 = vst.msk [vmem:[%s3 + $0x4] sm:$0xf] %vm1016, %v1009
    %1019 = vst.msk [vmem:[%s3 + $0x8] sm:$0xf] %vm1016, %v1010
    %1020 = vst.msk [vmem:[%s3 + $0xc] sm:$0xf] %vm1016, %v1011
  $region21: #{d_net64_forward.13} parent=0 // pred_fallthru
    _
  // Predicated region
  $region22: #{d_net64_forward.13} parent=0 // pred_check
    _
  $region23: #{d_net64_forward.13} parent=0 // pred_check_branch
    %1022 = sbr.rel (0) target = $region25
  $region24: #{d_net64_forward.13} parent=0 // pred_region
    _
  $region25: #{d_net64_forward.13} parent=0 // pred_fallthru
    _
  // Predicated region
  $region26: #{d_net64_forward.13} parent=0 // pred_check
    _
  $region27: #{d_net64_forward.13} parent=0 // pred_check_branch
    %1024 = sbr.rel (0) target = $region29
  $region28: #{d_net64_forward.13} parent=0 // pred_region
    _
  $region29: #{d_net64_forward.13} parent=0 // pred_fallthru
    _

// kernel: d_net64_forward.14
$region0: #{d_net64_forward.14}
  #allocation0 [shape = 'u32[]', space=smem, size = 0x4, offset = 0x4, fixed_abs, tag = 'smem constant byte address 0x4 - core index']
  #allocation1 [shape = 'u32[144,128]{1,0:T(1,128)}', space=vmem, size = 0x12000, scoped, tag = 'internal scratch']
  #allocation2 [shape = 'f32[32,64]{1,0:T(8,128)}', space=vmem, size = 0x4000, scoped, tag = 'scratch operand']
  %s0 = inlined_call_operand.vmem [shape: bf16[32,720], index: 0, kind: input, shape index: {}]
  %s1 = inlined_call_operand.vmem [shape: bf16[720,64], index: 1, kind: input, shape index: {}]
  %s2 = inlined_call_operand.vmem [shape: f32[1,64], index: 2, kind: input, shape index: {}]
  %s3 = inlined_call_operand.vmem [shape: bf16[32,64], index: 3, kind: output, shape index: {}]
  %s4 = sld [smem:[#allocation0]]
  $region30: #{d_net64_forward.14} parent=0
    _
  %s6 = ssub.s32 1, %s4
  %s7 = scalar_select 0, %s6, %s4
  // Predicated region
  $region2: #{d_net64_forward.14} parent=0 // pred_check
    _
  $region3: #{d_net64_forward.14} parent=0 // pred_check_branch
    %9 = sbr.rel (0) target = $region5
  $region4: #{d_net64_forward.14} parent=0 // pred_region
    _
  $region5: #{d_net64_forward.14} parent=0 // pred_fallthru
    _
  // Predicated region
  $region6: #{d_net64_forward.14} parent=0 // pred_check
    _
  $region7: #{d_net64_forward.14} parent=0 // pred_check_branch
    %11 = sbr.rel (0) target = $region9
  $region8: #{d_net64_forward.14} parent=0 // pred_region
    _
  $region9: #{d_net64_forward.14} parent=0 // pred_fallthru
    _
  // Predicated region
  $region10: #{d_net64_forward.14} parent=0 // pred_check
    _
  $region11: #{d_net64_forward.14} parent=0 // pred_check_branch
    %13 = sbr.rel (0) target = $region13
  $region12: #{d_net64_forward.14} parent=0 // pred_region
    _
  $region13: #{d_net64_forward.14} parent=0 // pred_fallthru
    _
  %p15 = scmp.eq.s32.totalorder 0, 0
  // Predicated region
  $region14: #{d_net64_forward.14} parent=0 // pred_check
    %p16 = pneg %p15
  $region15: #{d_net64_forward.14} parent=0 // pred_check_branch
    %18 = sbr.rel (%p16) target = $region17
  $region16: #{d_net64_forward.14} parent=0 // pred_region
    %vm19 = vcmask 523264
    %20 = vst.msk [vmem:[#allocation2] sm:$0xff] %vm19, 0.0
    %21 = vst.msk [vmem:[#allocation2 + $0x8] sm:$0xff] %vm19, 0.0
    %22 = vst.msk [vmem:[#allocation2 + $0x10] sm:$0xff] %vm19, 0.0
    %23 = vst.msk [vmem:[#allocation2 + $0x18] sm:$0xff] %vm19, 0.0
  $region17: #{d_net64_forward.14} parent=0 // pred_fallthru
    _
  %v24 = vld [vmem:[#allocation2] sm:$0xff]
  %v25 = vld [vmem:[#allocation2 + $0x8] sm:$0xff]
  %v26 = vld [vmem:[#allocation2 + $0x10] sm:$0xff]
  %v27 = vld [vmem:[#allocation2 + $0x18] sm:$0xff]
  %v28 = vld [vmem:[%s0] sm:$0xff]
  %v29 = vld [vmem:[%s0 + $0x8] sm:$0xff]
  %v30 = vld [vmem:[%s0 + $0x10] sm:$0xff]
  %v31 = vld [vmem:[%s0 + $0x18] sm:$0xff]
  %v32 = vld [vmem:[%s0 + $0x20] sm:$0xff]
  %v33 = vld [vmem:[%s0 + $0x28] sm:$0xff]
  %v34 = vld [vmem:[%s0 + $0x30] sm:$0xff]
  %v35 = vld [vmem:[%s0 + $0x38] sm:$0xff]
  %v36 = vld [vmem:[%s0 + $0x40] sm:$0xff]
  %v37 = vld [vmem:[%s0 + $0x48] sm:$0xff]
  %v38 = vld [vmem:[%s0 + $0x50] sm:$0xff]
  %v39 = vld [vmem:[%s0 + $0x58] sm:$0xff]
  %v40 = vld [vmem:[%s1] sm:$0xf]
  %v41 = vld [vmem:[%s1 + $0x4] sm:$0xf]
  %v42 = vld [vmem:[%s1 + $0x8] sm:$0xf]
  %v43 = vld [vmem:[%s1 + $0xc] sm:$0xf]
  %v44 = vld [vmem:[%s1 + $0x10] sm:$0xf]
  %v45 = vld [vmem:[%s1 + $0x14] sm:$0xf]
  %v46 = vld [vmem:[%s1 + $0x18] sm:$0xf]
  %v47 = vld [vmem:[%s1 + $0x1c] sm:$0xf]
  %v48 = vld [vmem:[%s1 + $0x20] sm:$0xf]
  %v49 = vld [vmem:[%s1 + $0x24] sm:$0xf]
  %v50 = vld [vmem:[%s1 + $0x28] sm:$0xf]
  %v51 = vld [vmem:[%s1 + $0x2c] sm:$0xf]
  %v52 = vld [vmem:[%s1 + $0x30] sm:$0xf]
  %v53 = vld [vmem:[%s1 + $0x34] sm:$0xf]
  %v54 = vld [vmem:[%s1 + $0x38] sm:$0xf]
  %v55 = vld [vmem:[%s1 + $0x3c] sm:$0xf]
  %v56 = vld [vmem:[%s1 + $0x40] sm:$0xf]
  %v57 = vld [vmem:[%s1 + $0x44] sm:$0xf]
  %v58 = vld [vmem:[%s1 + $0x48] sm:$0xf]
  %v59 = vld [vmem:[%s1 + $0x4c] sm:$0xf]
  %v60 = vld [vmem:[%s1 + $0x50] sm:$0xf]
  %v61 = vld [vmem:[%s1 + $0x54] sm:$0xf]
  %v62 = vld [vmem:[%s1 + $0x58] sm:$0xf]
  %v63 = vld [vmem:[%s1 + $0x5c] sm:$0xf]
  %v64 = vld [vmem:[%s1 + $0x60] sm:$0xf]
  %v65 = vld [vmem:[%s1 + $0x64] sm:$0xf]
  %v66 = vld [vmem:[%s1 + $0x68] sm:$0xf]
  %v67 = vld [vmem:[%s1 + $0x6c] sm:$0xf]
  %v68 = vld [vmem:[%s1 + $0x70] sm:$0xf]
  %v69 = vld [vmem:[%s1 + $0x74] sm:$0xf]
  %v70 = vld [vmem:[%s1 + $0x78] sm:$0xf]
  %v71 = vld [vmem:[%s1 + $0x7c] sm:$0xf]
  %v72 = vld [vmem:[%s1 + $0x80] sm:$0xf]
  %v73 = vld [vmem:[%s1 + $0x84] sm:$0xf]
  %v74 = vld [vmem:[%s1 + $0x88] sm:$0xf]
  %v75 = vld [vmem:[%s1 + $0x8c] sm:$0xf]
  %v76 = vld [vmem:[%s1 + $0x90] sm:$0xf]
  %v77 = vld [vmem:[%s1 + $0x94] sm:$0xf]
  %v78 = vld [vmem:[%s1 + $0x98] sm:$0xf]
  %v79 = vld [vmem:[%s1 + $0x9c] sm:$0xf]
  %v80 = vld [vmem:[%s1 + $0xa0] sm:$0xf]
  %v81 = vld [vmem:[%s1 + $0xa4] sm:$0xf]
  %v82 = vld [vmem:[%s1 + $0xa8] sm:$0xf]
  %v83 = vld [vmem:[%s1 + $0xac] sm:$0xf]
  %v84 = vld [vmem:[%s1 + $0xb0] sm:$0xf]
  %v85 = vld [vmem:[%s1 + $0xb4] sm:$0xf]
  %v86 = vld [vmem:[%s1 + $0xb8] sm:$0xf]
  %v87 = vld [vmem:[%s1 + $0xbc] sm:$0xf]
  %v88 = vld [vmem:[%s1 + $0xc0] sm:$0xf]
  %v89 = vld [vmem:[%s1 + $0xc4] sm:$0xf]
  %v90 = vld [vmem:[%s1 + $0xc8] sm:$0xf]
  %v91 = vld [vmem:[%s1 + $0xcc] sm:$0xf]
  %v92 = vld [vmem:[%s1 + $0xd0] sm:$0xf]
  %v93 = vld [vmem:[%s1 + $0xd4] sm:$0xf]
  %v94 = vld [vmem:[%s1 + $0xd8] sm:$0xf]
  %v95 = vld [vmem:[%s1 + $0xdc] sm:$0xf]
  %v96 = vld [vmem:[%s1 + $0xe0] sm:$0xf]
  %v97 = vld [vmem:[%s1 + $0xe4] sm:$0xf]
  %v98 = vld [vmem:[%s1 + $0xe8] sm:$0xf]
  %v99 = vld [vmem:[%s1 + $0xec] sm:$0xf]
  %v100 = vld [vmem:[%s1 + $0xf0] sm:$0xf]
  %v101 = vld [vmem:[%s1 + $0xf4] sm:$0xf]
  %v102 = vld [vmem:[%s1 + $0xf8] sm:$0xf]
  %v103 = vld [vmem:[%s1 + $0xfc] sm:$0xf]
  %v104 = vld [vmem:[%s1 + $0x100] sm:$0xf]
  %v105 = vld [vmem:[%s1 + $0x104] sm:$0xf]
  %v106 = vld [vmem:[%s1 + $0x108] sm:$0xf]
  %v107 = vld [vmem:[%s1 + $0x10c] sm:$0xf]
  %v108 = vld [vmem:[%s1 + $0x110] sm:$0xf]
  %v109 = vld [vmem:[%s1 + $0x114] sm:$0xf]
  %v110 = vld [vmem:[%s1 + $0x118] sm:$0xf]
  %v111 = vld [vmem:[%s1 + $0x11c] sm:$0xf]
  %v112 = vld [vmem:[%s1 + $0x120] sm:$0xf]
  %v113 = vld [vmem:[%s1 + $0x124] sm:$0xf]
  %v114 = vld [vmem:[%s1 + $0x128] sm:$0xf]
  %v115 = vld [vmem:[%s1 + $0x12c] sm:$0xf]
  %v116 = vld [vmem:[%s1 + $0x130] sm:$0xf]
  %v117 = vld [vmem:[%s1 + $0x134] sm:$0xf]
  %v118 = vld [vmem:[%s1 + $0x138] sm:$0xf]
  %v119 = vld [vmem:[%s1 + $0x13c] sm:$0xf]
  %v120 = vld [vmem:[%s1 + $0x140] sm:$0xf]
  %v121 = vld [vmem:[%s1 + $0x144] sm:$0xf]
  %v122 = vld [vmem:[%s1 + $0x148] sm:$0xf]
  %v123 = vld [vmem:[%s1 + $0x14c] sm:$0xf]
  %v124 = vld [vmem:[%s1 + $0x150] sm:$0xf]
  %v125 = vld [vmem:[%s1 + $0x154] sm:$0xf]
  %v126 = vld [vmem:[%s1 + $0x158] sm:$0xf]
  %v127 = vld [vmem:[%s1 + $0x15c] sm:$0xf]
  %v128 = vld [vmem:[%s1 + $0x160] sm:$0xf]
  %v129 = vld [vmem:[%s1 + $0x164] sm:$0xf]
  %v142 = vunpack.c.l.b16 %v28
  %v143 = vunpack.c.h.b16 %v28
  %v144 = vunpack.c.l.b16 %v29
  %v145 = vunpack.c.h.b16 %v29
  %v146 = vunpack.c.l.b16 %v30
  %v147 = vunpack.c.h.b16 %v30
  %v148 = vunpack.c.l.b16 %v31
  %v149 = vunpack.c.h.b16 %v31
  %v150 = vunpack.c.l.b16 %v32
  %v151 = vunpack.c.h.b16 %v32
  %v152 = vunpack.c.l.b16 %v33
  %v153 = vunpack.c.h.b16 %v33
  %v154 = vunpack.c.l.b16 %v34
  %v155 = vunpack.c.h.b16 %v34
  %v156 = vunpack.c.l.b16 %v35
  %v157 = vunpack.c.h.b16 %v35
  %v158 = vunpack.c.l.b16 %v36
  %v159 = vunpack.c.h.b16 %v36
  %v160 = vunpack.c.l.b16 %v37
  %v161 = vunpack.c.h.b16 %v37
  %v162 = vunpack.c.l.b16 %v38
  %v163 = vunpack.c.h.b16 %v38
  %v164 = vunpack.c.l.b16 %v39
  %v165 = vunpack.c.h.b16 %v39
  %v166 = vpack.c.b16 %v148, %v142
  %v167 = vpack.c.b16 %v149, %v143
  %v168 = vpack.c.b16 %v150, %v144
  %v169 = vpack.c.b16 %v151, %v145
  %v170 = vpack.c.b16 %v152, %v146
  %v171 = vpack.c.b16 %v153, %v147
  %v172 = vpack.c.b16 %v160, %v154
  %v173 = vpack.c.b16 %v161, %v155
  %v174 = vpack.c.b16 %v162, %v156
  %v175 = vpack.c.b16 %v163, %v157
  %v176 = vpack.c.b16 %v164, %v158
  %v177 = vpack.c.b16 %v165, %v159
  %v278 = vunpack.c.l.b16 %v40
  %v279 = vunpack.c.l.b16 %v41
  %v280 = vunpack.c.l.b16 %v42
  %v281 = vunpack.c.l.b16 %v43
  %v282 = vunpack.c.l.b16 %v44
  %v283 = vunpack.c.l.b16 %v45
  %v284 = vunpack.c.l.b16 %v46
  %v285 = vunpack.c.l.b16 %v47
  %v286 = vunpack.c.l.b16 %v48
  %v287 = vunpack.c.l.b16 %v49
  %v288 = vunpack.c.l.b16 %v50
  %v289 = vunpack.c.l.b16 %v51
  %v290 = vunpack.c.l.b16 %v52
  %v291 = vunpack.c.l.b16 %v53
  %v292 = vunpack.c.l.b16 %v54
  %v293 = vunpack.c.l.b16 %v55
  %v294 = vunpack.c.l.b16 %v56
  %v295 = vunpack.c.l.b16 %v57
  %v296 = vunpack.c.l.b16 %v58
  %v297 = vunpack.c.l.b16 %v59
  %v298 = vunpack.c.l.b16 %v60
  %v299 = vunpack.c.l.b16 %v61
  %v300 = vunpack.c.l.b16 %v62
  %v301 = vunpack.c.l.b16 %v63
  %v302 = vunpack.c.l.b16 %v64
  %v303 = vunpack.c.l.b16 %v65
  %v304 = vunpack.c.l.b16 %v66
  %v305 = vunpack.c.l.b16 %v67
  %v306 = vunpack.c.l.b16 %v68
  %v307 = vunpack.c.l.b16 %v69
  %v308 = vunpack.c.l.b16 %v70
  %v309 = vunpack.c.l.b16 %v71
  %v310 = vunpack.c.l.b16 %v72
  %v311 = vunpack.c.l.b16 %v73
  %v312 = vunpack.c.l.b16 %v74
  %v313 = vunpack.c.l.b16 %v75
  %v314 = vunpack.c.l.b16 %v76
  %v315 = vunpack.c.l.b16 %v77
  %v316 = vunpack.c.l.b16 %v78
  %v317 = vunpack.c.l.b16 %v79
  %v318 = vunpack.c.l.b16 %v80
  %v319 = vunpack.c.l.b16 %v81
  %v320 = vunpack.c.l.b16 %v82
  %v321 = vunpack.c.l.b16 %v83
  %v322 = vunpack.c.l.b16 %v84
  %v323 = vunpack.c.l.b16 %v85
  %v324 = vunpack.c.l.b16 %v86
  %v325 = vunpack.c.l.b16 %v87
  %v326 = vunpack.c.l.b16 %v88
  %v327 = vunpack.c.l.b16 %v89
  %v328 = vunpack.c.l.b16 %v90
  %v329 = vunpack.c.l.b16 %v91
  %v330 = vunpack.c.l.b16 %v92
  %v331 = vunpack.c.l.b16 %v93
  %v332 = vunpack.c.l.b16 %v94
  %v333 = vunpack.c.l.b16 %v95
  %v334 = vunpack.c.l.b16 %v96
  %v335 = vunpack.c.l.b16 %v97
  %v336 = vunpack.c.l.b16 %v98
  %v337 = vunpack.c.l.b16 %v99
  %v338 = vunpack.c.l.b16 %v100
  %v339 = vunpack.c.l.b16 %v101
  %v340 = vunpack.c.l.b16 %v102
  %v341 = vunpack.c.l.b16 %v103
  %v342 = vunpack.c.l.b16 %v104
  %v343 = vunpack.c.l.b16 %v105
  %v344 = vunpack.c.l.b16 %v106
  %v345 = vunpack.c.l.b16 %v107
  %v346 = vunpack.c.l.b16 %v108
  %v347 = vunpack.c.l.b16 %v109
  %v348 = vunpack.c.l.b16 %v110
  %v349 = vunpack.c.l.b16 %v111
  %v350 = vunpack.c.l.b16 %v112
  %v351 = vunpack.c.l.b16 %v113
  %v352 = vunpack.c.l.b16 %v114
  %v353 = vunpack.c.l.b16 %v115
  %v354 = vunpack.c.l.b16 %v116
  %v355 = vunpack.c.l.b16 %v117
  %v356 = vunpack.c.l.b16 %v118
  %v357 = vunpack.c.l.b16 %v119
  %v358 = vunpack.c.l.b16 %v120
  %v359 = vunpack.c.l.b16 %v121
  %v360 = vunpack.c.l.b16 %v122
  %v361 = vunpack.c.l.b16 %v123
  %v362 = vunpack.c.l.b16 %v124
  %v363 = vunpack.c.l.b16 %v125
  %v364 = vunpack.c.l.b16 %v126
  %v365 = vunpack.c.l.b16 %v127
  %v366 = vunpack.c.l.b16 %v128
  %v367 = vunpack.c.l.b16 %v129
  %v368 = vpack.c.b16 %v279, %v278
  %v369 = vpack.c.b16 %v281, %v280
  %v370 = vpack.c.b16 %v283, %v282
  %v371 = vpack.c.b16 %v285, %v284
  %v372 = vpack.c.b16 %v287, %v286
  %v373 = vpack.c.b16 %v289, %v288
  %v374 = vpack.c.b16 %v291, %v290
  %v375 = vpack.c.b16 %v293, %v292
  %v376 = vpack.c.b16 %v295, %v294
  %v377 = vpack.c.b16 %v297, %v296
  %v378 = vpack.c.b16 %v299, %v298
  %v379 = vpack.c.b16 %v301, %v300
  %v380 = vpack.c.b16 %v303, %v302
  %v381 = vpack.c.b16 %v305, %v304
  %v382 = vpack.c.b16 %v307, %v306
  %v383 = vpack.c.b16 %v309, %v308
  %v384 = vpack.c.b16 %v311, %v310
  %v385 = vpack.c.b16 %v313, %v312
  %v386 = vpack.c.b16 %v315, %v314
  %v387 = vpack.c.b16 %v317, %v316
  %v388 = vpack.c.b16 %v319, %v318
  %v389 = vpack.c.b16 %v321, %v320
  %v390 = vpack.c.b16 %v323, %v322
  %v391 = vpack.c.b16 %v325, %v324
  %v392 = vpack.c.b16 %v327, %v326
  %v393 = vpack.c.b16 %v329, %v328
  %v394 = vpack.c.b16 %v331, %v330
  %v395 = vpack.c.b16 %v333, %v332
  %v396 = vpack.c.b16 %v335, %v334
  %v397 = vpack.c.b16 %v337, %v336
  %v398 = vpack.c.b16 %v339, %v338
  %v399 = vpack.c.b16 %v341, %v340
  %v400 = vpack.c.b16 %v343, %v342
  %v401 = vpack.c.b16 %v345, %v344
  %v402 = vpack.c.b16 %v347, %v346
  %v403 = vpack.c.b16 %v349, %v348
  %v404 = vpack.c.b16 %v351, %v350
  %v405 = vpack.c.b16 %v353, %v352
  %v406 = vpack.c.b16 %v355, %v354
  %v407 = vpack.c.b16 %v357, %v356
  %v408 = vpack.c.b16 %v359, %v358
  %v409 = vpack.c.b16 %v361, %v360
  %v410 = vpack.c.b16 %v363, %v362
  %v411 = vpack.c.b16 %v365, %v364
  %v412 = vpack.c.b16 %v367, %v366
  %vm458 = vcmask 654336
  %v460 = vsel %vm458, %v171, 0
  %v463 = vsel %vm458, %v177, 0
  %465 = vmatprep.subr.bf16.mxu0 0
  %466 = vmatpush1.bf16.msra.mxu0 %v375
  %467 = vmatprep.subr.bf16.mxu0 0
  %468 = vmatpush1.bf16.msra.mxu0 %v374
  %469 = vmatprep.subr.bf16.mxu0 0
  %470 = vmatpush1.bf16.msra.mxu0 %v373
  %471 = vmatprep.subr.bf16.mxu0 0
  %472 = vmatpush1.bf16.msra.mxu0 %v372
  %473 = vmatprep.subr.bf16.mxu0 0
  %474 = vmatpush1.bf16.msra.mxu0 %v371
  %475 = vmatprep.subr.bf16.mxu0 0
  %476 = vmatpush1.bf16.msra.mxu0 %v370
  %477 = vmatprep.subr.bf16.mxu0 0
  %478 = vmatpush1.bf16.msra.mxu0 %v369
  %479 = vmatprep.subr.bf16.mxu0 0
  %480 = vmatpush1.bf16.msra.mxu0 %v368
  %481 = vmatprep.subr.bf16.mxu0 0
  %482 = vmatpush2.bf16.msra.mxu0 %v383
  %483 = vmatprep.subr.bf16.mxu0 0
  %484 = vmatpush2.bf16.msra.mxu0 %v382
  %485 = vmatprep.subr.bf16.mxu0 0
  %486 = vmatpush2.bf16.msra.mxu0 %v381
  %487 = vmatprep.subr.bf16.mxu0 0
  %488 = vmatpush2.bf16.msra.mxu0 %v380
  %489 = vmatprep.subr.bf16.mxu0 0
  %490 = vmatpush2.bf16.msra.mxu0 %v379
  %491 = vmatprep.subr.bf16.mxu0 0
  %492 = vmatpush2.bf16.msra.mxu0 %v378
  %493 = vmatprep.subr.bf16.mxu0 0
  %494 = vmatpush2.bf16.msra.mxu0 %v377
  %495 = vmatprep.subr.bf16.mxu0 0
  %496 = vmatpush2.bf16.msra.mxu0 %v376
  %497 = vmatprep.mubr.bf16.mxu0 %v167
  %498 = vmatmul.mubr.bf16.gmra.mxu0 %v166
  %v499 = vpop.f32.mrf.mxu0
  %v500 = vadd.f32 0.0, %v499
  %v501 = vpop.f32.mrf.mxu0
  %v502 = vpop.f32.mrf.mxu0
  %v503 = vadd.f32 0.0, %v502
  %v504 = vpop.f32.mrf.mxu0
  %505 = vmatprep.mubr.bf16.mxu0 %v173
  %506 = vmatmul.mubr.bf16.gmra.mxu0 %v172
  %v507 = vpop.f32.mrf.mxu0
  %v508 = vadd.f32 0.0, %v507
  %v509 = vpop.f32.mrf.mxu0
  %v510 = vpop.f32.mrf.mxu0
  %v511 = vadd.f32 0.0, %v510
  %v512 = vpop.f32.mrf.mxu0
  %513 = vdwg.mxu0
  %514 = vmatprep.subr.bf16.mxu0 0
  %515 = vmatpush1.bf16.msra.mxu0 %v391
  %516 = vmatprep.subr.bf16.mxu0 0
  %517 = vmatpush1.bf16.msra.mxu0 %v390
  %518 = vmatprep.subr.bf16.mxu0 0
  %519 = vmatpush1.bf16.msra.mxu0 %v389
  %520 = vmatprep.subr.bf16.mxu0 0
  %521 = vmatpush1.bf16.msra.mxu0 %v388
  %522 = vmatprep.subr.bf16.mxu0 0
  %523 = vmatpush1.bf16.msra.mxu0 %v387
  %524 = vmatprep.subr.bf16.mxu0 0
  %525 = vmatpush1.bf16.msra.mxu0 %v386
  %526 = vmatprep.subr.bf16.mxu0 0
  %527 = vmatpush1.bf16.msra.mxu0 %v385
  %528 = vmatprep.subr.bf16.mxu0 0
  %529 = vmatpush1.bf16.msra.mxu0 %v384
  %530 = vmatprep.subr.bf16.mxu0 0
  %531 = vmatpush2.bf16.msra.mxu0 %v399
  %532 = vmatprep.subr.bf16.mxu0 0
  %533 = vmatpush2.bf16.msra.mxu0 %v398
  %534 = vmatprep.subr.bf16.mxu0 0
  %535 = vmatpush2.bf16.msra.mxu0 %v397
  %536 = vmatprep.subr.bf16.mxu0 0
  %537 = vmatpush2.bf16.msra.mxu0 %v396
  %538 = vmatprep.subr.bf16.mxu0 0
  %539 = vmatpush2.bf16.msra.mxu0 %v395
  %540 = vmatprep.subr.bf16.mxu0 0
  %541 = vmatpush2.bf16.msra.mxu0 %v394
  %542 = vmatprep.subr.bf16.mxu0 0
  %543 = vmatpush2.bf16.msra.mxu0 %v393
  %544 = vmatprep.subr.bf16.mxu0 0
  %545 = vmatpush2.bf16.msra.mxu0 %v392
  %546 = vmatprep.mubr.bf16.mxu0 %v169
  %547 = vmatmul.mubr.bf16.gmra.mxu0 %v168
  %v548 = vpop.f32.mrf.mxu0
  %v549 = vadd.f32 %v500, %v548
  %v550 = vpop.f32.mrf.mxu0
  %v551 = vpop.f32.mrf.mxu0
  %v552 = vadd.f32 %v503, %v551
  %v553 = vpop.f32.mrf.mxu0
  %554 = vmatprep.mubr.bf16.mxu0 %v175
  %555 = vmatmul.mubr.bf16.gmra.mxu0 %v174
  %v556 = vpop.f32.mrf.mxu0
  %v557 = vadd.f32 %v508, %v556
  %v558 = vpop.f32.mrf.mxu0
  %v559 = vpop.f32.mrf.mxu0
  %v560 = vadd.f32 %v511, %v559
  %v561 = vpop.f32.mrf.mxu0
  %562 = vdwg.mxu0
  %563 = vmatprep.subr.bf16.mxu0 0
  %564 = vmatpush1.bf16.msra.mxu0 %v407
  %565 = vmatprep.subr.bf16.mxu0 0
  %566 = vmatpush1.bf16.msra.mxu0 %v406
  %567 = vmatprep.subr.bf16.mxu0 0
  %568 = vmatpush1.bf16.msra.mxu0 %v405
  %569 = vmatprep.subr.bf16.mxu0 0
  %570 = vmatpush1.bf16.msra.mxu0 %v404
  %571 = vmatprep.subr.bf16.mxu0 0
  %572 = vmatpush1.bf16.msra.mxu0 %v403
  %573 = vmatprep.subr.bf16.mxu0 0
  %574 = vmatpush1.bf16.msra.mxu0 %v402
  %575 = vmatprep.subr.bf16.mxu0 0
  %576 = vmatpush1.bf16.msra.mxu0 %v401
  %577 = vmatprep.subr.bf16.mxu0 0
  %578 = vmatpush1.bf16.msra.mxu0 %v400
  %579 = vmatprep.subr.bf16.mxu0 0
  %580 = vmatpush2.bf16.msra.mxu0 0
  %581 = vmatprep.subr.bf16.mxu0 0
  %582 = vmatpush2.bf16.msra.mxu0 0
  %583 = vmatprep.subr.bf16.mxu0 0
  %584 = vmatpush2.bf16.msra.mxu0 0
  %585 = vmatprep.subr.bf16.mxu0 0
  %586 = vmatpush2.bf16.msra.mxu0 %v412
  %587 = vmatprep.subr.bf16.mxu0 0
  %588 = vmatpush2.bf16.msra.mxu0 %v411
  %589 = vmatprep.subr.bf16.mxu0 0
  %590 = vmatpush2.bf16.msra.mxu0 %v410
  %591 = vmatprep.subr.bf16.mxu0 0
  %592 = vmatpush2.bf16.msra.mxu0 %v409
  %593 = vmatprep.subr.bf16.mxu0 0
  %594 = vmatpush2.bf16.msra.mxu0 %v408
  %595 = vmatprep.mubr.bf16.mxu0 %v460
  %596 = vmatmul.mubr.bf16.gmra.mxu0 %v170
  %v597 = vpop.f32.mrf.mxu0
  %v598 = vadd.f32 %v549, %v597
  %v599 = vpop.f32.mrf.mxu0
  %v600 = vpop.f32.mrf.mxu0
  %v601 = vadd.f32 %v552, %v600
  %v602 = vpop.f32.mrf.mxu0
  %603 = vmatprep.mubr.bf16.mxu0 %v463
  %604 = vmatmul.mubr.bf16.gmra.mxu0 %v176
  %v605 = vpop.f32.mrf.mxu0
  %v606 = vadd.f32 %v557, %v605
  %v607 = vpop.f32.mrf.mxu0
  %v608 = vpop.f32.mrf.mxu0
  %v609 = vadd.f32 %v560, %v608
  %v610 = vpop.f32.mrf.mxu0
  %611 = vdwg.mxu0
  %v612 = vadd.f32 %v24, %v598
  %v613 = vadd.f32 %v25, %v601
  %v614 = vadd.f32 %v26, %v606
  %v615 = vadd.f32 %v27, %v609
  %vm616 = vcmask 523264
  %617 = vst.msk [vmem:[#allocation2] sm:$0xff] %vm616, %v612
  %618 = vst.msk [vmem:[#allocation2 + $0x8] sm:$0xff] %vm616, %v613
  %619 = vst.msk [vmem:[#allocation2 + $0x10] sm:$0xff] %vm616, %v614
  %620 = vst.msk [vmem:[#allocation2 + $0x18] sm:$0xff] %vm616, %v615
  // Predicated region
  $region18: #{d_net64_forward.14} parent=0 // pred_check
    %p621 = pneg %p15
  $region19: #{d_net64_forward.14} parent=0 // pred_check_branch
    %623 = sbr.rel (%p621) target = $region21
  $region20: #{d_net64_forward.14} parent=0 // pred_region
    %v624 = vld [vmem:[#allocation2] sm:$0xff]
    %v625 = vld [vmem:[#allocation2 + $0x8] sm:$0xff]
    %v626 = vld [vmem:[#allocation2 + $0x10] sm:$0xff]
    %v627 = vld [vmem:[#allocation2 + $0x18] sm:$0xff]
    %v628 = vld [vmem:[%s2] sm:$0x1]
    %v630 = vlaneseq
    %v631 = vshrl.u32 %v630, 7
    %v632 = vsub.s32 0, %v631
    %v633 = vrot.slane %v628, %v632
    %v635 = vadd.f32 %v624, %v633
    %v636 = vadd.f32 %v625, %v633
    %v637 = vadd.f32 %v626, %v633
    %v638 = vadd.f32 %v627, %v633
    %vm639 = vcmp.gt.f32.partialorder %v635, 0.0
    %vm640 = vcmp.gt.f32.partialorder %v636, 0.0
    %vm641 = vcmp.gt.f32.partialorder %v637, 0.0
    %vm642 = vcmp.gt.f32.partialorder %v638, 0.0
    %v643 = vmul.f32 %v635, 0.2
    %v644 = vmul.f32 %v636, 0.2
    %v645 = vmul.f32 %v637, 0.2
    %v646 = vmul.f32 %v638, 0.2
    %v647 = vsel %vm639, %v635, %v643
    %v648 = vsel %vm640, %v636, %v644
    %v649 = vsel %vm641, %v637, %v645
    %v650 = vsel %vm642, %v638, %v646
    %v651 = vpack.c.bf16 %v648, %v647
    %v652 = vpack.c.bf16 %v650, %v649
    %v655 = vunpack.c.l.b16 %v651
    %v656 = vunpack.c.h.b16 %v651
    %v657 = vunpack.c.l.b16 %v652
    %v658 = vunpack.c.h.b16 %v652
    %v659 = vpack.c.b16 %v655, %v655
    %v660 = vpack.c.b16 %v656, %v656
    %v661 = vpack.c.b16 %v657, %v657
    %v662 = vpack.c.b16 %v658, %v658
    %vm667 = vcmask 519168
    %668 = vst.msk [vmem:[%s3] sm:$0xf] %vm667, %v659
    %669 = vst.msk [vmem:[%s3 + $0x4] sm:$0xf] %vm667, %v660
    %670 = vst.msk [vmem:[%s3 + $0x8] sm:$0xf] %vm667, %v661
    %671 = vst.msk [vmem:[%s3 + $0xc] sm:$0xf] %vm667, %v662
  $region21: #{d_net64_forward.14} parent=0 // pred_fallthru
    _
  // Predicated region
  $region22: #{d_net64_forward.14} parent=0 // pred_check
    _
  $region23: #{d_net64_forward.14} parent=0 // pred_check_branch
    %673 = sbr.rel (0) target = $region25
  $region24: #{d_net64_forward.14} parent=0 // pred_region
    _
  $region25: #{d_net64_forward.14} parent=0 // pred_fallthru
    _
  // Predicated region
  $region26: #{d_net64_forward.14} parent=0 // pred_check
    _
  $region27: #{d_net64_forward.14} parent=0 // pred_check_branch
    %675 = sbr.rel (0) target = $region29
  $region28: #{d_net64_forward.14} parent=0 // pred_region
    _
  $region29: #{d_net64_forward.14} parent=0 // pred_fallthru
    _

// kernel: d_net64_forward.15
$region0: #{d_net64_forward.15}
  #allocation0 [shape = 'u32[]', space=smem, size = 0x4, offset = 0x4, fixed_abs, tag = 'smem constant byte address 0x4 - core index']
  #allocation1 [shape = 'u32[144,128]{1,0:T(1,128)}', space=vmem, size = 0x12000, scoped, tag = 'internal scratch']
  #allocation2 [shape = 'f32[16,2]{1,0:T(8,128)}', space=vmem, size = 0x2000, scoped, tag = 'scratch operand']
  %s0 = inlined_call_operand.vmem [shape: bf16[16,1024], index: 0, kind: input, shape index: {}]
  %s1 = inlined_call_operand.vmem [shape: bf16[1024,2], index: 1, kind: input, shape index: {}]
  %s2 = inlined_call_operand.vmem [shape: f32[1,2], index: 2, kind: input, shape index: {}]
  %s3 = inlined_call_operand.vmem [shape: f32[16,2], index: 3, kind: output, shape index: {}]
  %s4 = sld [smem:[#allocation0]]
  $region30: #{d_net64_forward.15} parent=0
    _
  %s6 = ssub.s32 1, %s4
  %s7 = scalar_select 0, %s6, %s4
  // Predicated region
  $region2: #{d_net64_forward.15} parent=0 // pred_check
    _
  $region3: #{d_net64_forward.15} parent=0 // pred_check_branch
    %9 = sbr.rel (0) target = $region5
  $region4: #{d_net64_forward.15} parent=0 // pred_region
    _
  $region5: #{d_net64_forward.15} parent=0 // pred_fallthru
    _
  // Predicated region
  $region6: #{d_net64_forward.15} parent=0 // pred_check
    _
  $region7: #{d_net64_forward.15} parent=0 // pred_check_branch
    %11 = sbr.rel (0) target = $region9
  $region8: #{d_net64_forward.15} parent=0 // pred_region
    _
  $region9: #{d_net64_forward.15} parent=0 // pred_fallthru
    _
  // Predicated region
  $region10: #{d_net64_forward.15} parent=0 // pred_check
    _
  $region11: #{d_net64_forward.15} parent=0 // pred_check_branch
    %13 = sbr.rel (0) target = $region13
  $region12: #{d_net64_forward.15} parent=0 // pred_region
    _
  $region13: #{d_net64_forward.15} parent=0 // pred_fallthru
    _
  %p15 = scmp.eq.s32.totalorder 0, 0
  // Predicated region
  $region14: #{d_net64_forward.15} parent=0 // pred_check
    %p16 = pneg %p15
  $region15: #{d_net64_forward.15} parent=0 // pred_check_branch
    %18 = sbr.rel (%p16) target = $region17
  $region16: #{d_net64_forward.15} parent=0 // pred_region
    %vm19 = vcmask 15360
    %20 = vst.msk [vmem:[#allocation2] sm:$0xff] %vm19, 0.0
    %21 = vst.msk [vmem:[#allocation2 + $0x8] sm:$0xff] %vm19, 0.0
  $region17: #{d_net64_forward.15} parent=0 // pred_fallthru
    _
  %v22 = vld [vmem:[#allocation2] sm:$0xff]
  %v23 = vld [vmem:[#allocation2 + $0x8] sm:$0xff]
  %v24 = vld [vmem:[%s0] sm:$0xff]
  %v25 = vld [vmem:[%s0 + $0x8] sm:$0xff]
  %v26 = vld [vmem:[%s0 + $0x10] sm:$0xff]
  %v27 = vld [vmem:[%s0 + $0x18] sm:$0xff]
  %v28 = vld [vmem:[%s0 + $0x20] sm:$0xff]
  %v29 = vld [vmem:[%s0 + $0x28] sm:$0xff]
  %v30 = vld [vmem:[%s0 + $0x30] sm:$0xff]
  %v31 = vld [vmem:[%s0 + $0x38] sm:$0xff]
  %v32 = vld [vmem:[%s1] sm:$0xf]
  %v33 = vld [vmem:[%s1 + $0x4] sm:$0xf]
  %v34 = vld [vmem:[%s1 + $0x8] sm:$0xf]
  %v35 = vld [vmem:[%s1 + $0xc] sm:$0xf]
  %v36 = vld [vmem:[%s1 + $0x10] sm:$0xf]
  %v37 = vld [vmem:[%s1 + $0x14] sm:$0xf]
  %v38 = vld [vmem:[%s1 + $0x18] sm:$0xf]
  %v39 = vld [vmem:[%s1 + $0x1c] sm:$0xf]
  %v40 = vld [vmem:[%s1 + $0x20] sm:$0xf]
  %v41 = vld [vmem:[%s1 + $0x24] sm:$0xf]
  %v42 = vld [vmem:[%s1 + $0x28] sm:$0xf]
  %v43 = vld [vmem:[%s1 + $0x2c] sm:$0xf]
  %v44 = vld [vmem:[%s1 + $0x30] sm:$0xf]
  %v45 = vld [vmem:[%s1 + $0x34] sm:$0xf]
  %v46 = vld [vmem:[%s1 + $0x38] sm:$0xf]
  %v47 = vld [vmem:[%s1 + $0x3c] sm:$0xf]
  %v48 = vld [vmem:[%s1 + $0x40] sm:$0xf]
  %v49 = vld [vmem:[%s1 + $0x44] sm:$0xf]
  %v50 = vld [vmem:[%s1 + $0x48] sm:$0xf]
  %v51 = vld [vmem:[%s1 + $0x4c] sm:$0xf]
  %v52 = vld [vmem:[%s1 + $0x50] sm:$0xf]
  %v53 = vld [vmem:[%s1 + $0x54] sm:$0xf]
  %v54 = vld [vmem:[%s1 + $0x58] sm:$0xf]
  %v55 = vld [vmem:[%s1 + $0x5c] sm:$0xf]
  %v56 = vld [vmem:[%s1 + $0x60] sm:$0xf]
  %v57 = vld [vmem:[%s1 + $0x64] sm:$0xf]
  %v58 = vld [vmem:[%s1 + $0x68] sm:$0xf]
  %v59 = vld [vmem:[%s1 + $0x6c] sm:$0xf]
  %v60 = vld [vmem:[%s1 + $0x70] sm:$0xf]
  %v61 = vld [vmem:[%s1 + $0x74] sm:$0xf]
  %v62 = vld [vmem:[%s1 + $0x78] sm:$0xf]
  %v63 = vld [vmem:[%s1 + $0x7c] sm:$0xf]
  %v64 = vld [vmem:[%s1 + $0x80] sm:$0xf]
  %v65 = vld [vmem:[%s1 + $0x84] sm:$0xf]
  %v66 = vld [vmem:[%s1 + $0x88] sm:$0xf]
  %v67 = vld [vmem:[%s1 + $0x8c] sm:$0xf]
  %v68 = vld [vmem:[%s1 + $0x90] sm:$0xf]
  %v69 = vld [vmem:[%s1 + $0x94] sm:$0xf]
  %v70 = vld [vmem:[%s1 + $0x98] sm:$0xf]
  %v71 = vld [vmem:[%s1 + $0x9c] sm:$0xf]
  %v72 = vld [vmem:[%s1 + $0xa0] sm:$0xf]
  %v73 = vld [vmem:[%s1 + $0xa4] sm:$0xf]
  %v74 = vld [vmem:[%s1 + $0xa8] sm:$0xf]
  %v75 = vld [vmem:[%s1 + $0xac] sm:$0xf]
  %v76 = vld [vmem:[%s1 + $0xb0] sm:$0xf]
  %v77 = vld [vmem:[%s1 + $0xb4] sm:$0xf]
  %v78 = vld [vmem:[%s1 + $0xb8] sm:$0xf]
  %v79 = vld [vmem:[%s1 + $0xbc] sm:$0xf]
  %v80 = vld [vmem:[%s1 + $0xc0] sm:$0xf]
  %v81 = vld [vmem:[%s1 + $0xc4] sm:$0xf]
  %v82 = vld [vmem:[%s1 + $0xc8] sm:$0xf]
  %v83 = vld [vmem:[%s1 + $0xcc] sm:$0xf]
  %v84 = vld [vmem:[%s1 + $0xd0] sm:$0xf]
  %v85 = vld [vmem:[%s1 + $0xd4] sm:$0xf]
  %v86 = vld [vmem:[%s1 + $0xd8] sm:$0xf]
  %v87 = vld [vmem:[%s1 + $0xdc] sm:$0xf]
  %v88 = vld [vmem:[%s1 + $0xe0] sm:$0xf]
  %v89 = vld [vmem:[%s1 + $0xe4] sm:$0xf]
  %v90 = vld [vmem:[%s1 + $0xe8] sm:$0xf]
  %v91 = vld [vmem:[%s1 + $0xec] sm:$0xf]
  %v92 = vld [vmem:[%s1 + $0xf0] sm:$0xf]
  %v93 = vld [vmem:[%s1 + $0xf4] sm:$0xf]
  %v94 = vld [vmem:[%s1 + $0xf8] sm:$0xf]
  %v95 = vld [vmem:[%s1 + $0xfc] sm:$0xf]
  %v96 = vld [vmem:[%s1 + $0x100] sm:$0xf]
  %v97 = vld [vmem:[%s1 + $0x104] sm:$0xf]
  %v98 = vld [vmem:[%s1 + $0x108] sm:$0xf]
  %v99 = vld [vmem:[%s1 + $0x10c] sm:$0xf]
  %v100 = vld [vmem:[%s1 + $0x110] sm:$0xf]
  %v101 = vld [vmem:[%s1 + $0x114] sm:$0xf]
  %v102 = vld [vmem:[%s1 + $0x118] sm:$0xf]
  %v103 = vld [vmem:[%s1 + $0x11c] sm:$0xf]
  %v104 = vld [vmem:[%s1 + $0x120] sm:$0xf]
  %v105 = vld [vmem:[%s1 + $0x124] sm:$0xf]
  %v106 = vld [vmem:[%s1 + $0x128] sm:$0xf]
  %v107 = vld [vmem:[%s1 + $0x12c] sm:$0xf]
  %v108 = vld [vmem:[%s1 + $0x130] sm:$0xf]
  %v109 = vld [vmem:[%s1 + $0x134] sm:$0xf]
  %v110 = vld [vmem:[%s1 + $0x138] sm:$0xf]
  %v111 = vld [vmem:[%s1 + $0x13c] sm:$0xf]
  %v112 = vld [vmem:[%s1 + $0x140] sm:$0xf]
  %v113 = vld [vmem:[%s1 + $0x144] sm:$0xf]
  %v114 = vld [vmem:[%s1 + $0x148] sm:$0xf]
  %v115 = vld [vmem:[%s1 + $0x14c] sm:$0xf]
  %v116 = vld [vmem:[%s1 + $0x150] sm:$0xf]
  %v117 = vld [vmem:[%s1 + $0x154] sm:$0xf]
  %v118 = vld [vmem:[%s1 + $0x158] sm:$0xf]
  %v119 = vld [vmem:[%s1 + $0x15c] sm:$0xf]
  %v120 = vld [vmem:[%s1 + $0x160] sm:$0xf]
  %v121 = vld [vmem:[%s1 + $0x164] sm:$0xf]
  %v122 = vld [vmem:[%s1 + $0x168] sm:$0xf]
  %v123 = vld [vmem:[%s1 + $0x16c] sm:$0xf]
  %v124 = vld [vmem:[%s1 + $0x170] sm:$0xf]
  %v125 = vld [vmem:[%s1 + $0x174] sm:$0xf]
  %v126 = vld [vmem:[%s1 + $0x178] sm:$0xf]
  %v127 = vld [vmem:[%s1 + $0x17c] sm:$0xf]
  %v128 = vld [vmem:[%s1 + $0x180] sm:$0xf]
  %v129 = vld [vmem:[%s1 + $0x184] sm:$0xf]
  %v130 = vld [vmem:[%s1 + $0x188] sm:$0xf]
  %v131 = vld [vmem:[%s1 + $0x18c] sm:$0xf]
  %v132 = vld [vmem:[%s1 + $0x190] sm:$0xf]
  %v133 = vld [vmem:[%s1 + $0x194] sm:$0xf]
  %v134 = vld [vmem:[%s1 + $0x198] sm:$0xf]
  %v135 = vld [vmem:[%s1 + $0x19c] sm:$0xf]
  %v136 = vld [vmem:[%s1 + $0x1a0] sm:$0xf]
  %v137 = vld [vmem:[%s1 + $0x1a4] sm:$0xf]
  %v138 = vld [vmem:[%s1 + $0x1a8] sm:$0xf]
  %v139 = vld [vmem:[%s1 + $0x1ac] sm:$0xf]
  %v140 = vld [vmem:[%s1 + $0x1b0] sm:$0xf]
  %v141 = vld [vmem:[%s1 + $0x1b4] sm:$0xf]
  %v142 = vld [vmem:[%s1 + $0x1b8] sm:$0xf]
  %v143 = vld [vmem:[%s1 + $0x1bc] sm:$0xf]
  %v144 = vld [vmem:[%s1 + $0x1c0] sm:$0xf]
  %v145 = vld [vmem:[%s1 + $0x1c4] sm:$0xf]
  %v146 = vld [vmem:[%s1 + $0x1c8] sm:$0xf]
  %v147 = vld [vmem:[%s1 + $0x1cc] sm:$0xf]
  %v148 = vld [vmem:[%s1 + $0x1d0] sm:$0xf]
  %v149 = vld [vmem:[%s1 + $0x1d4] sm:$0xf]
  %v150 = vld [vmem:[%s1 + $0x1d8] sm:$0xf]
  %v151 = vld [vmem:[%s1 + $0x1dc] sm:$0xf]
  %v152 = vld [vmem:[%s1 + $0x1e0] sm:$0xf]
  %v153 = vld [vmem:[%s1 + $0x1e4] sm:$0xf]
  %v154 = vld [vmem:[%s1 + $0x1e8] sm:$0xf]
  %v155 = vld [vmem:[%s1 + $0x1ec] sm:$0xf]
  %v156 = vld [vmem:[%s1 + $0x1f0] sm:$0xf]
  %v157 = vld [vmem:[%s1 + $0x1f4] sm:$0xf]
  %v158 = vld [vmem:[%s1 + $0x1f8] sm:$0xf]
  %v159 = vld [vmem:[%s1 + $0x1fc] sm:$0xf]
  %v168 = vunpack.c.l.b16 %v24
  %v169 = vunpack.c.h.b16 %v24
  %v170 = vunpack.c.l.b16 %v25
  %v171 = vunpack.c.h.b16 %v25
  %v172 = vunpack.c.l.b16 %v26
  %v173 = vunpack.c.h.b16 %v26
  %v174 = vunpack.c.l.b16 %v27
  %v175 = vunpack.c.h.b16 %v27
  %v176 = vunpack.c.l.b16 %v28
  %v177 = vunpack.c.h.b16 %v28
  %v178 = vunpack.c.l.b16 %v29
  %v179 = vunpack.c.h.b16 %v29
  %v180 = vunpack.c.l.b16 %v30
  %v181 = vunpack.c.h.b16 %v30
  %v182 = vunpack.c.l.b16 %v31
  %v183 = vunpack.c.h.b16 %v31
  %v184 = vpack.c.b16 %v176, %v168
  %v185 = vpack.c.b16 %v177, %v169
  %v186 = vpack.c.b16 %v178, %v170
  %v187 = vpack.c.b16 %v179, %v171
  %v188 = vpack.c.b16 %v180, %v172
  %v189 = vpack.c.b16 %v181, %v173
  %v190 = vpack.c.b16 %v182, %v174
  %v191 = vpack.c.b16 %v183, %v175
  %v328 = vunpack.c.l.b16 %v32
  %v329 = vunpack.c.l.b16 %v33
  %v330 = vunpack.c.l.b16 %v34
  %v331 = vunpack.c.l.b16 %v35
  %v332 = vunpack.c.l.b16 %v36
  %v333 = vunpack.c.l.b16 %v37
  %v334 = vunpack.c.l.b16 %v38
  %v335 = vunpack.c.l.b16 %v39
  %v336 = vunpack.c.l.b16 %v40
  %v337 = vunpack.c.l.b16 %v41
  %v338 = vunpack.c.l.b16 %v42
  %v339 = vunpack.c.l.b16 %v43
  %v340 = vunpack.c.l.b16 %v44
  %v341 = vunpack.c.l.b16 %v45
  %v342 = vunpack.c.l.b16 %v46
  %v343 = vunpack.c.l.b16 %v47
  %v344 = vunpack.c.l.b16 %v48
  %v345 = vunpack.c.l.b16 %v49
  %v346 = vunpack.c.l.b16 %v50
  %v347 = vunpack.c.l.b16 %v51
  %v348 = vunpack.c.l.b16 %v52
  %v349 = vunpack.c.l.b16 %v53
  %v350 = vunpack.c.l.b16 %v54
  %v351 = vunpack.c.l.b16 %v55
  %v352 = vunpack.c.l.b16 %v56
  %v353 = vunpack.c.l.b16 %v57
  %v354 = vunpack.c.l.b16 %v58
  %v355 = vunpack.c.l.b16 %v59
  %v356 = vunpack.c.l.b16 %v60
  %v357 = vunpack.c.l.b16 %v61
  %v358 = vunpack.c.l.b16 %v62
  %v359 = vunpack.c.l.b16 %v63
  %v360 = vunpack.c.l.b16 %v64
  %v361 = vunpack.c.l.b16 %v65
  %v362 = vunpack.c.l.b16 %v66
  %v363 = vunpack.c.l.b16 %v67
  %v364 = vunpack.c.l.b16 %v68
  %v365 = vunpack.c.l.b16 %v69
  %v366 = vunpack.c.l.b16 %v70
  %v367 = vunpack.c.l.b16 %v71
  %v368 = vunpack.c.l.b16 %v72
  %v369 = vunpack.c.l.b16 %v73
  %v370 = vunpack.c.l.b16 %v74
  %v371 = vunpack.c.l.b16 %v75
  %v372 = vunpack.c.l.b16 %v76
  %v373 = vunpack.c.l.b16 %v77
  %v374 = vunpack.c.l.b16 %v78
  %v375 = vunpack.c.l.b16 %v79
  %v376 = vunpack.c.l.b16 %v80
  %v377 = vunpack.c.l.b16 %v81
  %v378 = vunpack.c.l.b16 %v82
  %v379 = vunpack.c.l.b16 %v83
  %v380 = vunpack.c.l.b16 %v84
  %v381 = vunpack.c.l.b16 %v85
  %v382 = vunpack.c.l.b16 %v86
  %v383 = vunpack.c.l.b16 %v87
  %v384 = vunpack.c.l.b16 %v88
  %v385 = vunpack.c.l.b16 %v89
  %v386 = vunpack.c.l.b16 %v90
  %v387 = vunpack.c.l.b16 %v91
  %v388 = vunpack.c.l.b16 %v92
  %v389 = vunpack.c.l.b16 %v93
  %v390 = vunpack.c.l.b16 %v94
  %v391 = vunpack.c.l.b16 %v95
  %v392 = vunpack.c.l.b16 %v96
  %v393 = vunpack.c.l.b16 %v97
  %v394 = vunpack.c.l.b16 %v98
  %v395 = vunpack.c.l.b16 %v99
  %v396 = vunpack.c.l.b16 %v100
  %v397 = vunpack.c.l.b16 %v101
  %v398 = vunpack.c.l.b16 %v102
  %v399 = vunpack.c.l.b16 %v103
  %v400 = vunpack.c.l.b16 %v104
  %v401 = vunpack.c.l.b16 %v105
  %v402 = vunpack.c.l.b16 %v106
  %v403 = vunpack.c.l.b16 %v107
  %v404 = vunpack.c.l.b16 %v108
  %v405 = vunpack.c.l.b16 %v109
  %v406 = vunpack.c.l.b16 %v110
  %v407 = vunpack.c.l.b16 %v111
  %v408 = vunpack.c.l.b16 %v112
  %v409 = vunpack.c.l.b16 %v113
  %v410 = vunpack.c.l.b16 %v114
  %v411 = vunpack.c.l.b16 %v115
  %v412 = vunpack.c.l.b16 %v116
  %v413 = vunpack.c.l.b16 %v117
  %v414 = vunpack.c.l.b16 %v118
  %v415 = vunpack.c.l.b16 %v119
  %v416 = vunpack.c.l.b16 %v120
  %v417 = vunpack.c.l.b16 %v121
  %v418 = vunpack.c.l.b16 %v122
  %v419 = vunpack.c.l.b16 %v123
  %v420 = vunpack.c.l.b16 %v124
  %v421 = vunpack.c.l.b16 %v125
  %v422 = vunpack.c.l.b16 %v126
  %v423 = vunpack.c.l.b16 %v127
  %v424 = vunpack.c.l.b16 %v128
  %v425 = vunpack.c.l.b16 %v129
  %v426 = vunpack.c.l.b16 %v130
  %v427 = vunpack.c.l.b16 %v131
  %v428 = vunpack.c.l.b16 %v132
  %v429 = vunpack.c.l.b16 %v133
  %v430 = vunpack.c.l.b16 %v134
  %v431 = vunpack.c.l.b16 %v135
  %v432 = vunpack.c.l.b16 %v136
  %v433 = vunpack.c.l.b16 %v137
  %v434 = vunpack.c.l.b16 %v138
  %v435 = vunpack.c.l.b16 %v139
  %v436 = vunpack.c.l.b16 %v140
  %v437 = vunpack.c.l.b16 %v141
  %v438 = vunpack.c.l.b16 %v142
  %v439 = vunpack.c.l.b16 %v143
  %v440 = vunpack.c.l.b16 %v144
  %v441 = vunpack.c.l.b16 %v145
  %v442 = vunpack.c.l.b16 %v146
  %v443 = vunpack.c.l.b16 %v147
  %v444 = vunpack.c.l.b16 %v148
  %v445 = vunpack.c.l.b16 %v149
  %v446 = vunpack.c.l.b16 %v150
  %v447 = vunpack.c.l.b16 %v151
  %v448 = vunpack.c.l.b16 %v152
  %v449 = vunpack.c.l.b16 %v153
  %v450 = vunpack.c.l.b16 %v154
  %v451 = vunpack.c.l.b16 %v155
  %v452 = vunpack.c.l.b16 %v156
  %v453 = vunpack.c.l.b16 %v157
  %v454 = vunpack.c.l.b16 %v158
  %v455 = vunpack.c.l.b16 %v159
  %v456 = vpack.c.b16 %v329, %v328
  %v457 = vpack.c.b16 %v331, %v330
  %v458 = vpack.c.b16 %v333, %v332
  %v459 = vpack.c.b16 %v335, %v334
  %v460 = vpack.c.b16 %v337, %v336
  %v461 = vpack.c.b16 %v339, %v338
  %v462 = vpack.c.b16 %v341, %v340
  %v463 = vpack.c.b16 %v343, %v342
  %v464 = vpack.c.b16 %v345, %v344
  %v465 = vpack.c.b16 %v347, %v346
  %v466 = vpack.c.b16 %v349, %v348
  %v467 = vpack.c.b16 %v351, %v350
  %v468 = vpack.c.b16 %v353, %v352
  %v469 = vpack.c.b16 %v355, %v354
  %v470 = vpack.c.b16 %v357, %v356
  %v471 = vpack.c.b16 %v359, %v358
  %v472 = vpack.c.b16 %v361, %v360
  %v473 = vpack.c.b16 %v363, %v362
  %v474 = vpack.c.b16 %v365, %v364
  %v475 = vpack.c.b16 %v367, %v366
  %v476 = vpack.c.b16 %v369, %v368
  %v477 = vpack.c.b16 %v371, %v370
  %v478 = vpack.c.b16 %v373, %v372
  %v479 = vpack.c.b16 %v375, %v374
  %v480 = vpack.c.b16 %v377, %v376
  %v481 = vpack.c.b16 %v379, %v378
  %v482 = vpack.c.b16 %v381, %v380
  %v483 = vpack.c.b16 %v383, %v382
  %v484 = vpack.c.b16 %v385, %v384
  %v485 = vpack.c.b16 %v387, %v386
  %v486 = vpack.c.b16 %v389, %v388
  %v487 = vpack.c.b16 %v391, %v390
  %v488 = vpack.c.b16 %v393, %v392
  %v489 = vpack.c.b16 %v395, %v394
  %v490 = vpack.c.b16 %v397, %v396
  %v491 = vpack.c.b16 %v399, %v398
  %v492 = vpack.c.b16 %v401, %v400
  %v493 = vpack.c.b16 %v403, %v402
  %v494 = vpack.c.b16 %v405, %v404
  %v495 = vpack.c.b16 %v407, %v406
  %v496 = vpack.c.b16 %v409, %v408
  %v497 = vpack.c.b16 %v411, %v410
  %v498 = vpack.c.b16 %v413, %v412
  %v499 = vpack.c.b16 %v415, %v414
  %v500 = vpack.c.b16 %v417, %v416
  %v501 = vpack.c.b16 %v419, %v418
  %v502 = vpack.c.b16 %v421, %v420
  %v503 = vpack.c.b16 %v423, %v422
  %v504 = vpack.c.b16 %v425, %v424
  %v505 = vpack.c.b16 %v427, %v426
  %v506 = vpack.c.b16 %v429, %v428
  %v507 = vpack.c.b16 %v431, %v430
  %v508 = vpack.c.b16 %v433, %v432
  %v509 = vpack.c.b16 %v435, %v434
  %v510 = vpack.c.b16 %v437, %v436
  %v511 = vpack.c.b16 %v439, %v438
  %v512 = vpack.c.b16 %v441, %v440
  %v513 = vpack.c.b16 %v443, %v442
  %v514 = vpack.c.b16 %v445, %v444
  %v515 = vpack.c.b16 %v447, %v446
  %v516 = vpack.c.b16 %v449, %v448
  %v517 = vpack.c.b16 %v451, %v450
  %v518 = vpack.c.b16 %v453, %v452
  %v519 = vpack.c.b16 %v455, %v454
  %584 = vmatprep.subr.bf16.mxu0 0
  %585 = vmatpush1.bf16.msra.mxu0 %v463
  %586 = vmatprep.subr.bf16.mxu0 0
  %587 = vmatpush1.bf16.msra.mxu0 %v462
  %588 = vmatprep.subr.bf16.mxu0 0
  %589 = vmatpush1.bf16.msra.mxu0 %v461
  %590 = vmatprep.subr.bf16.mxu0 0
  %591 = vmatpush1.bf16.msra.mxu0 %v460
  %592 = vmatprep.subr.bf16.mxu0 0
  %593 = vmatpush1.bf16.msra.mxu0 %v459
  %594 = vmatprep.subr.bf16.mxu0 0
  %595 = vmatpush1.bf16.msra.mxu0 %v458
  %596 = vmatprep.subr.bf16.mxu0 0
  %597 = vmatpush1.bf16.msra.mxu0 %v457
  %598 = vmatprep.subr.bf16.mxu0 0
  %599 = vmatpush1.bf16.msra.mxu0 %v456
  %600 = vmatprep.subr.bf16.mxu0 0
  %601 = vmatpush2.bf16.msra.mxu0 %v471
  %602 = vmatprep.subr.bf16.mxu0 0
  %603 = vmatpush2.bf16.msra.mxu0 %v470
  %604 = vmatprep.subr.bf16.mxu0 0
  %605 = vmatpush2.bf16.msra.mxu0 %v469
  %606 = vmatprep.subr.bf16.mxu0 0
  %607 = vmatpush2.bf16.msra.mxu0 %v468
  %608 = vmatprep.subr.bf16.mxu0 0
  %609 = vmatpush2.bf16.msra.mxu0 %v467
  %610 = vmatprep.subr.bf16.mxu0 0
  %611 = vmatpush2.bf16.msra.mxu0 %v466
  %612 = vmatprep.subr.bf16.mxu0 0
  %613 = vmatpush2.bf16.msra.mxu0 %v465
  %614 = vmatprep.subr.bf16.mxu0 0
  %615 = vmatpush2.bf16.msra.mxu0 %v464
  %616 = vmatprep.mubr.bf16.mxu0 %v185
  %617 = vmatmul.mubr.bf16.gmra.mxu0 %v184
  %v618 = vpop.f32.mrf.mxu0
  %v619 = vadd.f32 0.0, %v618
  %v620 = vpop.f32.mrf.mxu0
  %v621 = vpop.f32.mrf.mxu0
  %v622 = vadd.f32 0.0, %v621
  %v623 = vpop.f32.mrf.mxu0
  %624 = vdwg.mxu0
  %625 = vmatprep.subr.bf16.mxu0 0
  %626 = vmatpush1.bf16.msra.mxu0 %v479
  %627 = vmatprep.subr.bf16.mxu0 0
  %628 = vmatpush1.bf16.msra.mxu0 %v478
  %629 = vmatprep.subr.bf16.mxu0 0
  %630 = vmatpush1.bf16.msra.mxu0 %v477
  %631 = vmatprep.subr.bf16.mxu0 0
  %632 = vmatpush1.bf16.msra.mxu0 %v476
  %633 = vmatprep.subr.bf16.mxu0 0
  %634 = vmatpush1.bf16.msra.mxu0 %v475
  %635 = vmatprep.subr.bf16.mxu0 0
  %636 = vmatpush1.bf16.msra.mxu0 %v474
  %637 = vmatprep.subr.bf16.mxu0 0
  %638 = vmatpush1.bf16.msra.mxu0 %v473
  %639 = vmatprep.subr.bf16.mxu0 0
  %640 = vmatpush1.bf16.msra.mxu0 %v472
  %641 = vmatprep.subr.bf16.mxu0 0
  %642 = vmatpush2.bf16.msra.mxu0 %v487
  %643 = vmatprep.subr.bf16.mxu0 0
  %644 = vmatpush2.bf16.msra.mxu0 %v486
  %645 = vmatprep.subr.bf16.mxu0 0
  %646 = vmatpush2.bf16.msra.mxu0 %v485
  %647 = vmatprep.subr.bf16.mxu0 0
  %648 = vmatpush2.bf16.msra.mxu0 %v484
  %649 = vmatprep.subr.bf16.mxu0 0
  %650 = vmatpush2.bf16.msra.mxu0 %v483
  %651 = vmatprep.subr.bf16.mxu0 0
  %652 = vmatpush2.bf16.msra.mxu0 %v482
  %653 = vmatprep.subr.bf16.mxu0 0
  %654 = vmatpush2.bf16.msra.mxu0 %v481
  %655 = vmatprep.subr.bf16.mxu0 0
  %656 = vmatpush2.bf16.msra.mxu0 %v480
  %657 = vmatprep.mubr.bf16.mxu0 %v187
  %658 = vmatmul.mubr.bf16.gmra.mxu0 %v186
  %v659 = vpop.f32.mrf.mxu0
  %v660 = vadd.f32 %v619, %v659
  %v661 = vpop.f32.mrf.mxu0
  %v662 = vpop.f32.mrf.mxu0
  %v663 = vadd.f32 %v622, %v662
  %v664 = vpop.f32.mrf.mxu0
  %665 = vdwg.mxu0
  %666 = vmatprep.subr.bf16.mxu0 0
  %667 = vmatpush1.bf16.msra.mxu0 %v495
  %668 = vmatprep.subr.bf16.mxu0 0
  %669 = vmatpush1.bf16.msra.mxu0 %v494
  %670 = vmatprep.subr.bf16.mxu0 0
  %671 = vmatpush1.bf16.msra.mxu0 %v493
  %672 = vmatprep.subr.bf16.mxu0 0
  %673 = vmatpush1.bf16.msra.mxu0 %v492
  %674 = vmatprep.subr.bf16.mxu0 0
  %675 = vmatpush1.bf16.msra.mxu0 %v491
  %676 = vmatprep.subr.bf16.mxu0 0
  %677 = vmatpush1.bf16.msra.mxu0 %v490
  %678 = vmatprep.subr.bf16.mxu0 0
  %679 = vmatpush1.bf16.msra.mxu0 %v489
  %680 = vmatprep.subr.bf16.mxu0 0
  %681 = vmatpush1.bf16.msra.mxu0 %v488
  %682 = vmatprep.subr.bf16.mxu0 0
  %683 = vmatpush2.bf16.msra.mxu0 %v503
  %684 = vmatprep.subr.bf16.mxu0 0
  %685 = vmatpush2.bf16.msra.mxu0 %v502
  %686 = vmatprep.subr.bf16.mxu0 0
  %687 = vmatpush2.bf16.msra.mxu0 %v501
  %688 = vmatprep.subr.bf16.mxu0 0
  %689 = vmatpush2.bf16.msra.mxu0 %v500
  %690 = vmatprep.subr.bf16.mxu0 0
  %691 = vmatpush2.bf16.msra.mxu0 %v499
  %692 = vmatprep.subr.bf16.mxu0 0
  %693 = vmatpush2.bf16.msra.mxu0 %v498
  %694 = vmatprep.subr.bf16.mxu0 0
  %695 = vmatpush2.bf16.msra.mxu0 %v497
  %696 = vmatprep.subr.bf16.mxu0 0
  %697 = vmatpush2.bf16.msra.mxu0 %v496
  %698 = vmatprep.mubr.bf16.mxu0 %v189
  %699 = vmatmul.mubr.bf16.gmra.mxu0 %v188
  %v700 = vpop.f32.mrf.mxu0
  %v701 = vadd.f32 %v660, %v700
  %v702 = vpop.f32.mrf.mxu0
  %v703 = vpop.f32.mrf.mxu0
  %v704 = vadd.f32 %v663, %v703
  %v705 = vpop.f32.mrf.mxu0
  %706 = vdwg.mxu0
  %707 = vmatprep.subr.bf16.mxu0 0
  %708 = vmatpush1.bf16.msra.mxu0 %v511
  %709 = vmatprep.subr.bf16.mxu0 0
  %710 = vmatpush1.bf16.msra.mxu0 %v510
  %711 = vmatprep.subr.bf16.mxu0 0
  %712 = vmatpush1.bf16.msra.mxu0 %v509
  %713 = vmatprep.subr.bf16.mxu0 0
  %714 = vmatpush1.bf16.msra.mxu0 %v508
  %715 = vmatprep.subr.bf16.mxu0 0
  %716 = vmatpush1.bf16.msra.mxu0 %v507
  %717 = vmatprep.subr.bf16.mxu0 0
  %718 = vmatpush1.bf16.msra.mxu0 %v506
  %719 = vmatprep.subr.bf16.mxu0 0
  %720 = vmatpush1.bf16.msra.mxu0 %v505
  %721 = vmatprep.subr.bf16.mxu0 0
  %722 = vmatpush1.bf16.msra.mxu0 %v504
  %723 = vmatprep.subr.bf16.mxu0 0
  %724 = vmatpush2.bf16.msra.mxu0 %v519
  %725 = vmatprep.subr.bf16.mxu0 0
  %726 = vmatpush2.bf16.msra.mxu0 %v518
  %727 = vmatprep.subr.bf16.mxu0 0
  %728 = vmatpush2.bf16.msra.mxu0 %v517
  %729 = vmatprep.subr.bf16.mxu0 0
  %730 = vmatpush2.bf16.msra.mxu0 %v516
  %731 = vmatprep.subr.bf16.mxu0 0
  %732 = vmatpush2.bf16.msra.mxu0 %v515
  %733 = vmatprep.subr.bf16.mxu0 0
  %734 = vmatpush2.bf16.msra.mxu0 %v514
  %735 = vmatprep.subr.bf16.mxu0 0
  %736 = vmatpush2.bf16.msra.mxu0 %v513
  %737 = vmatprep.subr.bf16.mxu0 0
  %738 = vmatpush2.bf16.msra.mxu0 %v512
  %739 = vmatprep.mubr.bf16.mxu0 %v191
  %740 = vmatmul.mubr.bf16.gmra.mxu0 %v190
  %v741 = vpop.f32.mrf.mxu0
  %v742 = vadd.f32 %v701, %v741
  %v743 = vpop.f32.mrf.mxu0
  %v744 = vpop.f32.mrf.mxu0
  %v745 = vadd.f32 %v704, %v744
  %v746 = vpop.f32.mrf.mxu0
  %747 = vdwg.mxu0
  %v748 = vadd.f32 %v22, %v742
  %v749 = vadd.f32 %v23, %v745
  %vm750 = vcmask 15360
  %751 = vst.msk [vmem:[#allocation2] sm:$0xff] %vm750, %v748
  %752 = vst.msk [vmem:[#allocation2 + $0x8] sm:$0xff] %vm750, %v749
  // Predicated region
  $region18: #{d_net64_forward.15} parent=0 // pred_check
    %p753 = pneg %p15
  $region19: #{d_net64_forward.15} parent=0 // pred_check_branch
    %755 = sbr.rel (%p753) target = $region21
  $region20: #{d_net64_forward.15} parent=0 // pred_region
    %v756 = vld [vmem:[#allocation2] sm:$0xff]
    %v757 = vld [vmem:[#allocation2 + $0x8] sm:$0xff]
    %v758 = vld [vmem:[%s2] sm:$0x1]
    %v760 = vlaneseq
    %v761 = vshrl.u32 %v760, 7
    %v762 = vsub.s32 0, %v761
    %v763 = vrot.slane %v758, %v762
    %v765 = vadd.f32 %v756, %v763
    %v766 = vadd.f32 %v757, %v763
    %v767 = vxor.u32 %v765, 2147483648
    %v768 = vxor.u32 %v766, 2147483648
    %v769 = vmul.f32 %v767, 1.442695
    %v770 = vpow.pop %v769
    %v771 = vmul.f32 %v768, 1.442695
    %v772 = vpow.pop %v771
    %v773 = vadd.f32 %v770, 1.0
    %v774 = vadd.f32 %v772, 1.0
    %v775 = vrcp.pop %v773
    %v776 = vmul.f32 1.0, %v775
    %v777 = vrcp.pop %v774
    %v778 = vmul.f32 1.0, %v777
    %779 = vst.msk [vmem:[%s3] sm:$0xff] %vm750, %v776
    %780 = vst.msk [vmem:[%s3 + $0x8] sm:$0xff] %vm750, %v778
  $region21: #{d_net64_forward.15} parent=0 // pred_fallthru
    _
  // Predicated region
  $region22: #{d_net64_forward.15} parent=0 // pred_check
    _
  $region23: #{d_net64_forward.15} parent=0 // pred_check_branch
    %782 = sbr.rel (0) target = $region25
  $region24: #{d_net64_forward.15} parent=0 // pred_region
    _
  $region25: #{d_net64_forward.15} parent=0 // pred_fallthru
    _
  // Predicated region
  $region26: #{d_net64_forward.15} parent=0 // pred_check
    _
  $region27: #{d_net64_forward.15} parent=0 // pred_check_branch
    %784 = sbr.rel (0) target = $region29
  $region28: #{d_net64_forward.15} parent=0 // pred_region
    _
  $region29: #{d_net64_forward.15} parent=0 // pred_fallthru
    _

</llo_original>
